<compile_context>
chip_gen: v7x
topology: tpu7x:2x2x1
jax: 0.10.0
libtpu: 0.0.40
codegen_flags: <defaults>
</compile_context>

<pallas_src>
import functools

import jax
import jax.numpy as jnp
from jax import lax
from jax.experimental import pallas as pl
from jax.experimental.pallas import tpu as pltpu


_PKEYS = ("w1", "b1", "g1", "be1", "w2", "b2", "g2", "be2", "lw", "lb")


def _round_up(n, m):
    return ((n + m - 1) // m) * m


def _pick_batch_block(batch, t_pad):
    """Batch elements per grid step: pack rows for the MXU M-dim while keeping
    >= 2 grid steps whenever the batch allows it (v7x has 2 TensorCores)."""
    if batch <= 2:
        return 1
    bblk = min(batch // 2, max(1, 256 // t_pad))
    while batch % bblk:
        bblk -= 1
    return max(bblk, 1)


def _pad_bins(bins):
    """(n_bins-1,) -> (1, 128k) with +inf sentinels so the bucketize compare and
    the lane reduction run on full aligned lanes (pred > +inf is always False)."""
    n = bins.shape[0]
    n_pad = _round_up(max(n, 1), 128)
    pad = jnp.full((n_pad - n,), jnp.inf, bins.dtype)
    return jnp.concatenate([bins, pad]).reshape(1, n_pad)


# --------------------------------------------------------------------------
# Fused kernel: duration -> pitch branch -> energy branch, one grid step per
# (Bblk, Tp) slab of batch x time rows.
# --------------------------------------------------------------------------
def _make_fused_kernel(T, Tp, Bblk, n_bins):
    rows = Bblk * Tp
    has_pad = Tp > T

    def kernel(*refs):
        x_ref, mask_ref = refs[0], refs[1]
        dur_w = refs[2:12]
        pit_w = refs[12:22]
        ene_w = refs[22:32]
        pctrl_ref, ectrl_ref, pbins_ref, ebins_ref, pemb_ref, eemb_ref = refs[32:38]
        dur_ref, pitch_ref, energy_ref, xp_ref, xe_ref = refs[38:43]

        x = x_ref[0]                                   # (rows, H) f32
        mask = mask_ref[0]                             # (1, rows) f32, 1.0 = padded

        # Hoisted once, shared by all 6 conv layers / 3 predictors.
        tpos = lax.broadcasted_iota(jnp.int32, (rows, 1), 0) % Tp
        not_first = (tpos != 0).astype(jnp.float32)            # kills wrapped t-1 tap
        not_last = (tpos != Tp - 1).astype(jnp.float32)        # kills wrapped t+1 tap
        keep = (tpos < T).astype(jnp.float32) if has_pad else None

        def zero_pad_rows(a):
            # Lane-pad rows must stay zero so position T-1's "next" conv tap sees
            # the same zero padding as the PyTorch k=3 / pad=1 convolution.
            return a * keep if has_pad else a

        def conv_relu_ln(h, w_ref, b_ref, g_ref, be_ref):
            c = h.shape[1]
            h_prev = pltpu.roll(h, shift=1, axis=0) * not_first
            h_next = pltpu.roll(h, shift=rows - 1, axis=0) * not_last
            w = w_ref[...]                                          # (3C, F) bf16
            if c % 128 == 0:
                # prod-size channels: single MXU matmul, K = 3C.
                cat = jnp.concatenate([h_prev, h, h_next], axis=-1)
                y = jnp.dot(cat.astype(jnp.bfloat16), w,
                            preferred_element_type=jnp.float32)
            else:
                # sub-128 channels: three small matmuls, no lane-concat relayout.
                y = (jnp.dot(h_prev.astype(jnp.bfloat16), w[:c],
                             preferred_element_type=jnp.float32)
                     + jnp.dot(h.astype(jnp.bfloat16), w[c:2 * c],
                               preferred_element_type=jnp.float32)
                     + jnp.dot(h_next.astype(jnp.bfloat16), w[2 * c:],
                               preferred_element_type=jnp.float32))
            y = jnp.maximum(y + b_ref[...], 0.0)                    # bias + ReLU
            mu = jnp.mean(y, axis=-1, keepdims=True)                # single-pass LN stats
            var = jnp.mean(y * y, axis=-1, keepdims=True) - mu * mu
            inv = lax.rsqrt(jnp.maximum(var, 0.0) + 1e-5)
            return (y - mu) * (inv * g_ref[...]) + be_ref[...]

        def predictor(h, p):
            w1, b1, g1, be1, w2, b2, g2, be2, lw, lb = p
            h = zero_pad_rows(h)
            h = conv_relu_ln(h, w1, b1, g1, be1)       # dropout = identity (eval)
            h = zero_pad_rows(h)
            h = conv_relu_ln(h, w2, b2, g2, be2)
            # Linear(F -> 1) computed transposed: prediction is lane-dense (1, rows).
            pred = lax.dot_general(lw[...], h.astype(jnp.bfloat16),
                                   (((1,), (1,)), ((), ())),
                                   preferred_element_type=jnp.float32) + lb[...]
            return jnp.where(mask > 0.5, 0.0, pred)                 # masked_fill

        def branch(x_cur, p, ctrl_ref, bins_ref, emb_ref):
            pred = predictor(x_cur, p) + ctrl_ref[...]              # + control bias
            # torch.bucketize(pred, bins, right=False): #bins strictly below.
            pred_col = jnp.transpose(pred)                          # (rows, 1)
            bucket = jnp.sum((pred_col > bins_ref[...]).astype(jnp.int32),
                             axis=-1, keepdims=True)                # (rows, 1)
            col = lax.broadcasted_iota(jnp.int32, (rows, n_bins), 1)
            one_hot = (col == bucket).astype(jnp.float32)           # (rows, NB)
            emb = jnp.dot(one_hot, emb_ref[...],
                          preferred_element_type=jnp.float32)       # (rows, H), exact f32
            return pred, x_cur + zero_pad_rows(emb)

        dur_ref[0] = predictor(x, dur_w)
        pitch_pred, x1 = branch(x, pit_w, pctrl_ref, pbins_ref, pemb_ref)
        pitch_ref[0] = pitch_pred
        xp_ref[0] = x1
        energy_pred, x2 = branch(x1, ene_w, ectrl_ref, ebins_ref, eemb_ref)
        energy_ref[0] = energy_pred
        xe_ref[0] = x2

    return kernel


# --------------------------------------------------------------------------
# pallas_call wrapper
# --------------------------------------------------------------------------
def run_variance_adaptor_fused(x, src_mask, params, p_ctrl, e_ctrl):
    """Returns (log_dur_pred (B,T), pitch_pred (B,T), energy_pred (B,T),
    x_after_pitch (B,T,H), x_after_energy (B,T,H)) from a single pallas_call."""
    B, T, H = x.shape
    F = params["duration"]["b1"].shape[1]
    NB = params["pitch_emb"].shape[0]

    Tp = _round_up(T, 128)          # lane-dense pred stores / mask loads
    Bblk = _pick_batch_block(B, Tp)
    G = B // Bblk
    rows = Bblk * Tp

    mask_f = src_mask.astype(jnp.float32)
    if Tp > T:
        x_p = jnp.pad(x, ((0, 0), (0, Tp - T), (0, 0)))
        mask_f = jnp.pad(mask_f, ((0, 0), (0, Tp - T)), constant_values=1.0)
    else:
        x_p = x
    x_g = x_p.reshape(G, rows, H)          # contiguous merges: free at XLA level
    mask_g = mask_f.reshape(G, 1, rows)

    pctrl = jnp.full((1, 1), p_ctrl, jnp.float32)
    ectrl = jnp.full((1, 1), e_ctrl, jnp.float32)
    pbins = _pad_bins(params["pitch_bins"])
    ebins = _pad_bins(params["energy_bins"])
    NBP = pbins.shape[1]

    def const(shape):
        return pl.BlockSpec(shape, lambda g: (0,) * len(shape))

    def row_spec():
        return pl.BlockSpec((1, 1, rows), lambda g: (g, 0, 0))

    def x_spec():
        return pl.BlockSpec((1, rows, H), lambda g: (g, 0, 0))

    pred_specs = [const((3 * H, F)), const((1, F)), const((1, F)), const((1, F)),
                  const((3 * F, F)), const((1, F)), const((1, F)), const((1, F)),
                  const((1, F)), const((1, 1))]
    in_specs = ([x_spec(), row_spec()] + pred_specs * 3
                + [const((1, 1)), const((1, 1)),
                   const((1, NBP)), const((1, NBP)),
                   const((NB, H)), const((NB, H))])

    args = [x_g, mask_g]
    for name in ("duration", "pitch", "energy"):
        args += [params[name][k] for k in _PKEYS]
    args += [pctrl, ectrl, pbins, ebins, params["pitch_emb"], params["energy_emb"]]

    # TODO(synk): input_output_aliases / pl.Buffered(1) on the constant weight specs
    # skipped: original x is reused after this call (au-level regulation), and the
    # weight double-buffers are only a few MB even at prod sizes (fits 64 MiB VMEM).
    dur, pit, ene, x1, x2 = pl.pallas_call(
        _make_fused_kernel(T, Tp, Bblk, NB),
        out_shape=(jax.ShapeDtypeStruct((G, 1, rows), jnp.float32),
                   jax.ShapeDtypeStruct((G, 1, rows), jnp.float32),
                   jax.ShapeDtypeStruct((G, 1, rows), jnp.float32),
                   jax.ShapeDtypeStruct((G, rows, H), jnp.float32),
                   jax.ShapeDtypeStruct((G, rows, H), jnp.float32)),
        grid_spec=pltpu.PrefetchScalarGridSpec(
            num_scalar_prefetch=0,
            grid=(G,),
            in_specs=in_specs,
            out_specs=[row_spec(), row_spec(), row_spec(), x_spec(), x_spec()]),
        compiler_params=pltpu.CompilerParams(dimension_semantics=("parallel",)),
    )(*args)

    def unrow(a):
        return a.reshape(B, Tp)[:, :T]

    def unx(a):
        return a.reshape(B, Tp, H)[:, :T, :]

    return unrow(dur), unrow(pit), unrow(ene), unx(x1), unx(x2)


# --------------------------------------------------------------------------
# Plain-JAX glue reproducing the non-kernel parts of VarianceAdaptor.forward
# --------------------------------------------------------------------------
def float2int(duration):
    """Exact mirror of the reference residual-compensated rounding scan
    (clamp to >= 0 happens after the scan, as in the reference)."""
    def step(residual, d):
        r = jnp.round(d + residual)
        return residual + d - r, r
    _, rounded = lax.scan(step,
                          jnp.zeros((duration.shape[0],), duration.dtype),
                          jnp.swapaxes(duration, 0, 1))
    return jnp.maximum(jnp.swapaxes(rounded, 0, 1), 0.0).astype(jnp.int32)


def length_regulator(x, duration, max_len):
    """Ragged repeat of phoneme vectors by integer durations, zero-padded to a
    STATIC max_len (no device->host sync; jit-friendly)."""
    B, T, H = x.shape
    out_len = jnp.sum(duration, axis=1)
    cum = jnp.cumsum(duration, axis=1)                                 # (B, T)
    frames = jnp.arange(max_len, dtype=cum.dtype)                      # (L,)
    idx = jnp.sum(cum[:, None, :] <= frames[None, :, None], axis=-1)   # (B, L)
    idx = jnp.clip(idx, 0, T - 1)
    out = jnp.take_along_axis(x, idx[:, :, None], axis=1)              # (B, L, H)
    valid = frames[None, :] < out_len[:, None]
    return out * valid[:, :, None].astype(x.dtype), out_len


def get_mask_from_lengths(lengths, max_len):
    return jnp.arange(max_len)[None, :] >= lengths[:, None]            # True = padding


def variance_adaptor_forward(x, src_mask, params, cfg,
                             p_control=0.0, e_control=0.0, d_control=1.0,
                             max_mel_len=None, max_au_len=None):
    """Inference path (all targets None), phoneme-level pitch/energy, default
    control_bias_array (EmbeddingBias.layer_control is the identity there)."""
    # TODO(synk): EmbeddingBias.layer_control loads .mat bias vectors from disk;
    # with the default control_bias_array it is the identity, modeled as such.
    factor_interp = cfg["factor_interp"]

    (log_duration_prediction, pitch_prediction, energy_prediction,
     x_after_pitch, x_after_energy) = run_variance_adaptor_fused(
        x, src_mask, params,
        p_control / 3.5701,      # pitch_normalization
        e_control / 8.4094)      # energy_normalization

    predicted_duration = (jnp.exp(log_duration_prediction) - 1.0) * d_control
    predicted_duration_au = predicted_duration / factor_interp

    # ---- au-level length regulation on the ORIGINAL x ----
    duration_rounded_au = float2int(predicted_duration_au)
    if max_au_len is None:
        # TODO(synk): dynamic max_len forces a device->host sync and breaks jit;
        # prefer passing a static max_au_len.
        max_au_len = max(int(jnp.max(jnp.sum(duration_rounded_au, axis=1))), 1)
    x_au, au_len = length_regulator(x, duration_rounded_au, max_au_len)
    au_mask = get_mask_from_lengths(au_len, max_au_len)

    output_by_layer = jnp.stack([x_after_pitch, x_after_energy], axis=0)

    # ---- frame-level length regulation of x (after pitch + energy embeddings) ----
    duration_rounded = float2int(predicted_duration)
    if max_mel_len is None:
        max_mel_len = max(int(jnp.max(jnp.sum(duration_rounded, axis=1))), 1)
    x_mel, mel_len = length_regulator(x_after_energy, duration_rounded, max_mel_len)
    mel_mask = get_mask_from_lengths(mel_len, max_mel_len)

    return (x_mel, x_au, pitch_prediction, energy_prediction,
            log_duration_prediction, duration_rounded, mel_len, mel_mask,
            output_by_layer, params["pitch_emb"], params["pitch_bins"],
            au_len, au_mask)


# --------------------------------------------------------------------------
# Deterministic parameter construction (synthetic, no checkpoint load)
# --------------------------------------------------------------------------
def init_predictor_params(key, H, F, linear_bias=0.0):
    k1, k2, k3 = jax.random.split(key, 3)
    # Real Conv1d weights (out, in, k) map to this fused layout via
    # transpose(w, (2, 1, 0)).reshape(3*in, out); synthetic weights are built
    # directly in (k, in, out) order (k index 0 = t-1 tap, 1 = t, 2 = t+1).
    w1 = 0.1 * jax.random.normal(k1, (3, H, F), jnp.float32)
    w2 = 0.1 * jax.random.normal(k2, (3, F, F), jnp.float32)
    lw = 0.1 * jax.random.normal(k3, (1, F), jnp.float32)
    return {
        "w1": w1.reshape(3 * H, F).astype(jnp.bfloat16),   # bf16 MXU operand
        "b1": jnp.zeros((1, F), jnp.float32),
        "g1": jnp.ones((1, F), jnp.float32),
        "be1": jnp.zeros((1, F), jnp.float32),
        "w2": w2.reshape(3 * F, F).astype(jnp.bfloat16),
        "b2": jnp.zeros((1, F), jnp.float32),
        "g2": jnp.ones((1, F), jnp.float32),
        "be2": jnp.zeros((1, F), jnp.float32),
        "lw": lw.astype(jnp.bfloat16),
        "lb": jnp.full((1, 1), linear_bias, jnp.float32),
    }


if __name__ == "__main__":
    B, T, H = 2, 8, 32        # batch, phoneme seq len, encoder_hidden
    F = 32                    # variance_predictor filter_size (prod: 256)
    N_BINS = 64               # variance_embedding n_bins
    MAX_AU_LEN = 512          # static bounds so the whole forward jits (no host sync)
    MAX_MEL_LEN = 512

    cfg = {
        # sampling_rate / hop_length / au_sampling_rate (stats.json replaced by constants)
        "factor_interp": 22050.0 / 256.0 / 200.0,
    }

    key = jax.random.PRNGKey(0)
    kx, kd, kp, ke, kpe, kee = jax.random.split(key, 6)

    params = {
        "duration": init_predictor_params(kd, H, F, linear_bias=1.0),
        "pitch": init_predictor_params(kp, H, F),
        "energy": init_predictor_params(ke, H, F),
        "pitch_bins": jnp.linspace(-2.5, 6.0, N_BINS - 1, dtype=jnp.float32),
        "energy_bins": jnp.linspace(-1.5, 8.0, N_BINS - 1, dtype=jnp.float32),
        "pitch_emb": 0.05 * jax.random.normal(kpe, (N_BINS, H), jnp.float32),
        "energy_emb": 0.05 * jax.random.normal(kee, (N_BINS, H), jnp.float32),
    }

    x = jax.random.normal(kx, (B, T, H), jnp.float32)
    src_lens = jnp.array([8, 6], jnp.int32)
    src_mask = jnp.arange(T)[None, :] >= src_lens[:, None]   # True = padding

    fwd = jax.jit(functools.partial(variance_adaptor_forward, cfg=cfg,
                                    max_mel_len=MAX_MEL_LEN, max_au_len=MAX_AU_LEN))
    outs = fwd(x, src_mask, params)
    jax.block_until_ready(outs)
    print("KERNEL_OK")
</pallas_src>

<mosaic_0001>
module attributes {stable_mosaic.version = 11 : i64} {
  func.func @kernel(%arg0: i32, %arg1: memref<1x128x32xf32, #tpu.memory_space<vmem>>, %arg2: memref<1x1x128xf32, #tpu.memory_space<vmem>>, %arg3: memref<96x32xbf16, #tpu.memory_space<vmem>>, %arg4: memref<1x32xf32, #tpu.memory_space<vmem>>, %arg5: memref<1x32xf32, #tpu.memory_space<vmem>>, %arg6: memref<1x32xf32, #tpu.memory_space<vmem>>, %arg7: memref<96x32xbf16, #tpu.memory_space<vmem>>, %arg8: memref<1x32xf32, #tpu.memory_space<vmem>>, %arg9: memref<1x32xf32, #tpu.memory_space<vmem>>, %arg10: memref<1x32xf32, #tpu.memory_space<vmem>>, %arg11: memref<1x32xbf16, #tpu.memory_space<vmem>>, %arg12: memref<1x1xf32, #tpu.memory_space<vmem>>, %arg13: memref<96x32xbf16, #tpu.memory_space<vmem>>, %arg14: memref<1x32xf32, #tpu.memory_space<vmem>>, %arg15: memref<1x32xf32, #tpu.memory_space<vmem>>, %arg16: memref<1x32xf32, #tpu.memory_space<vmem>>, %arg17: memref<96x32xbf16, #tpu.memory_space<vmem>>, %arg18: memref<1x32xf32, #tpu.memory_space<vmem>>, %arg19: memref<1x32xf32, #tpu.memory_space<vmem>>, %arg20: memref<1x32xf32, #tpu.memory_space<vmem>>, %arg21: memref<1x32xbf16, #tpu.memory_space<vmem>>, %arg22: memref<1x1xf32, #tpu.memory_space<vmem>>, %arg23: memref<96x32xbf16, #tpu.memory_space<vmem>>, %arg24: memref<1x32xf32, #tpu.memory_space<vmem>>, %arg25: memref<1x32xf32, #tpu.memory_space<vmem>>, %arg26: memref<1x32xf32, #tpu.memory_space<vmem>>, %arg27: memref<96x32xbf16, #tpu.memory_space<vmem>>, %arg28: memref<1x32xf32, #tpu.memory_space<vmem>>, %arg29: memref<1x32xf32, #tpu.memory_space<vmem>>, %arg30: memref<1x32xf32, #tpu.memory_space<vmem>>, %arg31: memref<1x32xbf16, #tpu.memory_space<vmem>>, %arg32: memref<1x1xf32, #tpu.memory_space<vmem>>, %arg33: memref<1x1xf32, #tpu.memory_space<vmem>>, %arg34: memref<1x1xf32, #tpu.memory_space<vmem>>, %arg35: memref<1x128xf32, #tpu.memory_space<vmem>>, %arg36: memref<1x128xf32, #tpu.memory_space<vmem>>, %arg37: memref<64x32xf32, #tpu.memory_space<vmem>>, %arg38: memref<64x32xf32, #tpu.memory_space<vmem>>, %arg39: memref<1x1x128xf32, #tpu.memory_space<vmem>>, %arg40: memref<1x1x128xf32, #tpu.memory_space<vmem>>, %arg41: memref<1x1x128xf32, #tpu.memory_space<vmem>>, %arg42: memref<1x128x32xf32, #tpu.memory_space<vmem>>, %arg43: memref<1x128x32xf32, #tpu.memory_space<vmem>>) attributes {dimension_semantics = [#tpu.dimension_semantics<parallel>], iteration_bounds = array<i64: 2>, scalar_prefetch = 0 : i64, scratch_operands = 0 : i64, tpu.core_type = #tpu.core_type<tc>, window_params = [{transform_indices = @transform_0, window_bounds = array<i64: 1, 128, 32>}, {transform_indices = @transform_1, window_bounds = array<i64: 1, 1, 128>}, {pipeline_mode = #tpu.pipeline_mode<synchronous>, transform_indices = @transform_2, window_bounds = array<i64: 96, 32>}, {pipeline_mode = #tpu.pipeline_mode<synchronous>, transform_indices = @transform_3, window_bounds = array<i64: 1, 32>}, {pipeline_mode = #tpu.pipeline_mode<synchronous>, transform_indices = @transform_4, window_bounds = array<i64: 1, 32>}, {pipeline_mode = #tpu.pipeline_mode<synchronous>, transform_indices = @transform_5, window_bounds = array<i64: 1, 32>}, {pipeline_mode = #tpu.pipeline_mode<synchronous>, transform_indices = @transform_6, window_bounds = array<i64: 96, 32>}, {pipeline_mode = #tpu.pipeline_mode<synchronous>, transform_indices = @transform_7, window_bounds = array<i64: 1, 32>}, {pipeline_mode = #tpu.pipeline_mode<synchronous>, transform_indices = @transform_8, window_bounds = array<i64: 1, 32>}, {pipeline_mode = #tpu.pipeline_mode<synchronous>, transform_indices = @transform_9, window_bounds = array<i64: 1, 32>}, {pipeline_mode = #tpu.pipeline_mode<synchronous>, transform_indices = @transform_10, window_bounds = array<i64: 1, 32>}, {pipeline_mode = #tpu.pipeline_mode<synchronous>, transform_indices = @transform_11, window_bounds = array<i64: 1, 1>}, {pipeline_mode = #tpu.pipeline_mode<synchronous>, transform_indices = @transform_12, window_bounds = array<i64: 96, 32>}, {pipeline_mode = #tpu.pipeline_mode<synchronous>, transform_indices = @transform_13, window_bounds = array<i64: 1, 32>}, {pipeline_mode = #tpu.pipeline_mode<synchronous>, transform_indices = @transform_14, window_bounds = array<i64: 1, 32>}, {pipeline_mode = #tpu.pipeline_mode<synchronous>, transform_indices = @transform_15, window_bounds = array<i64: 1, 32>}, {pipeline_mode = #tpu.pipeline_mode<synchronous>, transform_indices = @transform_16, window_bounds = array<i64: 96, 32>}, {pipeline_mode = #tpu.pipeline_mode<synchronous>, transform_indices = @transform_17, window_bounds = array<i64: 1, 32>}, {pipeline_mode = #tpu.pipeline_mode<synchronous>, transform_indices = @transform_18, window_bounds = array<i64: 1, 32>}, {pipeline_mode = #tpu.pipeline_mode<synchronous>, transform_indices = @transform_19, window_bounds = array<i64: 1, 32>}, {pipeline_mode = #tpu.pipeline_mode<synchronous>, transform_indices = @transform_20, window_bounds = array<i64: 1, 32>}, {pipeline_mode = #tpu.pipeline_mode<synchronous>, transform_indices = @transform_21, window_bounds = array<i64: 1, 1>}, {pipeline_mode = #tpu.pipeline_mode<synchronous>, transform_indices = @transform_22, window_bounds = array<i64: 96, 32>}, {pipeline_mode = #tpu.pipeline_mode<synchronous>, transform_indices = @transform_23, window_bounds = array<i64: 1, 32>}, {pipeline_mode = #tpu.pipeline_mode<synchronous>, transform_indices = @transform_24, window_bounds = array<i64: 1, 32>}, {pipeline_mode = #tpu.pipeline_mode<synchronous>, transform_indices = @transform_25, window_bounds = array<i64: 1, 32>}, {pipeline_mode = #tpu.pipeline_mode<synchronous>, transform_indices = @transform_26, window_bounds = array<i64: 96, 32>}, {pipeline_mode = #tpu.pipeline_mode<synchronous>, transform_indices = @transform_27, window_bounds = array<i64: 1, 32>}, {pipeline_mode = #tpu.pipeline_mode<synchronous>, transform_indices = @transform_28, window_bounds = array<i64: 1, 32>}, {pipeline_mode = #tpu.pipeline_mode<synchronous>, transform_indices = @transform_29, window_bounds = array<i64: 1, 32>}, {pipeline_mode = #tpu.pipeline_mode<synchronous>, transform_indices = @transform_30, window_bounds = array<i64: 1, 32>}, {pipeline_mode = #tpu.pipeline_mode<synchronous>, transform_indices = @transform_31, window_bounds = array<i64: 1, 1>}, {pipeline_mode = #tpu.pipeline_mode<synchronous>, transform_indices = @transform_32, window_bounds = array<i64: 1, 1>}, {pipeline_mode = #tpu.pipeline_mode<synchronous>, transform_indices = @transform_33, window_bounds = array<i64: 1, 1>}, {pipeline_mode = #tpu.pipeline_mode<synchronous>, transform_indices = @transform_34, window_bounds = array<i64: 1, 128>}, {pipeline_mode = #tpu.pipeline_mode<synchronous>, transform_indices = @transform_35, window_bounds = array<i64: 1, 128>}, {pipeline_mode = #tpu.pipeline_mode<synchronous>, transform_indices = @transform_36, window_bounds = array<i64: 64, 32>}, {pipeline_mode = #tpu.pipeline_mode<synchronous>, transform_indices = @transform_37, window_bounds = array<i64: 64, 32>}, {transform_indices = @transform_38, window_bounds = array<i64: 1, 1, 128>}, {transform_indices = @transform_39, window_bounds = array<i64: 1, 1, 128>}, {transform_indices = @transform_40, window_bounds = array<i64: 1, 1, 128>}, {transform_indices = @transform_41, window_bounds = array<i64: 1, 128, 32>}, {transform_indices = @transform_42, window_bounds = array<i64: 1, 128, 32>}]} {
    %c0 = arith.constant 0 : index
    %c0_0 = arith.constant 0 : index
    %c0_1 = arith.constant 0 : index
    %0 = vector.load %arg1[%c0, %c0_0, %c0_1] : memref<1x128x32xf32, #tpu.memory_space<vmem>>, vector<1x128x32xf32>
    %1 = vector.shape_cast %0 : vector<1x128x32xf32> to vector<128x32xf32>
    %c0_2 = arith.constant 0 : index
    %c0_3 = arith.constant 0 : index
    %c0_4 = arith.constant 0 : index
    %2 = vector.load %arg2[%c0_2, %c0_3, %c0_4] : memref<1x1x128xf32, #tpu.memory_space<vmem>>, vector<1x1x128xf32>
    %3 = vector.shape_cast %2 : vector<1x1x128xf32> to vector<1x128xf32>
    %4 = tpu.iota {dimensions = array<i32: 0>} : vector<128x1xi32>
    %c128_i32 = arith.constant 128 : i32
    %c0_i32 = arith.constant 0 : i32
    %5 = arith.cmpi eq, %c128_i32, %c0_i32 : i32
    %c1_i32 = arith.constant 1 : i32
    %6 = arith.select %5, %c1_i32, %c128_i32 : i32
    %7 = vector.broadcast %6 : i32 to vector<128x1xi32>
    %8 = arith.remsi %4, %7 : vector<128x1xi32>
    %c0_i32_5 = arith.constant 0 : i32
    %9 = vector.broadcast %c0_i32_5 : i32 to vector<128x1xi32>
    %10 = arith.cmpi ne, %8, %9 : vector<128x1xi32>
    %c0_i32_6 = arith.constant 0 : i32
    %11 = vector.broadcast %c0_i32_6 : i32 to vector<128x1xi32>
    %12 = arith.cmpi slt, %8, %11 : vector<128x1xi32>
    %c0_i32_7 = arith.constant 0 : i32
    %13 = arith.cmpi slt, %6, %c0_i32_7 : i32
    %14 = vector.broadcast %13 : i1 to vector<128x1xi1>
    %15 = vector.broadcast %14 : vector<128x1xi1> to vector<128x1xi1>
    %16 = arith.xori %12, %15 : vector<128x1xi1>
    %17 = arith.andi %16, %10 : vector<128x1xi1>
    %18 = vector.broadcast %6 : i32 to vector<128x1xi32>
    %19 = arith.addi %8, %18 : vector<128x1xi32>
    %20 = arith.select %17, %19, %8 : vector<128x1xi1>, vector<128x1xi32>
    %c0_i32_8 = arith.constant 0 : i32
    %21 = vector.broadcast %c0_i32_8 : i32 to vector<128x1xi32>
    %22 = arith.cmpi ne, %20, %21 : vector<128x1xi32>
    %23 = arith.extui %22 : vector<128x1xi1> to vector<128x1xi32>
    %24 = arith.sitofp %23 : vector<128x1xi32> to vector<128x1xf32>
    %c127_i32 = arith.constant 127 : i32
    %25 = vector.broadcast %c127_i32 : i32 to vector<128x1xi32>
    %26 = arith.cmpi ne, %20, %25 : vector<128x1xi32>
    %27 = arith.extui %26 : vector<128x1xi1> to vector<128x1xi32>
    %28 = arith.sitofp %27 : vector<128x1xi32> to vector<128x1xf32>
    %c8_i32 = arith.constant 8 : i32
    %29 = vector.broadcast %c8_i32 : i32 to vector<128x1xi32>
    %30 = arith.cmpi slt, %20, %29 : vector<128x1xi32>
    %31 = arith.extui %30 : vector<128x1xi1> to vector<128x1xi32>
    %32 = arith.sitofp %31 : vector<128x1xi32> to vector<128x1xf32>
    %33 = vector.broadcast %32 : vector<128x1xf32> to vector<128x32xf32>
    %34 = arith.mulf %1, %33 : vector<128x32xf32>
    %c1_i32_9 = arith.constant 1 : i32
    %35 = tpu.dynamic_rotate %34 by %c1_i32_9 dim 0 : vector<128x32xf32>, i32 -> vector<128x32xf32>
    %36 = vector.broadcast %24 : vector<128x1xf32> to vector<128x32xf32>
    %37 = arith.mulf %35, %36 : vector<128x32xf32>
    %c127_i32_10 = arith.constant 127 : i32
    %38 = tpu.dynamic_rotate %34 by %c127_i32_10 dim 0 : vector<128x32xf32>, i32 -> vector<128x32xf32>
    %39 = vector.broadcast %28 : vector<128x1xf32> to vector<128x32xf32>
    %40 = arith.mulf %38, %39 : vector<128x32xf32>
    %c0_11 = arith.constant 0 : index
    %c0_12 = arith.constant 0 : index
    %41 = vector.load %arg3[%c0_11, %c0_12] : memref<96x32xbf16, #tpu.memory_space<vmem>>, vector<96x32xbf16>
    %42 = arith.truncf %37 : vector<128x32xf32> to vector<128x32xbf16>
    %43 = vector.extract_strided_slice %41 {offsets = [0, 0], sizes = [32, 32], strides = [1, 1]} : vector<96x32xbf16> to vector<32x32xbf16>
    %cst = arith.constant dense<0.000000e+00> : vector<128x32xf32>
    %44 = tpu.matmul %42, %43, %cst {dimension_numbers = #tpu.dot_dimension_numbers<[1], [0], [0], [1], [0, 0, 1, 1], [], []>} : vector<128x32xbf16>, vector<32x32xbf16>, vector<128x32xf32> -> vector<128x32xf32>
    %45 = arith.truncf %34 : vector<128x32xf32> to vector<128x32xbf16>
    %46 = vector.extract_strided_slice %41 {offsets = [32, 0], sizes = [32, 32], strides = [1, 1]} : vector<96x32xbf16> to vector<32x32xbf16>
    %cst_13 = arith.constant dense<0.000000e+00> : vector<128x32xf32>
    %47 = tpu.matmul %45, %46, %cst_13 {dimension_numbers = #tpu.dot_dimension_numbers<[1], [0], [0], [1], [0, 0, 1, 1], [], []>} : vector<128x32xbf16>, vector<32x32xbf16>, vector<128x32xf32> -> vector<128x32xf32>
    %48 = arith.addf %44, %47 : vector<128x32xf32>
    %49 = arith.truncf %40 : vector<128x32xf32> to vector<128x32xbf16>
    %50 = vector.extract_strided_slice %41 {offsets = [64, 0], sizes = [32, 32], strides = [1, 1]} : vector<96x32xbf16> to vector<32x32xbf16>
    %cst_14 = arith.constant dense<0.000000e+00> : vector<128x32xf32>
    %51 = tpu.matmul %49, %50, %cst_14 {dimension_numbers = #tpu.dot_dimension_numbers<[1], [0], [0], [1], [0, 0, 1, 1], [], []>} : vector<128x32xbf16>, vector<32x32xbf16>, vector<128x32xf32> -> vector<128x32xf32>
    %52 = arith.addf %48, %51 : vector<128x32xf32>
    %c0_15 = arith.constant 0 : index
    %c0_16 = arith.constant 0 : index
    %53 = vector.load %arg4[%c0_15, %c0_16] : memref<1x32xf32, #tpu.memory_space<vmem>>, vector<1x32xf32>
    %54 = vector.broadcast %53 : vector<1x32xf32> to vector<128x32xf32>
    %55 = arith.addf %52, %54 : vector<128x32xf32>
    %cst_17 = arith.constant 0.000000e+00 : f32
    %56 = vector.broadcast %cst_17 : f32 to vector<128x32xf32>
    %57 = arith.maximumf %55, %56 : vector<128x32xf32>
    %cst_18 = arith.constant dense<0.000000e+00> : vector<128xf32>
    %58 = vector.multi_reduction <add>, %57, %cst_18 [1] : vector<128x32xf32> to vector<128xf32>
    %59 = vector.shape_cast %58 : vector<128xf32> to vector<128x1xf32>
    %cst_19 = arith.constant 3.200000e+01 : f32
    %60 = vector.broadcast %cst_19 : f32 to vector<128x1xf32>
    %61 = arith.divf %59, %60 : vector<128x1xf32>
    %62 = arith.mulf %57, %57 : vector<128x32xf32>
    %cst_20 = arith.constant dense<0.000000e+00> : vector<128xf32>
    %63 = vector.multi_reduction <add>, %62, %cst_20 [1] : vector<128x32xf32> to vector<128xf32>
    %64 = vector.shape_cast %63 : vector<128xf32> to vector<128x1xf32>
    %cst_21 = arith.constant 3.200000e+01 : f32
    %65 = vector.broadcast %cst_21 : f32 to vector<128x1xf32>
    %66 = arith.divf %64, %65 : vector<128x1xf32>
    %67 = arith.mulf %61, %61 : vector<128x1xf32>
    %68 = arith.subf %66, %67 : vector<128x1xf32>
    %cst_22 = arith.constant 0.000000e+00 : f32
    %69 = vector.broadcast %cst_22 : f32 to vector<128x1xf32>
    %70 = arith.maximumf %68, %69 : vector<128x1xf32>
    %cst_23 = arith.constant 9.99999974E-6 : f32
    %71 = vector.broadcast %cst_23 : f32 to vector<128x1xf32>
    %72 = arith.addf %70, %71 : vector<128x1xf32>
    %73 = math.rsqrt %72 : vector<128x1xf32>
    %74 = vector.broadcast %61 : vector<128x1xf32> to vector<128x32xf32>
    %75 = arith.subf %57, %74 : vector<128x32xf32>
    %c0_24 = arith.constant 0 : index
    %c0_25 = arith.constant 0 : index
    %76 = vector.load %arg5[%c0_24, %c0_25] : memref<1x32xf32, #tpu.memory_space<vmem>>, vector<1x32xf32>
    %77 = vector.broadcast %73 : vector<128x1xf32> to vector<128x32xf32>
    %78 = vector.broadcast %76 : vector<1x32xf32> to vector<128x32xf32>
    %79 = arith.mulf %77, %78 : vector<128x32xf32>
    %80 = arith.mulf %75, %79 : vector<128x32xf32>
    %c0_26 = arith.constant 0 : index
    %c0_27 = arith.constant 0 : index
    %81 = vector.load %arg6[%c0_26, %c0_27] : memref<1x32xf32, #tpu.memory_space<vmem>>, vector<1x32xf32>
    %82 = vector.broadcast %81 : vector<1x32xf32> to vector<128x32xf32>
    %83 = arith.addf %80, %82 : vector<128x32xf32>
    %84 = vector.broadcast %32 : vector<128x1xf32> to vector<128x32xf32>
    %85 = arith.mulf %83, %84 : vector<128x32xf32>
    %c1_i32_28 = arith.constant 1 : i32
    %86 = tpu.dynamic_rotate %85 by %c1_i32_28 dim 0 : vector<128x32xf32>, i32 -> vector<128x32xf32>
    %87 = vector.broadcast %24 : vector<128x1xf32> to vector<128x32xf32>
    %88 = arith.mulf %86, %87 : vector<128x32xf32>
    %c127_i32_29 = arith.constant 127 : i32
    %89 = tpu.dynamic_rotate %85 by %c127_i32_29 dim 0 : vector<128x32xf32>, i32 -> vector<128x32xf32>
    %90 = vector.broadcast %28 : vector<128x1xf32> to vector<128x32xf32>
    %91 = arith.mulf %89, %90 : vector<128x32xf32>
    %c0_30 = arith.constant 0 : index
    %c0_31 = arith.constant 0 : index
    %92 = vector.load %arg7[%c0_30, %c0_31] : memref<96x32xbf16, #tpu.memory_space<vmem>>, vector<96x32xbf16>
    %93 = arith.truncf %88 : vector<128x32xf32> to vector<128x32xbf16>
    %94 = vector.extract_strided_slice %92 {offsets = [0, 0], sizes = [32, 32], strides = [1, 1]} : vector<96x32xbf16> to vector<32x32xbf16>
    %cst_32 = arith.constant dense<0.000000e+00> : vector<128x32xf32>
    %95 = tpu.matmul %93, %94, %cst_32 {dimension_numbers = #tpu.dot_dimension_numbers<[1], [0], [0], [1], [0, 0, 1, 1], [], []>} : vector<128x32xbf16>, vector<32x32xbf16>, vector<128x32xf32> -> vector<128x32xf32>
    %96 = arith.truncf %85 : vector<128x32xf32> to vector<128x32xbf16>
    %97 = vector.extract_strided_slice %92 {offsets = [32, 0], sizes = [32, 32], strides = [1, 1]} : vector<96x32xbf16> to vector<32x32xbf16>
    %cst_33 = arith.constant dense<0.000000e+00> : vector<128x32xf32>
    %98 = tpu.matmul %96, %97, %cst_33 {dimension_numbers = #tpu.dot_dimension_numbers<[1], [0], [0], [1], [0, 0, 1, 1], [], []>} : vector<128x32xbf16>, vector<32x32xbf16>, vector<128x32xf32> -> vector<128x32xf32>
    %99 = arith.addf %95, %98 : vector<128x32xf32>
    %100 = arith.truncf %91 : vector<128x32xf32> to vector<128x32xbf16>
    %101 = vector.extract_strided_slice %92 {offsets = [64, 0], sizes = [32, 32], strides = [1, 1]} : vector<96x32xbf16> to vector<32x32xbf16>
    %cst_34 = arith.constant dense<0.000000e+00> : vector<128x32xf32>
    %102 = tpu.matmul %100, %101, %cst_34 {dimension_numbers = #tpu.dot_dimension_numbers<[1], [0], [0], [1], [0, 0, 1, 1], [], []>} : vector<128x32xbf16>, vector<32x32xbf16>, vector<128x32xf32> -> vector<128x32xf32>
    %103 = arith.addf %99, %102 : vector<128x32xf32>
    %c0_35 = arith.constant 0 : index
    %c0_36 = arith.constant 0 : index
    %104 = vector.load %arg8[%c0_35, %c0_36] : memref<1x32xf32, #tpu.memory_space<vmem>>, vector<1x32xf32>
    %105 = vector.broadcast %104 : vector<1x32xf32> to vector<128x32xf32>
    %106 = arith.addf %103, %105 : vector<128x32xf32>
    %cst_37 = arith.constant 0.000000e+00 : f32
    %107 = vector.broadcast %cst_37 : f32 to vector<128x32xf32>
    %108 = arith.maximumf %106, %107 : vector<128x32xf32>
    %cst_38 = arith.constant dense<0.000000e+00> : vector<128xf32>
    %109 = vector.multi_reduction <add>, %108, %cst_38 [1] : vector<128x32xf32> to vector<128xf32>
    %110 = vector.shape_cast %109 : vector<128xf32> to vector<128x1xf32>
    %cst_39 = arith.constant 3.200000e+01 : f32
    %111 = vector.broadcast %cst_39 : f32 to vector<128x1xf32>
    %112 = arith.divf %110, %111 : vector<128x1xf32>
    %113 = arith.mulf %108, %108 : vector<128x32xf32>
    %cst_40 = arith.constant dense<0.000000e+00> : vector<128xf32>
    %114 = vector.multi_reduction <add>, %113, %cst_40 [1] : vector<128x32xf32> to vector<128xf32>
    %115 = vector.shape_cast %114 : vector<128xf32> to vector<128x1xf32>
    %cst_41 = arith.constant 3.200000e+01 : f32
    %116 = vector.broadcast %cst_41 : f32 to vector<128x1xf32>
    %117 = arith.divf %115, %116 : vector<128x1xf32>
    %118 = arith.mulf %112, %112 : vector<128x1xf32>
    %119 = arith.subf %117, %118 : vector<128x1xf32>
    %cst_42 = arith.constant 0.000000e+00 : f32
    %120 = vector.broadcast %cst_42 : f32 to vector<128x1xf32>
    %121 = arith.maximumf %119, %120 : vector<128x1xf32>
    %cst_43 = arith.constant 9.99999974E-6 : f32
    %122 = vector.broadcast %cst_43 : f32 to vector<128x1xf32>
    %123 = arith.addf %121, %122 : vector<128x1xf32>
    %124 = math.rsqrt %123 : vector<128x1xf32>
    %125 = vector.broadcast %112 : vector<128x1xf32> to vector<128x32xf32>
    %126 = arith.subf %108, %125 : vector<128x32xf32>
    %c0_44 = arith.constant 0 : index
    %c0_45 = arith.constant 0 : index
    %127 = vector.load %arg9[%c0_44, %c0_45] : memref<1x32xf32, #tpu.memory_space<vmem>>, vector<1x32xf32>
    %128 = vector.broadcast %124 : vector<128x1xf32> to vector<128x32xf32>
    %129 = vector.broadcast %127 : vector<1x32xf32> to vector<128x32xf32>
    %130 = arith.mulf %128, %129 : vector<128x32xf32>
    %131 = arith.mulf %126, %130 : vector<128x32xf32>
    %c0_46 = arith.constant 0 : index
    %c0_47 = arith.constant 0 : index
    %132 = vector.load %arg10[%c0_46, %c0_47] : memref<1x32xf32, #tpu.memory_space<vmem>>, vector<1x32xf32>
    %133 = vector.broadcast %132 : vector<1x32xf32> to vector<128x32xf32>
    %134 = arith.addf %131, %133 : vector<128x32xf32>
    %c0_48 = arith.constant 0 : index
    %c0_49 = arith.constant 0 : index
    %135 = vector.load %arg11[%c0_48, %c0_49] : memref<1x32xbf16, #tpu.memory_space<vmem>>, vector<1x32xbf16>
    %136 = arith.truncf %134 : vector<128x32xf32> to vector<128x32xbf16>
    %cst_50 = arith.constant dense<0.000000e+00> : vector<1x128xf32>
    %137 = tpu.matmul %135, %136, %cst_50 {dimension_numbers = #tpu.dot_dimension_numbers<[1], [1], [0], [0], [0, 0, 1, 0], [], []>} : vector<1x32xbf16>, vector<128x32xbf16>, vector<1x128xf32> -> vector<1x128xf32>
    %c0_51 = arith.constant 0 : index
    %c0_52 = arith.constant 0 : index
    %138 = vector.load %arg12[%c0_51, %c0_52] : memref<1x1xf32, #tpu.memory_space<vmem>>, vector<1x1xf32>
    %139 = vector.broadcast %138 : vector<1x1xf32> to vector<1x128xf32>
    %140 = arith.addf %137, %139 : vector<1x128xf32>
    %cst_53 = arith.constant 5.000000e-01 : f32
    %141 = vector.broadcast %cst_53 : f32 to vector<1x128xf32>
    %142 = arith.cmpf ogt, %3, %141 : vector<1x128xf32>
    %cst_54 = arith.constant 0.000000e+00 : f32
    %143 = vector.broadcast %cst_54 : f32 to vector<1x128xf32>
    %144 = arith.select %142, %143, %140 : vector<1x128xi1>, vector<1x128xf32>
    %c0_55 = arith.constant 0 : index
    %c0_56 = arith.constant 0 : index
    %c0_57 = arith.constant 0 : index
    %145 = vector.load %arg39[%c0_55, %c0_56, %c0_57] : memref<1x1x128xf32, #tpu.memory_space<vmem>>, vector<1x1x128xf32>
    %146 = vector.shape_cast %145 : vector<1x1x128xf32> to vector<1x128xf32>
    %147 = vector.shape_cast %144 : vector<1x128xf32> to vector<1x1x128xf32>
    tpu.vector_store %arg39[%c0_55, %c0_56, %c0_57], %147 {strides = array<i32>} : memref<1x1x128xf32, #tpu.memory_space<vmem>>, vector<1x1x128xf32>,
    %148 = vector.broadcast %32 : vector<128x1xf32> to vector<128x32xf32>
    %149 = arith.mulf %1, %148 : vector<128x32xf32>
    %c1_i32_58 = arith.constant 1 : i32
    %150 = tpu.dynamic_rotate %149 by %c1_i32_58 dim 0 : vector<128x32xf32>, i32 -> vector<128x32xf32>
    %151 = vector.broadcast %24 : vector<128x1xf32> to vector<128x32xf32>
    %152 = arith.mulf %150, %151 : vector<128x32xf32>
    %c127_i32_59 = arith.constant 127 : i32
    %153 = tpu.dynamic_rotate %149 by %c127_i32_59 dim 0 : vector<128x32xf32>, i32 -> vector<128x32xf32>
    %154 = vector.broadcast %28 : vector<128x1xf32> to vector<128x32xf32>
    %155 = arith.mulf %153, %154 : vector<128x32xf32>
    %c0_60 = arith.constant 0 : index
    %c0_61 = arith.constant 0 : index
    %156 = vector.load %arg13[%c0_60, %c0_61] : memref<96x32xbf16, #tpu.memory_space<vmem>>, vector<96x32xbf16>
    %157 = arith.truncf %152 : vector<128x32xf32> to vector<128x32xbf16>
    %158 = vector.extract_strided_slice %156 {offsets = [0, 0], sizes = [32, 32], strides = [1, 1]} : vector<96x32xbf16> to vector<32x32xbf16>
    %cst_62 = arith.constant dense<0.000000e+00> : vector<128x32xf32>
    %159 = tpu.matmul %157, %158, %cst_62 {dimension_numbers = #tpu.dot_dimension_numbers<[1], [0], [0], [1], [0, 0, 1, 1], [], []>} : vector<128x32xbf16>, vector<32x32xbf16>, vector<128x32xf32> -> vector<128x32xf32>
    %160 = arith.truncf %149 : vector<128x32xf32> to vector<128x32xbf16>
    %161 = vector.extract_strided_slice %156 {offsets = [32, 0], sizes = [32, 32], strides = [1, 1]} : vector<96x32xbf16> to vector<32x32xbf16>
    %cst_63 = arith.constant dense<0.000000e+00> : vector<128x32xf32>
    %162 = tpu.matmul %160, %161, %cst_63 {dimension_numbers = #tpu.dot_dimension_numbers<[1], [0], [0], [1], [0, 0, 1, 1], [], []>} : vector<128x32xbf16>, vector<32x32xbf16>, vector<128x32xf32> -> vector<128x32xf32>
    %163 = arith.addf %159, %162 : vector<128x32xf32>
    %164 = arith.truncf %155 : vector<128x32xf32> to vector<128x32xbf16>
    %165 = vector.extract_strided_slice %156 {offsets = [64, 0], sizes = [32, 32], strides = [1, 1]} : vector<96x32xbf16> to vector<32x32xbf16>
    %cst_64 = arith.constant dense<0.000000e+00> : vector<128x32xf32>
    %166 = tpu.matmul %164, %165, %cst_64 {dimension_numbers = #tpu.dot_dimension_numbers<[1], [0], [0], [1], [0, 0, 1, 1], [], []>} : vector<128x32xbf16>, vector<32x32xbf16>, vector<128x32xf32> -> vector<128x32xf32>
    %167 = arith.addf %163, %166 : vector<128x32xf32>
    %c0_65 = arith.constant 0 : index
    %c0_66 = arith.constant 0 : index
    %168 = vector.load %arg14[%c0_65, %c0_66] : memref<1x32xf32, #tpu.memory_space<vmem>>, vector<1x32xf32>
    %169 = vector.broadcast %168 : vector<1x32xf32> to vector<128x32xf32>
    %170 = arith.addf %167, %169 : vector<128x32xf32>
    %cst_67 = arith.constant 0.000000e+00 : f32
    %171 = vector.broadcast %cst_67 : f32 to vector<128x32xf32>
    %172 = arith.maximumf %170, %171 : vector<128x32xf32>
    %cst_68 = arith.constant dense<0.000000e+00> : vector<128xf32>
    %173 = vector.multi_reduction <add>, %172, %cst_68 [1] : vector<128x32xf32> to vector<128xf32>
    %174 = vector.shape_cast %173 : vector<128xf32> to vector<128x1xf32>
    %cst_69 = arith.constant 3.200000e+01 : f32
    %175 = vector.broadcast %cst_69 : f32 to vector<128x1xf32>
    %176 = arith.divf %174, %175 : vector<128x1xf32>
    %177 = arith.mulf %172, %172 : vector<128x32xf32>
    %cst_70 = arith.constant dense<0.000000e+00> : vector<128xf32>
    %178 = vector.multi_reduction <add>, %177, %cst_70 [1] : vector<128x32xf32> to vector<128xf32>
    %179 = vector.shape_cast %178 : vector<128xf32> to vector<128x1xf32>
    %cst_71 = arith.constant 3.200000e+01 : f32
    %180 = vector.broadcast %cst_71 : f32 to vector<128x1xf32>
    %181 = arith.divf %179, %180 : vector<128x1xf32>
    %182 = arith.mulf %176, %176 : vector<128x1xf32>
    %183 = arith.subf %181, %182 : vector<128x1xf32>
    %cst_72 = arith.constant 0.000000e+00 : f32
    %184 = vector.broadcast %cst_72 : f32 to vector<128x1xf32>
    %185 = arith.maximumf %183, %184 : vector<128x1xf32>
    %cst_73 = arith.constant 9.99999974E-6 : f32
    %186 = vector.broadcast %cst_73 : f32 to vector<128x1xf32>
    %187 = arith.addf %185, %186 : vector<128x1xf32>
    %188 = math.rsqrt %187 : vector<128x1xf32>
    %189 = vector.broadcast %176 : vector<128x1xf32> to vector<128x32xf32>
    %190 = arith.subf %172, %189 : vector<128x32xf32>
    %c0_74 = arith.constant 0 : index
    %c0_75 = arith.constant 0 : index
    %191 = vector.load %arg15[%c0_74, %c0_75] : memref<1x32xf32, #tpu.memory_space<vmem>>, vector<1x32xf32>
    %192 = vector.broadcast %188 : vector<128x1xf32> to vector<128x32xf32>
    %193 = vector.broadcast %191 : vector<1x32xf32> to vector<128x32xf32>
    %194 = arith.mulf %192, %193 : vector<128x32xf32>
    %195 = arith.mulf %190, %194 : vector<128x32xf32>
    %c0_76 = arith.constant 0 : index
    %c0_77 = arith.constant 0 : index
    %196 = vector.load %arg16[%c0_76, %c0_77] : memref<1x32xf32, #tpu.memory_space<vmem>>, vector<1x32xf32>
    %197 = vector.broadcast %196 : vector<1x32xf32> to vector<128x32xf32>
    %198 = arith.addf %195, %197 : vector<128x32xf32>
    %199 = vector.broadcast %32 : vector<128x1xf32> to vector<128x32xf32>
    %200 = arith.mulf %198, %199 : vector<128x32xf32>
    %c1_i32_78 = arith.constant 1 : i32
    %201 = tpu.dynamic_rotate %200 by %c1_i32_78 dim 0 : vector<128x32xf32>, i32 -> vector<128x32xf32>
    %202 = vector.broadcast %24 : vector<128x1xf32> to vector<128x32xf32>
    %203 = arith.mulf %201, %202 : vector<128x32xf32>
    %c127_i32_79 = arith.constant 127 : i32
    %204 = tpu.dynamic_rotate %200 by %c127_i32_79 dim 0 : vector<128x32xf32>, i32 -> vector<128x32xf32>
    %205 = vector.broadcast %28 : vector<128x1xf32> to vector<128x32xf32>
    %206 = arith.mulf %204, %205 : vector<128x32xf32>
    %c0_80 = arith.constant 0 : index
    %c0_81 = arith.constant 0 : index
    %207 = vector.load %arg17[%c0_80, %c0_81] : memref<96x32xbf16, #tpu.memory_space<vmem>>, vector<96x32xbf16>
    %208 = arith.truncf %203 : vector<128x32xf32> to vector<128x32xbf16>
    %209 = vector.extract_strided_slice %207 {offsets = [0, 0], sizes = [32, 32], strides = [1, 1]} : vector<96x32xbf16> to vector<32x32xbf16>
    %cst_82 = arith.constant dense<0.000000e+00> : vector<128x32xf32>
    %210 = tpu.matmul %208, %209, %cst_82 {dimension_numbers = #tpu.dot_dimension_numbers<[1], [0], [0], [1], [0, 0, 1, 1], [], []>} : vector<128x32xbf16>, vector<32x32xbf16>, vector<128x32xf32> -> vector<128x32xf32>
    %211 = arith.truncf %200 : vector<128x32xf32> to vector<128x32xbf16>
    %212 = vector.extract_strided_slice %207 {offsets = [32, 0], sizes = [32, 32], strides = [1, 1]} : vector<96x32xbf16> to vector<32x32xbf16>
    %cst_83 = arith.constant dense<0.000000e+00> : vector<128x32xf32>
    %213 = tpu.matmul %211, %212, %cst_83 {dimension_numbers = #tpu.dot_dimension_numbers<[1], [0], [0], [1], [0, 0, 1, 1], [], []>} : vector<128x32xbf16>, vector<32x32xbf16>, vector<128x32xf32> -> vector<128x32xf32>
    %214 = arith.addf %210, %213 : vector<128x32xf32>
    %215 = arith.truncf %206 : vector<128x32xf32> to vector<128x32xbf16>
    %216 = vector.extract_strided_slice %207 {offsets = [64, 0], sizes = [32, 32], strides = [1, 1]} : vector<96x32xbf16> to vector<32x32xbf16>
    %cst_84 = arith.constant dense<0.000000e+00> : vector<128x32xf32>
    %217 = tpu.matmul %215, %216, %cst_84 {dimension_numbers = #tpu.dot_dimension_numbers<[1], [0], [0], [1], [0, 0, 1, 1], [], []>} : vector<128x32xbf16>, vector<32x32xbf16>, vector<128x32xf32> -> vector<128x32xf32>
    %218 = arith.addf %214, %217 : vector<128x32xf32>
    %c0_85 = arith.constant 0 : index
    %c0_86 = arith.constant 0 : index
    %219 = vector.load %arg18[%c0_85, %c0_86] : memref<1x32xf32, #tpu.memory_space<vmem>>, vector<1x32xf32>
    %220 = vector.broadcast %219 : vector<1x32xf32> to vector<128x32xf32>
    %221 = arith.addf %218, %220 : vector<128x32xf32>
    %cst_87 = arith.constant 0.000000e+00 : f32
    %222 = vector.broadcast %cst_87 : f32 to vector<128x32xf32>
    %223 = arith.maximumf %221, %222 : vector<128x32xf32>
    %cst_88 = arith.constant dense<0.000000e+00> : vector<128xf32>
    %224 = vector.multi_reduction <add>, %223, %cst_88 [1] : vector<128x32xf32> to vector<128xf32>
    %225 = vector.shape_cast %224 : vector<128xf32> to vector<128x1xf32>
    %cst_89 = arith.constant 3.200000e+01 : f32
    %226 = vector.broadcast %cst_89 : f32 to vector<128x1xf32>
    %227 = arith.divf %225, %226 : vector<128x1xf32>
    %228 = arith.mulf %223, %223 : vector<128x32xf32>
    %cst_90 = arith.constant dense<0.000000e+00> : vector<128xf32>
    %229 = vector.multi_reduction <add>, %228, %cst_90 [1] : vector<128x32xf32> to vector<128xf32>
    %230 = vector.shape_cast %229 : vector<128xf32> to vector<128x1xf32>
    %cst_91 = arith.constant 3.200000e+01 : f32
    %231 = vector.broadcast %cst_91 : f32 to vector<128x1xf32>
    %232 = arith.divf %230, %231 : vector<128x1xf32>
    %233 = arith.mulf %227, %227 : vector<128x1xf32>
    %234 = arith.subf %232, %233 : vector<128x1xf32>
    %cst_92 = arith.constant 0.000000e+00 : f32
    %235 = vector.broadcast %cst_92 : f32 to vector<128x1xf32>
    %236 = arith.maximumf %234, %235 : vector<128x1xf32>
    %cst_93 = arith.constant 9.99999974E-6 : f32
    %237 = vector.broadcast %cst_93 : f32 to vector<128x1xf32>
    %238 = arith.addf %236, %237 : vector<128x1xf32>
    %239 = math.rsqrt %238 : vector<128x1xf32>
    %240 = vector.broadcast %227 : vector<128x1xf32> to vector<128x32xf32>
    %241 = arith.subf %223, %240 : vector<128x32xf32>
    %c0_94 = arith.constant 0 : index
    %c0_95 = arith.constant 0 : index
    %242 = vector.load %arg19[%c0_94, %c0_95] : memref<1x32xf32, #tpu.memory_space<vmem>>, vector<1x32xf32>
    %243 = vector.broadcast %239 : vector<128x1xf32> to vector<128x32xf32>
    %244 = vector.broadcast %242 : vector<1x32xf32> to vector<128x32xf32>
    %245 = arith.mulf %243, %244 : vector<128x32xf32>
    %246 = arith.mulf %241, %245 : vector<128x32xf32>
    %c0_96 = arith.constant 0 : index
    %c0_97 = arith.constant 0 : index
    %247 = vector.load %arg20[%c0_96, %c0_97] : memref<1x32xf32, #tpu.memory_space<vmem>>, vector<1x32xf32>
    %248 = vector.broadcast %247 : vector<1x32xf32> to vector<128x32xf32>
    %249 = arith.addf %246, %248 : vector<128x32xf32>
    %c0_98 = arith.constant 0 : index
    %c0_99 = arith.constant 0 : index
    %250 = vector.load %arg21[%c0_98, %c0_99] : memref<1x32xbf16, #tpu.memory_space<vmem>>, vector<1x32xbf16>
    %251 = arith.truncf %249 : vector<128x32xf32> to vector<128x32xbf16>
    %cst_100 = arith.constant dense<0.000000e+00> : vector<1x128xf32>
    %252 = tpu.matmul %250, %251, %cst_100 {dimension_numbers = #tpu.dot_dimension_numbers<[1], [1], [0], [0], [0, 0, 1, 0], [], []>} : vector<1x32xbf16>, vector<128x32xbf16>, vector<1x128xf32> -> vector<1x128xf32>
    %c0_101 = arith.constant 0 : index
    %c0_102 = arith.constant 0 : index
    %253 = vector.load %arg22[%c0_101, %c0_102] : memref<1x1xf32, #tpu.memory_space<vmem>>, vector<1x1xf32>
    %254 = vector.broadcast %253 : vector<1x1xf32> to vector<1x128xf32>
    %255 = arith.addf %252, %254 : vector<1x128xf32>
    %cst_103 = arith.constant 5.000000e-01 : f32
    %256 = vector.broadcast %cst_103 : f32 to vector<1x128xf32>
    %257 = arith.cmpf ogt, %3, %256 : vector<1x128xf32>
    %cst_104 = arith.constant 0.000000e+00 : f32
    %258 = vector.broadcast %cst_104 : f32 to vector<1x128xf32>
    %259 = arith.select %257, %258, %255 : vector<1x128xi1>, vector<1x128xf32>
    %c0_105 = arith.constant 0 : index
    %c0_106 = arith.constant 0 : index
    %260 = vector.load %arg33[%c0_105, %c0_106] : memref<1x1xf32, #tpu.memory_space<vmem>>, vector<1x1xf32>
    %261 = vector.broadcast %260 : vector<1x1xf32> to vector<1x128xf32>
    %262 = arith.addf %259, %261 : vector<1x128xf32>
    %263 = tpu.transpose %262, [1, 0] : vector<1x128xf32> -> vector<128x1xf32>
    %c0_107 = arith.constant 0 : index
    %c0_108 = arith.constant 0 : index
    %264 = vector.load %arg35[%c0_107, %c0_108] : memref<1x128xf32, #tpu.memory_space<vmem>>, vector<1x128xf32>
    %265 = vector.broadcast %263 : vector<128x1xf32> to vector<128x128xf32>
    %266 = vector.broadcast %264 : vector<1x128xf32> to vector<128x128xf32>
    %267 = arith.cmpf ogt, %265, %266 : vector<128x128xf32>
    %268 = arith.extui %267 : vector<128x128xi1> to vector<128x128xi32>
    %cst_109 = arith.constant dense<0> : vector<128xi32>
    %269 = vector.multi_reduction <add>, %268, %cst_109 [1] : vector<128x128xi32> to vector<128xi32>
    %270 = vector.shape_cast %269 : vector<128xi32> to vector<128x1xi32>
    %271 = tpu.iota {dimensions = array<i32: 1>} : vector<128x64xi32>
    %272 = vector.broadcast %270 : vector<128x1xi32> to vector<128x64xi32>
    %273 = arith.cmpi eq, %271, %272 : vector<128x64xi32>
    %274 = arith.extui %273 : vector<128x64xi1> to vector<128x64xi32>
    %275 = arith.sitofp %274 : vector<128x64xi32> to vector<128x64xf32>
    %c0_110 = arith.constant 0 : index
    %c0_111 = arith.constant 0 : index
    %276 = vector.load %arg37[%c0_110, %c0_111] : memref<64x32xf32, #tpu.memory_space<vmem>>, vector<64x32xf32>
    %cst_112 = arith.constant dense<0.000000e+00> : vector<128x32xf32>
    %277 = tpu.matmul %275, %276, %cst_112 {dimension_numbers = #tpu.dot_dimension_numbers<[1], [0], [0], [1], [0, 0, 1, 1], [], []>} : vector<128x64xf32>, vector<64x32xf32>, vector<128x32xf32> -> vector<128x32xf32>
    %278 = vector.broadcast %32 : vector<128x1xf32> to vector<128x32xf32>
    %279 = arith.mulf %277, %278 : vector<128x32xf32>
    %280 = arith.addf %1, %279 : vector<128x32xf32>
    %c0_113 = arith.constant 0 : index
    %c0_114 = arith.constant 0 : index
    %c0_115 = arith.constant 0 : index
    %281 = vector.load %arg40[%c0_113, %c0_114, %c0_115] : memref<1x1x128xf32, #tpu.memory_space<vmem>>, vector<1x1x128xf32>
    %282 = vector.shape_cast %281 : vector<1x1x128xf32> to vector<1x128xf32>
    %283 = vector.shape_cast %262 : vector<1x128xf32> to vector<1x1x128xf32>
    tpu.vector_store %arg40[%c0_113, %c0_114, %c0_115], %283 {strides = array<i32>} : memref<1x1x128xf32, #tpu.memory_space<vmem>>, vector<1x1x128xf32>,
    %c0_116 = arith.constant 0 : index
    %c0_117 = arith.constant 0 : index
    %c0_118 = arith.constant 0 : index
    %284 = vector.load %arg42[%c0_116, %c0_117, %c0_118] : memref<1x128x32xf32, #tpu.memory_space<vmem>>, vector<1x128x32xf32>
    %285 = vector.shape_cast %284 : vector<1x128x32xf32> to vector<128x32xf32>
    %286 = vector.shape_cast %280 : vector<128x32xf32> to vector<1x128x32xf32>
    tpu.vector_store %arg42[%c0_116, %c0_117, %c0_118], %286 {strides = array<i32>} : memref<1x128x32xf32, #tpu.memory_space<vmem>>, vector<1x128x32xf32>,
    %287 = vector.broadcast %32 : vector<128x1xf32> to vector<128x32xf32>
    %288 = arith.mulf %280, %287 : vector<128x32xf32>
    %c1_i32_119 = arith.constant 1 : i32
    %289 = tpu.dynamic_rotate %288 by %c1_i32_119 dim 0 : vector<128x32xf32>, i32 -> vector<128x32xf32>
    %290 = vector.broadcast %24 : vector<128x1xf32> to vector<128x32xf32>
    %291 = arith.mulf %289, %290 : vector<128x32xf32>
    %c127_i32_120 = arith.constant 127 : i32
    %292 = tpu.dynamic_rotate %288 by %c127_i32_120 dim 0 : vector<128x32xf32>, i32 -> vector<128x32xf32>
    %293 = vector.broadcast %28 : vector<128x1xf32> to vector<128x32xf32>
    %294 = arith.mulf %292, %293 : vector<128x32xf32>
    %c0_121 = arith.constant 0 : index
    %c0_122 = arith.constant 0 : index
    %295 = vector.load %arg23[%c0_121, %c0_122] : memref<96x32xbf16, #tpu.memory_space<vmem>>, vector<96x32xbf16>
    %296 = arith.truncf %291 : vector<128x32xf32> to vector<128x32xbf16>
    %297 = vector.extract_strided_slice %295 {offsets = [0, 0], sizes = [32, 32], strides = [1, 1]} : vector<96x32xbf16> to vector<32x32xbf16>
    %cst_123 = arith.constant dense<0.000000e+00> : vector<128x32xf32>
    %298 = tpu.matmul %296, %297, %cst_123 {dimension_numbers = #tpu.dot_dimension_numbers<[1], [0], [0], [1], [0, 0, 1, 1], [], []>} : vector<128x32xbf16>, vector<32x32xbf16>, vector<128x32xf32> -> vector<128x32xf32>
    %299 = arith.truncf %288 : vector<128x32xf32> to vector<128x32xbf16>
    %300 = vector.extract_strided_slice %295 {offsets = [32, 0], sizes = [32, 32], strides = [1, 1]} : vector<96x32xbf16> to vector<32x32xbf16>
    %cst_124 = arith.constant dense<0.000000e+00> : vector<128x32xf32>
    %301 = tpu.matmul %299, %300, %cst_124 {dimension_numbers = #tpu.dot_dimension_numbers<[1], [0], [0], [1], [0, 0, 1, 1], [], []>} : vector<128x32xbf16>, vector<32x32xbf16>, vector<128x32xf32> -> vector<128x32xf32>
    %302 = arith.addf %298, %301 : vector<128x32xf32>
    %303 = arith.truncf %294 : vector<128x32xf32> to vector<128x32xbf16>
    %304 = vector.extract_strided_slice %295 {offsets = [64, 0], sizes = [32, 32], strides = [1, 1]} : vector<96x32xbf16> to vector<32x32xbf16>
    %cst_125 = arith.constant dense<0.000000e+00> : vector<128x32xf32>
    %305 = tpu.matmul %303, %304, %cst_125 {dimension_numbers = #tpu.dot_dimension_numbers<[1], [0], [0], [1], [0, 0, 1, 1], [], []>} : vector<128x32xbf16>, vector<32x32xbf16>, vector<128x32xf32> -> vector<128x32xf32>
    %306 = arith.addf %302, %305 : vector<128x32xf32>
    %c0_126 = arith.constant 0 : index
    %c0_127 = arith.constant 0 : index
    %307 = vector.load %arg24[%c0_126, %c0_127] : memref<1x32xf32, #tpu.memory_space<vmem>>, vector<1x32xf32>
    %308 = vector.broadcast %307 : vector<1x32xf32> to vector<128x32xf32>
    %309 = arith.addf %306, %308 : vector<128x32xf32>
    %cst_128 = arith.constant 0.000000e+00 : f32
    %310 = vector.broadcast %cst_128 : f32 to vector<128x32xf32>
    %311 = arith.maximumf %309, %310 : vector<128x32xf32>
    %cst_129 = arith.constant dense<0.000000e+00> : vector<128xf32>
    %312 = vector.multi_reduction <add>, %311, %cst_129 [1] : vector<128x32xf32> to vector<128xf32>
    %313 = vector.shape_cast %312 : vector<128xf32> to vector<128x1xf32>
    %cst_130 = arith.constant 3.200000e+01 : f32
    %314 = vector.broadcast %cst_130 : f32 to vector<128x1xf32>
    %315 = arith.divf %313, %314 : vector<128x1xf32>
    %316 = arith.mulf %311, %311 : vector<128x32xf32>
    %cst_131 = arith.constant dense<0.000000e+00> : vector<128xf32>
    %317 = vector.multi_reduction <add>, %316, %cst_131 [1] : vector<128x32xf32> to vector<128xf32>
    %318 = vector.shape_cast %317 : vector<128xf32> to vector<128x1xf32>
    %cst_132 = arith.constant 3.200000e+01 : f32
    %319 = vector.broadcast %cst_132 : f32 to vector<128x1xf32>
    %320 = arith.divf %318, %319 : vector<128x1xf32>
    %321 = arith.mulf %315, %315 : vector<128x1xf32>
    %322 = arith.subf %320, %321 : vector<128x1xf32>
    %cst_133 = arith.constant 0.000000e+00 : f32
    %323 = vector.broadcast %cst_133 : f32 to vector<128x1xf32>
    %324 = arith.maximumf %322, %323 : vector<128x1xf32>
    %cst_134 = arith.constant 9.99999974E-6 : f32
    %325 = vector.broadcast %cst_134 : f32 to vector<128x1xf32>
    %326 = arith.addf %324, %325 : vector<128x1xf32>
    %327 = math.rsqrt %326 : vector<128x1xf32>
    %328 = vector.broadcast %315 : vector<128x1xf32> to vector<128x32xf32>
    %329 = arith.subf %311, %328 : vector<128x32xf32>
    %c0_135 = arith.constant 0 : index
    %c0_136 = arith.constant 0 : index
    %330 = vector.load %arg25[%c0_135, %c0_136] : memref<1x32xf32, #tpu.memory_space<vmem>>, vector<1x32xf32>
    %331 = vector.broadcast %327 : vector<128x1xf32> to vector<128x32xf32>
    %332 = vector.broadcast %330 : vector<1x32xf32> to vector<128x32xf32>
    %333 = arith.mulf %331, %332 : vector<128x32xf32>
    %334 = arith.mulf %329, %333 : vector<128x32xf32>
    %c0_137 = arith.constant 0 : index
    %c0_138 = arith.constant 0 : index
    %335 = vector.load %arg26[%c0_137, %c0_138] : memref<1x32xf32, #tpu.memory_space<vmem>>, vector<1x32xf32>
    %336 = vector.broadcast %335 : vector<1x32xf32> to vector<128x32xf32>
    %337 = arith.addf %334, %336 : vector<128x32xf32>
    %338 = vector.broadcast %32 : vector<128x1xf32> to vector<128x32xf32>
    %339 = arith.mulf %337, %338 : vector<128x32xf32>
    %c1_i32_139 = arith.constant 1 : i32
    %340 = tpu.dynamic_rotate %339 by %c1_i32_139 dim 0 : vector<128x32xf32>, i32 -> vector<128x32xf32>
    %341 = vector.broadcast %24 : vector<128x1xf32> to vector<128x32xf32>
    %342 = arith.mulf %340, %341 : vector<128x32xf32>
    %c127_i32_140 = arith.constant 127 : i32
    %343 = tpu.dynamic_rotate %339 by %c127_i32_140 dim 0 : vector<128x32xf32>, i32 -> vector<128x32xf32>
    %344 = vector.broadcast %28 : vector<128x1xf32> to vector<128x32xf32>
    %345 = arith.mulf %343, %344 : vector<128x32xf32>
    %c0_141 = arith.constant 0 : index
    %c0_142 = arith.constant 0 : index
    %346 = vector.load %arg27[%c0_141, %c0_142] : memref<96x32xbf16, #tpu.memory_space<vmem>>, vector<96x32xbf16>
    %347 = arith.truncf %342 : vector<128x32xf32> to vector<128x32xbf16>
    %348 = vector.extract_strided_slice %346 {offsets = [0, 0], sizes = [32, 32], strides = [1, 1]} : vector<96x32xbf16> to vector<32x32xbf16>
    %cst_143 = arith.constant dense<0.000000e+00> : vector<128x32xf32>
    %349 = tpu.matmul %347, %348, %cst_143 {dimension_numbers = #tpu.dot_dimension_numbers<[1], [0], [0], [1], [0, 0, 1, 1], [], []>} : vector<128x32xbf16>, vector<32x32xbf16>, vector<128x32xf32> -> vector<128x32xf32>
    %350 = arith.truncf %339 : vector<128x32xf32> to vector<128x32xbf16>
    %351 = vector.extract_strided_slice %346 {offsets = [32, 0], sizes = [32, 32], strides = [1, 1]} : vector<96x32xbf16> to vector<32x32xbf16>
    %cst_144 = arith.constant dense<0.000000e+00> : vector<128x32xf32>
    %352 = tpu.matmul %350, %351, %cst_144 {dimension_numbers = #tpu.dot_dimension_numbers<[1], [0], [0], [1], [0, 0, 1, 1], [], []>} : vector<128x32xbf16>, vector<32x32xbf16>, vector<128x32xf32> -> vector<128x32xf32>
    %353 = arith.addf %349, %352 : vector<128x32xf32>
    %354 = arith.truncf %345 : vector<128x32xf32> to vector<128x32xbf16>
    %355 = vector.extract_strided_slice %346 {offsets = [64, 0], sizes = [32, 32], strides = [1, 1]} : vector<96x32xbf16> to vector<32x32xbf16>
    %cst_145 = arith.constant dense<0.000000e+00> : vector<128x32xf32>
    %356 = tpu.matmul %354, %355, %cst_145 {dimension_numbers = #tpu.dot_dimension_numbers<[1], [0], [0], [1], [0, 0, 1, 1], [], []>} : vector<128x32xbf16>, vector<32x32xbf16>, vector<128x32xf32> -> vector<128x32xf32>
    %357 = arith.addf %353, %356 : vector<128x32xf32>
    %c0_146 = arith.constant 0 : index
    %c0_147 = arith.constant 0 : index
    %358 = vector.load %arg28[%c0_146, %c0_147] : memref<1x32xf32, #tpu.memory_space<vmem>>, vector<1x32xf32>
    %359 = vector.broadcast %358 : vector<1x32xf32> to vector<128x32xf32>
    %360 = arith.addf %357, %359 : vector<128x32xf32>
    %cst_148 = arith.constant 0.000000e+00 : f32
    %361 = vector.broadcast %cst_148 : f32 to vector<128x32xf32>
    %362 = arith.maximumf %360, %361 : vector<128x32xf32>
    %cst_149 = arith.constant dense<0.000000e+00> : vector<128xf32>
    %363 = vector.multi_reduction <add>, %362, %cst_149 [1] : vector<128x32xf32> to vector<128xf32>
    %364 = vector.shape_cast %363 : vector<128xf32> to vector<128x1xf32>
    %cst_150 = arith.constant 3.200000e+01 : f32
    %365 = vector.broadcast %cst_150 : f32 to vector<128x1xf32>
    %366 = arith.divf %364, %365 : vector<128x1xf32>
    %367 = arith.mulf %362, %362 : vector<128x32xf32>
    %cst_151 = arith.constant dense<0.000000e+00> : vector<128xf32>
    %368 = vector.multi_reduction <add>, %367, %cst_151 [1] : vector<128x32xf32> to vector<128xf32>
    %369 = vector.shape_cast %368 : vector<128xf32> to vector<128x1xf32>
    %cst_152 = arith.constant 3.200000e+01 : f32
    %370 = vector.broadcast %cst_152 : f32 to vector<128x1xf32>
    %371 = arith.divf %369, %370 : vector<128x1xf32>
    %372 = arith.mulf %366, %366 : vector<128x1xf32>
    %373 = arith.subf %371, %372 : vector<128x1xf32>
    %cst_153 = arith.constant 0.000000e+00 : f32
    %374 = vector.broadcast %cst_153 : f32 to vector<128x1xf32>
    %375 = arith.maximumf %373, %374 : vector<128x1xf32>
    %cst_154 = arith.constant 9.99999974E-6 : f32
    %376 = vector.broadcast %cst_154 : f32 to vector<128x1xf32>
    %377 = arith.addf %375, %376 : vector<128x1xf32>
    %378 = math.rsqrt %377 : vector<128x1xf32>
    %379 = vector.broadcast %366 : vector<128x1xf32> to vector<128x32xf32>
    %380 = arith.subf %362, %379 : vector<128x32xf32>
    %c0_155 = arith.constant 0 : index
    %c0_156 = arith.constant 0 : index
    %381 = vector.load %arg29[%c0_155, %c0_156] : memref<1x32xf32, #tpu.memory_space<vmem>>, vector<1x32xf32>
    %382 = vector.broadcast %378 : vector<128x1xf32> to vector<128x32xf32>
    %383 = vector.broadcast %381 : vector<1x32xf32> to vector<128x32xf32>
    %384 = arith.mulf %382, %383 : vector<128x32xf32>
    %385 = arith.mulf %380, %384 : vector<128x32xf32>
    %c0_157 = arith.constant 0 : index
    %c0_158 = arith.constant 0 : index
    %386 = vector.load %arg30[%c0_157, %c0_158] : memref<1x32xf32, #tpu.memory_space<vmem>>, vector<1x32xf32>
    %387 = vector.broadcast %386 : vector<1x32xf32> to vector<128x32xf32>
    %388 = arith.addf %385, %387 : vector<128x32xf32>
    %c0_159 = arith.constant 0 : index
    %c0_160 = arith.constant 0 : index
    %389 = vector.load %arg31[%c0_159, %c0_160] : memref<1x32xbf16, #tpu.memory_space<vmem>>, vector<1x32xbf16>
    %390 = arith.truncf %388 : vector<128x32xf32> to vector<128x32xbf16>
    %cst_161 = arith.constant dense<0.000000e+00> : vector<1x128xf32>
    %391 = tpu.matmul %389, %390, %cst_161 {dimension_numbers = #tpu.dot_dimension_numbers<[1], [1], [0], [0], [0, 0, 1, 0], [], []>} : vector<1x32xbf16>, vector<128x32xbf16>, vector<1x128xf32> -> vector<1x128xf32>
    %c0_162 = arith.constant 0 : index
    %c0_163 = arith.constant 0 : index
    %392 = vector.load %arg32[%c0_162, %c0_163] : memref<1x1xf32, #tpu.memory_space<vmem>>, vector<1x1xf32>
    %393 = vector.broadcast %392 : vector<1x1xf32> to vector<1x128xf32>
    %394 = arith.addf %391, %393 : vector<1x128xf32>
    %cst_164 = arith.constant 5.000000e-01 : f32
    %395 = vector.broadcast %cst_164 : f32 to vector<1x128xf32>
    %396 = arith.cmpf ogt, %3, %395 : vector<1x128xf32>
    %cst_165 = arith.constant 0.000000e+00 : f32
    %397 = vector.broadcast %cst_165 : f32 to vector<1x128xf32>
    %398 = arith.select %396, %397, %394 : vector<1x128xi1>, vector<1x128xf32>
    %c0_166 = arith.constant 0 : index
    %c0_167 = arith.constant 0 : index
    %399 = vector.load %arg34[%c0_166, %c0_167] : memref<1x1xf32, #tpu.memory_space<vmem>>, vector<1x1xf32>
    %400 = vector.broadcast %399 : vector<1x1xf32> to vector<1x128xf32>
    %401 = arith.addf %398, %400 : vector<1x128xf32>
    %402 = tpu.transpose %401, [1, 0] : vector<1x128xf32> -> vector<128x1xf32>
    %c0_168 = arith.constant 0 : index
    %c0_169 = arith.constant 0 : index
    %403 = vector.load %arg36[%c0_168, %c0_169] : memref<1x128xf32, #tpu.memory_space<vmem>>, vector<1x128xf32>
    %404 = vector.broadcast %402 : vector<128x1xf32> to vector<128x128xf32>
    %405 = vector.broadcast %403 : vector<1x128xf32> to vector<128x128xf32>
    %406 = arith.cmpf ogt, %404, %405 : vector<128x128xf32>
    %407 = arith.extui %406 : vector<128x128xi1> to vector<128x128xi32>
    %cst_170 = arith.constant dense<0> : vector<128xi32>
    %408 = vector.multi_reduction <add>, %407, %cst_170 [1] : vector<128x128xi32> to vector<128xi32>
    %409 = vector.shape_cast %408 : vector<128xi32> to vector<128x1xi32>
    %410 = tpu.iota {dimensions = array<i32: 1>} : vector<128x64xi32>
    %411 = vector.broadcast %409 : vector<128x1xi32> to vector<128x64xi32>
    %412 = arith.cmpi eq, %410, %411 : vector<128x64xi32>
    %413 = arith.extui %412 : vector<128x64xi1> to vector<128x64xi32>
    %414 = arith.sitofp %413 : vector<128x64xi32> to vector<128x64xf32>
    %c0_171 = arith.constant 0 : index
    %c0_172 = arith.constant 0 : index
    %415 = vector.load %arg38[%c0_171, %c0_172] : memref<64x32xf32, #tpu.memory_space<vmem>>, vector<64x32xf32>
    %cst_173 = arith.constant dense<0.000000e+00> : vector<128x32xf32>
    %416 = tpu.matmul %414, %415, %cst_173 {dimension_numbers = #tpu.dot_dimension_numbers<[1], [0], [0], [1], [0, 0, 1, 1], [], []>} : vector<128x64xf32>, vector<64x32xf32>, vector<128x32xf32> -> vector<128x32xf32>
    %417 = vector.broadcast %32 : vector<128x1xf32> to vector<128x32xf32>
    %418 = arith.mulf %416, %417 : vector<128x32xf32>
    %419 = arith.addf %280, %418 : vector<128x32xf32>
    %c0_174 = arith.constant 0 : index
    %c0_175 = arith.constant 0 : index
    %c0_176 = arith.constant 0 : index
    %420 = vector.load %arg41[%c0_174, %c0_175, %c0_176] : memref<1x1x128xf32, #tpu.memory_space<vmem>>, vector<1x1x128xf32>
    %421 = vector.shape_cast %420 : vector<1x1x128xf32> to vector<1x128xf32>
    %422 = vector.shape_cast %401 : vector<1x128xf32> to vector<1x1x128xf32>
    tpu.vector_store %arg41[%c0_174, %c0_175, %c0_176], %422 {strides = array<i32>} : memref<1x1x128xf32, #tpu.memory_space<vmem>>, vector<1x1x128xf32>,
    %c0_177 = arith.constant 0 : index
    %c0_178 = arith.constant 0 : index
    %c0_179 = arith.constant 0 : index
    %423 = vector.load %arg43[%c0_177, %c0_178, %c0_179] : memref<1x128x32xf32, #tpu.memory_space<vmem>>, vector<1x128x32xf32>
    %424 = vector.shape_cast %423 : vector<1x128x32xf32> to vector<128x32xf32>
    %425 = vector.shape_cast %419 : vector<128x32xf32> to vector<1x128x32xf32>
    tpu.vector_store %arg43[%c0_177, %c0_178, %c0_179], %425 {strides = array<i32>} : memref<1x128x32xf32, #tpu.memory_space<vmem>>, vector<1x128x32xf32>,
    return
  }
  func.func @transform_0(%arg0: i32) -> (i32, i32, i32) {
    %c0_i32 = arith.constant 0 : i32
    %c0_i32_0 = arith.constant 0 : i32
    %c0_i32_1 = arith.constant 0 : i32
    return %arg0, %c0_i32, %c0_i32_0 : i32, i32, i32
  }
  func.func @transform_1(%arg0: i32) -> (i32, i32, i32) {
    %c0_i32 = arith.constant 0 : i32
    %c0_i32_0 = arith.constant 0 : i32
    %c0_i32_1 = arith.constant 0 : i32
    return %arg0, %c0_i32, %c0_i32_0 : i32, i32, i32
  }
  func.func @transform_2(%arg0: i32) -> (i32, i32) {
    %c0_i32 = arith.constant 0 : i32
    %c0_i32_0 = arith.constant 0 : i32
    %c0_i32_1 = arith.constant 0 : i32
    return %c0_i32, %c0_i32_0 : i32, i32
  }
  func.func @transform_3(%arg0: i32) -> (i32, i32) {
    %c0_i32 = arith.constant 0 : i32
    %c0_i32_0 = arith.constant 0 : i32
    %c0_i32_1 = arith.constant 0 : i32
    return %c0_i32, %c0_i32_0 : i32, i32
  }
  func.func @transform_4(%arg0: i32) -> (i32, i32) {
    %c0_i32 = arith.constant 0 : i32
    %c0_i32_0 = arith.constant 0 : i32
    %c0_i32_1 = arith.constant 0 : i32
    return %c0_i32, %c0_i32_0 : i32, i32
  }
  func.func @transform_5(%arg0: i32) -> (i32, i32) {
    %c0_i32 = arith.constant 0 : i32
    %c0_i32_0 = arith.constant 0 : i32
    %c0_i32_1 = arith.constant 0 : i32
    return %c0_i32, %c0_i32_0 : i32, i32
  }
  func.func @transform_6(%arg0: i32) -> (i32, i32) {
    %c0_i32 = arith.constant 0 : i32
    %c0_i32_0 = arith.constant 0 : i32
    %c0_i32_1 = arith.constant 0 : i32
    return %c0_i32, %c0_i32_0 : i32, i32
  }
  func.func @transform_7(%arg0: i32) -> (i32, i32) {
    %c0_i32 = arith.constant 0 : i32
    %c0_i32_0 = arith.constant 0 : i32
    %c0_i32_1 = arith.constant 0 : i32
    return %c0_i32, %c0_i32_0 : i32, i32
  }
  func.func @transform_8(%arg0: i32) -> (i32, i32) {
    %c0_i32 = arith.constant 0 : i32
    %c0_i32_0 = arith.constant 0 : i32
    %c0_i32_1 = arith.constant 0 : i32
    return %c0_i32, %c0_i32_0 : i32, i32
  }
  func.func @transform_9(%arg0: i32) -> (i32, i32) {
    %c0_i32 = arith.constant 0 : i32
    %c0_i32_0 = arith.constant 0 : i32
    %c0_i32_1 = arith.constant 0 : i32
    return %c0_i32, %c0_i32_0 : i32, i32
  }
  func.func @transform_10(%arg0: i32) -> (i32, i32) {
    %c0_i32 = arith.constant 0 : i32
    %c0_i32_0 = arith.constant 0 : i32
    %c0_i32_1 = arith.constant 0 : i32
    return %c0_i32, %c0_i32_0 : i32, i32
  }
  func.func @transform_11(%arg0: i32) -> (i32, i32) {
    %c0_i32 = arith.constant 0 : i32
    %c0_i32_0 = arith.constant 0 : i32
    %c0_i32_1 = arith.constant 0 : i32
    return %c0_i32, %c0_i32_0 : i32, i32
  }
  func.func @transform_12(%arg0: i32) -> (i32, i32) {
    %c0_i32 = arith.constant 0 : i32
    %c0_i32_0 = arith.constant 0 : i32
    %c0_i32_1 = arith.constant 0 : i32
    return %c0_i32, %c0_i32_0 : i32, i32
  }
  func.func @transform_13(%arg0: i32) -> (i32, i32) {
    %c0_i32 = arith.constant 0 : i32
    %c0_i32_0 = arith.constant 0 : i32
    %c0_i32_1 = arith.constant 0 : i32
    return %c0_i32, %c0_i32_0 : i32, i32
  }
  func.func @transform_14(%arg0: i32) -> (i32, i32) {
    %c0_i32 = arith.constant 0 : i32
    %c0_i32_0 = arith.constant 0 : i32
    %c0_i32_1 = arith.constant 0 : i32
    return %c0_i32, %c0_i32_0 : i32, i32
  }
  func.func @transform_15(%arg0: i32) -> (i32, i32) {
    %c0_i32 = arith.constant 0 : i32
    %c0_i32_0 = arith.constant 0 : i32
    %c0_i32_1 = arith.constant 0 : i32
    return %c0_i32, %c0_i32_0 : i32, i32
  }
  func.func @transform_16(%arg0: i32) -> (i32, i32) {
    %c0_i32 = arith.constant 0 : i32
    %c0_i32_0 = arith.constant 0 : i32
    %c0_i32_1 = arith.constant 0 : i32
    return %c0_i32, %c0_i32_0 : i32, i32
  }
  func.func @transform_17(%arg0: i32) -> (i32, i32) {
    %c0_i32 = arith.constant 0 : i32
    %c0_i32_0 = arith.constant 0 : i32
    %c0_i32_1 = arith.constant 0 : i32
    return %c0_i32, %c0_i32_0 : i32, i32
  }
  func.func @transform_18(%arg0: i32) -> (i32, i32) {
    %c0_i32 = arith.constant 0 : i32
    %c0_i32_0 = arith.constant 0 : i32
    %c0_i32_1 = arith.constant 0 : i32
    return %c0_i32, %c0_i32_0 : i32, i32
  }
  func.func @transform_19(%arg0: i32) -> (i32, i32) {
    %c0_i32 = arith.constant 0 : i32
    %c0_i32_0 = arith.constant 0 : i32
    %c0_i32_1 = arith.constant 0 : i32
    return %c0_i32, %c0_i32_0 : i32, i32
  }
  func.func @transform_20(%arg0: i32) -> (i32, i32) {
    %c0_i32 = arith.constant 0 : i32
    %c0_i32_0 = arith.constant 0 : i32
    %c0_i32_1 = arith.constant 0 : i32
    return %c0_i32, %c0_i32_0 : i32, i32
  }
  func.func @transform_21(%arg0: i32) -> (i32, i32) {
    %c0_i32 = arith.constant 0 : i32
    %c0_i32_0 = arith.constant 0 : i32
    %c0_i32_1 = arith.constant 0 : i32
    return %c0_i32, %c0_i32_0 : i32, i32
  }
  func.func @transform_22(%arg0: i32) -> (i32, i32) {
    %c0_i32 = arith.constant 0 : i32
    %c0_i32_0 = arith.constant 0 : i32
    %c0_i32_1 = arith.constant 0 : i32
    return %c0_i32, %c0_i32_0 : i32, i32
  }
  func.func @transform_23(%arg0: i32) -> (i32, i32) {
    %c0_i32 = arith.constant 0 : i32
    %c0_i32_0 = arith.constant 0 : i32
    %c0_i32_1 = arith.constant 0 : i32
    return %c0_i32, %c0_i32_0 : i32, i32
  }
  func.func @transform_24(%arg0: i32) -> (i32, i32) {
    %c0_i32 = arith.constant 0 : i32
    %c0_i32_0 = arith.constant 0 : i32
    %c0_i32_1 = arith.constant 0 : i32
    return %c0_i32, %c0_i32_0 : i32, i32
  }
  func.func @transform_25(%arg0: i32) -> (i32, i32) {
    %c0_i32 = arith.constant 0 : i32
    %c0_i32_0 = arith.constant 0 : i32
    %c0_i32_1 = arith.constant 0 : i32
    return %c0_i32, %c0_i32_0 : i32, i32
  }
  func.func @transform_26(%arg0: i32) -> (i32, i32) {
    %c0_i32 = arith.constant 0 : i32
    %c0_i32_0 = arith.constant 0 : i32
    %c0_i32_1 = arith.constant 0 : i32
    return %c0_i32, %c0_i32_0 : i32, i32
  }
  func.func @transform_27(%arg0: i32) -> (i32, i32) {
    %c0_i32 = arith.constant 0 : i32
    %c0_i32_0 = arith.constant 0 : i32
    %c0_i32_1 = arith.constant 0 : i32
    return %c0_i32, %c0_i32_0 : i32, i32
  }
  func.func @transform_28(%arg0: i32) -> (i32, i32) {
    %c0_i32 = arith.constant 0 : i32
    %c0_i32_0 = arith.constant 0 : i32
    %c0_i32_1 = arith.constant 0 : i32
    return %c0_i32, %c0_i32_0 : i32, i32
  }
  func.func @transform_29(%arg0: i32) -> (i32, i32) {
    %c0_i32 = arith.constant 0 : i32
    %c0_i32_0 = arith.constant 0 : i32
    %c0_i32_1 = arith.constant 0 : i32
    return %c0_i32, %c0_i32_0 : i32, i32
  }
  func.func @transform_30(%arg0: i32) -> (i32, i32) {
    %c0_i32 = arith.constant 0 : i32
    %c0_i32_0 = arith.constant 0 : i32
    %c0_i32_1 = arith.constant 0 : i32
    return %c0_i32, %c0_i32_0 : i32, i32
  }
  func.func @transform_31(%arg0: i32) -> (i32, i32) {
    %c0_i32 = arith.constant 0 : i32
    %c0_i32_0 = arith.constant 0 : i32
    %c0_i32_1 = arith.constant 0 : i32
    return %c0_i32, %c0_i32_0 : i32, i32
  }
  func.func @transform_32(%arg0: i32) -> (i32, i32) {
    %c0_i32 = arith.constant 0 : i32
    %c0_i32_0 = arith.constant 0 : i32
    %c0_i32_1 = arith.constant 0 : i32
    return %c0_i32, %c0_i32_0 : i32, i32
  }
  func.func @transform_33(%arg0: i32) -> (i32, i32) {
    %c0_i32 = arith.constant 0 : i32
    %c0_i32_0 = arith.constant 0 : i32
    %c0_i32_1 = arith.constant 0 : i32
    return %c0_i32, %c0_i32_0 : i32, i32
  }
  func.func @transform_34(%arg0: i32) -> (i32, i32) {
    %c0_i32 = arith.constant 0 : i32
    %c0_i32_0 = arith.constant 0 : i32
    %c0_i32_1 = arith.constant 0 : i32
    return %c0_i32, %c0_i32_0 : i32, i32
  }
  func.func @transform_35(%arg0: i32) -> (i32, i32) {
    %c0_i32 = arith.constant 0 : i32
    %c0_i32_0 = arith.constant 0 : i32
    %c0_i32_1 = arith.constant 0 : i32
    return %c0_i32, %c0_i32_0 : i32, i32
  }
  func.func @transform_36(%arg0: i32) -> (i32, i32) {
    %c0_i32 = arith.constant 0 : i32
    %c0_i32_0 = arith.constant 0 : i32
    %c0_i32_1 = arith.constant 0 : i32
    return %c0_i32, %c0_i32_0 : i32, i32
  }
  func.func @transform_37(%arg0: i32) -> (i32, i32) {
    %c0_i32 = arith.constant 0 : i32
    %c0_i32_0 = arith.constant 0 : i32
    %c0_i32_1 = arith.constant 0 : i32
    return %c0_i32, %c0_i32_0 : i32, i32
  }
  func.func @transform_38(%arg0: i32) -> (i32, i32, i32) {
    %c0_i32 = arith.constant 0 : i32
    %c0_i32_0 = arith.constant 0 : i32
    %c0_i32_1 = arith.constant 0 : i32
    return %arg0, %c0_i32, %c0_i32_0 : i32, i32, i32
  }
  func.func @transform_39(%arg0: i32) -> (i32, i32, i32) {
    %c0_i32 = arith.constant 0 : i32
    %c0_i32_0 = arith.constant 0 : i32
    %c0_i32_1 = arith.constant 0 : i32
    return %arg0, %c0_i32, %c0_i32_0 : i32, i32, i32
  }
  func.func @transform_40(%arg0: i32) -> (i32, i32, i32) {
    %c0_i32 = arith.constant 0 : i32
    %c0_i32_0 = arith.constant 0 : i32
    %c0_i32_1 = arith.constant 0 : i32
    return %arg0, %c0_i32, %c0_i32_0 : i32, i32, i32
  }
  func.func @transform_41(%arg0: i32) -> (i32, i32, i32) {
    %c0_i32 = arith.constant 0 : i32
    %c0_i32_0 = arith.constant 0 : i32
    %c0_i32_1 = arith.constant 0 : i32
    return %arg0, %c0_i32, %c0_i32_0 : i32, i32, i32
  }
  func.func @transform_42(%arg0: i32) -> (i32, i32, i32) {
    %c0_i32 = arith.constant 0 : i32
    %c0_i32_0 = arith.constant 0 : i32
    %c0_i32_1 = arith.constant 0 : i32
    return %arg0, %c0_i32, %c0_i32_0 : i32, i32, i32
  }
}

</mosaic_0001>

<llo_original>
// kernel: custom-call.5
$region0: #{custom-call.5}
  %s0 = inlined_call_operand.vmem [shape: f32[2], index: 0, kind: output, shape index: {}]

// kernel: variance_adaptor_forward.1
$region0: #{variance_adaptor_forward.1}
  #allocation0 [shape = 'u32[]', space=smem, size = 0x4, offset = 0x4, fixed_abs, tag = 'smem constant byte address 0x4 - core index']
  #allocation1 [shape = 'u32[144,128]{1,0:T(1,128)}', space=vmem, size = 0x12000, scoped, tag = 'internal scratch']
  #allocation2 [shape = 'f32[1,1]{1,0:T(1,128)S(1)}', space=vmem, size = 0x200, scoped, tag = 'scoped memory for variance_adaptor_forward.1']
  #allocation3 [shape = 'f32[1,1]{1,0:T(1,128)S(1)}', space=vmem, size = 0x200, scoped, tag = 'scoped memory for variance_adaptor_forward.1']
  #allocation4 [shape = 'f32[1,1]{1,0:T(1,128)S(1)}', space=vmem, size = 0x200, scoped, tag = 'scoped memory for variance_adaptor_forward.1']
  #allocation5 [shape = 'f32[1,1]{1,0:T(1,128)S(1)}', space=vmem, size = 0x200, scoped, tag = 'scoped memory for variance_adaptor_forward.1']
  #allocation6 [shape = 'f32[1,1]{1,0:T(1,128)S(1)}', space=vmem, size = 0x200, scoped, tag = 'scoped memory for variance_adaptor_forward.1']
  %s0 = inlined_call_operand.smem [shape: u32[43], index: -1, kind: input, shape index: {}]
  %s1 = sld [smem:[%s0]]
  %s2 = scalar_lea.smem %s0, 1
  %s3 = sld [smem:[%s2]]
  %s4 = scalar_lea.smem %s0, 2
  %s5 = sld [smem:[%s4]]
  %s6 = scalar_lea.smem %s0, 3
  %s7 = sld [smem:[%s6]]
  %s8 = scalar_lea.smem %s0, 4
  %s9 = sld [smem:[%s8]]
  %s10 = scalar_lea.smem %s0, 5
  %s11 = sld [smem:[%s10]]
  %s12 = scalar_lea.smem %s0, 6
  %s13 = sld [smem:[%s12]]
  %s14 = scalar_lea.smem %s0, 7
  %s15 = sld [smem:[%s14]]
  %s16 = scalar_lea.smem %s0, 8
  %s17 = sld [smem:[%s16]]
  %s18 = scalar_lea.smem %s0, 9
  %s19 = sld [smem:[%s18]]
  %s20 = scalar_lea.smem %s0, 10
  %s21 = sld [smem:[%s20]]
  %s22 = scalar_lea.smem %s0, 11
  %s23 = sld [smem:[%s22]]
  %s24 = scalar_lea.smem %s0, 12
  %s25 = sld [smem:[%s24]]
  %s26 = scalar_lea.smem %s0, 13
  %s27 = sld [smem:[%s26]]
  %s28 = scalar_lea.smem %s0, 14
  %s29 = sld [smem:[%s28]]
  %s30 = scalar_lea.smem %s0, 15
  %s31 = sld [smem:[%s30]]
  %s32 = scalar_lea.smem %s0, 16
  %s33 = sld [smem:[%s32]]
  %s34 = scalar_lea.smem %s0, 17
  %s35 = sld [smem:[%s34]]
  %s36 = scalar_lea.smem %s0, 18
  %s37 = sld [smem:[%s36]]
  %s38 = scalar_lea.smem %s0, 19
  %s39 = sld [smem:[%s38]]
  %s40 = scalar_lea.smem %s0, 20
  %s41 = sld [smem:[%s40]]
  %s42 = scalar_lea.smem %s0, 21
  %s43 = sld [smem:[%s42]]
  %s44 = scalar_lea.smem %s0, 22
  %s45 = sld [smem:[%s44]]
  %s46 = scalar_lea.smem %s0, 23
  %s47 = sld [smem:[%s46]]
  %s48 = scalar_lea.smem %s0, 24
  %s49 = sld [smem:[%s48]]
  %s50 = scalar_lea.smem %s0, 25
  %s51 = sld [smem:[%s50]]
  %s52 = scalar_lea.smem %s0, 26
  %s53 = sld [smem:[%s52]]
  %s54 = scalar_lea.smem %s0, 27
  %s55 = sld [smem:[%s54]]
  %s56 = scalar_lea.smem %s0, 28
  %s57 = sld [smem:[%s56]]
  %s58 = scalar_lea.smem %s0, 29
  %s59 = sld [smem:[%s58]]
  %s60 = scalar_lea.smem %s0, 30
  %s61 = sld [smem:[%s60]]
  %s62 = scalar_lea.smem %s0, 31
  %s63 = sld [smem:[%s62]]
  %s64 = scalar_lea.smem %s0, 32
  %s65 = sld [smem:[%s64]]
  %s66 = scalar_lea.smem %s0, 33
  %s67 = sld [smem:[%s66]]
  %s68 = scalar_lea.smem %s0, 34
  %s69 = sld [smem:[%s68]]
  %s70 = scalar_lea.smem %s0, 35
  %s71 = sld [smem:[%s70]]
  %s72 = scalar_lea.smem %s0, 36
  %s73 = sld [smem:[%s72]]
  %s74 = scalar_lea.smem %s0, 37
  %s75 = sld [smem:[%s74]]
  %s76 = scalar_lea.smem %s0, 38
  %s77 = sld [smem:[%s76]]
  %s78 = scalar_lea.smem %s0, 39
  %s79 = sld [smem:[%s78]]
  %s80 = scalar_lea.smem %s0, 40
  %s81 = sld [smem:[%s80]]
  %s82 = scalar_lea.smem %s0, 41
  %s83 = sld [smem:[%s82]]
  %s84 = scalar_lea.smem %s0, 42
  %s85 = sld [smem:[%s84]]
  %86 = xla_tuple %s77, %s79, %s81, %s83, %s85
  %s87 = sld [smem:[#allocation0]]
  $region217: #{variance_adaptor_forward.1} parent=0
    _
  %s89 = ssub.s32 1, %s87
  %s90 = scalar_select 0, %s89, %s87
  %v91 = vstv %s23
  %92 = vst [vmem:[#allocation2] sm:$0x1] %v91
  %v93 = vstv %s43
  %94 = vst [vmem:[#allocation3] sm:$0x1] %v93
  %v95 = vstv %s63
  %96 = vst [vmem:[#allocation4] sm:$0x1] %v95
  %v97 = vstv %s65
  %98 = vst [vmem:[#allocation5] sm:$0x1] %v97
  %v99 = vstv %s67
  %100 = vst [vmem:[#allocation6] sm:$0x1] %v99
  $region1: #{variance_adaptor_forward.1} parent=0
    #allocation7 [shape = 'u8[1024]{0}', space=vmem, size = 0x400, scoped, tag = 'output window, operand 1']
    #allocation8 [shape = 's32[2]{0}', space=sflag, size = 0x8, scoped, tag = 'scoped memory for variance_adaptor_forward.1']
    #allocation9 [shape = 'u8[1024]{0}', space=vmem, size = 0x400, scoped, tag = 'output window, operand 2']
    #allocation10 [shape = 's32[2]{0}', space=sflag, size = 0x8, scoped, tag = 'scoped memory for variance_adaptor_forward.1']
    %101 = vsyncpa [#allocation8], 0
    %s102 = scalar_lea.sflag [#allocation8], 1
    %103 = vsyncpa %s102, 0
    %104 = vsyncpa [#allocation10], 0
    %s105 = scalar_lea.sflag [#allocation10], 1
    %106 = vsyncpa %s105, 0
    loop: start=0, step=1, limit=4
    $region2: #{variance_adaptor_forward.1} parent=1 // loop_pre_header
      _
    $region3: #{variance_adaptor_forward.1} parent=1 // loop_header
      %s108 = sphi 0, %s112
      %p109 = scmp.ge.s32.totalorder %s108, 4
      %s118 = sphi 0, %s120
      %s121 = sphi 0, %s118
      %s122 = sphi 0, %s121
      %s138 = sphi 0, %s122
      %s144 = sphi 0, %s146
      %s147 = sphi 0, %s144
      %s148 = sphi 0, %s147
      %s164 = sphi 0, %s148
      %s168 = sphi 0, %s168
      %s170 = sphi 0, %s168
      %s171 = sphi 0, %s170
      %s185 = sphi 0, %s171
      %s189 = sphi 0, %s189
      %s191 = sphi 0, %s189
      %s192 = sphi 0, %s191
      %s206 = sphi 0, %s192
      %s210 = sphi 0, %s210
      %s212 = sphi 0, %s210
      %s213 = sphi 0, %s212
      %s227 = sphi 0, %s213
      %s231 = sphi 0, %s231
      %s233 = sphi 0, %s231
      %s234 = sphi 0, %s233
      %s248 = sphi 0, %s234
      %s252 = sphi 0, %s252
      %s254 = sphi 0, %s252
      %s255 = sphi 0, %s254
      %s269 = sphi 0, %s255
      %s273 = sphi 0, %s273
      %s275 = sphi 0, %s273
      %s276 = sphi 0, %s275
      %s290 = sphi 0, %s276
      %s294 = sphi 0, %s294
      %s296 = sphi 0, %s294
      %s297 = sphi 0, %s296
      %s311 = sphi 0, %s297
      %s315 = sphi 0, %s315
      %s317 = sphi 0, %s315
      %s318 = sphi 0, %s317
      %s332 = sphi 0, %s318
      %s336 = sphi 0, %s336
      %s338 = sphi 0, %s336
      %s339 = sphi 0, %s338
      %s353 = sphi 0, %s339
      %s357 = sphi 0, %s357
      %s359 = sphi 0, %s357
      %s360 = sphi 0, %s359
      %s374 = sphi 0, %s360
      %s378 = sphi 0, %s378
      %s380 = sphi 0, %s378
      %s381 = sphi 0, %s380
      %s395 = sphi 0, %s381
      %s399 = sphi 0, %s399
      %s401 = sphi 0, %s399
      %s402 = sphi 0, %s401
      %s416 = sphi 0, %s402
      %s420 = sphi 0, %s420
      %s422 = sphi 0, %s420
      %s423 = sphi 0, %s422
      %s437 = sphi 0, %s423
      %s441 = sphi 0, %s441
      %s443 = sphi 0, %s441
      %s444 = sphi 0, %s443
      %s458 = sphi 0, %s444
      %s462 = sphi 0, %s462
      %s464 = sphi 0, %s462
      %s465 = sphi 0, %s464
      %s479 = sphi 0, %s465
      %s483 = sphi 0, %s483
      %s485 = sphi 0, %s483
      %s486 = sphi 0, %s485
      %s500 = sphi 0, %s486
      %s504 = sphi 0, %s504
      %s506 = sphi 0, %s504
      %s507 = sphi 0, %s506
      %s521 = sphi 0, %s507
      %s525 = sphi 0, %s525
      %s527 = sphi 0, %s525
      %s528 = sphi 0, %s527
      %s542 = sphi 0, %s528
      %s546 = sphi 0, %s546
      %s548 = sphi 0, %s546
      %s549 = sphi 0, %s548
      %s563 = sphi 0, %s549
      %s567 = sphi 0, %s567
      %s569 = sphi 0, %s567
      %s570 = sphi 0, %s569
      %s584 = sphi 0, %s570
      %s588 = sphi 0, %s588
      %s590 = sphi 0, %s588
      %s591 = sphi 0, %s590
      %s605 = sphi 0, %s591
      %s609 = sphi 0, %s609
      %s611 = sphi 0, %s609
      %s612 = sphi 0, %s611
      %s626 = sphi 0, %s612
      %s630 = sphi 0, %s630
      %s632 = sphi 0, %s630
      %s633 = sphi 0, %s632
      %s647 = sphi 0, %s633
      %s651 = sphi 0, %s651
      %s653 = sphi 0, %s651
      %s654 = sphi 0, %s653
      %s668 = sphi 0, %s654
      %s672 = sphi 0, %s672
      %s674 = sphi 0, %s672
      %s675 = sphi 0, %s674
      %s689 = sphi 0, %s675
      %s693 = sphi 0, %s693
      %s695 = sphi 0, %s693
      %s696 = sphi 0, %s695
      %s710 = sphi 0, %s696
      %s714 = sphi 0, %s714
      %s716 = sphi 0, %s714
      %s717 = sphi 0, %s716
      %s731 = sphi 0, %s717
      %s735 = sphi 0, %s735
      %s737 = sphi 0, %s735
      %s738 = sphi 0, %s737
      %s752 = sphi 0, %s738
      %s756 = sphi 0, %s756
      %s758 = sphi 0, %s756
      %s759 = sphi 0, %s758
      %s773 = sphi 0, %s759
      %s777 = sphi 0, %s777
      %s779 = sphi 0, %s777
      %s780 = sphi 0, %s779
      %s794 = sphi 0, %s780
      %s798 = sphi 0, %s798
      %s800 = sphi 0, %s798
      %s801 = sphi 0, %s800
      %s815 = sphi 0, %s801
      %s819 = sphi 0, %s819
      %s821 = sphi 0, %s819
      %s822 = sphi 0, %s821
      %s836 = sphi 0, %s822
      %s840 = sphi 0, %s840
      %s842 = sphi 0, %s840
      %s843 = sphi 0, %s842
      %s857 = sphi 0, %s843
      %s861 = sphi 0, %s861
      %s863 = sphi 0, %s861
      %s864 = sphi 0, %s863
      %s878 = sphi 0, %s864
      %s882 = sphi 0, %s882
      %s884 = sphi 0, %s882
      %s885 = sphi 0, %s884
      %s899 = sphi 0, %s885
      %s903 = sphi 0, %s903
      %s905 = sphi 0, %s903
      %s906 = sphi 0, %s905
      %s920 = sphi 0, %s906
      %s926 = sphi 0, %s928
      %s929 = sphi 0, %s926
      %s930 = sphi 0, %s929
      %s946 = sphi 0, %s930
      %s952 = sphi 0, %s954
      %s955 = sphi 0, %s952
      %s956 = sphi 0, %s955
      %s972 = sphi 0, %s956
      %s978 = sphi 0, %s980
      %s981 = sphi 0, %s978
      %s982 = sphi 0, %s981
      %s998 = sphi 0, %s982
      %s1004 = sphi 0, %s1006
      %s1007 = sphi 0, %s1004
      %s1008 = sphi 0, %s1007
      %s1024 = sphi 0, %s1008
      %s1030 = sphi 0, %s1032
      %s1033 = sphi 0, %s1030
      %s1034 = sphi 0, %s1033
      %s1050 = sphi 0, %s1034
    $region4: #{variance_adaptor_forward.1} parent=1 // loop_header_branch
      %111 = sbr.rel (%p109) target = $region8
    $region5: #{variance_adaptor_forward.1} parent=1 // loop_body
      %s113 = ssub.s32 %s108, 1
      %s114 = ssub.s32 %s108, 2
      %s115 = sadd.s32 %s108, 1
      %s116 = ssub.s32 %s108, %s115
      %p117 = scmp.eq.s32.totalorder %s116, 0
      %s119 = sadd.s32 %s118, 1
      %s120 = scalar_select %p117, %s118, %s119
      %p123 = pneg %p117
      %p124 = scmp.eq.s32.totalorder %s108, 1
      %p125 = por %p123, %p124
      %p126 = scmp.ne.s32.totalorder %s118, %s121
      %p127 = scmp.eq.s32.totalorder %s108, 0
      %p128 = por %p126, %p127
      %p129 = scmp.ne.s32.totalorder %s118, %s121
      %p130 = scmp.eq.s32.totalorder %s113, 1
      %p131 = por %p129, %p130
      %p132 = scmp.ne.s32.totalorder %s121, %s122
      %p133 = scmp.eq.s32.totalorder %s113, 0
      %p134 = por %p132, %p133
      %p135 = scmp.ne.s32.totalorder %s121, %s122
      %p136 = scmp.eq.s32.totalorder %s114, 1
      %p137 = por %p135, %p136
      %p139 = scmp.ne.s32.totalorder %s122, %s138
      %p140 = scmp.eq.s32.totalorder %s114, 0
      %p141 = por %p139, %p140
      %s142 = ssub.s32 %s108, %s115
      %p143 = scmp.eq.s32.totalorder %s142, 0
      %s145 = sadd.s32 %s144, 1
      %s146 = scalar_select %p143, %s144, %s145
      %p149 = pneg %p143
      %p150 = scmp.eq.s32.totalorder %s108, 1
      %p151 = por %p149, %p150
      %p152 = scmp.ne.s32.totalorder %s144, %s147
      %p153 = scmp.eq.s32.totalorder %s108, 0
      %p154 = por %p152, %p153
      %p155 = scmp.ne.s32.totalorder %s144, %s147
      %p156 = scmp.eq.s32.totalorder %s113, 1
      %p157 = por %p155, %p156
      %p158 = scmp.ne.s32.totalorder %s147, %s148
      %p159 = scmp.eq.s32.totalorder %s113, 0
      %p160 = por %p158, %p159
      %p161 = scmp.ne.s32.totalorder %s147, %s148
      %p162 = scmp.eq.s32.totalorder %s114, 1
      %p163 = por %p161, %p162
      %p165 = scmp.ne.s32.totalorder %s148, %s164
      %p166 = scmp.eq.s32.totalorder %s114, 0
      %p167 = por %p165, %p166
      %s169 = sadd.s32 %s168, 1
      %p172 = scmp.eq.s32.totalorder %s108, 1
      %p173 = scmp.ne.s32.totalorder %s168, %s170
      %p174 = scmp.eq.s32.totalorder %s108, 0
      %p175 = por %p173, %p174
      %p176 = scmp.ne.s32.totalorder %s168, %s170
      %p177 = scmp.eq.s32.totalorder %s113, 1
      %p178 = por %p176, %p177
      %p179 = scmp.ne.s32.totalorder %s170, %s171
      %p180 = scmp.eq.s32.totalorder %s113, 0
      %p181 = por %p179, %p180
      %p182 = scmp.ne.s32.totalorder %s170, %s171
      %p183 = scmp.eq.s32.totalorder %s114, 1
      %p184 = por %p182, %p183
      %p186 = scmp.ne.s32.totalorder %s171, %s185
      %p187 = scmp.eq.s32.totalorder %s114, 0
      %p188 = por %p186, %p187
      %s190 = sadd.s32 %s189, 1
      %p193 = scmp.eq.s32.totalorder %s108, 1
      %p194 = scmp.ne.s32.totalorder %s189, %s191
      %p195 = scmp.eq.s32.totalorder %s108, 0
      %p196 = por %p194, %p195
      %p197 = scmp.ne.s32.totalorder %s189, %s191
      %p198 = scmp.eq.s32.totalorder %s113, 1
      %p199 = por %p197, %p198
      %p200 = scmp.ne.s32.totalorder %s191, %s192
      %p201 = scmp.eq.s32.totalorder %s113, 0
      %p202 = por %p200, %p201
      %p203 = scmp.ne.s32.totalorder %s191, %s192
      %p204 = scmp.eq.s32.totalorder %s114, 1
      %p205 = por %p203, %p204
      %p207 = scmp.ne.s32.totalorder %s192, %s206
      %p208 = scmp.eq.s32.totalorder %s114, 0
      %p209 = por %p207, %p208
      %s211 = sadd.s32 %s210, 1
      %p214 = scmp.eq.s32.totalorder %s108, 1
      %p215 = scmp.ne.s32.totalorder %s210, %s212
      %p216 = scmp.eq.s32.totalorder %s108, 0
      %p217 = por %p215, %p216
      %p218 = scmp.ne.s32.totalorder %s210, %s212
      %p219 = scmp.eq.s32.totalorder %s113, 1
      %p220 = por %p218, %p219
      %p221 = scmp.ne.s32.totalorder %s212, %s213
      %p222 = scmp.eq.s32.totalorder %s113, 0
      %p223 = por %p221, %p222
      %p224 = scmp.ne.s32.totalorder %s212, %s213
      %p225 = scmp.eq.s32.totalorder %s114, 1
      %p226 = por %p224, %p225
      %p228 = scmp.ne.s32.totalorder %s213, %s227
      %p229 = scmp.eq.s32.totalorder %s114, 0
      %p230 = por %p228, %p229
      %s232 = sadd.s32 %s231, 1
      %p235 = scmp.eq.s32.totalorder %s108, 1
      %p236 = scmp.ne.s32.totalorder %s231, %s233
      %p237 = scmp.eq.s32.totalorder %s108, 0
      %p238 = por %p236, %p237
      %p239 = scmp.ne.s32.totalorder %s231, %s233
      %p240 = scmp.eq.s32.totalorder %s113, 1
      %p241 = por %p239, %p240
      %p242 = scmp.ne.s32.totalorder %s233, %s234
      %p243 = scmp.eq.s32.totalorder %s113, 0
      %p244 = por %p242, %p243
      %p245 = scmp.ne.s32.totalorder %s233, %s234
      %p246 = scmp.eq.s32.totalorder %s114, 1
      %p247 = por %p245, %p246
      %p249 = scmp.ne.s32.totalorder %s234, %s248
      %p250 = scmp.eq.s32.totalorder %s114, 0
      %p251 = por %p249, %p250
      %s253 = sadd.s32 %s252, 1
      %p256 = scmp.eq.s32.totalorder %s108, 1
      %p257 = scmp.ne.s32.totalorder %s252, %s254
      %p258 = scmp.eq.s32.totalorder %s108, 0
      %p259 = por %p257, %p258
      %p260 = scmp.ne.s32.totalorder %s252, %s254
      %p261 = scmp.eq.s32.totalorder %s113, 1
      %p262 = por %p260, %p261
      %p263 = scmp.ne.s32.totalorder %s254, %s255
      %p264 = scmp.eq.s32.totalorder %s113, 0
      %p265 = por %p263, %p264
      %p266 = scmp.ne.s32.totalorder %s254, %s255
      %p267 = scmp.eq.s32.totalorder %s114, 1
      %p268 = por %p266, %p267
      %p270 = scmp.ne.s32.totalorder %s255, %s269
      %p271 = scmp.eq.s32.totalorder %s114, 0
      %p272 = por %p270, %p271
      %s274 = sadd.s32 %s273, 1
      %p277 = scmp.eq.s32.totalorder %s108, 1
      %p278 = scmp.ne.s32.totalorder %s273, %s275
      %p279 = scmp.eq.s32.totalorder %s108, 0
      %p280 = por %p278, %p279
      %p281 = scmp.ne.s32.totalorder %s273, %s275
      %p282 = scmp.eq.s32.totalorder %s113, 1
      %p283 = por %p281, %p282
      %p284 = scmp.ne.s32.totalorder %s275, %s276
      %p285 = scmp.eq.s32.totalorder %s113, 0
      %p286 = por %p284, %p285
      %p287 = scmp.ne.s32.totalorder %s275, %s276
      %p288 = scmp.eq.s32.totalorder %s114, 1
      %p289 = por %p287, %p288
      %p291 = scmp.ne.s32.totalorder %s276, %s290
      %p292 = scmp.eq.s32.totalorder %s114, 0
      %p293 = por %p291, %p292
      %s295 = sadd.s32 %s294, 1
      %p298 = scmp.eq.s32.totalorder %s108, 1
      %p299 = scmp.ne.s32.totalorder %s294, %s296
      %p300 = scmp.eq.s32.totalorder %s108, 0
      %p301 = por %p299, %p300
      %p302 = scmp.ne.s32.totalorder %s294, %s296
      %p303 = scmp.eq.s32.totalorder %s113, 1
      %p304 = por %p302, %p303
      %p305 = scmp.ne.s32.totalorder %s296, %s297
      %p306 = scmp.eq.s32.totalorder %s113, 0
      %p307 = por %p305, %p306
      %p308 = scmp.ne.s32.totalorder %s296, %s297
      %p309 = scmp.eq.s32.totalorder %s114, 1
      %p310 = por %p308, %p309
      %p312 = scmp.ne.s32.totalorder %s297, %s311
      %p313 = scmp.eq.s32.totalorder %s114, 0
      %p314 = por %p312, %p313
      %s316 = sadd.s32 %s315, 1
      %p319 = scmp.eq.s32.totalorder %s108, 1
      %p320 = scmp.ne.s32.totalorder %s315, %s317
      %p321 = scmp.eq.s32.totalorder %s108, 0
      %p322 = por %p320, %p321
      %p323 = scmp.ne.s32.totalorder %s315, %s317
      %p324 = scmp.eq.s32.totalorder %s113, 1
      %p325 = por %p323, %p324
      %p326 = scmp.ne.s32.totalorder %s317, %s318
      %p327 = scmp.eq.s32.totalorder %s113, 0
      %p328 = por %p326, %p327
      %p329 = scmp.ne.s32.totalorder %s317, %s318
      %p330 = scmp.eq.s32.totalorder %s114, 1
      %p331 = por %p329, %p330
      %p333 = scmp.ne.s32.totalorder %s318, %s332
      %p334 = scmp.eq.s32.totalorder %s114, 0
      %p335 = por %p333, %p334
      %s337 = sadd.s32 %s336, 1
      %p340 = scmp.eq.s32.totalorder %s108, 1
      %p341 = scmp.ne.s32.totalorder %s336, %s338
      %p342 = scmp.eq.s32.totalorder %s108, 0
      %p343 = por %p341, %p342
      %p344 = scmp.ne.s32.totalorder %s336, %s338
      %p345 = scmp.eq.s32.totalorder %s113, 1
      %p346 = por %p344, %p345
      %p347 = scmp.ne.s32.totalorder %s338, %s339
      %p348 = scmp.eq.s32.totalorder %s113, 0
      %p349 = por %p347, %p348
      %p350 = scmp.ne.s32.totalorder %s338, %s339
      %p351 = scmp.eq.s32.totalorder %s114, 1
      %p352 = por %p350, %p351
      %p354 = scmp.ne.s32.totalorder %s339, %s353
      %p355 = scmp.eq.s32.totalorder %s114, 0
      %p356 = por %p354, %p355
      %s358 = sadd.s32 %s357, 1
      %p361 = scmp.eq.s32.totalorder %s108, 1
      %p362 = scmp.ne.s32.totalorder %s357, %s359
      %p363 = scmp.eq.s32.totalorder %s108, 0
      %p364 = por %p362, %p363
      %p365 = scmp.ne.s32.totalorder %s357, %s359
      %p366 = scmp.eq.s32.totalorder %s113, 1
      %p367 = por %p365, %p366
      %p368 = scmp.ne.s32.totalorder %s359, %s360
      %p369 = scmp.eq.s32.totalorder %s113, 0
      %p370 = por %p368, %p369
      %p371 = scmp.ne.s32.totalorder %s359, %s360
      %p372 = scmp.eq.s32.totalorder %s114, 1
      %p373 = por %p371, %p372
      %p375 = scmp.ne.s32.totalorder %s360, %s374
      %p376 = scmp.eq.s32.totalorder %s114, 0
      %p377 = por %p375, %p376
      %s379 = sadd.s32 %s378, 1
      %p382 = scmp.eq.s32.totalorder %s108, 1
      %p383 = scmp.ne.s32.totalorder %s378, %s380
      %p384 = scmp.eq.s32.totalorder %s108, 0
      %p385 = por %p383, %p384
      %p386 = scmp.ne.s32.totalorder %s378, %s380
      %p387 = scmp.eq.s32.totalorder %s113, 1
      %p388 = por %p386, %p387
      %p389 = scmp.ne.s32.totalorder %s380, %s381
      %p390 = scmp.eq.s32.totalorder %s113, 0
      %p391 = por %p389, %p390
      %p392 = scmp.ne.s32.totalorder %s380, %s381
      %p393 = scmp.eq.s32.totalorder %s114, 1
      %p394 = por %p392, %p393
      %p396 = scmp.ne.s32.totalorder %s381, %s395
      %p397 = scmp.eq.s32.totalorder %s114, 0
      %p398 = por %p396, %p397
      %s400 = sadd.s32 %s399, 1
      %p403 = scmp.eq.s32.totalorder %s108, 1
      %p404 = scmp.ne.s32.totalorder %s399, %s401
      %p405 = scmp.eq.s32.totalorder %s108, 0
      %p406 = por %p404, %p405
      %p407 = scmp.ne.s32.totalorder %s399, %s401
      %p408 = scmp.eq.s32.totalorder %s113, 1
      %p409 = por %p407, %p408
      %p410 = scmp.ne.s32.totalorder %s401, %s402
      %p411 = scmp.eq.s32.totalorder %s113, 0
      %p412 = por %p410, %p411
      %p413 = scmp.ne.s32.totalorder %s401, %s402
      %p414 = scmp.eq.s32.totalorder %s114, 1
      %p415 = por %p413, %p414
      %p417 = scmp.ne.s32.totalorder %s402, %s416
      %p418 = scmp.eq.s32.totalorder %s114, 0
      %p419 = por %p417, %p418
      %s421 = sadd.s32 %s420, 1
      %p424 = scmp.eq.s32.totalorder %s108, 1
      %p425 = scmp.ne.s32.totalorder %s420, %s422
      %p426 = scmp.eq.s32.totalorder %s108, 0
      %p427 = por %p425, %p426
      %p428 = scmp.ne.s32.totalorder %s420, %s422
      %p429 = scmp.eq.s32.totalorder %s113, 1
      %p430 = por %p428, %p429
      %p431 = scmp.ne.s32.totalorder %s422, %s423
      %p432 = scmp.eq.s32.totalorder %s113, 0
      %p433 = por %p431, %p432
      %p434 = scmp.ne.s32.totalorder %s422, %s423
      %p435 = scmp.eq.s32.totalorder %s114, 1
      %p436 = por %p434, %p435
      %p438 = scmp.ne.s32.totalorder %s423, %s437
      %p439 = scmp.eq.s32.totalorder %s114, 0
      %p440 = por %p438, %p439
      %s442 = sadd.s32 %s441, 1
      %p445 = scmp.eq.s32.totalorder %s108, 1
      %p446 = scmp.ne.s32.totalorder %s441, %s443
      %p447 = scmp.eq.s32.totalorder %s108, 0
      %p448 = por %p446, %p447
      %p449 = scmp.ne.s32.totalorder %s441, %s443
      %p450 = scmp.eq.s32.totalorder %s113, 1
      %p451 = por %p449, %p450
      %p452 = scmp.ne.s32.totalorder %s443, %s444
      %p453 = scmp.eq.s32.totalorder %s113, 0
      %p454 = por %p452, %p453
      %p455 = scmp.ne.s32.totalorder %s443, %s444
      %p456 = scmp.eq.s32.totalorder %s114, 1
      %p457 = por %p455, %p456
      %p459 = scmp.ne.s32.totalorder %s444, %s458
      %p460 = scmp.eq.s32.totalorder %s114, 0
      %p461 = por %p459, %p460
      %s463 = sadd.s32 %s462, 1
      %p466 = scmp.eq.s32.totalorder %s108, 1
      %p467 = scmp.ne.s32.totalorder %s462, %s464
      %p468 = scmp.eq.s32.totalorder %s108, 0
      %p469 = por %p467, %p468
      %p470 = scmp.ne.s32.totalorder %s462, %s464
      %p471 = scmp.eq.s32.totalorder %s113, 1
      %p472 = por %p470, %p471
      %p473 = scmp.ne.s32.totalorder %s464, %s465
      %p474 = scmp.eq.s32.totalorder %s113, 0
      %p475 = por %p473, %p474
      %p476 = scmp.ne.s32.totalorder %s464, %s465
      %p477 = scmp.eq.s32.totalorder %s114, 1
      %p478 = por %p476, %p477
      %p480 = scmp.ne.s32.totalorder %s465, %s479
      %p481 = scmp.eq.s32.totalorder %s114, 0
      %p482 = por %p480, %p481
      %s484 = sadd.s32 %s483, 1
      %p487 = scmp.eq.s32.totalorder %s108, 1
      %p488 = scmp.ne.s32.totalorder %s483, %s485
      %p489 = scmp.eq.s32.totalorder %s108, 0
      %p490 = por %p488, %p489
      %p491 = scmp.ne.s32.totalorder %s483, %s485
      %p492 = scmp.eq.s32.totalorder %s113, 1
      %p493 = por %p491, %p492
      %p494 = scmp.ne.s32.totalorder %s485, %s486
      %p495 = scmp.eq.s32.totalorder %s113, 0
      %p496 = por %p494, %p495
      %p497 = scmp.ne.s32.totalorder %s485, %s486
      %p498 = scmp.eq.s32.totalorder %s114, 1
      %p499 = por %p497, %p498
      %p501 = scmp.ne.s32.totalorder %s486, %s500
      %p502 = scmp.eq.s32.totalorder %s114, 0
      %p503 = por %p501, %p502
      %s505 = sadd.s32 %s504, 1
      %p508 = scmp.eq.s32.totalorder %s108, 1
      %p509 = scmp.ne.s32.totalorder %s504, %s506
      %p510 = scmp.eq.s32.totalorder %s108, 0
      %p511 = por %p509, %p510
      %p512 = scmp.ne.s32.totalorder %s504, %s506
      %p513 = scmp.eq.s32.totalorder %s113, 1
      %p514 = por %p512, %p513
      %p515 = scmp.ne.s32.totalorder %s506, %s507
      %p516 = scmp.eq.s32.totalorder %s113, 0
      %p517 = por %p515, %p516
      %p518 = scmp.ne.s32.totalorder %s506, %s507
      %p519 = scmp.eq.s32.totalorder %s114, 1
      %p520 = por %p518, %p519
      %p522 = scmp.ne.s32.totalorder %s507, %s521
      %p523 = scmp.eq.s32.totalorder %s114, 0
      %p524 = por %p522, %p523
      %s526 = sadd.s32 %s525, 1
      %p529 = scmp.eq.s32.totalorder %s108, 1
      %p530 = scmp.ne.s32.totalorder %s525, %s527
      %p531 = scmp.eq.s32.totalorder %s108, 0
      %p532 = por %p530, %p531
      %p533 = scmp.ne.s32.totalorder %s525, %s527
      %p534 = scmp.eq.s32.totalorder %s113, 1
      %p535 = por %p533, %p534
      %p536 = scmp.ne.s32.totalorder %s527, %s528
      %p537 = scmp.eq.s32.totalorder %s113, 0
      %p538 = por %p536, %p537
      %p539 = scmp.ne.s32.totalorder %s527, %s528
      %p540 = scmp.eq.s32.totalorder %s114, 1
      %p541 = por %p539, %p540
      %p543 = scmp.ne.s32.totalorder %s528, %s542
      %p544 = scmp.eq.s32.totalorder %s114, 0
      %p545 = por %p543, %p544
      %s547 = sadd.s32 %s546, 1
      %p550 = scmp.eq.s32.totalorder %s108, 1
      %p551 = scmp.ne.s32.totalorder %s546, %s548
      %p552 = scmp.eq.s32.totalorder %s108, 0
      %p553 = por %p551, %p552
      %p554 = scmp.ne.s32.totalorder %s546, %s548
      %p555 = scmp.eq.s32.totalorder %s113, 1
      %p556 = por %p554, %p555
      %p557 = scmp.ne.s32.totalorder %s548, %s549
      %p558 = scmp.eq.s32.totalorder %s113, 0
      %p559 = por %p557, %p558
      %p560 = scmp.ne.s32.totalorder %s548, %s549
      %p561 = scmp.eq.s32.totalorder %s114, 1
      %p562 = por %p560, %p561
      %p564 = scmp.ne.s32.totalorder %s549, %s563
      %p565 = scmp.eq.s32.totalorder %s114, 0
      %p566 = por %p564, %p565
      %s568 = sadd.s32 %s567, 1
      %p571 = scmp.eq.s32.totalorder %s108, 1
      %p572 = scmp.ne.s32.totalorder %s567, %s569
      %p573 = scmp.eq.s32.totalorder %s108, 0
      %p574 = por %p572, %p573
      %p575 = scmp.ne.s32.totalorder %s567, %s569
      %p576 = scmp.eq.s32.totalorder %s113, 1
      %p577 = por %p575, %p576
      %p578 = scmp.ne.s32.totalorder %s569, %s570
      %p579 = scmp.eq.s32.totalorder %s113, 0
      %p580 = por %p578, %p579
      %p581 = scmp.ne.s32.totalorder %s569, %s570
      %p582 = scmp.eq.s32.totalorder %s114, 1
      %p583 = por %p581, %p582
      %p585 = scmp.ne.s32.totalorder %s570, %s584
      %p586 = scmp.eq.s32.totalorder %s114, 0
      %p587 = por %p585, %p586
      %s589 = sadd.s32 %s588, 1
      %p592 = scmp.eq.s32.totalorder %s108, 1
      %p593 = scmp.ne.s32.totalorder %s588, %s590
      %p594 = scmp.eq.s32.totalorder %s108, 0
      %p595 = por %p593, %p594
      %p596 = scmp.ne.s32.totalorder %s588, %s590
      %p597 = scmp.eq.s32.totalorder %s113, 1
      %p598 = por %p596, %p597
      %p599 = scmp.ne.s32.totalorder %s590, %s591
      %p600 = scmp.eq.s32.totalorder %s113, 0
      %p601 = por %p599, %p600
      %p602 = scmp.ne.s32.totalorder %s590, %s591
      %p603 = scmp.eq.s32.totalorder %s114, 1
      %p604 = por %p602, %p603
      %p606 = scmp.ne.s32.totalorder %s591, %s605
      %p607 = scmp.eq.s32.totalorder %s114, 0
      %p608 = por %p606, %p607
      %s610 = sadd.s32 %s609, 1
      %p613 = scmp.eq.s32.totalorder %s108, 1
      %p614 = scmp.ne.s32.totalorder %s609, %s611
      %p615 = scmp.eq.s32.totalorder %s108, 0
      %p616 = por %p614, %p615
      %p617 = scmp.ne.s32.totalorder %s609, %s611
      %p618 = scmp.eq.s32.totalorder %s113, 1
      %p619 = por %p617, %p618
      %p620 = scmp.ne.s32.totalorder %s611, %s612
      %p621 = scmp.eq.s32.totalorder %s113, 0
      %p622 = por %p620, %p621
      %p623 = scmp.ne.s32.totalorder %s611, %s612
      %p624 = scmp.eq.s32.totalorder %s114, 1
      %p625 = por %p623, %p624
      %p627 = scmp.ne.s32.totalorder %s612, %s626
      %p628 = scmp.eq.s32.totalorder %s114, 0
      %p629 = por %p627, %p628
      %s631 = sadd.s32 %s630, 1
      %p634 = scmp.eq.s32.totalorder %s108, 1
      %p635 = scmp.ne.s32.totalorder %s630, %s632
      %p636 = scmp.eq.s32.totalorder %s108, 0
      %p637 = por %p635, %p636
      %p638 = scmp.ne.s32.totalorder %s630, %s632
      %p639 = scmp.eq.s32.totalorder %s113, 1
      %p640 = por %p638, %p639
      %p641 = scmp.ne.s32.totalorder %s632, %s633
      %p642 = scmp.eq.s32.totalorder %s113, 0
      %p643 = por %p641, %p642
      %p644 = scmp.ne.s32.totalorder %s632, %s633
      %p645 = scmp.eq.s32.totalorder %s114, 1
      %p646 = por %p644, %p645
      %p648 = scmp.ne.s32.totalorder %s633, %s647
      %p649 = scmp.eq.s32.totalorder %s114, 0
      %p650 = por %p648, %p649
      %s652 = sadd.s32 %s651, 1
      %p655 = scmp.eq.s32.totalorder %s108, 1
      %p656 = scmp.ne.s32.totalorder %s651, %s653
      %p657 = scmp.eq.s32.totalorder %s108, 0
      %p658 = por %p656, %p657
      %p659 = scmp.ne.s32.totalorder %s651, %s653
      %p660 = scmp.eq.s32.totalorder %s113, 1
      %p661 = por %p659, %p660
      %p662 = scmp.ne.s32.totalorder %s653, %s654
      %p663 = scmp.eq.s32.totalorder %s113, 0
      %p664 = por %p662, %p663
      %p665 = scmp.ne.s32.totalorder %s653, %s654
      %p666 = scmp.eq.s32.totalorder %s114, 1
      %p667 = por %p665, %p666
      %p669 = scmp.ne.s32.totalorder %s654, %s668
      %p670 = scmp.eq.s32.totalorder %s114, 0
      %p671 = por %p669, %p670
      %s673 = sadd.s32 %s672, 1
      %p676 = scmp.eq.s32.totalorder %s108, 1
      %p677 = scmp.ne.s32.totalorder %s672, %s674
      %p678 = scmp.eq.s32.totalorder %s108, 0
      %p679 = por %p677, %p678
      %p680 = scmp.ne.s32.totalorder %s672, %s674
      %p681 = scmp.eq.s32.totalorder %s113, 1
      %p682 = por %p680, %p681
      %p683 = scmp.ne.s32.totalorder %s674, %s675
      %p684 = scmp.eq.s32.totalorder %s113, 0
      %p685 = por %p683, %p684
      %p686 = scmp.ne.s32.totalorder %s674, %s675
      %p687 = scmp.eq.s32.totalorder %s114, 1
      %p688 = por %p686, %p687
      %p690 = scmp.ne.s32.totalorder %s675, %s689
      %p691 = scmp.eq.s32.totalorder %s114, 0
      %p692 = por %p690, %p691
      %s694 = sadd.s32 %s693, 1
      %p697 = scmp.eq.s32.totalorder %s108, 1
      %p698 = scmp.ne.s32.totalorder %s693, %s695
      %p699 = scmp.eq.s32.totalorder %s108, 0
      %p700 = por %p698, %p699
      %p701 = scmp.ne.s32.totalorder %s693, %s695
      %p702 = scmp.eq.s32.totalorder %s113, 1
      %p703 = por %p701, %p702
      %p704 = scmp.ne.s32.totalorder %s695, %s696
      %p705 = scmp.eq.s32.totalorder %s113, 0
      %p706 = por %p704, %p705
      %p707 = scmp.ne.s32.totalorder %s695, %s696
      %p708 = scmp.eq.s32.totalorder %s114, 1
      %p709 = por %p707, %p708
      %p711 = scmp.ne.s32.totalorder %s696, %s710
      %p712 = scmp.eq.s32.totalorder %s114, 0
      %p713 = por %p711, %p712
      %s715 = sadd.s32 %s714, 1
      %p718 = scmp.eq.s32.totalorder %s108, 1
      %p719 = scmp.ne.s32.totalorder %s714, %s716
      %p720 = scmp.eq.s32.totalorder %s108, 0
      %p721 = por %p719, %p720
      %p722 = scmp.ne.s32.totalorder %s714, %s716
      %p723 = scmp.eq.s32.totalorder %s113, 1
      %p724 = por %p722, %p723
      %p725 = scmp.ne.s32.totalorder %s716, %s717
      %p726 = scmp.eq.s32.totalorder %s113, 0
      %p727 = por %p725, %p726
      %p728 = scmp.ne.s32.totalorder %s716, %s717
      %p729 = scmp.eq.s32.totalorder %s114, 1
      %p730 = por %p728, %p729
      %p732 = scmp.ne.s32.totalorder %s717, %s731
      %p733 = scmp.eq.s32.totalorder %s114, 0
      %p734 = por %p732, %p733
      %s736 = sadd.s32 %s735, 1
      %p739 = scmp.eq.s32.totalorder %s108, 1
      %p740 = scmp.ne.s32.totalorder %s735, %s737
      %p741 = scmp.eq.s32.totalorder %s108, 0
      %p742 = por %p740, %p741
      %p743 = scmp.ne.s32.totalorder %s735, %s737
      %p744 = scmp.eq.s32.totalorder %s113, 1
      %p745 = por %p743, %p744
      %p746 = scmp.ne.s32.totalorder %s737, %s738
      %p747 = scmp.eq.s32.totalorder %s113, 0
      %p748 = por %p746, %p747
      %p749 = scmp.ne.s32.totalorder %s737, %s738
      %p750 = scmp.eq.s32.totalorder %s114, 1
      %p751 = por %p749, %p750
      %p753 = scmp.ne.s32.totalorder %s738, %s752
      %p754 = scmp.eq.s32.totalorder %s114, 0
      %p755 = por %p753, %p754
      %s757 = sadd.s32 %s756, 1
      %p760 = scmp.eq.s32.totalorder %s108, 1
      %p761 = scmp.ne.s32.totalorder %s756, %s758
      %p762 = scmp.eq.s32.totalorder %s108, 0
      %p763 = por %p761, %p762
      %p764 = scmp.ne.s32.totalorder %s756, %s758
      %p765 = scmp.eq.s32.totalorder %s113, 1
      %p766 = por %p764, %p765
      %p767 = scmp.ne.s32.totalorder %s758, %s759
      %p768 = scmp.eq.s32.totalorder %s113, 0
      %p769 = por %p767, %p768
      %p770 = scmp.ne.s32.totalorder %s758, %s759
      %p771 = scmp.eq.s32.totalorder %s114, 1
      %p772 = por %p770, %p771
      %p774 = scmp.ne.s32.totalorder %s759, %s773
      %p775 = scmp.eq.s32.totalorder %s114, 0
      %p776 = por %p774, %p775
      %s778 = sadd.s32 %s777, 1
      %p781 = scmp.eq.s32.totalorder %s108, 1
      %p782 = scmp.ne.s32.totalorder %s777, %s779
      %p783 = scmp.eq.s32.totalorder %s108, 0
      %p784 = por %p782, %p783
      %p785 = scmp.ne.s32.totalorder %s777, %s779
      %p786 = scmp.eq.s32.totalorder %s113, 1
      %p787 = por %p785, %p786
      %p788 = scmp.ne.s32.totalorder %s779, %s780
      %p789 = scmp.eq.s32.totalorder %s113, 0
      %p790 = por %p788, %p789
      %p791 = scmp.ne.s32.totalorder %s779, %s780
      %p792 = scmp.eq.s32.totalorder %s114, 1
      %p793 = por %p791, %p792
      %p795 = scmp.ne.s32.totalorder %s780, %s794
      %p796 = scmp.eq.s32.totalorder %s114, 0
      %p797 = por %p795, %p796
      %s799 = sadd.s32 %s798, 1
      %p802 = scmp.eq.s32.totalorder %s108, 1
      %p803 = scmp.ne.s32.totalorder %s798, %s800
      %p804 = scmp.eq.s32.totalorder %s108, 0
      %p805 = por %p803, %p804
      %p806 = scmp.ne.s32.totalorder %s798, %s800
      %p807 = scmp.eq.s32.totalorder %s113, 1
      %p808 = por %p806, %p807
      %p809 = scmp.ne.s32.totalorder %s800, %s801
      %p810 = scmp.eq.s32.totalorder %s113, 0
      %p811 = por %p809, %p810
      %p812 = scmp.ne.s32.totalorder %s800, %s801
      %p813 = scmp.eq.s32.totalorder %s114, 1
      %p814 = por %p812, %p813
      %p816 = scmp.ne.s32.totalorder %s801, %s815
      %p817 = scmp.eq.s32.totalorder %s114, 0
      %p818 = por %p816, %p817
      %s820 = sadd.s32 %s819, 1
      %p823 = scmp.eq.s32.totalorder %s108, 1
      %p824 = scmp.ne.s32.totalorder %s819, %s821
      %p825 = scmp.eq.s32.totalorder %s108, 0
      %p826 = por %p824, %p825
      %p827 = scmp.ne.s32.totalorder %s819, %s821
      %p828 = scmp.eq.s32.totalorder %s113, 1
      %p829 = por %p827, %p828
      %p830 = scmp.ne.s32.totalorder %s821, %s822
      %p831 = scmp.eq.s32.totalorder %s113, 0
      %p832 = por %p830, %p831
      %p833 = scmp.ne.s32.totalorder %s821, %s822
      %p834 = scmp.eq.s32.totalorder %s114, 1
      %p835 = por %p833, %p834
      %p837 = scmp.ne.s32.totalorder %s822, %s836
      %p838 = scmp.eq.s32.totalorder %s114, 0
      %p839 = por %p837, %p838
      %s841 = sadd.s32 %s840, 1
      %p844 = scmp.eq.s32.totalorder %s108, 1
      %p845 = scmp.ne.s32.totalorder %s840, %s842
      %p846 = scmp.eq.s32.totalorder %s108, 0
      %p847 = por %p845, %p846
      %p848 = scmp.ne.s32.totalorder %s840, %s842
      %p849 = scmp.eq.s32.totalorder %s113, 1
      %p850 = por %p848, %p849
      %p851 = scmp.ne.s32.totalorder %s842, %s843
      %p852 = scmp.eq.s32.totalorder %s113, 0
      %p853 = por %p851, %p852
      %p854 = scmp.ne.s32.totalorder %s842, %s843
      %p855 = scmp.eq.s32.totalorder %s114, 1
      %p856 = por %p854, %p855
      %p858 = scmp.ne.s32.totalorder %s843, %s857
      %p859 = scmp.eq.s32.totalorder %s114, 0
      %p860 = por %p858, %p859
      %s862 = sadd.s32 %s861, 1
      %p865 = scmp.eq.s32.totalorder %s108, 1
      %p866 = scmp.ne.s32.totalorder %s861, %s863
      %p867 = scmp.eq.s32.totalorder %s108, 0
      %p868 = por %p866, %p867
      %p869 = scmp.ne.s32.totalorder %s861, %s863
      %p870 = scmp.eq.s32.totalorder %s113, 1
      %p871 = por %p869, %p870
      %p872 = scmp.ne.s32.totalorder %s863, %s864
      %p873 = scmp.eq.s32.totalorder %s113, 0
      %p874 = por %p872, %p873
      %p875 = scmp.ne.s32.totalorder %s863, %s864
      %p876 = scmp.eq.s32.totalorder %s114, 1
      %p877 = por %p875, %p876
      %p879 = scmp.ne.s32.totalorder %s864, %s878
      %p880 = scmp.eq.s32.totalorder %s114, 0
      %p881 = por %p879, %p880
      %s883 = sadd.s32 %s882, 1
      %p886 = scmp.eq.s32.totalorder %s108, 1
      %p887 = scmp.ne.s32.totalorder %s882, %s884
      %p888 = scmp.eq.s32.totalorder %s108, 0
      %p889 = por %p887, %p888
      %p890 = scmp.ne.s32.totalorder %s882, %s884
      %p891 = scmp.eq.s32.totalorder %s113, 1
      %p892 = por %p890, %p891
      %p893 = scmp.ne.s32.totalorder %s884, %s885
      %p894 = scmp.eq.s32.totalorder %s113, 0
      %p895 = por %p893, %p894
      %p896 = scmp.ne.s32.totalorder %s884, %s885
      %p897 = scmp.eq.s32.totalorder %s114, 1
      %p898 = por %p896, %p897
      %p900 = scmp.ne.s32.totalorder %s885, %s899
      %p901 = scmp.eq.s32.totalorder %s114, 0
      %p902 = por %p900, %p901
      %s904 = sadd.s32 %s903, 1
      %p907 = scmp.eq.s32.totalorder %s108, 1
      %p908 = scmp.ne.s32.totalorder %s903, %s905
      %p909 = scmp.eq.s32.totalorder %s108, 0
      %p910 = por %p908, %p909
      %p911 = scmp.ne.s32.totalorder %s903, %s905
      %p912 = scmp.eq.s32.totalorder %s113, 1
      %p913 = por %p911, %p912
      %p914 = scmp.ne.s32.totalorder %s905, %s906
      %p915 = scmp.eq.s32.totalorder %s113, 0
      %p916 = por %p914, %p915
      %p917 = scmp.ne.s32.totalorder %s905, %s906
      %p918 = scmp.eq.s32.totalorder %s114, 1
      %p919 = por %p917, %p918
      %p921 = scmp.ne.s32.totalorder %s906, %s920
      %p922 = scmp.eq.s32.totalorder %s114, 0
      %p923 = por %p921, %p922
      %s924 = ssub.s32 %s108, %s115
      %p925 = scmp.eq.s32.totalorder %s924, 0
      %s927 = sadd.s32 %s926, 1
      %s928 = scalar_select %p925, %s926, %s927
      %p931 = pneg %p925
      %p932 = scmp.eq.s32.totalorder %s108, 1
      %p933 = por %p931, %p932
      %p934 = scmp.ne.s32.totalorder %s926, %s929
      %p935 = scmp.eq.s32.totalorder %s108, 0
      %p936 = por %p934, %p935
      %p937 = scmp.ne.s32.totalorder %s926, %s929
      %p938 = scmp.eq.s32.totalorder %s113, 1
      %p939 = por %p937, %p938
      %p940 = scmp.ne.s32.totalorder %s929, %s930
      %p941 = scmp.eq.s32.totalorder %s113, 0
      %p942 = por %p940, %p941
      %p943 = scmp.ne.s32.totalorder %s929, %s930
      %p944 = scmp.eq.s32.totalorder %s114, 1
      %p945 = por %p943, %p944
      %p947 = scmp.ne.s32.totalorder %s930, %s946
      %p948 = scmp.eq.s32.totalorder %s114, 0
      %p949 = por %p947, %p948
      %s950 = ssub.s32 %s108, %s115
      %p951 = scmp.eq.s32.totalorder %s950, 0
      %s953 = sadd.s32 %s952, 1
      %s954 = scalar_select %p951, %s952, %s953
      %p957 = pneg %p951
      %p958 = scmp.eq.s32.totalorder %s108, 1
      %p959 = por %p957, %p958
      %p960 = scmp.ne.s32.totalorder %s952, %s955
      %p961 = scmp.eq.s32.totalorder %s108, 0
      %p962 = por %p960, %p961
      %p963 = scmp.ne.s32.totalorder %s952, %s955
      %p964 = scmp.eq.s32.totalorder %s113, 1
      %p965 = por %p963, %p964
      %p966 = scmp.ne.s32.totalorder %s955, %s956
      %p967 = scmp.eq.s32.totalorder %s113, 0
      %p968 = por %p966, %p967
      %p969 = scmp.ne.s32.totalorder %s955, %s956
      %p970 = scmp.eq.s32.totalorder %s114, 1
      %p971 = por %p969, %p970
      %p973 = scmp.ne.s32.totalorder %s956, %s972
      %p974 = scmp.eq.s32.totalorder %s114, 0
      %p975 = por %p973, %p974
      %s976 = ssub.s32 %s108, %s115
      %p977 = scmp.eq.s32.totalorder %s976, 0
      %s979 = sadd.s32 %s978, 1
      %s980 = scalar_select %p977, %s978, %s979
      %p983 = pneg %p977
      %p984 = scmp.eq.s32.totalorder %s108, 1
      %p985 = por %p983, %p984
      %p986 = scmp.ne.s32.totalorder %s978, %s981
      %p987 = scmp.eq.s32.totalorder %s108, 0
      %p988 = por %p986, %p987
      %p989 = scmp.ne.s32.totalorder %s978, %s981
      %p990 = scmp.eq.s32.totalorder %s113, 1
      %p991 = por %p989, %p990
      %p992 = scmp.ne.s32.totalorder %s981, %s982
      %p993 = scmp.eq.s32.totalorder %s113, 0
      %p994 = por %p992, %p993
      %p995 = scmp.ne.s32.totalorder %s981, %s982
      %p996 = scmp.eq.s32.totalorder %s114, 1
      %p997 = por %p995, %p996
      %p999 = scmp.ne.s32.totalorder %s982, %s998
      %p1000 = scmp.eq.s32.totalorder %s114, 0
      %p1001 = por %p999, %p1000
      %s1002 = ssub.s32 %s108, %s115
      %p1003 = scmp.eq.s32.totalorder %s1002, 0
      %s1005 = sadd.s32 %s1004, 1
      %s1006 = scalar_select %p1003, %s1004, %s1005
      %p1009 = pneg %p1003
      %p1010 = scmp.eq.s32.totalorder %s108, 1
      %p1011 = por %p1009, %p1010
      %p1012 = scmp.ne.s32.totalorder %s1004, %s1007
      %p1013 = scmp.eq.s32.totalorder %s108, 0
      %p1014 = por %p1012, %p1013
      %p1015 = scmp.ne.s32.totalorder %s1004, %s1007
      %p1016 = scmp.eq.s32.totalorder %s113, 1
      %p1017 = por %p1015, %p1016
      %p1018 = scmp.ne.s32.totalorder %s1007, %s1008
      %p1019 = scmp.eq.s32.totalorder %s113, 0
      %p1020 = por %p1018, %p1019
      %p1021 = scmp.ne.s32.totalorder %s1007, %s1008
      %p1022 = scmp.eq.s32.totalorder %s114, 1
      %p1023 = por %p1021, %p1022
      %p1025 = scmp.ne.s32.totalorder %s1008, %s1024
      %p1026 = scmp.eq.s32.totalorder %s114, 0
      %p1027 = por %p1025, %p1026
      %s1028 = ssub.s32 %s108, %s115
      %p1029 = scmp.eq.s32.totalorder %s1028, 0
      %s1031 = sadd.s32 %s1030, 1
      %s1032 = scalar_select %p1029, %s1030, %s1031
      %p1035 = pneg %p1029
      %p1036 = scmp.eq.s32.totalorder %s108, 1
      %p1037 = por %p1035, %p1036
      %p1038 = scmp.ne.s32.totalorder %s1030, %s1033
      %p1039 = scmp.eq.s32.totalorder %s108, 0
      %p1040 = por %p1038, %p1039
      %p1041 = scmp.ne.s32.totalorder %s1030, %s1033
      %p1042 = scmp.eq.s32.totalorder %s113, 1
      %p1043 = por %p1041, %p1042
      %p1044 = scmp.ne.s32.totalorder %s1033, %s1034
      %p1045 = scmp.eq.s32.totalorder %s113, 0
      %p1046 = por %p1044, %p1045
      %p1047 = scmp.ne.s32.totalorder %s1033, %s1034
      %p1048 = scmp.eq.s32.totalorder %s114, 1
      %p1049 = por %p1047, %p1048
      %p1051 = scmp.ne.s32.totalorder %s1034, %s1050
      %p1052 = scmp.eq.s32.totalorder %s114, 0
      %p1053 = por %p1051, %p1052
      %p1054 = scmp.le.s32.totalorder 1, %s108
      %p1055 = scmp.lt.s32.totalorder %s108, 3
      %p1056 = pnand %p1054, %p1055
      %p1057 = pneg %p1056
      // Predicated region
      $region9: #{variance_adaptor_forward.1} parent=5 // pred_check
        _
      $region10: #{variance_adaptor_forward.1} parent=5 // pred_check_branch
        %1059 = sbr.rel (%p1056) target = $region12
      $region11: #{variance_adaptor_forward.1} parent=5 // pred_region
        %s1060 = ssub.s32 %s108, 1
        // Predicated region
        $region13: #{variance_adaptor_forward.1} parent=11 // pred_check
          %p1061 = pneg %p181
        $region14: #{variance_adaptor_forward.1} parent=11 // pred_check_branch
          %1063 = sbr.rel (%p1061) target = $region16
        $region15: #{variance_adaptor_forward.1} parent=11 // pred_region
          _
        $region16: #{variance_adaptor_forward.1} parent=11 // pred_fallthru
          _
        // Predicated region
        $region17: #{variance_adaptor_forward.1} parent=11 // pred_check
          %p1064 = pneg %p202
        $region18: #{variance_adaptor_forward.1} parent=11 // pred_check_branch
          %1066 = sbr.rel (%p1064) target = $region20
        $region19: #{variance_adaptor_forward.1} parent=11 // pred_region
          _
        $region20: #{variance_adaptor_forward.1} parent=11 // pred_fallthru
          _
        // Predicated region
        $region21: #{variance_adaptor_forward.1} parent=11 // pred_check
          %p1067 = pneg %p223
        $region22: #{variance_adaptor_forward.1} parent=11 // pred_check_branch
          %1069 = sbr.rel (%p1067) target = $region24
        $region23: #{variance_adaptor_forward.1} parent=11 // pred_region
          _
        $region24: #{variance_adaptor_forward.1} parent=11 // pred_fallthru
          _
        // Predicated region
        $region25: #{variance_adaptor_forward.1} parent=11 // pred_check
          %p1070 = pneg %p244
        $region26: #{variance_adaptor_forward.1} parent=11 // pred_check_branch
          %1072 = sbr.rel (%p1070) target = $region28
        $region27: #{variance_adaptor_forward.1} parent=11 // pred_region
          _
        $region28: #{variance_adaptor_forward.1} parent=11 // pred_fallthru
          _
        // Predicated region
        $region29: #{variance_adaptor_forward.1} parent=11 // pred_check
          %p1073 = pneg %p265
        $region30: #{variance_adaptor_forward.1} parent=11 // pred_check_branch
          %1075 = sbr.rel (%p1073) target = $region32
        $region31: #{variance_adaptor_forward.1} parent=11 // pred_region
          _
        $region32: #{variance_adaptor_forward.1} parent=11 // pred_fallthru
          _
        // Predicated region
        $region33: #{variance_adaptor_forward.1} parent=11 // pred_check
          %p1076 = pneg %p286
        $region34: #{variance_adaptor_forward.1} parent=11 // pred_check_branch
          %1078 = sbr.rel (%p1076) target = $region36
        $region35: #{variance_adaptor_forward.1} parent=11 // pred_region
          _
        $region36: #{variance_adaptor_forward.1} parent=11 // pred_fallthru
          _
        // Predicated region
        $region37: #{variance_adaptor_forward.1} parent=11 // pred_check
          %p1079 = pneg %p307
        $region38: #{variance_adaptor_forward.1} parent=11 // pred_check_branch
          %1081 = sbr.rel (%p1079) target = $region40
        $region39: #{variance_adaptor_forward.1} parent=11 // pred_region
          _
        $region40: #{variance_adaptor_forward.1} parent=11 // pred_fallthru
          _
        // Predicated region
        $region41: #{variance_adaptor_forward.1} parent=11 // pred_check
          %p1082 = pneg %p328
        $region42: #{variance_adaptor_forward.1} parent=11 // pred_check_branch
          %1084 = sbr.rel (%p1082) target = $region44
        $region43: #{variance_adaptor_forward.1} parent=11 // pred_region
          _
        $region44: #{variance_adaptor_forward.1} parent=11 // pred_fallthru
          _
        // Predicated region
        $region45: #{variance_adaptor_forward.1} parent=11 // pred_check
          %p1085 = pneg %p349
        $region46: #{variance_adaptor_forward.1} parent=11 // pred_check_branch
          %1087 = sbr.rel (%p1085) target = $region48
        $region47: #{variance_adaptor_forward.1} parent=11 // pred_region
          _
        $region48: #{variance_adaptor_forward.1} parent=11 // pred_fallthru
          _
        // Predicated region
        $region49: #{variance_adaptor_forward.1} parent=11 // pred_check
          %p1088 = pneg %p370
        $region50: #{variance_adaptor_forward.1} parent=11 // pred_check_branch
          %1090 = sbr.rel (%p1088) target = $region52
        $region51: #{variance_adaptor_forward.1} parent=11 // pred_region
          _
        $region52: #{variance_adaptor_forward.1} parent=11 // pred_fallthru
          _
        // Predicated region
        $region53: #{variance_adaptor_forward.1} parent=11 // pred_check
          %p1091 = pneg %p391
        $region54: #{variance_adaptor_forward.1} parent=11 // pred_check_branch
          %1093 = sbr.rel (%p1091) target = $region56
        $region55: #{variance_adaptor_forward.1} parent=11 // pred_region
          _
        $region56: #{variance_adaptor_forward.1} parent=11 // pred_fallthru
          _
        // Predicated region
        $region57: #{variance_adaptor_forward.1} parent=11 // pred_check
          %p1094 = pneg %p412
        $region58: #{variance_adaptor_forward.1} parent=11 // pred_check_branch
          %1096 = sbr.rel (%p1094) target = $region60
        $region59: #{variance_adaptor_forward.1} parent=11 // pred_region
          _
        $region60: #{variance_adaptor_forward.1} parent=11 // pred_fallthru
          _
        // Predicated region
        $region61: #{variance_adaptor_forward.1} parent=11 // pred_check
          %p1097 = pneg %p433
        $region62: #{variance_adaptor_forward.1} parent=11 // pred_check_branch
          %1099 = sbr.rel (%p1097) target = $region64
        $region63: #{variance_adaptor_forward.1} parent=11 // pred_region
          _
        $region64: #{variance_adaptor_forward.1} parent=11 // pred_fallthru
          _
        // Predicated region
        $region65: #{variance_adaptor_forward.1} parent=11 // pred_check
          %p1100 = pneg %p454
        $region66: #{variance_adaptor_forward.1} parent=11 // pred_check_branch
          %1102 = sbr.rel (%p1100) target = $region68
        $region67: #{variance_adaptor_forward.1} parent=11 // pred_region
          _
        $region68: #{variance_adaptor_forward.1} parent=11 // pred_fallthru
          _
        // Predicated region
        $region69: #{variance_adaptor_forward.1} parent=11 // pred_check
          %p1103 = pneg %p475
        $region70: #{variance_adaptor_forward.1} parent=11 // pred_check_branch
          %1105 = sbr.rel (%p1103) target = $region72
        $region71: #{variance_adaptor_forward.1} parent=11 // pred_region
          _
        $region72: #{variance_adaptor_forward.1} parent=11 // pred_fallthru
          _
        // Predicated region
        $region73: #{variance_adaptor_forward.1} parent=11 // pred_check
          %p1106 = pneg %p496
        $region74: #{variance_adaptor_forward.1} parent=11 // pred_check_branch
          %1108 = sbr.rel (%p1106) target = $region76
        $region75: #{variance_adaptor_forward.1} parent=11 // pred_region
          _
        $region76: #{variance_adaptor_forward.1} parent=11 // pred_fallthru
          _
        // Predicated region
        $region77: #{variance_adaptor_forward.1} parent=11 // pred_check
          %p1109 = pneg %p517
        $region78: #{variance_adaptor_forward.1} parent=11 // pred_check_branch
          %1111 = sbr.rel (%p1109) target = $region80
        $region79: #{variance_adaptor_forward.1} parent=11 // pred_region
          _
        $region80: #{variance_adaptor_forward.1} parent=11 // pred_fallthru
          _
        // Predicated region
        $region81: #{variance_adaptor_forward.1} parent=11 // pred_check
          %p1112 = pneg %p538
        $region82: #{variance_adaptor_forward.1} parent=11 // pred_check_branch
          %1114 = sbr.rel (%p1112) target = $region84
        $region83: #{variance_adaptor_forward.1} parent=11 // pred_region
          _
        $region84: #{variance_adaptor_forward.1} parent=11 // pred_fallthru
          _
        // Predicated region
        $region85: #{variance_adaptor_forward.1} parent=11 // pred_check
          %p1115 = pneg %p559
        $region86: #{variance_adaptor_forward.1} parent=11 // pred_check_branch
          %1117 = sbr.rel (%p1115) target = $region88
        $region87: #{variance_adaptor_forward.1} parent=11 // pred_region
          _
        $region88: #{variance_adaptor_forward.1} parent=11 // pred_fallthru
          _
        // Predicated region
        $region89: #{variance_adaptor_forward.1} parent=11 // pred_check
          %p1118 = pneg %p580
        $region90: #{variance_adaptor_forward.1} parent=11 // pred_check_branch
          %1120 = sbr.rel (%p1118) target = $region92
        $region91: #{variance_adaptor_forward.1} parent=11 // pred_region
          _
        $region92: #{variance_adaptor_forward.1} parent=11 // pred_fallthru
          _
        // Predicated region
        $region93: #{variance_adaptor_forward.1} parent=11 // pred_check
          %p1121 = pneg %p601
        $region94: #{variance_adaptor_forward.1} parent=11 // pred_check_branch
          %1123 = sbr.rel (%p1121) target = $region96
        $region95: #{variance_adaptor_forward.1} parent=11 // pred_region
          _
        $region96: #{variance_adaptor_forward.1} parent=11 // pred_fallthru
          _
        // Predicated region
        $region97: #{variance_adaptor_forward.1} parent=11 // pred_check
          %p1124 = pneg %p622
        $region98: #{variance_adaptor_forward.1} parent=11 // pred_check_branch
          %1126 = sbr.rel (%p1124) target = $region100
        $region99: #{variance_adaptor_forward.1} parent=11 // pred_region
          _
        $region100: #{variance_adaptor_forward.1} parent=11 // pred_fallthru
          _
        // Predicated region
        $region101: #{variance_adaptor_forward.1} parent=11 // pred_check
          %p1127 = pneg %p643
        $region102: #{variance_adaptor_forward.1} parent=11 // pred_check_branch
          %1129 = sbr.rel (%p1127) target = $region104
        $region103: #{variance_adaptor_forward.1} parent=11 // pred_region
          _
        $region104: #{variance_adaptor_forward.1} parent=11 // pred_fallthru
          _
        // Predicated region
        $region105: #{variance_adaptor_forward.1} parent=11 // pred_check
          %p1130 = pneg %p664
        $region106: #{variance_adaptor_forward.1} parent=11 // pred_check_branch
          %1132 = sbr.rel (%p1130) target = $region108
        $region107: #{variance_adaptor_forward.1} parent=11 // pred_region
          _
        $region108: #{variance_adaptor_forward.1} parent=11 // pred_fallthru
          _
        // Predicated region
        $region109: #{variance_adaptor_forward.1} parent=11 // pred_check
          %p1133 = pneg %p685
        $region110: #{variance_adaptor_forward.1} parent=11 // pred_check_branch
          %1135 = sbr.rel (%p1133) target = $region112
        $region111: #{variance_adaptor_forward.1} parent=11 // pred_region
          _
        $region112: #{variance_adaptor_forward.1} parent=11 // pred_fallthru
          _
        // Predicated region
        $region113: #{variance_adaptor_forward.1} parent=11 // pred_check
          %p1136 = pneg %p706
        $region114: #{variance_adaptor_forward.1} parent=11 // pred_check_branch
          %1138 = sbr.rel (%p1136) target = $region116
        $region115: #{variance_adaptor_forward.1} parent=11 // pred_region
          _
        $region116: #{variance_adaptor_forward.1} parent=11 // pred_fallthru
          _
        // Predicated region
        $region117: #{variance_adaptor_forward.1} parent=11 // pred_check
          %p1139 = pneg %p727
        $region118: #{variance_adaptor_forward.1} parent=11 // pred_check_branch
          %1141 = sbr.rel (%p1139) target = $region120
        $region119: #{variance_adaptor_forward.1} parent=11 // pred_region
          _
        $region120: #{variance_adaptor_forward.1} parent=11 // pred_fallthru
          _
        // Predicated region
        $region121: #{variance_adaptor_forward.1} parent=11 // pred_check
          %p1142 = pneg %p748
        $region122: #{variance_adaptor_forward.1} parent=11 // pred_check_branch
          %1144 = sbr.rel (%p1142) target = $region124
        $region123: #{variance_adaptor_forward.1} parent=11 // pred_region
          _
        $region124: #{variance_adaptor_forward.1} parent=11 // pred_fallthru
          _
        // Predicated region
        $region125: #{variance_adaptor_forward.1} parent=11 // pred_check
          %p1145 = pneg %p769
        $region126: #{variance_adaptor_forward.1} parent=11 // pred_check_branch
          %1147 = sbr.rel (%p1145) target = $region128
        $region127: #{variance_adaptor_forward.1} parent=11 // pred_region
          _
        $region128: #{variance_adaptor_forward.1} parent=11 // pred_fallthru
          _
        // Predicated region
        $region129: #{variance_adaptor_forward.1} parent=11 // pred_check
          %p1148 = pneg %p790
        $region130: #{variance_adaptor_forward.1} parent=11 // pred_check_branch
          %1150 = sbr.rel (%p1148) target = $region132
        $region131: #{variance_adaptor_forward.1} parent=11 // pred_region
          _
        $region132: #{variance_adaptor_forward.1} parent=11 // pred_fallthru
          _
        // Predicated region
        $region133: #{variance_adaptor_forward.1} parent=11 // pred_check
          %p1151 = pneg %p811
        $region134: #{variance_adaptor_forward.1} parent=11 // pred_check_branch
          %1153 = sbr.rel (%p1151) target = $region136
        $region135: #{variance_adaptor_forward.1} parent=11 // pred_region
          _
        $region136: #{variance_adaptor_forward.1} parent=11 // pred_fallthru
          _
        // Predicated region
        $region137: #{variance_adaptor_forward.1} parent=11 // pred_check
          %p1154 = pneg %p832
        $region138: #{variance_adaptor_forward.1} parent=11 // pred_check_branch
          %1156 = sbr.rel (%p1154) target = $region140
        $region139: #{variance_adaptor_forward.1} parent=11 // pred_region
          _
        $region140: #{variance_adaptor_forward.1} parent=11 // pred_fallthru
          _
        // Predicated region
        $region141: #{variance_adaptor_forward.1} parent=11 // pred_check
          %p1157 = pneg %p853
        $region142: #{variance_adaptor_forward.1} parent=11 // pred_check_branch
          %1159 = sbr.rel (%p1157) target = $region144
        $region143: #{variance_adaptor_forward.1} parent=11 // pred_region
          _
        $region144: #{variance_adaptor_forward.1} parent=11 // pred_fallthru
          _
        // Predicated region
        $region145: #{variance_adaptor_forward.1} parent=11 // pred_check
          %p1160 = pneg %p874
        $region146: #{variance_adaptor_forward.1} parent=11 // pred_check_branch
          %1162 = sbr.rel (%p1160) target = $region148
        $region147: #{variance_adaptor_forward.1} parent=11 // pred_region
          _
        $region148: #{variance_adaptor_forward.1} parent=11 // pred_fallthru
          _
        // Predicated region
        $region149: #{variance_adaptor_forward.1} parent=11 // pred_check
          %p1163 = pneg %p895
        $region150: #{variance_adaptor_forward.1} parent=11 // pred_check_branch
          %1165 = sbr.rel (%p1163) target = $region152
        $region151: #{variance_adaptor_forward.1} parent=11 // pred_region
          _
        $region152: #{variance_adaptor_forward.1} parent=11 // pred_fallthru
          _
        // Predicated region
        $region153: #{variance_adaptor_forward.1} parent=11 // pred_check
          %p1166 = pneg %p916
        $region154: #{variance_adaptor_forward.1} parent=11 // pred_check_branch
          %1168 = sbr.rel (%p1166) target = $region156
        $region155: #{variance_adaptor_forward.1} parent=11 // pred_region
          _
        $region156: #{variance_adaptor_forward.1} parent=11 // pred_fallthru
          _
      $region12: #{variance_adaptor_forward.1} parent=5 // pred_fallthru
        _
      %p1169 = scmp.lt.s32.totalorder %s108, 2
      // Predicated region
      $region157: #{variance_adaptor_forward.1} parent=5 // pred_check
        %p1170 = pneg %p1169
      $region158: #{variance_adaptor_forward.1} parent=5 // pred_check_branch
        %1172 = sbr.rel (%p1170) target = $region160
      $region159: #{variance_adaptor_forward.1} parent=5 // pred_region
        // Predicated region
        $region161: #{variance_adaptor_forward.1} parent=159 // pred_check
          %p1173 = pneg %p128
        $region162: #{variance_adaptor_forward.1} parent=159 // pred_check_branch
          %1175 = sbr.rel (%p1173) target = $region164
        $region163: #{variance_adaptor_forward.1} parent=159 // pred_region
          %p1176 = scmp.lt.s32.totalorder %s108, 1
          %s1177 = scalar_select %p1176, %s108, 1
          %s1178 = smul.addr %s1177, 16
          %s1179 = smul.addr %s1178, 8
          %s1180 = scalar_lea.vmem %s1, %s1179
        $region164: #{variance_adaptor_forward.1} parent=159 // pred_fallthru
          _
        // Predicated region
        $region165: #{variance_adaptor_forward.1} parent=159 // pred_check
          %p1181 = pneg %p154
        $region166: #{variance_adaptor_forward.1} parent=159 // pred_check_branch
          %1183 = sbr.rel (%p1181) target = $region168
        $region167: #{variance_adaptor_forward.1} parent=159 // pred_region
          %p1184 = scmp.lt.s32.totalorder %s108, 1
          %s1185 = scalar_select %p1184, %s108, 1
          %s1186 = scalar_lea.vmem %s3, %s1185
        $region168: #{variance_adaptor_forward.1} parent=159 // pred_fallthru
          _
      $region160: #{variance_adaptor_forward.1} parent=5 // pred_fallthru
        _
      %p1187 = scmp.le.s32.totalorder 1, %s108
      %p1188 = scmp.lt.s32.totalorder %s108, 3
      %p1189 = pnand %p1187, %p1188
      %p1190 = pneg %p1189
      // Predicated region
      $region169: #{variance_adaptor_forward.1} parent=5 // pred_check
        _
      $region170: #{variance_adaptor_forward.1} parent=5 // pred_check_branch
        %1192 = sbr.rel (%p1189) target = $region172
      $region171: #{variance_adaptor_forward.1} parent=5 // pred_region
        %s1193 = ssub.s32 %s108, 1
        %p1194 = scmp.lt.s32.totalorder %s113, 1
        %s1195 = scalar_select %p1194, %s113, 1
        %s1196 = smul.addr %s1195, 16
        %s1197 = smul.addr %s1196, 8
        %s1198 = scalar_lea.vmem %s1, %s1197
        %p1199 = pneg %p134
        %p1200 = pneg %p131
        %p1201 = scmp.lt.s32.totalorder %s113, 1
        %s1202 = scalar_select %p1201, %s113, 1
        %s1203 = scalar_lea.vmem %s3, %s1202
        %p1204 = pneg %p160
        %p1205 = pneg %p157
        %p1206 = pneg %p181
        %p1207 = pneg %p178
        %p1208 = pneg %p202
        %p1209 = pneg %p199
        %p1210 = pneg %p223
        %p1211 = pneg %p220
        %p1212 = pneg %p244
        %p1213 = pneg %p241
        %p1214 = pneg %p265
        %p1215 = pneg %p262
        %p1216 = pneg %p286
        %p1217 = pneg %p283
        %p1218 = pneg %p307
        %p1219 = pneg %p304
        %p1220 = pneg %p328
        %p1221 = pneg %p325
        %p1222 = pneg %p349
        %p1223 = pneg %p346
        %p1224 = pneg %p370
        %p1225 = pneg %p367
        %p1226 = pneg %p391
        %p1227 = pneg %p388
        %p1228 = pneg %p412
        %p1229 = pneg %p409
        %p1230 = pneg %p433
        %p1231 = pneg %p430
        %p1232 = pneg %p454
        %p1233 = pneg %p451
        %p1234 = pneg %p475
        %p1235 = pneg %p472
        %p1236 = pneg %p496
        %p1237 = pneg %p493
        %p1238 = pneg %p517
        %p1239 = pneg %p514
        %p1240 = pneg %p538
        %p1241 = pneg %p535
        %p1242 = pneg %p559
        %p1243 = pneg %p556
        %p1244 = pneg %p580
        %p1245 = pneg %p577
        %p1246 = pneg %p601
        %p1247 = pneg %p598
        %p1248 = pneg %p622
        %p1249 = pneg %p619
        %p1250 = pneg %p643
        %p1251 = pneg %p640
        %p1252 = pneg %p664
        %p1253 = pneg %p661
        %p1254 = pneg %p685
        %p1255 = pneg %p682
        %p1256 = pneg %p706
        %p1257 = pneg %p703
        %p1258 = pneg %p727
        %p1259 = pneg %p724
        %p1260 = pneg %p748
        %p1261 = pneg %p745
        %p1262 = pneg %p769
        %p1263 = pneg %p766
        %p1264 = pneg %p790
        %p1265 = pneg %p787
        %p1266 = pneg %p811
        %p1267 = pneg %p808
        %p1268 = pneg %p832
        %p1269 = pneg %p829
        %p1270 = pneg %p853
        %p1271 = pneg %p850
        %p1272 = pneg %p874
        %p1273 = pneg %p871
        %p1274 = pneg %p895
        %p1275 = pneg %p892
        %p1276 = pneg %p916
        %p1277 = pneg %p913
        %p1278 = pneg %p942
        %p1279 = pneg %p939
        %p1280 = scmp.lt.s32.totalorder %s113, 1
        %s1281 = scalar_select %p1280, %s113, 1
        %s1282 = scalar_lea.vmem %s77, %s1281
        %p1283 = pneg %p968
        %p1284 = pneg %p965
        %s1285 = sand.u32 %s955, 1
        %s1286 = scalar_lea.sflag [#allocation8], %s1285
        %s1287 = sand.u32 %s955, 1
        %s1288 = scalar_lea.vmem [#allocation7], %s1287
        %p1289 = pneg %p994
        %p1290 = pneg %p991
        %s1291 = sand.u32 %s981, 1
        %s1292 = scalar_lea.sflag [#allocation10], %s1291
        %s1293 = sand.u32 %s981, 1
        %s1294 = scalar_lea.vmem [#allocation9], %s1293
        %p1295 = pneg %p1020
        %p1296 = pneg %p1017
        %p1297 = scmp.lt.s32.totalorder %s113, 1
        %s1298 = scalar_select %p1297, %s113, 1
        %s1299 = smul.addr %s1298, 16
        %s1300 = smul.addr %s1299, 8
        %s1301 = scalar_lea.vmem %s83, %s1300
        %p1302 = pneg %p1046
        %p1303 = pneg %p1043
        %p1304 = scmp.lt.s32.totalorder %s113, 1
        %s1305 = scalar_select %p1304, %s113, 1
        %s1306 = smul.addr %s1305, 16
        %s1307 = smul.addr %s1306, 8
        %s1308 = scalar_lea.vmem %s85, %s1307
        %p1309 = scmp.lt.s32.totalorder %s113, 1
        %s1310 = scalar_select %p1309, %s113, 1
        %s1311 = smul.addr %s1310, 16
        %s1312 = smul.addr %s1311, 8
        %s1313 = scalar_lea.vmem %s1, %s1312
        %p1314 = scmp.lt.s32.totalorder %s113, 1
        %s1315 = scalar_select %p1314, %s113, 1
        %s1316 = scalar_lea.vmem %s3, %s1315
        %p1317 = scmp.lt.s32.totalorder %s113, 1
        %s1318 = scalar_select %p1317, %s113, 1
        %s1319 = scalar_lea.vmem %s77, %s1318
        %p1320 = scmp.lt.s32.totalorder %s113, 1
        %s1321 = scalar_select %p1320, %s113, 1
        %s1322 = smul.addr %s1321, 16
        %s1323 = smul.addr %s1322, 8
        %s1324 = scalar_lea.vmem %s83, %s1323
        %p1325 = scmp.lt.s32.totalorder %s113, 1
        %s1326 = scalar_select %p1325, %s113, 1
        %s1327 = smul.addr %s1326, 16
        %s1328 = smul.addr %s1327, 8
        %s1329 = scalar_lea.vmem %s85, %s1328
        %v1331 = vld [vmem:[%s1313] sm:$0xff]
        %v1332 = vld [vmem:[%s1313 + $0x8] sm:$0xff]
        %v1333 = vld [vmem:[%s1313 + $0x10] sm:$0xff]
        %v1334 = vld [vmem:[%s1313 + $0x18] sm:$0xff]
        %v1335 = vld [vmem:[%s1313 + $0x20] sm:$0xff]
        %v1336 = vld [vmem:[%s1313 + $0x28] sm:$0xff]
        %v1337 = vld [vmem:[%s1313 + $0x30] sm:$0xff]
        %v1338 = vld [vmem:[%s1313 + $0x38] sm:$0xff]
        %v1339 = vld [vmem:[%s1313 + $0x40] sm:$0xff]
        %v1340 = vld [vmem:[%s1313 + $0x48] sm:$0xff]
        %v1341 = vld [vmem:[%s1313 + $0x50] sm:$0xff]
        %v1342 = vld [vmem:[%s1313 + $0x58] sm:$0xff]
        %v1343 = vld [vmem:[%s1313 + $0x60] sm:$0xff]
        %v1344 = vld [vmem:[%s1313 + $0x68] sm:$0xff]
        %v1345 = vld [vmem:[%s1313 + $0x70] sm:$0xff]
        %v1346 = vld [vmem:[%s1313 + $0x78] sm:$0xff]
        %v1347 = vld [vmem:[%s1316] sm:$0x1]
        %v1348 = vlaneseq
        %v1349 = vshrl.u32 %v1348, 7
        %v1350 = vadd.s32 %v1349, 8
        %v1351 = vadd.s32 %v1349, 16
        %v1352 = vadd.s32 %v1349, 24
        %v1353 = vadd.s32 %v1349, 32
        %v1354 = vadd.s32 %v1349, 40
        %v1355 = vadd.s32 %v1349, 48
        %v1356 = vadd.s32 %v1349, 56
        %v1357 = vadd.s32 %v1349, 64
        %v1358 = vadd.s32 %v1349, 72
        %v1359 = vadd.s32 %v1349, 80
        %v1360 = vadd.s32 %v1349, 88
        %v1361 = vadd.s32 %v1349, 96
        %v1362 = vadd.s32 %v1349, 104
        %v1363 = vadd.s32 %v1349, 112
        %v1364 = vadd.s32 %v1349, 120
        %vm1365 = vcmp.lt.s32.totalorder %v1349, 0
        %v1366 = vsub.s32 0, %v1349
        %v1367 = vsel %vm1365, %v1366, %v1349
        %v1368 = vshrl.u32 %v1367, 7
        %v1369 = vand.u32 %v1367, 127
        %v1370 = vsub.s32 0, %v1369
        %v1371 = vsel %vm1365, %v1370, %v1369
        %vm1372 = vcmp.lt.s32.totalorder %v1350, 0
        %v1373 = vsub.s32 0, %v1350
        %v1374 = vsel %vm1372, %v1373, %v1350
        %v1375 = vshrl.u32 %v1374, 7
        %v1376 = vand.u32 %v1374, 127
        %v1377 = vsub.s32 0, %v1376
        %v1378 = vsel %vm1372, %v1377, %v1376
        %vm1379 = vcmp.lt.s32.totalorder %v1351, 0
        %v1380 = vsub.s32 0, %v1351
        %v1381 = vsel %vm1379, %v1380, %v1351
        %v1382 = vshrl.u32 %v1381, 7
        %v1383 = vand.u32 %v1381, 127
        %v1384 = vsub.s32 0, %v1383
        %v1385 = vsel %vm1379, %v1384, %v1383
        %vm1386 = vcmp.lt.s32.totalorder %v1352, 0
        %v1387 = vsub.s32 0, %v1352
        %v1388 = vsel %vm1386, %v1387, %v1352
        %v1389 = vshrl.u32 %v1388, 7
        %v1390 = vand.u32 %v1388, 127
        %v1391 = vsub.s32 0, %v1390
        %v1392 = vsel %vm1386, %v1391, %v1390
        %vm1393 = vcmp.lt.s32.totalorder %v1353, 0
        %v1394 = vsub.s32 0, %v1353
        %v1395 = vsel %vm1393, %v1394, %v1353
        %v1396 = vshrl.u32 %v1395, 7
        %v1397 = vand.u32 %v1395, 127
        %v1398 = vsub.s32 0, %v1397
        %v1399 = vsel %vm1393, %v1398, %v1397
        %vm1400 = vcmp.lt.s32.totalorder %v1354, 0
        %v1401 = vsub.s32 0, %v1354
        %v1402 = vsel %vm1400, %v1401, %v1354
        %v1403 = vshrl.u32 %v1402, 7
        %v1404 = vand.u32 %v1402, 127
        %v1405 = vsub.s32 0, %v1404
        %v1406 = vsel %vm1400, %v1405, %v1404
        %vm1407 = vcmp.lt.s32.totalorder %v1355, 0
        %v1408 = vsub.s32 0, %v1355
        %v1409 = vsel %vm1407, %v1408, %v1355
        %v1410 = vshrl.u32 %v1409, 7
        %v1411 = vand.u32 %v1409, 127
        %v1412 = vsub.s32 0, %v1411
        %v1413 = vsel %vm1407, %v1412, %v1411
        %vm1414 = vcmp.lt.s32.totalorder %v1356, 0
        %v1415 = vsub.s32 0, %v1356
        %v1416 = vsel %vm1414, %v1415, %v1356
        %v1417 = vshrl.u32 %v1416, 7
        %v1418 = vand.u32 %v1416, 127
        %v1419 = vsub.s32 0, %v1418
        %v1420 = vsel %vm1414, %v1419, %v1418
        %vm1421 = vcmp.lt.s32.totalorder %v1357, 0
        %v1422 = vsub.s32 0, %v1357
        %v1423 = vsel %vm1421, %v1422, %v1357
        %v1424 = vshrl.u32 %v1423, 7
        %v1425 = vand.u32 %v1423, 127
        %v1426 = vsub.s32 0, %v1425
        %v1427 = vsel %vm1421, %v1426, %v1425
        %vm1428 = vcmp.lt.s32.totalorder %v1358, 0
        %v1429 = vsub.s32 0, %v1358
        %v1430 = vsel %vm1428, %v1429, %v1358
        %v1431 = vshrl.u32 %v1430, 7
        %v1432 = vand.u32 %v1430, 127
        %v1433 = vsub.s32 0, %v1432
        %v1434 = vsel %vm1428, %v1433, %v1432
        %vm1435 = vcmp.lt.s32.totalorder %v1359, 0
        %v1436 = vsub.s32 0, %v1359
        %v1437 = vsel %vm1435, %v1436, %v1359
        %v1438 = vshrl.u32 %v1437, 7
        %v1439 = vand.u32 %v1437, 127
        %v1440 = vsub.s32 0, %v1439
        %v1441 = vsel %vm1435, %v1440, %v1439
        %vm1442 = vcmp.lt.s32.totalorder %v1360, 0
        %v1443 = vsub.s32 0, %v1360
        %v1444 = vsel %vm1442, %v1443, %v1360
        %v1445 = vshrl.u32 %v1444, 7
        %v1446 = vand.u32 %v1444, 127
        %v1447 = vsub.s32 0, %v1446
        %v1448 = vsel %vm1442, %v1447, %v1446
        %vm1449 = vcmp.lt.s32.totalorder %v1361, 0
        %v1450 = vsub.s32 0, %v1361
        %v1451 = vsel %vm1449, %v1450, %v1361
        %v1452 = vshrl.u32 %v1451, 7
        %v1453 = vand.u32 %v1451, 127
        %v1454 = vsub.s32 0, %v1453
        %v1455 = vsel %vm1449, %v1454, %v1453
        %vm1456 = vcmp.lt.s32.totalorder %v1362, 0
        %v1457 = vsub.s32 0, %v1362
        %v1458 = vsel %vm1456, %v1457, %v1362
        %v1459 = vshrl.u32 %v1458, 7
        %v1460 = vand.u32 %v1458, 127
        %v1461 = vsub.s32 0, %v1460
        %v1462 = vsel %vm1456, %v1461, %v1460
        %vm1463 = vcmp.lt.s32.totalorder %v1363, 0
        %v1464 = vsub.s32 0, %v1363
        %v1465 = vsel %vm1463, %v1464, %v1363
        %v1466 = vshrl.u32 %v1465, 7
        %v1467 = vand.u32 %v1465, 127
        %v1468 = vsub.s32 0, %v1467
        %v1469 = vsel %vm1463, %v1468, %v1467
        %vm1470 = vcmp.lt.s32.totalorder %v1364, 0
        %v1471 = vsub.s32 0, %v1364
        %v1472 = vsel %vm1470, %v1471, %v1364
        %v1473 = vshrl.u32 %v1472, 7
        %v1474 = vand.u32 %v1472, 127
        %v1475 = vsub.s32 0, %v1474
        %v1476 = vsel %vm1470, %v1475, %v1474
        %vm1477 = vcmp.ne.s32.totalorder %v1371, 0
        %vm1478 = vcmp.ne.s32.totalorder %v1378, 0
        %vm1479 = vcmp.ne.s32.totalorder %v1385, 0
        %vm1480 = vcmp.ne.s32.totalorder %v1392, 0
        %vm1481 = vcmp.ne.s32.totalorder %v1399, 0
        %vm1482 = vcmp.ne.s32.totalorder %v1406, 0
        %vm1483 = vcmp.ne.s32.totalorder %v1413, 0
        %vm1484 = vcmp.ne.s32.totalorder %v1420, 0
        %vm1485 = vcmp.ne.s32.totalorder %v1427, 0
        %vm1486 = vcmp.ne.s32.totalorder %v1434, 0
        %vm1487 = vcmp.ne.s32.totalorder %v1441, 0
        %vm1488 = vcmp.ne.s32.totalorder %v1448, 0
        %vm1489 = vcmp.ne.s32.totalorder %v1455, 0
        %vm1490 = vcmp.ne.s32.totalorder %v1462, 0
        %vm1491 = vcmp.ne.s32.totalorder %v1469, 0
        %vm1492 = vcmp.ne.s32.totalorder %v1476, 0
        %vm1493 = vcmp.lt.s32.totalorder %v1371, 0
        %vm1494 = vcmp.lt.s32.totalorder %v1378, 0
        %vm1495 = vcmp.lt.s32.totalorder %v1385, 0
        %vm1496 = vcmp.lt.s32.totalorder %v1392, 0
        %vm1497 = vcmp.lt.s32.totalorder %v1399, 0
        %vm1498 = vcmp.lt.s32.totalorder %v1406, 0
        %vm1499 = vcmp.lt.s32.totalorder %v1413, 0
        %vm1500 = vcmp.lt.s32.totalorder %v1420, 0
        %vm1501 = vcmp.lt.s32.totalorder %v1427, 0
        %vm1502 = vcmp.lt.s32.totalorder %v1434, 0
        %vm1503 = vcmp.lt.s32.totalorder %v1441, 0
        %vm1504 = vcmp.lt.s32.totalorder %v1448, 0
        %vm1505 = vcmp.lt.s32.totalorder %v1455, 0
        %vm1506 = vcmp.lt.s32.totalorder %v1462, 0
        %vm1507 = vcmp.lt.s32.totalorder %v1469, 0
        %vm1508 = vcmp.lt.s32.totalorder %v1476, 0
        %vm1509 = vmand %vm1493, %vm1477
        %vm1510 = vmand %vm1494, %vm1478
        %vm1511 = vmand %vm1495, %vm1479
        %vm1512 = vmand %vm1496, %vm1480
        %vm1513 = vmand %vm1497, %vm1481
        %vm1514 = vmand %vm1498, %vm1482
        %vm1515 = vmand %vm1499, %vm1483
        %vm1516 = vmand %vm1500, %vm1484
        %vm1517 = vmand %vm1501, %vm1485
        %vm1518 = vmand %vm1502, %vm1486
        %vm1519 = vmand %vm1503, %vm1487
        %vm1520 = vmand %vm1504, %vm1488
        %vm1521 = vmand %vm1505, %vm1489
        %vm1522 = vmand %vm1506, %vm1490
        %vm1523 = vmand %vm1507, %vm1491
        %vm1524 = vmand %vm1508, %vm1492
        %v1525 = vadd.s32 %v1371, 128
        %v1526 = vadd.s32 %v1378, 128
        %v1527 = vadd.s32 %v1385, 128
        %v1528 = vadd.s32 %v1392, 128
        %v1529 = vadd.s32 %v1399, 128
        %v1530 = vadd.s32 %v1406, 128
        %v1531 = vadd.s32 %v1413, 128
        %v1532 = vadd.s32 %v1420, 128
        %v1533 = vadd.s32 %v1427, 128
        %v1534 = vadd.s32 %v1434, 128
        %v1535 = vadd.s32 %v1441, 128
        %v1536 = vadd.s32 %v1448, 128
        %v1537 = vadd.s32 %v1455, 128
        %v1538 = vadd.s32 %v1462, 128
        %v1539 = vadd.s32 %v1469, 128
        %v1540 = vadd.s32 %v1476, 128
        %v1541 = vsel %vm1509, %v1525, %v1371
        %v1542 = vsel %vm1510, %v1526, %v1378
        %v1543 = vsel %vm1511, %v1527, %v1385
        %v1544 = vsel %vm1512, %v1528, %v1392
        %v1545 = vsel %vm1513, %v1529, %v1399
        %v1546 = vsel %vm1514, %v1530, %v1406
        %v1547 = vsel %vm1515, %v1531, %v1413
        %v1548 = vsel %vm1516, %v1532, %v1420
        %v1549 = vsel %vm1517, %v1533, %v1427
        %v1550 = vsel %vm1518, %v1534, %v1434
        %v1551 = vsel %vm1519, %v1535, %v1441
        %v1552 = vsel %vm1520, %v1536, %v1448
        %v1553 = vsel %vm1521, %v1537, %v1455
        %v1554 = vsel %vm1522, %v1538, %v1462
        %v1555 = vsel %vm1523, %v1539, %v1469
        %v1556 = vsel %vm1524, %v1540, %v1476
        %vm1557 = vcmp.ne.s32.totalorder %v1541, 0
        %vm1558 = vcmp.ne.s32.totalorder %v1542, 0
        %vm1559 = vcmp.ne.s32.totalorder %v1543, 0
        %vm1560 = vcmp.ne.s32.totalorder %v1544, 0
        %vm1561 = vcmp.ne.s32.totalorder %v1545, 0
        %vm1562 = vcmp.ne.s32.totalorder %v1546, 0
        %vm1563 = vcmp.ne.s32.totalorder %v1547, 0
        %vm1564 = vcmp.ne.s32.totalorder %v1548, 0
        %vm1565 = vcmp.ne.s32.totalorder %v1549, 0
        %vm1566 = vcmp.ne.s32.totalorder %v1550, 0
        %vm1567 = vcmp.ne.s32.totalorder %v1551, 0
        %vm1568 = vcmp.ne.s32.totalorder %v1552, 0
        %vm1569 = vcmp.ne.s32.totalorder %v1553, 0
        %vm1570 = vcmp.ne.s32.totalorder %v1554, 0
        %vm1571 = vcmp.ne.s32.totalorder %v1555, 0
        %vm1572 = vcmp.ne.s32.totalorder %v1556, 0
        %v1573 = vsel %vm1557, 1, 0
        %v1574 = vsel %vm1558, 1, 0
        %v1575 = vsel %vm1559, 1, 0
        %v1576 = vsel %vm1560, 1, 0
        %v1577 = vsel %vm1561, 1, 0
        %v1578 = vsel %vm1562, 1, 0
        %v1579 = vsel %vm1563, 1, 0
        %v1580 = vsel %vm1564, 1, 0
        %v1581 = vsel %vm1565, 1, 0
        %v1582 = vsel %vm1566, 1, 0
        %v1583 = vsel %vm1567, 1, 0
        %v1584 = vsel %vm1568, 1, 0
        %v1585 = vsel %vm1569, 1, 0
        %v1586 = vsel %vm1570, 1, 0
        %v1587 = vsel %vm1571, 1, 0
        %v1588 = vsel %vm1572, 1, 0
        %v1589 = vcvt.s32.f32 %v1573
        %v1590 = vcvt.s32.f32 %v1574
        %v1591 = vcvt.s32.f32 %v1575
        %v1592 = vcvt.s32.f32 %v1576
        %v1593 = vcvt.s32.f32 %v1577
        %v1594 = vcvt.s32.f32 %v1578
        %v1595 = vcvt.s32.f32 %v1579
        %v1596 = vcvt.s32.f32 %v1580
        %v1597 = vcvt.s32.f32 %v1581
        %v1598 = vcvt.s32.f32 %v1582
        %v1599 = vcvt.s32.f32 %v1583
        %v1600 = vcvt.s32.f32 %v1584
        %v1601 = vcvt.s32.f32 %v1585
        %v1602 = vcvt.s32.f32 %v1586
        %v1603 = vcvt.s32.f32 %v1587
        %v1604 = vcvt.s32.f32 %v1588
        %vm1605 = vcmp.ne.s32.totalorder %v1541, 127
        %vm1606 = vcmp.ne.s32.totalorder %v1542, 127
        %vm1607 = vcmp.ne.s32.totalorder %v1543, 127
        %vm1608 = vcmp.ne.s32.totalorder %v1544, 127
        %vm1609 = vcmp.ne.s32.totalorder %v1545, 127
        %vm1610 = vcmp.ne.s32.totalorder %v1546, 127
        %vm1611 = vcmp.ne.s32.totalorder %v1547, 127
        %vm1612 = vcmp.ne.s32.totalorder %v1548, 127
        %vm1613 = vcmp.ne.s32.totalorder %v1549, 127
        %vm1614 = vcmp.ne.s32.totalorder %v1550, 127
        %vm1615 = vcmp.ne.s32.totalorder %v1551, 127
        %vm1616 = vcmp.ne.s32.totalorder %v1552, 127
        %vm1617 = vcmp.ne.s32.totalorder %v1553, 127
        %vm1618 = vcmp.ne.s32.totalorder %v1554, 127
        %vm1619 = vcmp.ne.s32.totalorder %v1555, 127
        %vm1620 = vcmp.ne.s32.totalorder %v1556, 127
        %v1621 = vsel %vm1605, 1, 0
        %v1622 = vsel %vm1606, 1, 0
        %v1623 = vsel %vm1607, 1, 0
        %v1624 = vsel %vm1608, 1, 0
        %v1625 = vsel %vm1609, 1, 0
        %v1626 = vsel %vm1610, 1, 0
        %v1627 = vsel %vm1611, 1, 0
        %v1628 = vsel %vm1612, 1, 0
        %v1629 = vsel %vm1613, 1, 0
        %v1630 = vsel %vm1614, 1, 0
        %v1631 = vsel %vm1615, 1, 0
        %v1632 = vsel %vm1616, 1, 0
        %v1633 = vsel %vm1617, 1, 0
        %v1634 = vsel %vm1618, 1, 0
        %v1635 = vsel %vm1619, 1, 0
        %v1636 = vsel %vm1620, 1, 0
        %v1637 = vcvt.s32.f32 %v1621
        %v1638 = vcvt.s32.f32 %v1622
        %v1639 = vcvt.s32.f32 %v1623
        %v1640 = vcvt.s32.f32 %v1624
        %v1641 = vcvt.s32.f32 %v1625
        %v1642 = vcvt.s32.f32 %v1626
        %v1643 = vcvt.s32.f32 %v1627
        %v1644 = vcvt.s32.f32 %v1628
        %v1645 = vcvt.s32.f32 %v1629
        %v1646 = vcvt.s32.f32 %v1630
        %v1647 = vcvt.s32.f32 %v1631
        %v1648 = vcvt.s32.f32 %v1632
        %v1649 = vcvt.s32.f32 %v1633
        %v1650 = vcvt.s32.f32 %v1634
        %v1651 = vcvt.s32.f32 %v1635
        %v1652 = vcvt.s32.f32 %v1636
        %vm1653 = vcmp.lt.s32.totalorder %v1541, 8
        %vm1654 = vcmp.lt.s32.totalorder %v1542, 8
        %vm1655 = vcmp.lt.s32.totalorder %v1543, 8
        %vm1656 = vcmp.lt.s32.totalorder %v1544, 8
        %vm1657 = vcmp.lt.s32.totalorder %v1545, 8
        %vm1658 = vcmp.lt.s32.totalorder %v1546, 8
        %vm1659 = vcmp.lt.s32.totalorder %v1547, 8
        %vm1660 = vcmp.lt.s32.totalorder %v1548, 8
        %vm1661 = vcmp.lt.s32.totalorder %v1549, 8
        %vm1662 = vcmp.lt.s32.totalorder %v1550, 8
        %vm1663 = vcmp.lt.s32.totalorder %v1551, 8
        %vm1664 = vcmp.lt.s32.totalorder %v1552, 8
        %vm1665 = vcmp.lt.s32.totalorder %v1553, 8
        %vm1666 = vcmp.lt.s32.totalorder %v1554, 8
        %vm1667 = vcmp.lt.s32.totalorder %v1555, 8
        %vm1668 = vcmp.lt.s32.totalorder %v1556, 8
        %v1669 = vsel %vm1653, 1, 0
        %v1670 = vsel %vm1654, 1, 0
        %v1671 = vsel %vm1655, 1, 0
        %v1672 = vsel %vm1656, 1, 0
        %v1673 = vsel %vm1657, 1, 0
        %v1674 = vsel %vm1658, 1, 0
        %v1675 = vsel %vm1659, 1, 0
        %v1676 = vsel %vm1660, 1, 0
        %v1677 = vsel %vm1661, 1, 0
        %v1678 = vsel %vm1662, 1, 0
        %v1679 = vsel %vm1663, 1, 0
        %v1680 = vsel %vm1664, 1, 0
        %v1681 = vsel %vm1665, 1, 0
        %v1682 = vsel %vm1666, 1, 0
        %v1683 = vsel %vm1667, 1, 0
        %v1684 = vsel %vm1668, 1, 0
        %v1685 = vcvt.s32.f32 %v1669
        %v1686 = vcvt.s32.f32 %v1670
        %v1687 = vcvt.s32.f32 %v1671
        %v1688 = vcvt.s32.f32 %v1672
        %v1689 = vcvt.s32.f32 %v1673
        %v1690 = vcvt.s32.f32 %v1674
        %v1691 = vcvt.s32.f32 %v1675
        %v1692 = vcvt.s32.f32 %v1676
        %v1693 = vcvt.s32.f32 %v1677
        %v1694 = vcvt.s32.f32 %v1678
        %v1695 = vcvt.s32.f32 %v1679
        %v1696 = vcvt.s32.f32 %v1680
        %v1697 = vcvt.s32.f32 %v1681
        %v1698 = vcvt.s32.f32 %v1682
        %v1699 = vcvt.s32.f32 %v1683
        %v1700 = vcvt.s32.f32 %v1684
        %v1701 = vmul.f32 %v1331, %v1685
        %v1702 = vmul.f32 %v1332, %v1686
        %v1703 = vmul.f32 %v1333, %v1687
        %v1704 = vmul.f32 %v1334, %v1688
        %v1705 = vmul.f32 %v1335, %v1689
        %v1706 = vmul.f32 %v1336, %v1690
        %v1707 = vmul.f32 %v1337, %v1691
        %v1708 = vmul.f32 %v1338, %v1692
        %v1709 = vmul.f32 %v1339, %v1693
        %v1710 = vmul.f32 %v1340, %v1694
        %v1711 = vmul.f32 %v1341, %v1695
        %v1712 = vmul.f32 %v1342, %v1696
        %v1713 = vmul.f32 %v1343, %v1697
        %v1714 = vmul.f32 %v1344, %v1698
        %v1715 = vmul.f32 %v1345, %v1699
        %v1716 = vmul.f32 %v1346, %v1700
        %v1717 = vrot.slane %v1701, 7
        %v1718 = vrot.slane %v1702, 7
        %v1719 = vrot.slane %v1703, 7
        %v1720 = vrot.slane %v1704, 7
        %v1721 = vrot.slane %v1705, 7
        %v1722 = vrot.slane %v1706, 7
        %v1723 = vrot.slane %v1707, 7
        %v1724 = vrot.slane %v1708, 7
        %v1725 = vrot.slane %v1709, 7
        %v1726 = vrot.slane %v1710, 7
        %v1727 = vrot.slane %v1711, 7
        %v1728 = vrot.slane %v1712, 7
        %v1729 = vrot.slane %v1713, 7
        %v1730 = vrot.slane %v1714, 7
        %v1731 = vrot.slane %v1715, 7
        %v1732 = vrot.slane %v1716, 7
        %vm1733 = vcmp.lt.s32.totalorder %v1349, 1
        %v1734 = vsel %vm1733, %v1731, %v1732
        %v1735 = vsel %vm1733, %v1730, %v1731
        %v1736 = vsel %vm1733, %v1729, %v1730
        %v1737 = vsel %vm1733, %v1728, %v1729
        %v1738 = vsel %vm1733, %v1727, %v1728
        %v1739 = vsel %vm1733, %v1726, %v1727
        %v1740 = vsel %vm1733, %v1725, %v1726
        %v1741 = vsel %vm1733, %v1724, %v1725
        %v1742 = vsel %vm1733, %v1723, %v1724
        %v1743 = vsel %vm1733, %v1722, %v1723
        %v1744 = vsel %vm1733, %v1721, %v1722
        %v1745 = vsel %vm1733, %v1720, %v1721
        %v1746 = vsel %vm1733, %v1719, %v1720
        %v1747 = vsel %vm1733, %v1718, %v1719
        %v1748 = vsel %vm1733, %v1717, %v1718
        %v1749 = vsel %vm1733, %v1732, %v1717
        %v1750 = vmul.f32 %v1749, %v1589
        %v1751 = vmul.f32 %v1748, %v1590
        %v1752 = vmul.f32 %v1747, %v1591
        %v1753 = vmul.f32 %v1746, %v1592
        %v1754 = vmul.f32 %v1745, %v1593
        %v1755 = vmul.f32 %v1744, %v1594
        %v1756 = vmul.f32 %v1743, %v1595
        %v1757 = vmul.f32 %v1742, %v1596
        %v1758 = vmul.f32 %v1741, %v1597
        %v1759 = vmul.f32 %v1740, %v1598
        %v1760 = vmul.f32 %v1739, %v1599
        %v1761 = vmul.f32 %v1738, %v1600
        %v1762 = vmul.f32 %v1737, %v1601
        %v1763 = vmul.f32 %v1736, %v1602
        %v1764 = vmul.f32 %v1735, %v1603
        %v1765 = vmul.f32 %v1734, %v1604
        %v1766 = vrot.slane %v1701, 1
        %v1767 = vrot.slane %v1702, 1
        %v1768 = vrot.slane %v1703, 1
        %v1769 = vrot.slane %v1704, 1
        %v1770 = vrot.slane %v1705, 1
        %v1771 = vrot.slane %v1706, 1
        %v1772 = vrot.slane %v1707, 1
        %v1773 = vrot.slane %v1708, 1
        %v1774 = vrot.slane %v1709, 1
        %v1775 = vrot.slane %v1710, 1
        %v1776 = vrot.slane %v1711, 1
        %v1777 = vrot.slane %v1712, 1
        %v1778 = vrot.slane %v1713, 1
        %v1779 = vrot.slane %v1714, 1
        %v1780 = vrot.slane %v1715, 1
        %v1781 = vrot.slane %v1716, 1
        %vm1782 = vcmp.lt.s32.totalorder %v1349, 7
        %v1783 = vsel %vm1782, %v1780, %v1781
        %v1784 = vsel %vm1782, %v1779, %v1780
        %v1785 = vsel %vm1782, %v1778, %v1779
        %v1786 = vsel %vm1782, %v1777, %v1778
        %v1787 = vsel %vm1782, %v1776, %v1777
        %v1788 = vsel %vm1782, %v1775, %v1776
        %v1789 = vsel %vm1782, %v1774, %v1775
        %v1790 = vsel %vm1782, %v1773, %v1774
        %v1791 = vsel %vm1782, %v1772, %v1773
        %v1792 = vsel %vm1782, %v1771, %v1772
        %v1793 = vsel %vm1782, %v1770, %v1771
        %v1794 = vsel %vm1782, %v1769, %v1770
        %v1795 = vsel %vm1782, %v1768, %v1769
        %v1796 = vsel %vm1782, %v1767, %v1768
        %v1797 = vsel %vm1782, %v1766, %v1767
        %v1798 = vsel %vm1782, %v1781, %v1766
        %v1799 = vmul.f32 %v1797, %v1637
        %v1800 = vmul.f32 %v1796, %v1638
        %v1801 = vmul.f32 %v1795, %v1639
        %v1802 = vmul.f32 %v1794, %v1640
        %v1803 = vmul.f32 %v1793, %v1641
        %v1804 = vmul.f32 %v1792, %v1642
        %v1805 = vmul.f32 %v1791, %v1643
        %v1806 = vmul.f32 %v1790, %v1644
        %v1807 = vmul.f32 %v1789, %v1645
        %v1808 = vmul.f32 %v1788, %v1646
        %v1809 = vmul.f32 %v1787, %v1647
        %v1810 = vmul.f32 %v1786, %v1648
        %v1811 = vmul.f32 %v1785, %v1649
        %v1812 = vmul.f32 %v1784, %v1650
        %v1813 = vmul.f32 %v1783, %v1651
        %v1814 = vmul.f32 %v1798, %v1652
        %v1815 = vld [vmem:[%s5] sm:$0xf]
        %v1816 = vld [vmem:[%s5 + $0x4] sm:$0xf]
        %v1817 = vld [vmem:[%s5 + $0x8] sm:$0xf]
        %v1818 = vld [vmem:[%s5 + $0xc] sm:$0xf]
        %v1819 = vld [vmem:[%s5 + $0x10] sm:$0xf]
        %v1820 = vld [vmem:[%s5 + $0x14] sm:$0xf]
        %v1821 = vld [vmem:[%s5 + $0x18] sm:$0xf]
        %v1822 = vld [vmem:[%s5 + $0x1c] sm:$0xf]
        %v1823 = vld [vmem:[%s5 + $0x20] sm:$0xf]
        %v1824 = vld [vmem:[%s5 + $0x24] sm:$0xf]
        %v1825 = vld [vmem:[%s5 + $0x28] sm:$0xf]
        %v1826 = vld [vmem:[%s5 + $0x2c] sm:$0xf]
        %v1827 = vpack.c.bf16 %v1751, %v1750
        %v1828 = vpack.c.bf16 %v1753, %v1752
        %v1829 = vpack.c.bf16 %v1755, %v1754
        %v1830 = vpack.c.bf16 %v1757, %v1756
        %v1831 = vpack.c.bf16 %v1759, %v1758
        %v1832 = vpack.c.bf16 %v1761, %v1760
        %v1833 = vpack.c.bf16 %v1763, %v1762
        %v1834 = vpack.c.bf16 %v1765, %v1764
        %v1835 = vpack.c.bf16 %v1702, %v1701
        %v1836 = vpack.c.bf16 %v1704, %v1703
        %v1837 = vpack.c.bf16 %v1706, %v1705
        %v1838 = vpack.c.bf16 %v1708, %v1707
        %v1839 = vpack.c.bf16 %v1710, %v1709
        %v1840 = vpack.c.bf16 %v1712, %v1711
        %v1841 = vpack.c.bf16 %v1714, %v1713
        %v1842 = vpack.c.bf16 %v1716, %v1715
        %v1847 = vunpack.c.l.b16 %v1819
        %v1848 = vunpack.c.l.b16 %v1820
        %v1849 = vunpack.c.l.b16 %v1821
        %v1850 = vunpack.c.l.b16 %v1822
        %v1851 = vpack.c.b16 %v1848, %v1847
        %v1852 = vpack.c.b16 %v1850, %v1849
        %vm1855 = vcmask 261120
        %v1857 = vsel %vm1855, %v1835, 0
        %v1860 = vsel %vm1855, %v1836, 0
        %v1863 = vsel %vm1855, %v1837, 0
        %v1866 = vsel %vm1855, %v1838, 0
        %v1869 = vsel %vm1855, %v1839, 0
        %v1872 = vsel %vm1855, %v1840, 0
        %v1875 = vsel %vm1855, %v1841, 0
        %v1878 = vsel %vm1855, %v1842, 0
        %1880 = vmatprep.subr.bf16.mxu0 0
        %1881 = vmatpush1.bf16.msra.mxu0 %v1851
        %1882 = vmatprep.subr.bf16.mxu0 0
        %1883 = vmatpush1.bf16.msra.mxu0 %v1852
        %1884 = vmatprep.subr.bf16.mxu0 0
        %1885 = vmatpush1.bf16.msra.mxu0 0
        %1886 = vmatprep.subr.bf16.mxu0 0
        %1887 = vmatpush1.bf16.msra.mxu0 0
        %1888 = vmatprep.subr.bf16.mxu0 0
        %1889 = vmatpush1.bf16.msra.mxu0 0
        %1890 = vmatprep.subr.bf16.mxu0 0
        %1891 = vmatpush1.bf16.msra.mxu0 0
        %1892 = vmatprep.subr.bf16.mxu0 0
        %1893 = vmatpush1.bf16.msra.mxu0 0
        %1894 = vmatprep.subr.bf16.mxu0 0
        %1895 = vmatpush1.bf16.msra.mxu0 0
        %1896 = vmatprep.subr.bf16.mxu0 0
        %1897 = vmatpush1.bf16.msra.mxu0 0
        %1898 = vmatprep.subr.bf16.mxu0 0
        %1899 = vmatpush1.bf16.msra.mxu0 0
        %1900 = vmatprep.subr.bf16.mxu0 0
        %1901 = vmatpush1.bf16.msra.mxu0 0
        %1902 = vmatprep.subr.bf16.mxu0 0
        %1903 = vmatpush1.bf16.msra.mxu0 0
        %1904 = vmatprep.subr.bf16.mxu0 0
        %1905 = vmatpush1.bf16.msra.mxu0 0
        %1906 = vmatprep.subr.bf16.mxu0 0
        %1907 = vmatpush1.bf16.msra.mxu0 0
        %1908 = vmatprep.subr.bf16.mxu0 0
        %1909 = vmatpush1.bf16.msra.mxu0 0
        %1910 = vmatprep.subr.bf16.mxu0 0
        %1911 = vmatpush1.bf16.msra.mxu0 0
        %1912 = vmatprep.mubr.bf16.mxu0 0
        %1913 = vmatmul.mubr.bf16.gmra.mrb[0].mxu0 %v1857
        %v1914 = vpop.f32.mrb[0].mxu0
        %v1915 = vadd.f32 0.0, %v1914
        %v1916 = vpop.f32.mrb[0].mxu0
        %v1917 = vpop.f32.mrb[0].mxu0
        %v1918 = vadd.f32 0.0, %v1917
        %v1919 = vpop.f32.mrb[0].mxu0
        %1920 = vmatprep.mubr.bf16.mxu0 0
        %1921 = vmatmul.mubr.bf16.gmra.mrb[0].mxu0 %v1860
        %v1922 = vpop.f32.mrb[0].mxu0
        %v1923 = vadd.f32 0.0, %v1922
        %v1924 = vpop.f32.mrb[0].mxu0
        %v1925 = vpop.f32.mrb[0].mxu0
        %v1926 = vadd.f32 0.0, %v1925
        %v1927 = vpop.f32.mrb[0].mxu0
        %1928 = vmatprep.mubr.bf16.mxu0 0
        %1929 = vmatmul.mubr.bf16.gmra.mrb[0].mxu0 %v1863
        %v1930 = vpop.f32.mrb[0].mxu0
        %v1931 = vadd.f32 0.0, %v1930
        %v1932 = vpop.f32.mrb[0].mxu0
        %v1933 = vpop.f32.mrb[0].mxu0
        %v1934 = vadd.f32 0.0, %v1933
        %v1935 = vpop.f32.mrb[0].mxu0
        %1936 = vmatprep.mubr.bf16.mxu0 0
        %1937 = vmatmul.mubr.bf16.gmra.mrb[0].mxu0 %v1866
        %v1938 = vpop.f32.mrb[0].mxu0
        %v1939 = vadd.f32 0.0, %v1938
        %v1940 = vpop.f32.mrb[0].mxu0
        %v1941 = vpop.f32.mrb[0].mxu0
        %v1942 = vadd.f32 0.0, %v1941
        %v1943 = vpop.f32.mrb[0].mxu0
        %1944 = vmatprep.mubr.bf16.mxu0 0
        %1945 = vmatmul.mubr.bf16.gmra.mrb[0].mxu0 %v1869
        %v1946 = vpop.f32.mrb[0].mxu0
        %v1947 = vadd.f32 0.0, %v1946
        %v1948 = vpop.f32.mrb[0].mxu0
        %v1949 = vpop.f32.mrb[0].mxu0
        %v1950 = vadd.f32 0.0, %v1949
        %v1951 = vpop.f32.mrb[0].mxu0
        %1952 = vmatprep.mubr.bf16.mxu0 0
        %1953 = vmatmul.mubr.bf16.gmra.mrb[0].mxu0 %v1872
        %v1954 = vpop.f32.mrb[0].mxu0
        %v1955 = vadd.f32 0.0, %v1954
        %v1956 = vpop.f32.mrb[0].mxu0
        %v1957 = vpop.f32.mrb[0].mxu0
        %v1958 = vadd.f32 0.0, %v1957
        %v1959 = vpop.f32.mrb[0].mxu0
        %1960 = vmatprep.mubr.bf16.mxu0 0
        %1961 = vmatmul.mubr.bf16.gmra.mrb[0].mxu0 %v1875
        %v1962 = vpop.f32.mrb[0].mxu0
        %v1963 = vadd.f32 0.0, %v1962
        %v1964 = vpop.f32.mrb[0].mxu0
        %v1965 = vpop.f32.mrb[0].mxu0
        %v1966 = vadd.f32 0.0, %v1965
        %v1967 = vpop.f32.mrb[0].mxu0
        %1968 = vmatprep.mubr.bf16.mxu0 0
        %1969 = vmatmul.mubr.bf16.gmra.mrb[0].mxu0 %v1878
        %v1970 = vpop.f32.mrb[0].mxu0
        %v1971 = vadd.f32 0.0, %v1970
        %v1972 = vpop.f32.mrb[0].mxu0
        %v1973 = vpop.f32.mrb[0].mxu0
        %v1974 = vadd.f32 0.0, %v1973
        %v1975 = vpop.f32.mrb[0].mxu0
        %1976 = vdwg.mxu0
        %v1981 = vunpack.c.l.b16 %v1815
        %v1982 = vunpack.c.l.b16 %v1816
        %v1983 = vunpack.c.l.b16 %v1817
        %v1984 = vunpack.c.l.b16 %v1818
        %v1985 = vpack.c.b16 %v1982, %v1981
        %v1986 = vpack.c.b16 %v1984, %v1983
        %v1990 = vsel %vm1855, %v1827, 0
        %v1993 = vsel %vm1855, %v1828, 0
        %v1996 = vsel %vm1855, %v1829, 0
        %v1999 = vsel %vm1855, %v1830, 0
        %v2002 = vsel %vm1855, %v1831, 0
        %v2005 = vsel %vm1855, %v1832, 0
        %v2008 = vsel %vm1855, %v1833, 0
        %v2011 = vsel %vm1855, %v1834, 0
        %2013 = vmatprep.subr.bf16.mxu0 0
        %2014 = vmatpush1.bf16.msra.mxu0 %v1985
        %2015 = vmatprep.subr.bf16.mxu0 0
        %2016 = vmatpush1.bf16.msra.mxu0 %v1986
        %2017 = vmatprep.subr.bf16.mxu0 0
        %2018 = vmatpush1.bf16.msra.mxu0 0
        %2019 = vmatprep.subr.bf16.mxu0 0
        %2020 = vmatpush1.bf16.msra.mxu0 0
        %2021 = vmatprep.subr.bf16.mxu0 0
        %2022 = vmatpush1.bf16.msra.mxu0 0
        %2023 = vmatprep.subr.bf16.mxu0 0
        %2024 = vmatpush1.bf16.msra.mxu0 0
        %2025 = vmatprep.subr.bf16.mxu0 0
        %2026 = vmatpush1.bf16.msra.mxu0 0
        %2027 = vmatprep.subr.bf16.mxu0 0
        %2028 = vmatpush1.bf16.msra.mxu0 0
        %2029 = vmatprep.subr.bf16.mxu0 0
        %2030 = vmatpush1.bf16.msra.mxu0 0
        %2031 = vmatprep.subr.bf16.mxu0 0
        %2032 = vmatpush1.bf16.msra.mxu0 0
        %2033 = vmatprep.subr.bf16.mxu0 0
        %2034 = vmatpush1.bf16.msra.mxu0 0
        %2035 = vmatprep.subr.bf16.mxu0 0
        %2036 = vmatpush1.bf16.msra.mxu0 0
        %2037 = vmatprep.subr.bf16.mxu0 0
        %2038 = vmatpush1.bf16.msra.mxu0 0
        %2039 = vmatprep.subr.bf16.mxu0 0
        %2040 = vmatpush1.bf16.msra.mxu0 0
        %2041 = vmatprep.subr.bf16.mxu0 0
        %2042 = vmatpush1.bf16.msra.mxu0 0
        %2043 = vmatprep.subr.bf16.mxu0 0
        %2044 = vmatpush1.bf16.msra.mxu0 0
        %2045 = vmatprep.mubr.bf16.mxu0 0
        %2046 = vmatmul.mubr.bf16.gmra.mrb[0].mxu0 %v1990
        %v2047 = vpop.f32.mrb[0].mxu0
        %v2048 = vadd.f32 %v1915, %v2047
        %v2049 = vpop.f32.mrb[0].mxu0
        %v2050 = vpop.f32.mrb[0].mxu0
        %v2051 = vadd.f32 %v1918, %v2050
        %v2052 = vpop.f32.mrb[0].mxu0
        %2053 = vmatprep.mubr.bf16.mxu0 0
        %2054 = vmatmul.mubr.bf16.gmra.mrb[0].mxu0 %v1993
        %v2055 = vpop.f32.mrb[0].mxu0
        %v2056 = vadd.f32 %v1923, %v2055
        %v2057 = vpop.f32.mrb[0].mxu0
        %v2058 = vpop.f32.mrb[0].mxu0
        %v2059 = vadd.f32 %v1926, %v2058
        %v2060 = vpop.f32.mrb[0].mxu0
        %2061 = vmatprep.mubr.bf16.mxu0 0
        %2062 = vmatmul.mubr.bf16.gmra.mrb[0].mxu0 %v1996
        %v2063 = vpop.f32.mrb[0].mxu0
        %v2064 = vadd.f32 %v1931, %v2063
        %v2065 = vpop.f32.mrb[0].mxu0
        %v2066 = vpop.f32.mrb[0].mxu0
        %v2067 = vadd.f32 %v1934, %v2066
        %v2068 = vpop.f32.mrb[0].mxu0
        %2069 = vmatprep.mubr.bf16.mxu0 0
        %2070 = vmatmul.mubr.bf16.gmra.mrb[0].mxu0 %v1999
        %v2071 = vpop.f32.mrb[0].mxu0
        %v2072 = vadd.f32 %v1939, %v2071
        %v2073 = vpop.f32.mrb[0].mxu0
        %v2074 = vpop.f32.mrb[0].mxu0
        %v2075 = vadd.f32 %v1942, %v2074
        %v2076 = vpop.f32.mrb[0].mxu0
        %2077 = vmatprep.mubr.bf16.mxu0 0
        %2078 = vmatmul.mubr.bf16.gmra.mrb[0].mxu0 %v2002
        %v2079 = vpop.f32.mrb[0].mxu0
        %v2080 = vadd.f32 %v1947, %v2079
        %v2081 = vpop.f32.mrb[0].mxu0
        %v2082 = vpop.f32.mrb[0].mxu0
        %v2083 = vadd.f32 %v1950, %v2082
        %v2084 = vpop.f32.mrb[0].mxu0
        %2085 = vmatprep.mubr.bf16.mxu0 0
        %2086 = vmatmul.mubr.bf16.gmra.mrb[0].mxu0 %v2005
        %v2087 = vpop.f32.mrb[0].mxu0
        %v2088 = vadd.f32 %v1955, %v2087
        %v2089 = vpop.f32.mrb[0].mxu0
        %v2090 = vpop.f32.mrb[0].mxu0
        %v2091 = vadd.f32 %v1958, %v2090
        %v2092 = vpop.f32.mrb[0].mxu0
        %2093 = vmatprep.mubr.bf16.mxu0 0
        %2094 = vmatmul.mubr.bf16.gmra.mrb[0].mxu0 %v2008
        %v2095 = vpop.f32.mrb[0].mxu0
        %v2096 = vadd.f32 %v1963, %v2095
        %v2097 = vpop.f32.mrb[0].mxu0
        %v2098 = vpop.f32.mrb[0].mxu0
        %v2099 = vadd.f32 %v1966, %v2098
        %v2100 = vpop.f32.mrb[0].mxu0
        %2101 = vmatprep.mubr.bf16.mxu0 0
        %2102 = vmatmul.mubr.bf16.gmra.mrb[0].mxu0 %v2011
        %v2103 = vpop.f32.mrb[0].mxu0
        %v2104 = vadd.f32 %v1971, %v2103
        %v2105 = vpop.f32.mrb[0].mxu0
        %v2106 = vpop.f32.mrb[0].mxu0
        %v2107 = vadd.f32 %v1974, %v2106
        %v2108 = vpop.f32.mrb[0].mxu0
        %2109 = vdwg.mxu0
        %v2110 = vpack.c.bf16 %v1800, %v1799
        %v2111 = vpack.c.bf16 %v1802, %v1801
        %v2112 = vpack.c.bf16 %v1804, %v1803
        %v2113 = vpack.c.bf16 %v1806, %v1805
        %v2114 = vpack.c.bf16 %v1808, %v1807
        %v2115 = vpack.c.bf16 %v1810, %v1809
        %v2116 = vpack.c.bf16 %v1812, %v1811
        %v2117 = vpack.c.bf16 %v1814, %v1813
        %v2122 = vunpack.c.l.b16 %v1823
        %v2123 = vunpack.c.l.b16 %v1824
        %v2124 = vunpack.c.l.b16 %v1825
        %v2125 = vunpack.c.l.b16 %v1826
        %v2126 = vpack.c.b16 %v2123, %v2122
        %v2127 = vpack.c.b16 %v2125, %v2124
        %v2131 = vsel %vm1855, %v2110, 0
        %v2134 = vsel %vm1855, %v2111, 0
        %v2137 = vsel %vm1855, %v2112, 0
        %v2140 = vsel %vm1855, %v2113, 0
        %v2143 = vsel %vm1855, %v2114, 0
        %v2146 = vsel %vm1855, %v2115, 0
        %v2149 = vsel %vm1855, %v2116, 0
        %v2152 = vsel %vm1855, %v2117, 0
        %2154 = vmatprep.subr.bf16.mxu0 0
        %2155 = vmatpush1.bf16.msra.mxu0 %v2126
        %2156 = vmatprep.subr.bf16.mxu0 0
        %2157 = vmatpush1.bf16.msra.mxu0 %v2127
        %2158 = vmatprep.subr.bf16.mxu0 0
        %2159 = vmatpush1.bf16.msra.mxu0 0
        %2160 = vmatprep.subr.bf16.mxu0 0
        %2161 = vmatpush1.bf16.msra.mxu0 0
        %2162 = vmatprep.subr.bf16.mxu0 0
        %2163 = vmatpush1.bf16.msra.mxu0 0
        %2164 = vmatprep.subr.bf16.mxu0 0
        %2165 = vmatpush1.bf16.msra.mxu0 0
        %2166 = vmatprep.subr.bf16.mxu0 0
        %2167 = vmatpush1.bf16.msra.mxu0 0
        %2168 = vmatprep.subr.bf16.mxu0 0
        %2169 = vmatpush1.bf16.msra.mxu0 0
        %2170 = vmatprep.subr.bf16.mxu0 0
        %2171 = vmatpush1.bf16.msra.mxu0 0
        %2172 = vmatprep.subr.bf16.mxu0 0
        %2173 = vmatpush1.bf16.msra.mxu0 0
        %2174 = vmatprep.subr.bf16.mxu0 0
        %2175 = vmatpush1.bf16.msra.mxu0 0
        %2176 = vmatprep.subr.bf16.mxu0 0
        %2177 = vmatpush1.bf16.msra.mxu0 0
        %2178 = vmatprep.subr.bf16.mxu0 0
        %2179 = vmatpush1.bf16.msra.mxu0 0
        %2180 = vmatprep.subr.bf16.mxu0 0
        %2181 = vmatpush1.bf16.msra.mxu0 0
        %2182 = vmatprep.subr.bf16.mxu0 0
        %2183 = vmatpush1.bf16.msra.mxu0 0
        %2184 = vmatprep.subr.bf16.mxu0 0
        %2185 = vmatpush1.bf16.msra.mxu0 0
        %2186 = vmatprep.mubr.bf16.mxu0 0
        %2187 = vmatmul.mubr.bf16.gmra.mrb[0].mxu0 %v2131
        %v2188 = vpop.f32.mrb[0].mxu0
        %v2189 = vadd.f32 0.0, %v2188
        %v2190 = vpop.f32.mrb[0].mxu0
        %v2191 = vpop.f32.mrb[0].mxu0
        %v2192 = vadd.f32 0.0, %v2191
        %v2193 = vpop.f32.mrb[0].mxu0
        %2194 = vmatprep.mubr.bf16.mxu0 0
        %2195 = vmatmul.mubr.bf16.gmra.mrb[0].mxu0 %v2134
        %v2196 = vpop.f32.mrb[0].mxu0
        %v2197 = vadd.f32 0.0, %v2196
        %v2198 = vpop.f32.mrb[0].mxu0
        %v2199 = vpop.f32.mrb[0].mxu0
        %v2200 = vadd.f32 0.0, %v2199
        %v2201 = vpop.f32.mrb[0].mxu0
        %2202 = vmatprep.mubr.bf16.mxu0 0
        %2203 = vmatmul.mubr.bf16.gmra.mrb[0].mxu0 %v2137
        %v2204 = vpop.f32.mrb[0].mxu0
        %v2205 = vadd.f32 0.0, %v2204
        %v2206 = vpop.f32.mrb[0].mxu0
        %v2207 = vpop.f32.mrb[0].mxu0
        %v2208 = vadd.f32 0.0, %v2207
        %v2209 = vpop.f32.mrb[0].mxu0
        %2210 = vmatprep.mubr.bf16.mxu0 0
        %2211 = vmatmul.mubr.bf16.gmra.mrb[0].mxu0 %v2140
        %v2212 = vpop.f32.mrb[0].mxu0
        %v2213 = vadd.f32 0.0, %v2212
        %v2214 = vpop.f32.mrb[0].mxu0
        %v2215 = vpop.f32.mrb[0].mxu0
        %v2216 = vadd.f32 0.0, %v2215
        %v2217 = vpop.f32.mrb[0].mxu0
        %2218 = vmatprep.mubr.bf16.mxu0 0
        %2219 = vmatmul.mubr.bf16.gmra.mrb[0].mxu0 %v2143
        %v2220 = vpop.f32.mrb[0].mxu0
        %v2221 = vadd.f32 0.0, %v2220
        %v2222 = vpop.f32.mrb[0].mxu0
        %v2223 = vpop.f32.mrb[0].mxu0
        %v2224 = vadd.f32 0.0, %v2223
        %v2225 = vpop.f32.mrb[0].mxu0
        %2226 = vmatprep.mubr.bf16.mxu0 0
        %2227 = vmatmul.mubr.bf16.gmra.mrb[0].mxu0 %v2146
        %v2228 = vpop.f32.mrb[0].mxu0
        %v2229 = vadd.f32 0.0, %v2228
        %v2230 = vpop.f32.mrb[0].mxu0
        %v2231 = vpop.f32.mrb[0].mxu0
        %v2232 = vadd.f32 0.0, %v2231
        %v2233 = vpop.f32.mrb[0].mxu0
        %2234 = vmatprep.mubr.bf16.mxu0 0
        %2235 = vmatmul.mubr.bf16.gmra.mrb[0].mxu0 %v2149
        %v2236 = vpop.f32.mrb[0].mxu0
        %v2237 = vadd.f32 0.0, %v2236
        %v2238 = vpop.f32.mrb[0].mxu0
        %v2239 = vpop.f32.mrb[0].mxu0
        %v2240 = vadd.f32 0.0, %v2239
        %v2241 = vpop.f32.mrb[0].mxu0
        %2242 = vmatprep.mubr.bf16.mxu0 0
        %2243 = vmatmul.mubr.bf16.gmra.mrb[0].mxu0 %v2152
        %v2244 = vpop.f32.mrb[0].mxu0
        %v2245 = vadd.f32 0.0, %v2244
        %v2246 = vpop.f32.mrb[0].mxu0
        %v2247 = vpop.f32.mrb[0].mxu0
        %v2248 = vadd.f32 0.0, %v2247
        %v2249 = vpop.f32.mrb[0].mxu0
        %2250 = vdwg.mxu0
        %v2251 = vadd.f32 %v2048, %v2189
        %v2252 = vadd.f32 %v2051, %v2192
        %v2253 = vadd.f32 %v2056, %v2197
        %v2254 = vadd.f32 %v2059, %v2200
        %v2255 = vadd.f32 %v2064, %v2205
        %v2256 = vadd.f32 %v2067, %v2208
        %v2257 = vadd.f32 %v2072, %v2213
        %v2258 = vadd.f32 %v2075, %v2216
        %v2259 = vadd.f32 %v2080, %v2221
        %v2260 = vadd.f32 %v2083, %v2224
        %v2261 = vadd.f32 %v2088, %v2229
        %v2262 = vadd.f32 %v2091, %v2232
        %v2263 = vadd.f32 %v2096, %v2237
        %v2264 = vadd.f32 %v2099, %v2240
        %v2265 = vadd.f32 %v2104, %v2245
        %v2266 = vadd.f32 %v2107, %v2248
        %v2267 = vld [vmem:[%s7] sm:$0x1]
        %v2269 = vlaneseq
        %v2270 = vshrl.u32 %v2269, 7
        %v2271 = vsub.s32 0, %v2270
        %v2272 = vrot.slane %v2267, %v2271
        %v2274 = vadd.f32 %v2251, %v2272
        %v2275 = vadd.f32 %v2252, %v2272
        %v2276 = vadd.f32 %v2253, %v2272
        %v2277 = vadd.f32 %v2254, %v2272
        %v2278 = vadd.f32 %v2255, %v2272
        %v2279 = vadd.f32 %v2256, %v2272
        %v2280 = vadd.f32 %v2257, %v2272
        %v2281 = vadd.f32 %v2258, %v2272
        %v2282 = vadd.f32 %v2259, %v2272
        %v2283 = vadd.f32 %v2260, %v2272
        %v2284 = vadd.f32 %v2261, %v2272
        %v2285 = vadd.f32 %v2262, %v2272
        %v2286 = vadd.f32 %v2263, %v2272
        %v2287 = vadd.f32 %v2264, %v2272
        %v2288 = vadd.f32 %v2265, %v2272
        %v2289 = vadd.f32 %v2266, %v2272
        %v2290 = vmax.f32 %v2274, 0.0
        %v2291 = vmax.f32 %v2275, 0.0
        %v2292 = vmax.f32 %v2276, 0.0
        %v2293 = vmax.f32 %v2277, 0.0
        %v2294 = vmax.f32 %v2278, 0.0
        %v2295 = vmax.f32 %v2279, 0.0
        %v2296 = vmax.f32 %v2280, 0.0
        %v2297 = vmax.f32 %v2281, 0.0
        %v2298 = vmax.f32 %v2282, 0.0
        %v2299 = vmax.f32 %v2283, 0.0
        %v2300 = vmax.f32 %v2284, 0.0
        %v2301 = vmax.f32 %v2285, 0.0
        %v2302 = vmax.f32 %v2286, 0.0
        %v2303 = vmax.f32 %v2287, 0.0
        %v2304 = vmax.f32 %v2288, 0.0
        %v2305 = vmax.f32 %v2289, 0.0
        %v2306 = vsel %vm1855, %v2290, 0.0
        %2307 = vadd.xlane.f32.xlu0 %v2306
        %v2308 = vpop.xlane.xlu0 %2307
        %v2309 = vsel %vm1855, %v2291, 0.0
        %2310 = vadd.xlane.f32.xlu0 %v2309
        %v2311 = vpop.xlane.xlu0 %2310
        %v2312 = vsel %vm1855, %v2292, 0.0
        %2313 = vadd.xlane.f32.xlu0 %v2312
        %v2314 = vpop.xlane.xlu0 %2313
        %v2315 = vsel %vm1855, %v2293, 0.0
        %2316 = vadd.xlane.f32.xlu0 %v2315
        %v2317 = vpop.xlane.xlu0 %2316
        %v2318 = vsel %vm1855, %v2294, 0.0
        %2319 = vadd.xlane.f32.xlu0 %v2318
        %v2320 = vpop.xlane.xlu0 %2319
        %v2321 = vsel %vm1855, %v2295, 0.0
        %2322 = vadd.xlane.f32.xlu0 %v2321
        %v2323 = vpop.xlane.xlu0 %2322
        %v2324 = vsel %vm1855, %v2296, 0.0
        %2325 = vadd.xlane.f32.xlu0 %v2324
        %v2326 = vpop.xlane.xlu0 %2325
        %v2327 = vsel %vm1855, %v2297, 0.0
        %2328 = vadd.xlane.f32.xlu0 %v2327
        %v2329 = vpop.xlane.xlu0 %2328
        %v2330 = vsel %vm1855, %v2298, 0.0
        %2331 = vadd.xlane.f32.xlu0 %v2330
        %v2332 = vpop.xlane.xlu0 %2331
        %v2333 = vsel %vm1855, %v2299, 0.0
        %2334 = vadd.xlane.f32.xlu0 %v2333
        %v2335 = vpop.xlane.xlu0 %2334
        %v2336 = vsel %vm1855, %v2300, 0.0
        %2337 = vadd.xlane.f32.xlu0 %v2336
        %v2338 = vpop.xlane.xlu0 %2337
        %v2339 = vsel %vm1855, %v2301, 0.0
        %2340 = vadd.xlane.f32.xlu0 %v2339
        %v2341 = vpop.xlane.xlu0 %2340
        %v2342 = vsel %vm1855, %v2302, 0.0
        %2343 = vadd.xlane.f32.xlu0 %v2342
        %v2344 = vpop.xlane.xlu0 %2343
        %v2345 = vsel %vm1855, %v2303, 0.0
        %2346 = vadd.xlane.f32.xlu0 %v2345
        %v2347 = vpop.xlane.xlu0 %2346
        %v2348 = vsel %vm1855, %v2304, 0.0
        %2349 = vadd.xlane.f32.xlu0 %v2348
        %v2350 = vpop.xlane.xlu0 %2349
        %v2351 = vsel %vm1855, %v2305, 0.0
        %2352 = vadd.xlane.f32.xlu0 %v2351
        %v2353 = vpop.xlane.xlu0 %2352
        %v2354 = vrcp.pop 32.0
        %v2355 = vmul.f32 %v2308, %v2354
        %v2356 = vmul.f32 %v2311, %v2354
        %v2357 = vmul.f32 %v2314, %v2354
        %v2358 = vmul.f32 %v2317, %v2354
        %v2359 = vmul.f32 %v2320, %v2354
        %v2360 = vmul.f32 %v2323, %v2354
        %v2361 = vmul.f32 %v2326, %v2354
        %v2362 = vmul.f32 %v2329, %v2354
        %v2363 = vmul.f32 %v2332, %v2354
        %v2364 = vmul.f32 %v2335, %v2354
        %v2365 = vmul.f32 %v2338, %v2354
        %v2366 = vmul.f32 %v2341, %v2354
        %v2367 = vmul.f32 %v2344, %v2354
        %v2368 = vmul.f32 %v2347, %v2354
        %v2369 = vmul.f32 %v2350, %v2354
        %v2370 = vmul.f32 %v2353, %v2354
        %v2371 = vmul.f32 %v2290, %v2290
        %v2372 = vmul.f32 %v2291, %v2291
        %v2373 = vmul.f32 %v2292, %v2292
        %v2374 = vmul.f32 %v2293, %v2293
        %v2375 = vmul.f32 %v2294, %v2294
        %v2376 = vmul.f32 %v2295, %v2295
        %v2377 = vmul.f32 %v2296, %v2296
        %v2378 = vmul.f32 %v2297, %v2297
        %v2379 = vmul.f32 %v2298, %v2298
        %v2380 = vmul.f32 %v2299, %v2299
        %v2381 = vmul.f32 %v2300, %v2300
        %v2382 = vmul.f32 %v2301, %v2301
        %v2383 = vmul.f32 %v2302, %v2302
        %v2384 = vmul.f32 %v2303, %v2303
        %v2385 = vmul.f32 %v2304, %v2304
        %v2386 = vmul.f32 %v2305, %v2305
        %v2387 = vsel %vm1855, %v2371, 0.0
        %2388 = vadd.xlane.f32.xlu0 %v2387
        %v2389 = vpop.xlane.xlu0 %2388
        %v2390 = vsel %vm1855, %v2372, 0.0
        %2391 = vadd.xlane.f32.xlu0 %v2390
        %v2392 = vpop.xlane.xlu0 %2391
        %v2393 = vsel %vm1855, %v2373, 0.0
        %2394 = vadd.xlane.f32.xlu0 %v2393
        %v2395 = vpop.xlane.xlu0 %2394
        %v2396 = vsel %vm1855, %v2374, 0.0
        %2397 = vadd.xlane.f32.xlu0 %v2396
        %v2398 = vpop.xlane.xlu0 %2397
        %v2399 = vsel %vm1855, %v2375, 0.0
        %2400 = vadd.xlane.f32.xlu0 %v2399
        %v2401 = vpop.xlane.xlu0 %2400
        %v2402 = vsel %vm1855, %v2376, 0.0
        %2403 = vadd.xlane.f32.xlu0 %v2402
        %v2404 = vpop.xlane.xlu0 %2403
        %v2405 = vsel %vm1855, %v2377, 0.0
        %2406 = vadd.xlane.f32.xlu0 %v2405
        %v2407 = vpop.xlane.xlu0 %2406
        %v2408 = vsel %vm1855, %v2378, 0.0
        %2409 = vadd.xlane.f32.xlu0 %v2408
        %v2410 = vpop.xlane.xlu0 %2409
        %v2411 = vsel %vm1855, %v2379, 0.0
        %2412 = vadd.xlane.f32.xlu0 %v2411
        %v2413 = vpop.xlane.xlu0 %2412
        %v2414 = vsel %vm1855, %v2380, 0.0
        %2415 = vadd.xlane.f32.xlu0 %v2414
        %v2416 = vpop.xlane.xlu0 %2415
        %v2417 = vsel %vm1855, %v2381, 0.0
        %2418 = vadd.xlane.f32.xlu0 %v2417
        %v2419 = vpop.xlane.xlu0 %2418
        %v2420 = vsel %vm1855, %v2382, 0.0
        %2421 = vadd.xlane.f32.xlu0 %v2420
        %v2422 = vpop.xlane.xlu0 %2421
        %v2423 = vsel %vm1855, %v2383, 0.0
        %2424 = vadd.xlane.f32.xlu0 %v2423
        %v2425 = vpop.xlane.xlu0 %2424
        %v2426 = vsel %vm1855, %v2384, 0.0
        %2427 = vadd.xlane.f32.xlu0 %v2426
        %v2428 = vpop.xlane.xlu0 %2427
        %v2429 = vsel %vm1855, %v2385, 0.0
        %2430 = vadd.xlane.f32.xlu0 %v2429
        %v2431 = vpop.xlane.xlu0 %2430
        %v2432 = vsel %vm1855, %v2386, 0.0
        %2433 = vadd.xlane.f32.xlu0 %v2432
        %v2434 = vpop.xlane.xlu0 %2433
        %v2435 = vmul.f32 %v2389, %v2354
        %v2436 = vmul.f32 %v2392, %v2354
        %v2437 = vmul.f32 %v2395, %v2354
        %v2438 = vmul.f32 %v2398, %v2354
        %v2439 = vmul.f32 %v2401, %v2354
        %v2440 = vmul.f32 %v2404, %v2354
        %v2441 = vmul.f32 %v2407, %v2354
        %v2442 = vmul.f32 %v2410, %v2354
        %v2443 = vmul.f32 %v2413, %v2354
        %v2444 = vmul.f32 %v2416, %v2354
        %v2445 = vmul.f32 %v2419, %v2354
        %v2446 = vmul.f32 %v2422, %v2354
        %v2447 = vmul.f32 %v2425, %v2354
        %v2448 = vmul.f32 %v2428, %v2354
        %v2449 = vmul.f32 %v2431, %v2354
        %v2450 = vmul.f32 %v2434, %v2354
        %v2451 = vmul.f32 %v2355, %v2355
        %v2452 = vmul.f32 %v2356, %v2356
        %v2453 = vmul.f32 %v2357, %v2357
        %v2454 = vmul.f32 %v2358, %v2358
        %v2455 = vmul.f32 %v2359, %v2359
        %v2456 = vmul.f32 %v2360, %v2360
        %v2457 = vmul.f32 %v2361, %v2361
        %v2458 = vmul.f32 %v2362, %v2362
        %v2459 = vmul.f32 %v2363, %v2363
        %v2460 = vmul.f32 %v2364, %v2364
        %v2461 = vmul.f32 %v2365, %v2365
        %v2462 = vmul.f32 %v2366, %v2366
        %v2463 = vmul.f32 %v2367, %v2367
        %v2464 = vmul.f32 %v2368, %v2368
        %v2465 = vmul.f32 %v2369, %v2369
        %v2466 = vmul.f32 %v2370, %v2370
        %v2467 = vsub.f32 %v2435, %v2451
        %v2468 = vsub.f32 %v2436, %v2452
        %v2469 = vsub.f32 %v2437, %v2453
        %v2470 = vsub.f32 %v2438, %v2454
        %v2471 = vsub.f32 %v2439, %v2455
        %v2472 = vsub.f32 %v2440, %v2456
        %v2473 = vsub.f32 %v2441, %v2457
        %v2474 = vsub.f32 %v2442, %v2458
        %v2475 = vsub.f32 %v2443, %v2459
        %v2476 = vsub.f32 %v2444, %v2460
        %v2477 = vsub.f32 %v2445, %v2461
        %v2478 = vsub.f32 %v2446, %v2462
        %v2479 = vsub.f32 %v2447, %v2463
        %v2480 = vsub.f32 %v2448, %v2464
        %v2481 = vsub.f32 %v2449, %v2465
        %v2482 = vsub.f32 %v2450, %v2466
        %v2483 = vmax.f32 %v2467, 0.0
        %v2484 = vmax.f32 %v2468, 0.0
        %v2485 = vmax.f32 %v2469, 0.0
        %v2486 = vmax.f32 %v2470, 0.0
        %v2487 = vmax.f32 %v2471, 0.0
        %v2488 = vmax.f32 %v2472, 0.0
        %v2489 = vmax.f32 %v2473, 0.0
        %v2490 = vmax.f32 %v2474, 0.0
        %v2491 = vmax.f32 %v2475, 0.0
        %v2492 = vmax.f32 %v2476, 0.0
        %v2493 = vmax.f32 %v2477, 0.0
        %v2494 = vmax.f32 %v2478, 0.0
        %v2495 = vmax.f32 %v2479, 0.0
        %v2496 = vmax.f32 %v2480, 0.0
        %v2497 = vmax.f32 %v2481, 0.0
        %v2498 = vmax.f32 %v2482, 0.0
        %v2499 = vadd.f32 %v2483, 1e-05
        %v2500 = vadd.f32 %v2484, 1e-05
        %v2501 = vadd.f32 %v2485, 1e-05
        %v2502 = vadd.f32 %v2486, 1e-05
        %v2503 = vadd.f32 %v2487, 1e-05
        %v2504 = vadd.f32 %v2488, 1e-05
        %v2505 = vadd.f32 %v2489, 1e-05
        %v2506 = vadd.f32 %v2490, 1e-05
        %v2507 = vadd.f32 %v2491, 1e-05
        %v2508 = vadd.f32 %v2492, 1e-05
        %v2509 = vadd.f32 %v2493, 1e-05
        %v2510 = vadd.f32 %v2494, 1e-05
        %v2511 = vadd.f32 %v2495, 1e-05
        %v2512 = vadd.f32 %v2496, 1e-05
        %v2513 = vadd.f32 %v2497, 1e-05
        %v2514 = vadd.f32 %v2498, 1e-05
        %v2515 = vrsqrt.pop %v2499
        %v2516 = vrsqrt.pop %v2500
        %v2517 = vrsqrt.pop %v2501
        %v2518 = vrsqrt.pop %v2502
        %v2519 = vrsqrt.pop %v2503
        %v2520 = vrsqrt.pop %v2504
        %v2521 = vrsqrt.pop %v2505
        %v2522 = vrsqrt.pop %v2506
        %v2523 = vrsqrt.pop %v2507
        %v2524 = vrsqrt.pop %v2508
        %v2525 = vrsqrt.pop %v2509
        %v2526 = vrsqrt.pop %v2510
        %v2527 = vrsqrt.pop %v2511
        %v2528 = vrsqrt.pop %v2512
        %v2529 = vrsqrt.pop %v2513
        %v2530 = vrsqrt.pop %v2514
        %v2531 = vsub.f32 %v2290, %v2355
        %v2532 = vsub.f32 %v2291, %v2356
        %v2533 = vsub.f32 %v2292, %v2357
        %v2534 = vsub.f32 %v2293, %v2358
        %v2535 = vsub.f32 %v2294, %v2359
        %v2536 = vsub.f32 %v2295, %v2360
        %v2537 = vsub.f32 %v2296, %v2361
        %v2538 = vsub.f32 %v2297, %v2362
        %v2539 = vsub.f32 %v2298, %v2363
        %v2540 = vsub.f32 %v2299, %v2364
        %v2541 = vsub.f32 %v2300, %v2365
        %v2542 = vsub.f32 %v2301, %v2366
        %v2543 = vsub.f32 %v2302, %v2367
        %v2544 = vsub.f32 %v2303, %v2368
        %v2545 = vsub.f32 %v2304, %v2369
        %v2546 = vsub.f32 %v2305, %v2370
        %v2547 = vld [vmem:[%s9] sm:$0x1]
        %v2549 = vlaneseq
        %v2550 = vshrl.u32 %v2549, 7
        %v2551 = vsub.s32 0, %v2550
        %v2552 = vrot.slane %v2547, %v2551
        %v2554 = vmul.f32 %v2515, %v2552
        %v2555 = vmul.f32 %v2516, %v2552
        %v2556 = vmul.f32 %v2517, %v2552
        %v2557 = vmul.f32 %v2518, %v2552
        %v2558 = vmul.f32 %v2519, %v2552
        %v2559 = vmul.f32 %v2520, %v2552
        %v2560 = vmul.f32 %v2521, %v2552
        %v2561 = vmul.f32 %v2522, %v2552
        %v2562 = vmul.f32 %v2523, %v2552
        %v2563 = vmul.f32 %v2524, %v2552
        %v2564 = vmul.f32 %v2525, %v2552
        %v2565 = vmul.f32 %v2526, %v2552
        %v2566 = vmul.f32 %v2527, %v2552
        %v2567 = vmul.f32 %v2528, %v2552
        %v2568 = vmul.f32 %v2529, %v2552
        %v2569 = vmul.f32 %v2530, %v2552
        %v2570 = vmul.f32 %v2531, %v2554
        %v2571 = vmul.f32 %v2532, %v2555
        %v2572 = vmul.f32 %v2533, %v2556
        %v2573 = vmul.f32 %v2534, %v2557
        %v2574 = vmul.f32 %v2535, %v2558
        %v2575 = vmul.f32 %v2536, %v2559
        %v2576 = vmul.f32 %v2537, %v2560
        %v2577 = vmul.f32 %v2538, %v2561
        %v2578 = vmul.f32 %v2539, %v2562
        %v2579 = vmul.f32 %v2540, %v2563
        %v2580 = vmul.f32 %v2541, %v2564
        %v2581 = vmul.f32 %v2542, %v2565
        %v2582 = vmul.f32 %v2543, %v2566
        %v2583 = vmul.f32 %v2544, %v2567
        %v2584 = vmul.f32 %v2545, %v2568
        %v2585 = vmul.f32 %v2546, %v2569
        %v2586 = vld [vmem:[%s11] sm:$0x1]
        %v2588 = vlaneseq
        %v2589 = vshrl.u32 %v2588, 7
        %v2590 = vsub.s32 0, %v2589
        %v2591 = vrot.slane %v2586, %v2590
        %v2593 = vadd.f32 %v2570, %v2591
        %v2594 = vadd.f32 %v2571, %v2591
        %v2595 = vadd.f32 %v2572, %v2591
        %v2596 = vadd.f32 %v2573, %v2591
        %v2597 = vadd.f32 %v2574, %v2591
        %v2598 = vadd.f32 %v2575, %v2591
        %v2599 = vadd.f32 %v2576, %v2591
        %v2600 = vadd.f32 %v2577, %v2591
        %v2601 = vadd.f32 %v2578, %v2591
        %v2602 = vadd.f32 %v2579, %v2591
        %v2603 = vadd.f32 %v2580, %v2591
        %v2604 = vadd.f32 %v2581, %v2591
        %v2605 = vadd.f32 %v2582, %v2591
        %v2606 = vadd.f32 %v2583, %v2591
        %v2607 = vadd.f32 %v2584, %v2591
        %v2608 = vadd.f32 %v2585, %v2591
        %v2609 = vmul.f32 %v2593, %v1685
        %v2610 = vmul.f32 %v2594, %v1686
        %v2611 = vmul.f32 %v2595, %v1687
        %v2612 = vmul.f32 %v2596, %v1688
        %v2613 = vmul.f32 %v2597, %v1689
        %v2614 = vmul.f32 %v2598, %v1690
        %v2615 = vmul.f32 %v2599, %v1691
        %v2616 = vmul.f32 %v2600, %v1692
        %v2617 = vmul.f32 %v2601, %v1693
        %v2618 = vmul.f32 %v2602, %v1694
        %v2619 = vmul.f32 %v2603, %v1695
        %v2620 = vmul.f32 %v2604, %v1696
        %v2621 = vmul.f32 %v2605, %v1697
        %v2622 = vmul.f32 %v2606, %v1698
        %v2623 = vmul.f32 %v2607, %v1699
        %v2624 = vmul.f32 %v2608, %v1700
        %v2625 = vrot.slane %v2609, 7
        %v2626 = vrot.slane %v2610, 7
        %v2627 = vrot.slane %v2611, 7
        %v2628 = vrot.slane %v2612, 7
        %v2629 = vrot.slane %v2613, 7
        %v2630 = vrot.slane %v2614, 7
        %v2631 = vrot.slane %v2615, 7
        %v2632 = vrot.slane %v2616, 7
        %v2633 = vrot.slane %v2617, 7
        %v2634 = vrot.slane %v2618, 7
        %v2635 = vrot.slane %v2619, 7
        %v2636 = vrot.slane %v2620, 7
        %v2637 = vrot.slane %v2621, 7
        %v2638 = vrot.slane %v2622, 7
        %v2639 = vrot.slane %v2623, 7
        %v2640 = vrot.slane %v2624, 7
        %v2641 = vsel %vm1733, %v2639, %v2640
        %v2642 = vsel %vm1733, %v2638, %v2639
        %v2643 = vsel %vm1733, %v2637, %v2638
        %v2644 = vsel %vm1733, %v2636, %v2637
        %v2645 = vsel %vm1733, %v2635, %v2636
        %v2646 = vsel %vm1733, %v2634, %v2635
        %v2647 = vsel %vm1733, %v2633, %v2634
        %v2648 = vsel %vm1733, %v2632, %v2633
        %v2649 = vsel %vm1733, %v2631, %v2632
        %v2650 = vsel %vm1733, %v2630, %v2631
        %v2651 = vsel %vm1733, %v2629, %v2630
        %v2652 = vsel %vm1733, %v2628, %v2629
        %v2653 = vsel %vm1733, %v2627, %v2628
        %v2654 = vsel %vm1733, %v2626, %v2627
        %v2655 = vsel %vm1733, %v2625, %v2626
        %v2656 = vsel %vm1733, %v2640, %v2625
        %v2657 = vmul.f32 %v2656, %v1589
        %v2658 = vmul.f32 %v2655, %v1590
        %v2659 = vmul.f32 %v2654, %v1591
        %v2660 = vmul.f32 %v2653, %v1592
        %v2661 = vmul.f32 %v2652, %v1593
        %v2662 = vmul.f32 %v2651, %v1594
        %v2663 = vmul.f32 %v2650, %v1595
        %v2664 = vmul.f32 %v2649, %v1596
        %v2665 = vmul.f32 %v2648, %v1597
        %v2666 = vmul.f32 %v2647, %v1598
        %v2667 = vmul.f32 %v2646, %v1599
        %v2668 = vmul.f32 %v2645, %v1600
        %v2669 = vmul.f32 %v2644, %v1601
        %v2670 = vmul.f32 %v2643, %v1602
        %v2671 = vmul.f32 %v2642, %v1603
        %v2672 = vmul.f32 %v2641, %v1604
        %v2673 = vrot.slane %v2609, 1
        %v2674 = vrot.slane %v2610, 1
        %v2675 = vrot.slane %v2611, 1
        %v2676 = vrot.slane %v2612, 1
        %v2677 = vrot.slane %v2613, 1
        %v2678 = vrot.slane %v2614, 1
        %v2679 = vrot.slane %v2615, 1
        %v2680 = vrot.slane %v2616, 1
        %v2681 = vrot.slane %v2617, 1
        %v2682 = vrot.slane %v2618, 1
        %v2683 = vrot.slane %v2619, 1
        %v2684 = vrot.slane %v2620, 1
        %v2685 = vrot.slane %v2621, 1
        %v2686 = vrot.slane %v2622, 1
        %v2687 = vrot.slane %v2623, 1
        %v2688 = vrot.slane %v2624, 1
        %v2689 = vsel %vm1782, %v2687, %v2688
        %v2690 = vsel %vm1782, %v2686, %v2687
        %v2691 = vsel %vm1782, %v2685, %v2686
        %v2692 = vsel %vm1782, %v2684, %v2685
        %v2693 = vsel %vm1782, %v2683, %v2684
        %v2694 = vsel %vm1782, %v2682, %v2683
        %v2695 = vsel %vm1782, %v2681, %v2682
        %v2696 = vsel %vm1782, %v2680, %v2681
        %v2697 = vsel %vm1782, %v2679, %v2680
        %v2698 = vsel %vm1782, %v2678, %v2679
        %v2699 = vsel %vm1782, %v2677, %v2678
        %v2700 = vsel %vm1782, %v2676, %v2677
        %v2701 = vsel %vm1782, %v2675, %v2676
        %v2702 = vsel %vm1782, %v2674, %v2675
        %v2703 = vsel %vm1782, %v2673, %v2674
        %v2704 = vsel %vm1782, %v2688, %v2673
        %v2705 = vmul.f32 %v2703, %v1637
        %v2706 = vmul.f32 %v2702, %v1638
        %v2707 = vmul.f32 %v2701, %v1639
        %v2708 = vmul.f32 %v2700, %v1640
        %v2709 = vmul.f32 %v2699, %v1641
        %v2710 = vmul.f32 %v2698, %v1642
        %v2711 = vmul.f32 %v2697, %v1643
        %v2712 = vmul.f32 %v2696, %v1644
        %v2713 = vmul.f32 %v2695, %v1645
        %v2714 = vmul.f32 %v2694, %v1646
        %v2715 = vmul.f32 %v2693, %v1647
        %v2716 = vmul.f32 %v2692, %v1648
        %v2717 = vmul.f32 %v2691, %v1649
        %v2718 = vmul.f32 %v2690, %v1650
        %v2719 = vmul.f32 %v2689, %v1651
        %v2720 = vmul.f32 %v2704, %v1652
        %v2721 = vld [vmem:[%s13] sm:$0xf]
        %v2722 = vld [vmem:[%s13 + $0x4] sm:$0xf]
        %v2723 = vld [vmem:[%s13 + $0x8] sm:$0xf]
        %v2724 = vld [vmem:[%s13 + $0xc] sm:$0xf]
        %v2725 = vld [vmem:[%s13 + $0x10] sm:$0xf]
        %v2726 = vld [vmem:[%s13 + $0x14] sm:$0xf]
        %v2727 = vld [vmem:[%s13 + $0x18] sm:$0xf]
        %v2728 = vld [vmem:[%s13 + $0x1c] sm:$0xf]
        %v2729 = vld [vmem:[%s13 + $0x20] sm:$0xf]
        %v2730 = vld [vmem:[%s13 + $0x24] sm:$0xf]
        %v2731 = vld [vmem:[%s13 + $0x28] sm:$0xf]
        %v2732 = vld [vmem:[%s13 + $0x2c] sm:$0xf]
        %v2733 = vpack.c.bf16 %v2658, %v2657
        %v2734 = vpack.c.bf16 %v2660, %v2659
        %v2735 = vpack.c.bf16 %v2662, %v2661
        %v2736 = vpack.c.bf16 %v2664, %v2663
        %v2737 = vpack.c.bf16 %v2666, %v2665
        %v2738 = vpack.c.bf16 %v2668, %v2667
        %v2739 = vpack.c.bf16 %v2670, %v2669
        %v2740 = vpack.c.bf16 %v2672, %v2671
        %v2741 = vpack.c.bf16 %v2610, %v2609
        %v2742 = vpack.c.bf16 %v2612, %v2611
        %v2743 = vpack.c.bf16 %v2614, %v2613
        %v2744 = vpack.c.bf16 %v2616, %v2615
        %v2745 = vpack.c.bf16 %v2618, %v2617
        %v2746 = vpack.c.bf16 %v2620, %v2619
        %v2747 = vpack.c.bf16 %v2622, %v2621
        %v2748 = vpack.c.bf16 %v2624, %v2623
        %v2753 = vunpack.c.l.b16 %v2725
        %v2754 = vunpack.c.l.b16 %v2726
        %v2755 = vunpack.c.l.b16 %v2727
        %v2756 = vunpack.c.l.b16 %v2728
        %v2757 = vpack.c.b16 %v2754, %v2753
        %v2758 = vpack.c.b16 %v2756, %v2755
        %v2762 = vsel %vm1855, %v2741, 0
        %v2765 = vsel %vm1855, %v2742, 0
        %v2768 = vsel %vm1855, %v2743, 0
        %v2771 = vsel %vm1855, %v2744, 0
        %v2774 = vsel %vm1855, %v2745, 0
        %v2777 = vsel %vm1855, %v2746, 0
        %v2780 = vsel %vm1855, %v2747, 0
        %v2783 = vsel %vm1855, %v2748, 0
        %2785 = vmatprep.subr.bf16.mxu0 0
        %2786 = vmatpush1.bf16.msra.mxu0 %v2757
        %2787 = vmatprep.subr.bf16.mxu0 0
        %2788 = vmatpush1.bf16.msra.mxu0 %v2758
        %2789 = vmatprep.subr.bf16.mxu0 0
        %2790 = vmatpush1.bf16.msra.mxu0 0
        %2791 = vmatprep.subr.bf16.mxu0 0
        %2792 = vmatpush1.bf16.msra.mxu0 0
        %2793 = vmatprep.subr.bf16.mxu0 0
        %2794 = vmatpush1.bf16.msra.mxu0 0
        %2795 = vmatprep.subr.bf16.mxu0 0
        %2796 = vmatpush1.bf16.msra.mxu0 0
        %2797 = vmatprep.subr.bf16.mxu0 0
        %2798 = vmatpush1.bf16.msra.mxu0 0
        %2799 = vmatprep.subr.bf16.mxu0 0
        %2800 = vmatpush1.bf16.msra.mxu0 0
        %2801 = vmatprep.subr.bf16.mxu0 0
        %2802 = vmatpush1.bf16.msra.mxu0 0
        %2803 = vmatprep.subr.bf16.mxu0 0
        %2804 = vmatpush1.bf16.msra.mxu0 0
        %2805 = vmatprep.subr.bf16.mxu0 0
        %2806 = vmatpush1.bf16.msra.mxu0 0
        %2807 = vmatprep.subr.bf16.mxu0 0
        %2808 = vmatpush1.bf16.msra.mxu0 0
        %2809 = vmatprep.subr.bf16.mxu0 0
        %2810 = vmatpush1.bf16.msra.mxu0 0
        %2811 = vmatprep.subr.bf16.mxu0 0
        %2812 = vmatpush1.bf16.msra.mxu0 0
        %2813 = vmatprep.subr.bf16.mxu0 0
        %2814 = vmatpush1.bf16.msra.mxu0 0
        %2815 = vmatprep.subr.bf16.mxu0 0
        %2816 = vmatpush1.bf16.msra.mxu0 0
        %2817 = vmatprep.mubr.bf16.mxu0 0
        %2818 = vmatmul.mubr.bf16.gmra.mrb[0].mxu0 %v2762
        %v2819 = vpop.f32.mrb[0].mxu0
        %v2820 = vadd.f32 0.0, %v2819
        %v2821 = vpop.f32.mrb[0].mxu0
        %v2822 = vpop.f32.mrb[0].mxu0
        %v2823 = vadd.f32 0.0, %v2822
        %v2824 = vpop.f32.mrb[0].mxu0
        %2825 = vmatprep.mubr.bf16.mxu0 0
        %2826 = vmatmul.mubr.bf16.gmra.mrb[0].mxu0 %v2765
        %v2827 = vpop.f32.mrb[0].mxu0
        %v2828 = vadd.f32 0.0, %v2827
        %v2829 = vpop.f32.mrb[0].mxu0
        %v2830 = vpop.f32.mrb[0].mxu0
        %v2831 = vadd.f32 0.0, %v2830
        %v2832 = vpop.f32.mrb[0].mxu0
        %2833 = vmatprep.mubr.bf16.mxu0 0
        %2834 = vmatmul.mubr.bf16.gmra.mrb[0].mxu0 %v2768
        %v2835 = vpop.f32.mrb[0].mxu0
        %v2836 = vadd.f32 0.0, %v2835
        %v2837 = vpop.f32.mrb[0].mxu0
        %v2838 = vpop.f32.mrb[0].mxu0
        %v2839 = vadd.f32 0.0, %v2838
        %v2840 = vpop.f32.mrb[0].mxu0
        %2841 = vmatprep.mubr.bf16.mxu0 0
        %2842 = vmatmul.mubr.bf16.gmra.mrb[0].mxu0 %v2771
        %v2843 = vpop.f32.mrb[0].mxu0
        %v2844 = vadd.f32 0.0, %v2843
        %v2845 = vpop.f32.mrb[0].mxu0
        %v2846 = vpop.f32.mrb[0].mxu0
        %v2847 = vadd.f32 0.0, %v2846
        %v2848 = vpop.f32.mrb[0].mxu0
        %2849 = vmatprep.mubr.bf16.mxu0 0
        %2850 = vmatmul.mubr.bf16.gmra.mrb[0].mxu0 %v2774
        %v2851 = vpop.f32.mrb[0].mxu0
        %v2852 = vadd.f32 0.0, %v2851
        %v2853 = vpop.f32.mrb[0].mxu0
        %v2854 = vpop.f32.mrb[0].mxu0
        %v2855 = vadd.f32 0.0, %v2854
        %v2856 = vpop.f32.mrb[0].mxu0
        %2857 = vmatprep.mubr.bf16.mxu0 0
        %2858 = vmatmul.mubr.bf16.gmra.mrb[0].mxu0 %v2777
        %v2859 = vpop.f32.mrb[0].mxu0
        %v2860 = vadd.f32 0.0, %v2859
        %v2861 = vpop.f32.mrb[0].mxu0
        %v2862 = vpop.f32.mrb[0].mxu0
        %v2863 = vadd.f32 0.0, %v2862
        %v2864 = vpop.f32.mrb[0].mxu0
        %2865 = vmatprep.mubr.bf16.mxu0 0
        %2866 = vmatmul.mubr.bf16.gmra.mrb[0].mxu0 %v2780
        %v2867 = vpop.f32.mrb[0].mxu0
        %v2868 = vadd.f32 0.0, %v2867
        %v2869 = vpop.f32.mrb[0].mxu0
        %v2870 = vpop.f32.mrb[0].mxu0
        %v2871 = vadd.f32 0.0, %v2870
        %v2872 = vpop.f32.mrb[0].mxu0
        %2873 = vmatprep.mubr.bf16.mxu0 0
        %2874 = vmatmul.mubr.bf16.gmra.mrb[0].mxu0 %v2783
        %v2875 = vpop.f32.mrb[0].mxu0
        %v2876 = vadd.f32 0.0, %v2875
        %v2877 = vpop.f32.mrb[0].mxu0
        %v2878 = vpop.f32.mrb[0].mxu0
        %v2879 = vadd.f32 0.0, %v2878
        %v2880 = vpop.f32.mrb[0].mxu0
        %2881 = vdwg.mxu0
        %v2886 = vunpack.c.l.b16 %v2721
        %v2887 = vunpack.c.l.b16 %v2722
        %v2888 = vunpack.c.l.b16 %v2723
        %v2889 = vunpack.c.l.b16 %v2724
        %v2890 = vpack.c.b16 %v2887, %v2886
        %v2891 = vpack.c.b16 %v2889, %v2888
        %v2895 = vsel %vm1855, %v2733, 0
        %v2898 = vsel %vm1855, %v2734, 0
        %v2901 = vsel %vm1855, %v2735, 0
        %v2904 = vsel %vm1855, %v2736, 0
        %v2907 = vsel %vm1855, %v2737, 0
        %v2910 = vsel %vm1855, %v2738, 0
        %v2913 = vsel %vm1855, %v2739, 0
        %v2916 = vsel %vm1855, %v2740, 0
        %2918 = vmatprep.subr.bf16.mxu0 0
        %2919 = vmatpush1.bf16.msra.mxu0 %v2890
        %2920 = vmatprep.subr.bf16.mxu0 0
        %2921 = vmatpush1.bf16.msra.mxu0 %v2891
        %2922 = vmatprep.subr.bf16.mxu0 0
        %2923 = vmatpush1.bf16.msra.mxu0 0
        %2924 = vmatprep.subr.bf16.mxu0 0
        %2925 = vmatpush1.bf16.msra.mxu0 0
        %2926 = vmatprep.subr.bf16.mxu0 0
        %2927 = vmatpush1.bf16.msra.mxu0 0
        %2928 = vmatprep.subr.bf16.mxu0 0
        %2929 = vmatpush1.bf16.msra.mxu0 0
        %2930 = vmatprep.subr.bf16.mxu0 0
        %2931 = vmatpush1.bf16.msra.mxu0 0
        %2932 = vmatprep.subr.bf16.mxu0 0
        %2933 = vmatpush1.bf16.msra.mxu0 0
        %2934 = vmatprep.subr.bf16.mxu0 0
        %2935 = vmatpush1.bf16.msra.mxu0 0
        %2936 = vmatprep.subr.bf16.mxu0 0
        %2937 = vmatpush1.bf16.msra.mxu0 0
        %2938 = vmatprep.subr.bf16.mxu0 0
        %2939 = vmatpush1.bf16.msra.mxu0 0
        %2940 = vmatprep.subr.bf16.mxu0 0
        %2941 = vmatpush1.bf16.msra.mxu0 0
        %2942 = vmatprep.subr.bf16.mxu0 0
        %2943 = vmatpush1.bf16.msra.mxu0 0
        %2944 = vmatprep.subr.bf16.mxu0 0
        %2945 = vmatpush1.bf16.msra.mxu0 0
        %2946 = vmatprep.subr.bf16.mxu0 0
        %2947 = vmatpush1.bf16.msra.mxu0 0
        %2948 = vmatprep.subr.bf16.mxu0 0
        %2949 = vmatpush1.bf16.msra.mxu0 0
        %2950 = vmatprep.mubr.bf16.mxu0 0
        %2951 = vmatmul.mubr.bf16.gmra.mrb[0].mxu0 %v2895
        %v2952 = vpop.f32.mrb[0].mxu0
        %v2953 = vadd.f32 %v2820, %v2952
        %v2954 = vpop.f32.mrb[0].mxu0
        %v2955 = vpop.f32.mrb[0].mxu0
        %v2956 = vadd.f32 %v2823, %v2955
        %v2957 = vpop.f32.mrb[0].mxu0
        %2958 = vmatprep.mubr.bf16.mxu0 0
        %2959 = vmatmul.mubr.bf16.gmra.mrb[0].mxu0 %v2898
        %v2960 = vpop.f32.mrb[0].mxu0
        %v2961 = vadd.f32 %v2828, %v2960
        %v2962 = vpop.f32.mrb[0].mxu0
        %v2963 = vpop.f32.mrb[0].mxu0
        %v2964 = vadd.f32 %v2831, %v2963
        %v2965 = vpop.f32.mrb[0].mxu0
        %2966 = vmatprep.mubr.bf16.mxu0 0
        %2967 = vmatmul.mubr.bf16.gmra.mrb[0].mxu0 %v2901
        %v2968 = vpop.f32.mrb[0].mxu0
        %v2969 = vadd.f32 %v2836, %v2968
        %v2970 = vpop.f32.mrb[0].mxu0
        %v2971 = vpop.f32.mrb[0].mxu0
        %v2972 = vadd.f32 %v2839, %v2971
        %v2973 = vpop.f32.mrb[0].mxu0
        %2974 = vmatprep.mubr.bf16.mxu0 0
        %2975 = vmatmul.mubr.bf16.gmra.mrb[0].mxu0 %v2904
        %v2976 = vpop.f32.mrb[0].mxu0
        %v2977 = vadd.f32 %v2844, %v2976
        %v2978 = vpop.f32.mrb[0].mxu0
        %v2979 = vpop.f32.mrb[0].mxu0
        %v2980 = vadd.f32 %v2847, %v2979
        %v2981 = vpop.f32.mrb[0].mxu0
        %2982 = vmatprep.mubr.bf16.mxu0 0
        %2983 = vmatmul.mubr.bf16.gmra.mrb[0].mxu0 %v2907
        %v2984 = vpop.f32.mrb[0].mxu0
        %v2985 = vadd.f32 %v2852, %v2984
        %v2986 = vpop.f32.mrb[0].mxu0
        %v2987 = vpop.f32.mrb[0].mxu0
        %v2988 = vadd.f32 %v2855, %v2987
        %v2989 = vpop.f32.mrb[0].mxu0
        %2990 = vmatprep.mubr.bf16.mxu0 0
        %2991 = vmatmul.mubr.bf16.gmra.mrb[0].mxu0 %v2910
        %v2992 = vpop.f32.mrb[0].mxu0
        %v2993 = vadd.f32 %v2860, %v2992
        %v2994 = vpop.f32.mrb[0].mxu0
        %v2995 = vpop.f32.mrb[0].mxu0
        %v2996 = vadd.f32 %v2863, %v2995
        %v2997 = vpop.f32.mrb[0].mxu0
        %2998 = vmatprep.mubr.bf16.mxu0 0
        %2999 = vmatmul.mubr.bf16.gmra.mrb[0].mxu0 %v2913
        %v3000 = vpop.f32.mrb[0].mxu0
        %v3001 = vadd.f32 %v2868, %v3000
        %v3002 = vpop.f32.mrb[0].mxu0
        %v3003 = vpop.f32.mrb[0].mxu0
        %v3004 = vadd.f32 %v2871, %v3003
        %v3005 = vpop.f32.mrb[0].mxu0
        %3006 = vmatprep.mubr.bf16.mxu0 0
        %3007 = vmatmul.mubr.bf16.gmra.mrb[0].mxu0 %v2916
        %v3008 = vpop.f32.mrb[0].mxu0
        %v3009 = vadd.f32 %v2876, %v3008
        %v3010 = vpop.f32.mrb[0].mxu0
        %v3011 = vpop.f32.mrb[0].mxu0
        %v3012 = vadd.f32 %v2879, %v3011
        %v3013 = vpop.f32.mrb[0].mxu0
        %3014 = vdwg.mxu0
        %v3015 = vpack.c.bf16 %v2706, %v2705
        %v3016 = vpack.c.bf16 %v2708, %v2707
        %v3017 = vpack.c.bf16 %v2710, %v2709
        %v3018 = vpack.c.bf16 %v2712, %v2711
        %v3019 = vpack.c.bf16 %v2714, %v2713
        %v3020 = vpack.c.bf16 %v2716, %v2715
        %v3021 = vpack.c.bf16 %v2718, %v2717
        %v3022 = vpack.c.bf16 %v2720, %v2719
        %v3027 = vunpack.c.l.b16 %v2729
        %v3028 = vunpack.c.l.b16 %v2730
        %v3029 = vunpack.c.l.b16 %v2731
        %v3030 = vunpack.c.l.b16 %v2732
        %v3031 = vpack.c.b16 %v3028, %v3027
        %v3032 = vpack.c.b16 %v3030, %v3029
        %v3036 = vsel %vm1855, %v3015, 0
        %v3039 = vsel %vm1855, %v3016, 0
        %v3042 = vsel %vm1855, %v3017, 0
        %v3045 = vsel %vm1855, %v3018, 0
        %v3048 = vsel %vm1855, %v3019, 0
        %v3051 = vsel %vm1855, %v3020, 0
        %v3054 = vsel %vm1855, %v3021, 0
        %v3057 = vsel %vm1855, %v3022, 0
        %3059 = vmatprep.subr.bf16.mxu0 0
        %3060 = vmatpush1.bf16.msra.mxu0 %v3031
        %3061 = vmatprep.subr.bf16.mxu0 0
        %3062 = vmatpush1.bf16.msra.mxu0 %v3032
        %3063 = vmatprep.subr.bf16.mxu0 0
        %3064 = vmatpush1.bf16.msra.mxu0 0
        %3065 = vmatprep.subr.bf16.mxu0 0
        %3066 = vmatpush1.bf16.msra.mxu0 0
        %3067 = vmatprep.subr.bf16.mxu0 0
        %3068 = vmatpush1.bf16.msra.mxu0 0
        %3069 = vmatprep.subr.bf16.mxu0 0
        %3070 = vmatpush1.bf16.msra.mxu0 0
        %3071 = vmatprep.subr.bf16.mxu0 0
        %3072 = vmatpush1.bf16.msra.mxu0 0
        %3073 = vmatprep.subr.bf16.mxu0 0
        %3074 = vmatpush1.bf16.msra.mxu0 0
        %3075 = vmatprep.subr.bf16.mxu0 0
        %3076 = vmatpush1.bf16.msra.mxu0 0
        %3077 = vmatprep.subr.bf16.mxu0 0
        %3078 = vmatpush1.bf16.msra.mxu0 0
        %3079 = vmatprep.subr.bf16.mxu0 0
        %3080 = vmatpush1.bf16.msra.mxu0 0
        %3081 = vmatprep.subr.bf16.mxu0 0
        %3082 = vmatpush1.bf16.msra.mxu0 0
        %3083 = vmatprep.subr.bf16.mxu0 0
        %3084 = vmatpush1.bf16.msra.mxu0 0
        %3085 = vmatprep.subr.bf16.mxu0 0
        %3086 = vmatpush1.bf16.msra.mxu0 0
        %3087 = vmatprep.subr.bf16.mxu0 0
        %3088 = vmatpush1.bf16.msra.mxu0 0
        %3089 = vmatprep.subr.bf16.mxu0 0
        %3090 = vmatpush1.bf16.msra.mxu0 0
        %3091 = vmatprep.mubr.bf16.mxu0 0
        %3092 = vmatmul.mubr.bf16.gmra.mrb[0].mxu0 %v3036
        %v3093 = vpop.f32.mrb[0].mxu0
        %v3094 = vadd.f32 0.0, %v3093
        %v3095 = vpop.f32.mrb[0].mxu0
        %v3096 = vpop.f32.mrb[0].mxu0
        %v3097 = vadd.f32 0.0, %v3096
        %v3098 = vpop.f32.mrb[0].mxu0
        %3099 = vmatprep.mubr.bf16.mxu0 0
        %3100 = vmatmul.mubr.bf16.gmra.mrb[0].mxu0 %v3039
        %v3101 = vpop.f32.mrb[0].mxu0
        %v3102 = vadd.f32 0.0, %v3101
        %v3103 = vpop.f32.mrb[0].mxu0
        %v3104 = vpop.f32.mrb[0].mxu0
        %v3105 = vadd.f32 0.0, %v3104
        %v3106 = vpop.f32.mrb[0].mxu0
        %3107 = vmatprep.mubr.bf16.mxu0 0
        %3108 = vmatmul.mubr.bf16.gmra.mrb[0].mxu0 %v3042
        %v3109 = vpop.f32.mrb[0].mxu0
        %v3110 = vadd.f32 0.0, %v3109
        %v3111 = vpop.f32.mrb[0].mxu0
        %v3112 = vpop.f32.mrb[0].mxu0
        %v3113 = vadd.f32 0.0, %v3112
        %v3114 = vpop.f32.mrb[0].mxu0
        %3115 = vmatprep.mubr.bf16.mxu0 0
        %3116 = vmatmul.mubr.bf16.gmra.mrb[0].mxu0 %v3045
        %v3117 = vpop.f32.mrb[0].mxu0
        %v3118 = vadd.f32 0.0, %v3117
        %v3119 = vpop.f32.mrb[0].mxu0
        %v3120 = vpop.f32.mrb[0].mxu0
        %v3121 = vadd.f32 0.0, %v3120
        %v3122 = vpop.f32.mrb[0].mxu0
        %3123 = vmatprep.mubr.bf16.mxu0 0
        %3124 = vmatmul.mubr.bf16.gmra.mrb[0].mxu0 %v3048
        %v3125 = vpop.f32.mrb[0].mxu0
        %v3126 = vadd.f32 0.0, %v3125
        %v3127 = vpop.f32.mrb[0].mxu0
        %v3128 = vpop.f32.mrb[0].mxu0
        %v3129 = vadd.f32 0.0, %v3128
        %v3130 = vpop.f32.mrb[0].mxu0
        %3131 = vmatprep.mubr.bf16.mxu0 0
        %3132 = vmatmul.mubr.bf16.gmra.mrb[0].mxu0 %v3051
        %v3133 = vpop.f32.mrb[0].mxu0
        %v3134 = vadd.f32 0.0, %v3133
        %v3135 = vpop.f32.mrb[0].mxu0
        %v3136 = vpop.f32.mrb[0].mxu0
        %v3137 = vadd.f32 0.0, %v3136
        %v3138 = vpop.f32.mrb[0].mxu0
        %3139 = vmatprep.mubr.bf16.mxu0 0
        %3140 = vmatmul.mubr.bf16.gmra.mrb[0].mxu0 %v3054
        %v3141 = vpop.f32.mrb[0].mxu0
        %v3142 = vadd.f32 0.0, %v3141
        %v3143 = vpop.f32.mrb[0].mxu0
        %v3144 = vpop.f32.mrb[0].mxu0
        %v3145 = vadd.f32 0.0, %v3144
        %v3146 = vpop.f32.mrb[0].mxu0
        %3147 = vmatprep.mubr.bf16.mxu0 0
        %3148 = vmatmul.mubr.bf16.gmra.mrb[0].mxu0 %v3057
        %v3149 = vpop.f32.mrb[0].mxu0
        %v3150 = vadd.f32 0.0, %v3149
        %v3151 = vpop.f32.mrb[0].mxu0
        %v3152 = vpop.f32.mrb[0].mxu0
        %v3153 = vadd.f32 0.0, %v3152
        %v3154 = vpop.f32.mrb[0].mxu0
        %3155 = vdwg.mxu0
        %v3156 = vadd.f32 %v2953, %v3094
        %v3157 = vadd.f32 %v2956, %v3097
        %v3158 = vadd.f32 %v2961, %v3102
        %v3159 = vadd.f32 %v2964, %v3105
        %v3160 = vadd.f32 %v2969, %v3110
        %v3161 = vadd.f32 %v2972, %v3113
        %v3162 = vadd.f32 %v2977, %v3118
        %v3163 = vadd.f32 %v2980, %v3121
        %v3164 = vadd.f32 %v2985, %v3126
        %v3165 = vadd.f32 %v2988, %v3129
        %v3166 = vadd.f32 %v2993, %v3134
        %v3167 = vadd.f32 %v2996, %v3137
        %v3168 = vadd.f32 %v3001, %v3142
        %v3169 = vadd.f32 %v3004, %v3145
        %v3170 = vadd.f32 %v3009, %v3150
        %v3171 = vadd.f32 %v3012, %v3153
        %v3172 = vld [vmem:[%s15] sm:$0x1]
        %v3174 = vlaneseq
        %v3175 = vshrl.u32 %v3174, 7
        %v3176 = vsub.s32 0, %v3175
        %v3177 = vrot.slane %v3172, %v3176
        %v3179 = vadd.f32 %v3156, %v3177
        %v3180 = vadd.f32 %v3157, %v3177
        %v3181 = vadd.f32 %v3158, %v3177
        %v3182 = vadd.f32 %v3159, %v3177
        %v3183 = vadd.f32 %v3160, %v3177
        %v3184 = vadd.f32 %v3161, %v3177
        %v3185 = vadd.f32 %v3162, %v3177
        %v3186 = vadd.f32 %v3163, %v3177
        %v3187 = vadd.f32 %v3164, %v3177
        %v3188 = vadd.f32 %v3165, %v3177
        %v3189 = vadd.f32 %v3166, %v3177
        %v3190 = vadd.f32 %v3167, %v3177
        %v3191 = vadd.f32 %v3168, %v3177
        %v3192 = vadd.f32 %v3169, %v3177
        %v3193 = vadd.f32 %v3170, %v3177
        %v3194 = vadd.f32 %v3171, %v3177
        %v3195 = vmax.f32 %v3179, 0.0
        %v3196 = vmax.f32 %v3180, 0.0
        %v3197 = vmax.f32 %v3181, 0.0
        %v3198 = vmax.f32 %v3182, 0.0
        %v3199 = vmax.f32 %v3183, 0.0
        %v3200 = vmax.f32 %v3184, 0.0
        %v3201 = vmax.f32 %v3185, 0.0
        %v3202 = vmax.f32 %v3186, 0.0
        %v3203 = vmax.f32 %v3187, 0.0
        %v3204 = vmax.f32 %v3188, 0.0
        %v3205 = vmax.f32 %v3189, 0.0
        %v3206 = vmax.f32 %v3190, 0.0
        %v3207 = vmax.f32 %v3191, 0.0
        %v3208 = vmax.f32 %v3192, 0.0
        %v3209 = vmax.f32 %v3193, 0.0
        %v3210 = vmax.f32 %v3194, 0.0
        %v3211 = vsel %vm1855, %v3195, 0.0
        %3212 = vadd.xlane.f32.xlu0 %v3211
        %v3213 = vpop.xlane.xlu0 %3212
        %v3214 = vsel %vm1855, %v3196, 0.0
        %3215 = vadd.xlane.f32.xlu0 %v3214
        %v3216 = vpop.xlane.xlu0 %3215
        %v3217 = vsel %vm1855, %v3197, 0.0
        %3218 = vadd.xlane.f32.xlu0 %v3217
        %v3219 = vpop.xlane.xlu0 %3218
        %v3220 = vsel %vm1855, %v3198, 0.0
        %3221 = vadd.xlane.f32.xlu0 %v3220
        %v3222 = vpop.xlane.xlu0 %3221
        %v3223 = vsel %vm1855, %v3199, 0.0
        %3224 = vadd.xlane.f32.xlu0 %v3223
        %v3225 = vpop.xlane.xlu0 %3224
        %v3226 = vsel %vm1855, %v3200, 0.0
        %3227 = vadd.xlane.f32.xlu0 %v3226
        %v3228 = vpop.xlane.xlu0 %3227
        %v3229 = vsel %vm1855, %v3201, 0.0
        %3230 = vadd.xlane.f32.xlu0 %v3229
        %v3231 = vpop.xlane.xlu0 %3230
        %v3232 = vsel %vm1855, %v3202, 0.0
        %3233 = vadd.xlane.f32.xlu0 %v3232
        %v3234 = vpop.xlane.xlu0 %3233
        %v3235 = vsel %vm1855, %v3203, 0.0
        %3236 = vadd.xlane.f32.xlu0 %v3235
        %v3237 = vpop.xlane.xlu0 %3236
        %v3238 = vsel %vm1855, %v3204, 0.0
        %3239 = vadd.xlane.f32.xlu0 %v3238
        %v3240 = vpop.xlane.xlu0 %3239
        %v3241 = vsel %vm1855, %v3205, 0.0
        %3242 = vadd.xlane.f32.xlu0 %v3241
        %v3243 = vpop.xlane.xlu0 %3242
        %v3244 = vsel %vm1855, %v3206, 0.0
        %3245 = vadd.xlane.f32.xlu0 %v3244
        %v3246 = vpop.xlane.xlu0 %3245
        %v3247 = vsel %vm1855, %v3207, 0.0
        %3248 = vadd.xlane.f32.xlu0 %v3247
        %v3249 = vpop.xlane.xlu0 %3248
        %v3250 = vsel %vm1855, %v3208, 0.0
        %3251 = vadd.xlane.f32.xlu0 %v3250
        %v3252 = vpop.xlane.xlu0 %3251
        %v3253 = vsel %vm1855, %v3209, 0.0
        %3254 = vadd.xlane.f32.xlu0 %v3253
        %v3255 = vpop.xlane.xlu0 %3254
        %v3256 = vsel %vm1855, %v3210, 0.0
        %3257 = vadd.xlane.f32.xlu0 %v3256
        %v3258 = vpop.xlane.xlu0 %3257
        %v3259 = vmul.f32 %v3213, %v2354
        %v3260 = vmul.f32 %v3216, %v2354
        %v3261 = vmul.f32 %v3219, %v2354
        %v3262 = vmul.f32 %v3222, %v2354
        %v3263 = vmul.f32 %v3225, %v2354
        %v3264 = vmul.f32 %v3228, %v2354
        %v3265 = vmul.f32 %v3231, %v2354
        %v3266 = vmul.f32 %v3234, %v2354
        %v3267 = vmul.f32 %v3237, %v2354
        %v3268 = vmul.f32 %v3240, %v2354
        %v3269 = vmul.f32 %v3243, %v2354
        %v3270 = vmul.f32 %v3246, %v2354
        %v3271 = vmul.f32 %v3249, %v2354
        %v3272 = vmul.f32 %v3252, %v2354
        %v3273 = vmul.f32 %v3255, %v2354
        %v3274 = vmul.f32 %v3258, %v2354
        %v3275 = vmul.f32 %v3195, %v3195
        %v3276 = vmul.f32 %v3196, %v3196
        %v3277 = vmul.f32 %v3197, %v3197
        %v3278 = vmul.f32 %v3198, %v3198
        %v3279 = vmul.f32 %v3199, %v3199
        %v3280 = vmul.f32 %v3200, %v3200
        %v3281 = vmul.f32 %v3201, %v3201
        %v3282 = vmul.f32 %v3202, %v3202
        %v3283 = vmul.f32 %v3203, %v3203
        %v3284 = vmul.f32 %v3204, %v3204
        %v3285 = vmul.f32 %v3205, %v3205
        %v3286 = vmul.f32 %v3206, %v3206
        %v3287 = vmul.f32 %v3207, %v3207
        %v3288 = vmul.f32 %v3208, %v3208
        %v3289 = vmul.f32 %v3209, %v3209
        %v3290 = vmul.f32 %v3210, %v3210
        %v3291 = vsel %vm1855, %v3275, 0.0
        %3292 = vadd.xlane.f32.xlu0 %v3291
        %v3293 = vpop.xlane.xlu0 %3292
        %v3294 = vsel %vm1855, %v3276, 0.0
        %3295 = vadd.xlane.f32.xlu0 %v3294
        %v3296 = vpop.xlane.xlu0 %3295
        %v3297 = vsel %vm1855, %v3277, 0.0
        %3298 = vadd.xlane.f32.xlu0 %v3297
        %v3299 = vpop.xlane.xlu0 %3298
        %v3300 = vsel %vm1855, %v3278, 0.0
        %3301 = vadd.xlane.f32.xlu0 %v3300
        %v3302 = vpop.xlane.xlu0 %3301
        %v3303 = vsel %vm1855, %v3279, 0.0
        %3304 = vadd.xlane.f32.xlu0 %v3303
        %v3305 = vpop.xlane.xlu0 %3304
        %v3306 = vsel %vm1855, %v3280, 0.0
        %3307 = vadd.xlane.f32.xlu0 %v3306
        %v3308 = vpop.xlane.xlu0 %3307
        %v3309 = vsel %vm1855, %v3281, 0.0
        %3310 = vadd.xlane.f32.xlu0 %v3309
        %v3311 = vpop.xlane.xlu0 %3310
        %v3312 = vsel %vm1855, %v3282, 0.0
        %3313 = vadd.xlane.f32.xlu0 %v3312
        %v3314 = vpop.xlane.xlu0 %3313
        %v3315 = vsel %vm1855, %v3283, 0.0
        %3316 = vadd.xlane.f32.xlu0 %v3315
        %v3317 = vpop.xlane.xlu0 %3316
        %v3318 = vsel %vm1855, %v3284, 0.0
        %3319 = vadd.xlane.f32.xlu0 %v3318
        %v3320 = vpop.xlane.xlu0 %3319
        %v3321 = vsel %vm1855, %v3285, 0.0
        %3322 = vadd.xlane.f32.xlu0 %v3321
        %v3323 = vpop.xlane.xlu0 %3322
        %v3324 = vsel %vm1855, %v3286, 0.0
        %3325 = vadd.xlane.f32.xlu0 %v3324
        %v3326 = vpop.xlane.xlu0 %3325
        %v3327 = vsel %vm1855, %v3287, 0.0
        %3328 = vadd.xlane.f32.xlu0 %v3327
        %v3329 = vpop.xlane.xlu0 %3328
        %v3330 = vsel %vm1855, %v3288, 0.0
        %3331 = vadd.xlane.f32.xlu0 %v3330
        %v3332 = vpop.xlane.xlu0 %3331
        %v3333 = vsel %vm1855, %v3289, 0.0
        %3334 = vadd.xlane.f32.xlu0 %v3333
        %v3335 = vpop.xlane.xlu0 %3334
        %v3336 = vsel %vm1855, %v3290, 0.0
        %3337 = vadd.xlane.f32.xlu0 %v3336
        %v3338 = vpop.xlane.xlu0 %3337
        %v3339 = vmul.f32 %v3293, %v2354
        %v3340 = vmul.f32 %v3296, %v2354
        %v3341 = vmul.f32 %v3299, %v2354
        %v3342 = vmul.f32 %v3302, %v2354
        %v3343 = vmul.f32 %v3305, %v2354
        %v3344 = vmul.f32 %v3308, %v2354
        %v3345 = vmul.f32 %v3311, %v2354
        %v3346 = vmul.f32 %v3314, %v2354
        %v3347 = vmul.f32 %v3317, %v2354
        %v3348 = vmul.f32 %v3320, %v2354
        %v3349 = vmul.f32 %v3323, %v2354
        %v3350 = vmul.f32 %v3326, %v2354
        %v3351 = vmul.f32 %v3329, %v2354
        %v3352 = vmul.f32 %v3332, %v2354
        %v3353 = vmul.f32 %v3335, %v2354
        %v3354 = vmul.f32 %v3338, %v2354
        %v3355 = vmul.f32 %v3259, %v3259
        %v3356 = vmul.f32 %v3260, %v3260
        %v3357 = vmul.f32 %v3261, %v3261
        %v3358 = vmul.f32 %v3262, %v3262
        %v3359 = vmul.f32 %v3263, %v3263
        %v3360 = vmul.f32 %v3264, %v3264
        %v3361 = vmul.f32 %v3265, %v3265
        %v3362 = vmul.f32 %v3266, %v3266
        %v3363 = vmul.f32 %v3267, %v3267
        %v3364 = vmul.f32 %v3268, %v3268
        %v3365 = vmul.f32 %v3269, %v3269
        %v3366 = vmul.f32 %v3270, %v3270
        %v3367 = vmul.f32 %v3271, %v3271
        %v3368 = vmul.f32 %v3272, %v3272
        %v3369 = vmul.f32 %v3273, %v3273
        %v3370 = vmul.f32 %v3274, %v3274
        %v3371 = vsub.f32 %v3339, %v3355
        %v3372 = vsub.f32 %v3340, %v3356
        %v3373 = vsub.f32 %v3341, %v3357
        %v3374 = vsub.f32 %v3342, %v3358
        %v3375 = vsub.f32 %v3343, %v3359
        %v3376 = vsub.f32 %v3344, %v3360
        %v3377 = vsub.f32 %v3345, %v3361
        %v3378 = vsub.f32 %v3346, %v3362
        %v3379 = vsub.f32 %v3347, %v3363
        %v3380 = vsub.f32 %v3348, %v3364
        %v3381 = vsub.f32 %v3349, %v3365
        %v3382 = vsub.f32 %v3350, %v3366
        %v3383 = vsub.f32 %v3351, %v3367
        %v3384 = vsub.f32 %v3352, %v3368
        %v3385 = vsub.f32 %v3353, %v3369
        %v3386 = vsub.f32 %v3354, %v3370
        %v3387 = vmax.f32 %v3371, 0.0
        %v3388 = vmax.f32 %v3372, 0.0
        %v3389 = vmax.f32 %v3373, 0.0
        %v3390 = vmax.f32 %v3374, 0.0
        %v3391 = vmax.f32 %v3375, 0.0
        %v3392 = vmax.f32 %v3376, 0.0
        %v3393 = vmax.f32 %v3377, 0.0
        %v3394 = vmax.f32 %v3378, 0.0
        %v3395 = vmax.f32 %v3379, 0.0
        %v3396 = vmax.f32 %v3380, 0.0
        %v3397 = vmax.f32 %v3381, 0.0
        %v3398 = vmax.f32 %v3382, 0.0
        %v3399 = vmax.f32 %v3383, 0.0
        %v3400 = vmax.f32 %v3384, 0.0
        %v3401 = vmax.f32 %v3385, 0.0
        %v3402 = vmax.f32 %v3386, 0.0
        %v3403 = vadd.f32 %v3387, 1e-05
        %v3404 = vadd.f32 %v3388, 1e-05
        %v3405 = vadd.f32 %v3389, 1e-05
        %v3406 = vadd.f32 %v3390, 1e-05
        %v3407 = vadd.f32 %v3391, 1e-05
        %v3408 = vadd.f32 %v3392, 1e-05
        %v3409 = vadd.f32 %v3393, 1e-05
        %v3410 = vadd.f32 %v3394, 1e-05
        %v3411 = vadd.f32 %v3395, 1e-05
        %v3412 = vadd.f32 %v3396, 1e-05
        %v3413 = vadd.f32 %v3397, 1e-05
        %v3414 = vadd.f32 %v3398, 1e-05
        %v3415 = vadd.f32 %v3399, 1e-05
        %v3416 = vadd.f32 %v3400, 1e-05
        %v3417 = vadd.f32 %v3401, 1e-05
        %v3418 = vadd.f32 %v3402, 1e-05
        %v3419 = vrsqrt.pop %v3403
        %v3420 = vrsqrt.pop %v3404
        %v3421 = vrsqrt.pop %v3405
        %v3422 = vrsqrt.pop %v3406
        %v3423 = vrsqrt.pop %v3407
        %v3424 = vrsqrt.pop %v3408
        %v3425 = vrsqrt.pop %v3409
        %v3426 = vrsqrt.pop %v3410
        %v3427 = vrsqrt.pop %v3411
        %v3428 = vrsqrt.pop %v3412
        %v3429 = vrsqrt.pop %v3413
        %v3430 = vrsqrt.pop %v3414
        %v3431 = vrsqrt.pop %v3415
        %v3432 = vrsqrt.pop %v3416
        %v3433 = vrsqrt.pop %v3417
        %v3434 = vrsqrt.pop %v3418
        %v3435 = vsub.f32 %v3195, %v3259
        %v3436 = vsub.f32 %v3196, %v3260
        %v3437 = vsub.f32 %v3197, %v3261
        %v3438 = vsub.f32 %v3198, %v3262
        %v3439 = vsub.f32 %v3199, %v3263
        %v3440 = vsub.f32 %v3200, %v3264
        %v3441 = vsub.f32 %v3201, %v3265
        %v3442 = vsub.f32 %v3202, %v3266
        %v3443 = vsub.f32 %v3203, %v3267
        %v3444 = vsub.f32 %v3204, %v3268
        %v3445 = vsub.f32 %v3205, %v3269
        %v3446 = vsub.f32 %v3206, %v3270
        %v3447 = vsub.f32 %v3207, %v3271
        %v3448 = vsub.f32 %v3208, %v3272
        %v3449 = vsub.f32 %v3209, %v3273
        %v3450 = vsub.f32 %v3210, %v3274
        %v3451 = vld [vmem:[%s17] sm:$0x1]
        %v3453 = vlaneseq
        %v3454 = vshrl.u32 %v3453, 7
        %v3455 = vsub.s32 0, %v3454
        %v3456 = vrot.slane %v3451, %v3455
        %v3458 = vmul.f32 %v3419, %v3456
        %v3459 = vmul.f32 %v3420, %v3456
        %v3460 = vmul.f32 %v3421, %v3456
        %v3461 = vmul.f32 %v3422, %v3456
        %v3462 = vmul.f32 %v3423, %v3456
        %v3463 = vmul.f32 %v3424, %v3456
        %v3464 = vmul.f32 %v3425, %v3456
        %v3465 = vmul.f32 %v3426, %v3456
        %v3466 = vmul.f32 %v3427, %v3456
        %v3467 = vmul.f32 %v3428, %v3456
        %v3468 = vmul.f32 %v3429, %v3456
        %v3469 = vmul.f32 %v3430, %v3456
        %v3470 = vmul.f32 %v3431, %v3456
        %v3471 = vmul.f32 %v3432, %v3456
        %v3472 = vmul.f32 %v3433, %v3456
        %v3473 = vmul.f32 %v3434, %v3456
        %v3474 = vmul.f32 %v3435, %v3458
        %v3475 = vmul.f32 %v3436, %v3459
        %v3476 = vmul.f32 %v3437, %v3460
        %v3477 = vmul.f32 %v3438, %v3461
        %v3478 = vmul.f32 %v3439, %v3462
        %v3479 = vmul.f32 %v3440, %v3463
        %v3480 = vmul.f32 %v3441, %v3464
        %v3481 = vmul.f32 %v3442, %v3465
        %v3482 = vmul.f32 %v3443, %v3466
        %v3483 = vmul.f32 %v3444, %v3467
        %v3484 = vmul.f32 %v3445, %v3468
        %v3485 = vmul.f32 %v3446, %v3469
        %v3486 = vmul.f32 %v3447, %v3470
        %v3487 = vmul.f32 %v3448, %v3471
        %v3488 = vmul.f32 %v3449, %v3472
        %v3489 = vmul.f32 %v3450, %v3473
        %v3490 = vld [vmem:[%s19] sm:$0x1]
        %v3492 = vlaneseq
        %v3493 = vshrl.u32 %v3492, 7
        %v3494 = vsub.s32 0, %v3493
        %v3495 = vrot.slane %v3490, %v3494
        %v3497 = vadd.f32 %v3474, %v3495
        %v3498 = vadd.f32 %v3475, %v3495
        %v3499 = vadd.f32 %v3476, %v3495
        %v3500 = vadd.f32 %v3477, %v3495
        %v3501 = vadd.f32 %v3478, %v3495
        %v3502 = vadd.f32 %v3479, %v3495
        %v3503 = vadd.f32 %v3480, %v3495
        %v3504 = vadd.f32 %v3481, %v3495
        %v3505 = vadd.f32 %v3482, %v3495
        %v3506 = vadd.f32 %v3483, %v3495
        %v3507 = vadd.f32 %v3484, %v3495
        %v3508 = vadd.f32 %v3485, %v3495
        %v3509 = vadd.f32 %v3486, %v3495
        %v3510 = vadd.f32 %v3487, %v3495
        %v3511 = vadd.f32 %v3488, %v3495
        %v3512 = vadd.f32 %v3489, %v3495
        %v3513 = vld [vmem:[%s21] sm:$0x1]
        %v3514 = vpack.c.bf16 %v3498, %v3497
        %v3515 = vpack.c.bf16 %v3500, %v3499
        %v3516 = vpack.c.bf16 %v3502, %v3501
        %v3517 = vpack.c.bf16 %v3504, %v3503
        %v3518 = vpack.c.bf16 %v3506, %v3505
        %v3519 = vpack.c.bf16 %v3508, %v3507
        %v3520 = vpack.c.bf16 %v3510, %v3509
        %v3521 = vpack.c.bf16 %v3512, %v3511
        %v3522 = vld [vmem:[#allocation2] sm:$0x1]
        %3524 = vset.pattern.permute.xlu0 0
        %3525 = vperm.xlu0 %3524, %v3522
        %v3526 = vpop.permute.xlu0 %3525
        %v3528 = vlaneseq
        %v3529 = vshrl.u32 %v3528, 7
        %v3530 = vsub.s32 0, %v3529
        %v3531 = vrot.slane %v3526, %v3530
        %v3533 = vsel %vm1855, %v3513, 0
        %v3536 = vsel %vm1855, %v3514, 0
        %v3539 = vsel %vm1855, %v3515, 0
        %v3542 = vsel %vm1855, %v3516, 0
        %v3545 = vsel %vm1855, %v3517, 0
        %v3548 = vsel %vm1855, %v3518, 0
        %v3551 = vsel %vm1855, %v3519, 0
        %v3554 = vsel %vm1855, %v3520, 0
        %v3557 = vsel %vm1855, %v3521, 0
        %3559 = vmatprep.subr.bf16.mxu0 0
        %3560 = vmatpush1.bf16.xpose.msra.mxu0 %v3536
        %3561 = vmatprep.subr.bf16.mxu0 0
        %3562 = vmatpush1.bf16.xpose.msra.mxu0 %v3539
        %3563 = vmatprep.subr.bf16.mxu0 0
        %3564 = vmatpush1.bf16.xpose.msra.mxu0 %v3542
        %3565 = vmatprep.subr.bf16.mxu0 0
        %3566 = vmatpush1.bf16.xpose.msra.mxu0 %v3545
        %3567 = vmatprep.subr.bf16.mxu0 0
        %3568 = vmatpush1.bf16.xpose.msra.mxu0 %v3548
        %3569 = vmatprep.subr.bf16.mxu0 0
        %3570 = vmatpush1.bf16.xpose.msra.mxu0 %v3551
        %3571 = vmatprep.subr.bf16.mxu0 0
        %3572 = vmatpush1.bf16.xpose.msra.mxu0 %v3554
        %3573 = vmatprep.subr.bf16.mxu0 0
        %3574 = vmatpush1.bf16.xpose.msra.mxu0 %v3557
        %3575 = vmatprep.subr.bf16.mxu0 0
        %3576 = vmatpush1.bf16.xpose.msra.mxu0 0
        %3577 = vmatprep.subr.bf16.mxu0 0
        %3578 = vmatpush1.bf16.xpose.msra.mxu0 0
        %3579 = vmatprep.subr.bf16.mxu0 0
        %3580 = vmatpush1.bf16.xpose.msra.mxu0 0
        %3581 = vmatprep.subr.bf16.mxu0 0
        %3582 = vmatpush1.bf16.xpose.msra.mxu0 0
        %3583 = vmatprep.subr.bf16.mxu0 0
        %3584 = vmatpush1.bf16.xpose.msra.mxu0 0
        %3585 = vmatprep.subr.bf16.mxu0 0
        %3586 = vmatpush1.bf16.xpose.msra.mxu0 0
        %3587 = vmatprep.subr.bf16.mxu0 0
        %3588 = vmatpush1.bf16.xpose.msra.mxu0 0
        %3589 = vmatprep.subr.bf16.mxu0 0
        %3590 = vmatpush1.bf16.xpose.msra.mxu0 0
        %3591 = vmatprep.mubr.bf16.mxu0 0
        %3592 = vmatmul.mubr.bf16.gmra.mrb[0].mxu0 %v3533
        %v3593 = vpop.f32.mrb[0].mxu0
        %v3594 = vadd.f32 %v3531, %v3593
        %v3595 = vpop.f32.mrb[0].mxu0
        %v3596 = vpop.f32.mrb[0].mxu0
        %v3597 = vpop.f32.mrb[0].mxu0
        %3598 = vdwg.mxu0
        %vm3599 = vcmp.gt.f32.partialorder %v1347, 0.5
        %v3600 = vsel %vm3599, 0.0, %v3594
        %3601 = vst [vmem:[%s1319] sm:$0x1] %v3600
        %v3602 = vld [vmem:[%s25] sm:$0xf]
        %v3603 = vld [vmem:[%s25 + $0x4] sm:$0xf]
        %v3604 = vld [vmem:[%s25 + $0x8] sm:$0xf]
        %v3605 = vld [vmem:[%s25 + $0xc] sm:$0xf]
        %v3606 = vld [vmem:[%s25 + $0x10] sm:$0xf]
        %v3607 = vld [vmem:[%s25 + $0x14] sm:$0xf]
        %v3608 = vld [vmem:[%s25 + $0x18] sm:$0xf]
        %v3609 = vld [vmem:[%s25 + $0x1c] sm:$0xf]
        %v3610 = vld [vmem:[%s25 + $0x20] sm:$0xf]
        %v3611 = vld [vmem:[%s25 + $0x24] sm:$0xf]
        %v3612 = vld [vmem:[%s25 + $0x28] sm:$0xf]
        %v3613 = vld [vmem:[%s25 + $0x2c] sm:$0xf]
        %v3618 = vunpack.c.l.b16 %v3606
        %v3619 = vunpack.c.l.b16 %v3607
        %v3620 = vunpack.c.l.b16 %v3608
        %v3621 = vunpack.c.l.b16 %v3609
        %v3622 = vpack.c.b16 %v3619, %v3618
        %v3623 = vpack.c.b16 %v3621, %v3620
        %3626 = vmatprep.subr.bf16.mxu0 0
        %3627 = vmatpush1.bf16.msra.mxu0 %v3622
        %3628 = vmatprep.subr.bf16.mxu0 0
        %3629 = vmatpush1.bf16.msra.mxu0 %v3623
        %3630 = vmatprep.subr.bf16.mxu0 0
        %3631 = vmatpush1.bf16.msra.mxu0 0
        %3632 = vmatprep.subr.bf16.mxu0 0
        %3633 = vmatpush1.bf16.msra.mxu0 0
        %3634 = vmatprep.subr.bf16.mxu0 0
        %3635 = vmatpush1.bf16.msra.mxu0 0
        %3636 = vmatprep.subr.bf16.mxu0 0
        %3637 = vmatpush1.bf16.msra.mxu0 0
        %3638 = vmatprep.subr.bf16.mxu0 0
        %3639 = vmatpush1.bf16.msra.mxu0 0
        %3640 = vmatprep.subr.bf16.mxu0 0
        %3641 = vmatpush1.bf16.msra.mxu0 0
        %3642 = vmatprep.subr.bf16.mxu0 0
        %3643 = vmatpush1.bf16.msra.mxu0 0
        %3644 = vmatprep.subr.bf16.mxu0 0
        %3645 = vmatpush1.bf16.msra.mxu0 0
        %3646 = vmatprep.subr.bf16.mxu0 0
        %3647 = vmatpush1.bf16.msra.mxu0 0
        %3648 = vmatprep.subr.bf16.mxu0 0
        %3649 = vmatpush1.bf16.msra.mxu0 0
        %3650 = vmatprep.subr.bf16.mxu0 0
        %3651 = vmatpush1.bf16.msra.mxu0 0
        %3652 = vmatprep.subr.bf16.mxu0 0
        %3653 = vmatpush1.bf16.msra.mxu0 0
        %3654 = vmatprep.subr.bf16.mxu0 0
        %3655 = vmatpush1.bf16.msra.mxu0 0
        %3656 = vmatprep.subr.bf16.mxu0 0
        %3657 = vmatpush1.bf16.msra.mxu0 0
        %3658 = vmatprep.mubr.bf16.mxu0 0
        %3659 = vmatmul.mubr.bf16.gmra.mrb[0].mxu0 %v1857
        %v3660 = vpop.f32.mrb[0].mxu0
        %v3661 = vadd.f32 0.0, %v3660
        %v3662 = vpop.f32.mrb[0].mxu0
        %v3663 = vpop.f32.mrb[0].mxu0
        %v3664 = vadd.f32 0.0, %v3663
        %v3665 = vpop.f32.mrb[0].mxu0
        %3666 = vmatprep.mubr.bf16.mxu0 0
        %3667 = vmatmul.mubr.bf16.gmra.mrb[0].mxu0 %v1860
        %v3668 = vpop.f32.mrb[0].mxu0
        %v3669 = vadd.f32 0.0, %v3668
        %v3670 = vpop.f32.mrb[0].mxu0
        %v3671 = vpop.f32.mrb[0].mxu0
        %v3672 = vadd.f32 0.0, %v3671
        %v3673 = vpop.f32.mrb[0].mxu0
        %3674 = vmatprep.mubr.bf16.mxu0 0
        %3675 = vmatmul.mubr.bf16.gmra.mrb[0].mxu0 %v1863
        %v3676 = vpop.f32.mrb[0].mxu0
        %v3677 = vadd.f32 0.0, %v3676
        %v3678 = vpop.f32.mrb[0].mxu0
        %v3679 = vpop.f32.mrb[0].mxu0
        %v3680 = vadd.f32 0.0, %v3679
        %v3681 = vpop.f32.mrb[0].mxu0
        %3682 = vmatprep.mubr.bf16.mxu0 0
        %3683 = vmatmul.mubr.bf16.gmra.mrb[0].mxu0 %v1866
        %v3684 = vpop.f32.mrb[0].mxu0
        %v3685 = vadd.f32 0.0, %v3684
        %v3686 = vpop.f32.mrb[0].mxu0
        %v3687 = vpop.f32.mrb[0].mxu0
        %v3688 = vadd.f32 0.0, %v3687
        %v3689 = vpop.f32.mrb[0].mxu0
        %3690 = vmatprep.mubr.bf16.mxu0 0
        %3691 = vmatmul.mubr.bf16.gmra.mrb[0].mxu0 %v1869
        %v3692 = vpop.f32.mrb[0].mxu0
        %v3693 = vadd.f32 0.0, %v3692
        %v3694 = vpop.f32.mrb[0].mxu0
        %v3695 = vpop.f32.mrb[0].mxu0
        %v3696 = vadd.f32 0.0, %v3695
        %v3697 = vpop.f32.mrb[0].mxu0
        %3698 = vmatprep.mubr.bf16.mxu0 0
        %3699 = vmatmul.mubr.bf16.gmra.mrb[0].mxu0 %v1872
        %v3700 = vpop.f32.mrb[0].mxu0
        %v3701 = vadd.f32 0.0, %v3700
        %v3702 = vpop.f32.mrb[0].mxu0
        %v3703 = vpop.f32.mrb[0].mxu0
        %v3704 = vadd.f32 0.0, %v3703
        %v3705 = vpop.f32.mrb[0].mxu0
        %3706 = vmatprep.mubr.bf16.mxu0 0
        %3707 = vmatmul.mubr.bf16.gmra.mrb[0].mxu0 %v1875
        %v3708 = vpop.f32.mrb[0].mxu0
        %v3709 = vadd.f32 0.0, %v3708
        %v3710 = vpop.f32.mrb[0].mxu0
        %v3711 = vpop.f32.mrb[0].mxu0
        %v3712 = vadd.f32 0.0, %v3711
        %v3713 = vpop.f32.mrb[0].mxu0
        %3714 = vmatprep.mubr.bf16.mxu0 0
        %3715 = vmatmul.mubr.bf16.gmra.mrb[0].mxu0 %v1878
        %v3716 = vpop.f32.mrb[0].mxu0
        %v3717 = vadd.f32 0.0, %v3716
        %v3718 = vpop.f32.mrb[0].mxu0
        %v3719 = vpop.f32.mrb[0].mxu0
        %v3720 = vadd.f32 0.0, %v3719
        %v3721 = vpop.f32.mrb[0].mxu0
        %3722 = vdwg.mxu0
        %v3727 = vunpack.c.l.b16 %v3602
        %v3728 = vunpack.c.l.b16 %v3603
        %v3729 = vunpack.c.l.b16 %v3604
        %v3730 = vunpack.c.l.b16 %v3605
        %v3731 = vpack.c.b16 %v3728, %v3727
        %v3732 = vpack.c.b16 %v3730, %v3729
        %3735 = vmatprep.subr.bf16.mxu0 0
        %3736 = vmatpush1.bf16.msra.mxu0 %v3731
        %3737 = vmatprep.subr.bf16.mxu0 0
        %3738 = vmatpush1.bf16.msra.mxu0 %v3732
        %3739 = vmatprep.subr.bf16.mxu0 0
        %3740 = vmatpush1.bf16.msra.mxu0 0
        %3741 = vmatprep.subr.bf16.mxu0 0
        %3742 = vmatpush1.bf16.msra.mxu0 0
        %3743 = vmatprep.subr.bf16.mxu0 0
        %3744 = vmatpush1.bf16.msra.mxu0 0
        %3745 = vmatprep.subr.bf16.mxu0 0
        %3746 = vmatpush1.bf16.msra.mxu0 0
        %3747 = vmatprep.subr.bf16.mxu0 0
        %3748 = vmatpush1.bf16.msra.mxu0 0
        %3749 = vmatprep.subr.bf16.mxu0 0
        %3750 = vmatpush1.bf16.msra.mxu0 0
        %3751 = vmatprep.subr.bf16.mxu0 0
        %3752 = vmatpush1.bf16.msra.mxu0 0
        %3753 = vmatprep.subr.bf16.mxu0 0
        %3754 = vmatpush1.bf16.msra.mxu0 0
        %3755 = vmatprep.subr.bf16.mxu0 0
        %3756 = vmatpush1.bf16.msra.mxu0 0
        %3757 = vmatprep.subr.bf16.mxu0 0
        %3758 = vmatpush1.bf16.msra.mxu0 0
        %3759 = vmatprep.subr.bf16.mxu0 0
        %3760 = vmatpush1.bf16.msra.mxu0 0
        %3761 = vmatprep.subr.bf16.mxu0 0
        %3762 = vmatpush1.bf16.msra.mxu0 0
        %3763 = vmatprep.subr.bf16.mxu0 0
        %3764 = vmatpush1.bf16.msra.mxu0 0
        %3765 = vmatprep.subr.bf16.mxu0 0
        %3766 = vmatpush1.bf16.msra.mxu0 0
        %3767 = vmatprep.mubr.bf16.mxu0 0
        %3768 = vmatmul.mubr.bf16.gmra.mrb[0].mxu0 %v1990
        %v3769 = vpop.f32.mrb[0].mxu0
        %v3770 = vadd.f32 %v3661, %v3769
        %v3771 = vpop.f32.mrb[0].mxu0
        %v3772 = vpop.f32.mrb[0].mxu0
        %v3773 = vadd.f32 %v3664, %v3772
        %v3774 = vpop.f32.mrb[0].mxu0
        %3775 = vmatprep.mubr.bf16.mxu0 0
        %3776 = vmatmul.mubr.bf16.gmra.mrb[0].mxu0 %v1993
        %v3777 = vpop.f32.mrb[0].mxu0
        %v3778 = vadd.f32 %v3669, %v3777
        %v3779 = vpop.f32.mrb[0].mxu0
        %v3780 = vpop.f32.mrb[0].mxu0
        %v3781 = vadd.f32 %v3672, %v3780
        %v3782 = vpop.f32.mrb[0].mxu0
        %3783 = vmatprep.mubr.bf16.mxu0 0
        %3784 = vmatmul.mubr.bf16.gmra.mrb[0].mxu0 %v1996
        %v3785 = vpop.f32.mrb[0].mxu0
        %v3786 = vadd.f32 %v3677, %v3785
        %v3787 = vpop.f32.mrb[0].mxu0
        %v3788 = vpop.f32.mrb[0].mxu0
        %v3789 = vadd.f32 %v3680, %v3788
        %v3790 = vpop.f32.mrb[0].mxu0
        %3791 = vmatprep.mubr.bf16.mxu0 0
        %3792 = vmatmul.mubr.bf16.gmra.mrb[0].mxu0 %v1999
        %v3793 = vpop.f32.mrb[0].mxu0
        %v3794 = vadd.f32 %v3685, %v3793
        %v3795 = vpop.f32.mrb[0].mxu0
        %v3796 = vpop.f32.mrb[0].mxu0
        %v3797 = vadd.f32 %v3688, %v3796
        %v3798 = vpop.f32.mrb[0].mxu0
        %3799 = vmatprep.mubr.bf16.mxu0 0
        %3800 = vmatmul.mubr.bf16.gmra.mrb[0].mxu0 %v2002
        %v3801 = vpop.f32.mrb[0].mxu0
        %v3802 = vadd.f32 %v3693, %v3801
        %v3803 = vpop.f32.mrb[0].mxu0
        %v3804 = vpop.f32.mrb[0].mxu0
        %v3805 = vadd.f32 %v3696, %v3804
        %v3806 = vpop.f32.mrb[0].mxu0
        %3807 = vmatprep.mubr.bf16.mxu0 0
        %3808 = vmatmul.mubr.bf16.gmra.mrb[0].mxu0 %v2005
        %v3809 = vpop.f32.mrb[0].mxu0
        %v3810 = vadd.f32 %v3701, %v3809
        %v3811 = vpop.f32.mrb[0].mxu0
        %v3812 = vpop.f32.mrb[0].mxu0
        %v3813 = vadd.f32 %v3704, %v3812
        %v3814 = vpop.f32.mrb[0].mxu0
        %3815 = vmatprep.mubr.bf16.mxu0 0
        %3816 = vmatmul.mubr.bf16.gmra.mrb[0].mxu0 %v2008
        %v3817 = vpop.f32.mrb[0].mxu0
        %v3818 = vadd.f32 %v3709, %v3817
        %v3819 = vpop.f32.mrb[0].mxu0
        %v3820 = vpop.f32.mrb[0].mxu0
        %v3821 = vadd.f32 %v3712, %v3820
        %v3822 = vpop.f32.mrb[0].mxu0
        %3823 = vmatprep.mubr.bf16.mxu0 0
        %3824 = vmatmul.mubr.bf16.gmra.mrb[0].mxu0 %v2011
        %v3825 = vpop.f32.mrb[0].mxu0
        %v3826 = vadd.f32 %v3717, %v3825
        %v3827 = vpop.f32.mrb[0].mxu0
        %v3828 = vpop.f32.mrb[0].mxu0
        %v3829 = vadd.f32 %v3720, %v3828
        %v3830 = vpop.f32.mrb[0].mxu0
        %3831 = vdwg.mxu0
        %v3836 = vunpack.c.l.b16 %v3610
        %v3837 = vunpack.c.l.b16 %v3611
        %v3838 = vunpack.c.l.b16 %v3612
        %v3839 = vunpack.c.l.b16 %v3613
        %v3840 = vpack.c.b16 %v3837, %v3836
        %v3841 = vpack.c.b16 %v3839, %v3838
        %3844 = vmatprep.subr.bf16.mxu0 0
        %3845 = vmatpush1.bf16.msra.mxu0 %v3840
        %3846 = vmatprep.subr.bf16.mxu0 0
        %3847 = vmatpush1.bf16.msra.mxu0 %v3841
        %3848 = vmatprep.subr.bf16.mxu0 0
        %3849 = vmatpush1.bf16.msra.mxu0 0
        %3850 = vmatprep.subr.bf16.mxu0 0
        %3851 = vmatpush1.bf16.msra.mxu0 0
        %3852 = vmatprep.subr.bf16.mxu0 0
        %3853 = vmatpush1.bf16.msra.mxu0 0
        %3854 = vmatprep.subr.bf16.mxu0 0
        %3855 = vmatpush1.bf16.msra.mxu0 0
        %3856 = vmatprep.subr.bf16.mxu0 0
        %3857 = vmatpush1.bf16.msra.mxu0 0
        %3858 = vmatprep.subr.bf16.mxu0 0
        %3859 = vmatpush1.bf16.msra.mxu0 0
        %3860 = vmatprep.subr.bf16.mxu0 0
        %3861 = vmatpush1.bf16.msra.mxu0 0
        %3862 = vmatprep.subr.bf16.mxu0 0
        %3863 = vmatpush1.bf16.msra.mxu0 0
        %3864 = vmatprep.subr.bf16.mxu0 0
        %3865 = vmatpush1.bf16.msra.mxu0 0
        %3866 = vmatprep.subr.bf16.mxu0 0
        %3867 = vmatpush1.bf16.msra.mxu0 0
        %3868 = vmatprep.subr.bf16.mxu0 0
        %3869 = vmatpush1.bf16.msra.mxu0 0
        %3870 = vmatprep.subr.bf16.mxu0 0
        %3871 = vmatpush1.bf16.msra.mxu0 0
        %3872 = vmatprep.subr.bf16.mxu0 0
        %3873 = vmatpush1.bf16.msra.mxu0 0
        %3874 = vmatprep.subr.bf16.mxu0 0
        %3875 = vmatpush1.bf16.msra.mxu0 0
        %3876 = vmatprep.mubr.bf16.mxu0 0
        %3877 = vmatmul.mubr.bf16.gmra.mrb[0].mxu0 %v2131
        %v3878 = vpop.f32.mrb[0].mxu0
        %v3879 = vadd.f32 0.0, %v3878
        %v3880 = vpop.f32.mrb[0].mxu0
        %v3881 = vpop.f32.mrb[0].mxu0
        %v3882 = vadd.f32 0.0, %v3881
        %v3883 = vpop.f32.mrb[0].mxu0
        %3884 = vmatprep.mubr.bf16.mxu0 0
        %3885 = vmatmul.mubr.bf16.gmra.mrb[0].mxu0 %v2134
        %v3886 = vpop.f32.mrb[0].mxu0
        %v3887 = vadd.f32 0.0, %v3886
        %v3888 = vpop.f32.mrb[0].mxu0
        %v3889 = vpop.f32.mrb[0].mxu0
        %v3890 = vadd.f32 0.0, %v3889
        %v3891 = vpop.f32.mrb[0].mxu0
        %3892 = vmatprep.mubr.bf16.mxu0 0
        %3893 = vmatmul.mubr.bf16.gmra.mrb[0].mxu0 %v2137
        %v3894 = vpop.f32.mrb[0].mxu0
        %v3895 = vadd.f32 0.0, %v3894
        %v3896 = vpop.f32.mrb[0].mxu0
        %v3897 = vpop.f32.mrb[0].mxu0
        %v3898 = vadd.f32 0.0, %v3897
        %v3899 = vpop.f32.mrb[0].mxu0
        %3900 = vmatprep.mubr.bf16.mxu0 0
        %3901 = vmatmul.mubr.bf16.gmra.mrb[0].mxu0 %v2140
        %v3902 = vpop.f32.mrb[0].mxu0
        %v3903 = vadd.f32 0.0, %v3902
        %v3904 = vpop.f32.mrb[0].mxu0
        %v3905 = vpop.f32.mrb[0].mxu0
        %v3906 = vadd.f32 0.0, %v3905
        %v3907 = vpop.f32.mrb[0].mxu0
        %3908 = vmatprep.mubr.bf16.mxu0 0
        %3909 = vmatmul.mubr.bf16.gmra.mrb[0].mxu0 %v2143
        %v3910 = vpop.f32.mrb[0].mxu0
        %v3911 = vadd.f32 0.0, %v3910
        %v3912 = vpop.f32.mrb[0].mxu0
        %v3913 = vpop.f32.mrb[0].mxu0
        %v3914 = vadd.f32 0.0, %v3913
        %v3915 = vpop.f32.mrb[0].mxu0
        %3916 = vmatprep.mubr.bf16.mxu0 0
        %3917 = vmatmul.mubr.bf16.gmra.mrb[0].mxu0 %v2146
        %v3918 = vpop.f32.mrb[0].mxu0
        %v3919 = vadd.f32 0.0, %v3918
        %v3920 = vpop.f32.mrb[0].mxu0
        %v3921 = vpop.f32.mrb[0].mxu0
        %v3922 = vadd.f32 0.0, %v3921
        %v3923 = vpop.f32.mrb[0].mxu0
        %3924 = vmatprep.mubr.bf16.mxu0 0
        %3925 = vmatmul.mubr.bf16.gmra.mrb[0].mxu0 %v2149
        %v3926 = vpop.f32.mrb[0].mxu0
        %v3927 = vadd.f32 0.0, %v3926
        %v3928 = vpop.f32.mrb[0].mxu0
        %v3929 = vpop.f32.mrb[0].mxu0
        %v3930 = vadd.f32 0.0, %v3929
        %v3931 = vpop.f32.mrb[0].mxu0
        %3932 = vmatprep.mubr.bf16.mxu0 0
        %3933 = vmatmul.mubr.bf16.gmra.mrb[0].mxu0 %v2152
        %v3934 = vpop.f32.mrb[0].mxu0
        %v3935 = vadd.f32 0.0, %v3934
        %v3936 = vpop.f32.mrb[0].mxu0
        %v3937 = vpop.f32.mrb[0].mxu0
        %v3938 = vadd.f32 0.0, %v3937
        %v3939 = vpop.f32.mrb[0].mxu0
        %3940 = vdwg.mxu0
        %v3941 = vadd.f32 %v3770, %v3879
        %v3942 = vadd.f32 %v3773, %v3882
        %v3943 = vadd.f32 %v3778, %v3887
        %v3944 = vadd.f32 %v3781, %v3890
        %v3945 = vadd.f32 %v3786, %v3895
        %v3946 = vadd.f32 %v3789, %v3898
        %v3947 = vadd.f32 %v3794, %v3903
        %v3948 = vadd.f32 %v3797, %v3906
        %v3949 = vadd.f32 %v3802, %v3911
        %v3950 = vadd.f32 %v3805, %v3914
        %v3951 = vadd.f32 %v3810, %v3919
        %v3952 = vadd.f32 %v3813, %v3922
        %v3953 = vadd.f32 %v3818, %v3927
        %v3954 = vadd.f32 %v3821, %v3930
        %v3955 = vadd.f32 %v3826, %v3935
        %v3956 = vadd.f32 %v3829, %v3938
        %v3957 = vld [vmem:[%s27] sm:$0x1]
        %v3959 = vlaneseq
        %v3960 = vshrl.u32 %v3959, 7
        %v3961 = vsub.s32 0, %v3960
        %v3962 = vrot.slane %v3957, %v3961
        %v3964 = vadd.f32 %v3941, %v3962
        %v3965 = vadd.f32 %v3942, %v3962
        %v3966 = vadd.f32 %v3943, %v3962
        %v3967 = vadd.f32 %v3944, %v3962
        %v3968 = vadd.f32 %v3945, %v3962
        %v3969 = vadd.f32 %v3946, %v3962
        %v3970 = vadd.f32 %v3947, %v3962
        %v3971 = vadd.f32 %v3948, %v3962
        %v3972 = vadd.f32 %v3949, %v3962
        %v3973 = vadd.f32 %v3950, %v3962
        %v3974 = vadd.f32 %v3951, %v3962
        %v3975 = vadd.f32 %v3952, %v3962
        %v3976 = vadd.f32 %v3953, %v3962
        %v3977 = vadd.f32 %v3954, %v3962
        %v3978 = vadd.f32 %v3955, %v3962
        %v3979 = vadd.f32 %v3956, %v3962
        %v3980 = vmax.f32 %v3964, 0.0
        %v3981 = vmax.f32 %v3965, 0.0
        %v3982 = vmax.f32 %v3966, 0.0
        %v3983 = vmax.f32 %v3967, 0.0
        %v3984 = vmax.f32 %v3968, 0.0
        %v3985 = vmax.f32 %v3969, 0.0
        %v3986 = vmax.f32 %v3970, 0.0
        %v3987 = vmax.f32 %v3971, 0.0
        %v3988 = vmax.f32 %v3972, 0.0
        %v3989 = vmax.f32 %v3973, 0.0
        %v3990 = vmax.f32 %v3974, 0.0
        %v3991 = vmax.f32 %v3975, 0.0
        %v3992 = vmax.f32 %v3976, 0.0
        %v3993 = vmax.f32 %v3977, 0.0
        %v3994 = vmax.f32 %v3978, 0.0
        %v3995 = vmax.f32 %v3979, 0.0
        %v3996 = vsel %vm1855, %v3980, 0.0
        %3997 = vadd.xlane.f32.xlu0 %v3996
        %v3998 = vpop.xlane.xlu0 %3997
        %v3999 = vsel %vm1855, %v3981, 0.0
        %4000 = vadd.xlane.f32.xlu0 %v3999
        %v4001 = vpop.xlane.xlu0 %4000
        %v4002 = vsel %vm1855, %v3982, 0.0
        %4003 = vadd.xlane.f32.xlu0 %v4002
        %v4004 = vpop.xlane.xlu0 %4003
        %v4005 = vsel %vm1855, %v3983, 0.0
        %4006 = vadd.xlane.f32.xlu0 %v4005
        %v4007 = vpop.xlane.xlu0 %4006
        %v4008 = vsel %vm1855, %v3984, 0.0
        %4009 = vadd.xlane.f32.xlu0 %v4008
        %v4010 = vpop.xlane.xlu0 %4009
        %v4011 = vsel %vm1855, %v3985, 0.0
        %4012 = vadd.xlane.f32.xlu0 %v4011
        %v4013 = vpop.xlane.xlu0 %4012
        %v4014 = vsel %vm1855, %v3986, 0.0
        %4015 = vadd.xlane.f32.xlu0 %v4014
        %v4016 = vpop.xlane.xlu0 %4015
        %v4017 = vsel %vm1855, %v3987, 0.0
        %4018 = vadd.xlane.f32.xlu0 %v4017
        %v4019 = vpop.xlane.xlu0 %4018
        %v4020 = vsel %vm1855, %v3988, 0.0
        %4021 = vadd.xlane.f32.xlu0 %v4020
        %v4022 = vpop.xlane.xlu0 %4021
        %v4023 = vsel %vm1855, %v3989, 0.0
        %4024 = vadd.xlane.f32.xlu0 %v4023
        %v4025 = vpop.xlane.xlu0 %4024
        %v4026 = vsel %vm1855, %v3990, 0.0
        %4027 = vadd.xlane.f32.xlu0 %v4026
        %v4028 = vpop.xlane.xlu0 %4027
        %v4029 = vsel %vm1855, %v3991, 0.0
        %4030 = vadd.xlane.f32.xlu0 %v4029
        %v4031 = vpop.xlane.xlu0 %4030
        %v4032 = vsel %vm1855, %v3992, 0.0
        %4033 = vadd.xlane.f32.xlu0 %v4032
        %v4034 = vpop.xlane.xlu0 %4033
        %v4035 = vsel %vm1855, %v3993, 0.0
        %4036 = vadd.xlane.f32.xlu0 %v4035
        %v4037 = vpop.xlane.xlu0 %4036
        %v4038 = vsel %vm1855, %v3994, 0.0
        %4039 = vadd.xlane.f32.xlu0 %v4038
        %v4040 = vpop.xlane.xlu0 %4039
        %v4041 = vsel %vm1855, %v3995, 0.0
        %4042 = vadd.xlane.f32.xlu0 %v4041
        %v4043 = vpop.xlane.xlu0 %4042
        %v4044 = vmul.f32 %v3998, %v2354
        %v4045 = vmul.f32 %v4001, %v2354
        %v4046 = vmul.f32 %v4004, %v2354
        %v4047 = vmul.f32 %v4007, %v2354
        %v4048 = vmul.f32 %v4010, %v2354
        %v4049 = vmul.f32 %v4013, %v2354
        %v4050 = vmul.f32 %v4016, %v2354
        %v4051 = vmul.f32 %v4019, %v2354
        %v4052 = vmul.f32 %v4022, %v2354
        %v4053 = vmul.f32 %v4025, %v2354
        %v4054 = vmul.f32 %v4028, %v2354
        %v4055 = vmul.f32 %v4031, %v2354
        %v4056 = vmul.f32 %v4034, %v2354
        %v4057 = vmul.f32 %v4037, %v2354
        %v4058 = vmul.f32 %v4040, %v2354
        %v4059 = vmul.f32 %v4043, %v2354
        %v4060 = vmul.f32 %v3980, %v3980
        %v4061 = vmul.f32 %v3981, %v3981
        %v4062 = vmul.f32 %v3982, %v3982
        %v4063 = vmul.f32 %v3983, %v3983
        %v4064 = vmul.f32 %v3984, %v3984
        %v4065 = vmul.f32 %v3985, %v3985
        %v4066 = vmul.f32 %v3986, %v3986
        %v4067 = vmul.f32 %v3987, %v3987
        %v4068 = vmul.f32 %v3988, %v3988
        %v4069 = vmul.f32 %v3989, %v3989
        %v4070 = vmul.f32 %v3990, %v3990
        %v4071 = vmul.f32 %v3991, %v3991
        %v4072 = vmul.f32 %v3992, %v3992
        %v4073 = vmul.f32 %v3993, %v3993
        %v4074 = vmul.f32 %v3994, %v3994
        %v4075 = vmul.f32 %v3995, %v3995
        %v4076 = vsel %vm1855, %v4060, 0.0
        %4077 = vadd.xlane.f32.xlu0 %v4076
        %v4078 = vpop.xlane.xlu0 %4077
        %v4079 = vsel %vm1855, %v4061, 0.0
        %4080 = vadd.xlane.f32.xlu0 %v4079
        %v4081 = vpop.xlane.xlu0 %4080
        %v4082 = vsel %vm1855, %v4062, 0.0
        %4083 = vadd.xlane.f32.xlu0 %v4082
        %v4084 = vpop.xlane.xlu0 %4083
        %v4085 = vsel %vm1855, %v4063, 0.0
        %4086 = vadd.xlane.f32.xlu0 %v4085
        %v4087 = vpop.xlane.xlu0 %4086
        %v4088 = vsel %vm1855, %v4064, 0.0
        %4089 = vadd.xlane.f32.xlu0 %v4088
        %v4090 = vpop.xlane.xlu0 %4089
        %v4091 = vsel %vm1855, %v4065, 0.0
        %4092 = vadd.xlane.f32.xlu0 %v4091
        %v4093 = vpop.xlane.xlu0 %4092
        %v4094 = vsel %vm1855, %v4066, 0.0
        %4095 = vadd.xlane.f32.xlu0 %v4094
        %v4096 = vpop.xlane.xlu0 %4095
        %v4097 = vsel %vm1855, %v4067, 0.0
        %4098 = vadd.xlane.f32.xlu0 %v4097
        %v4099 = vpop.xlane.xlu0 %4098
        %v4100 = vsel %vm1855, %v4068, 0.0
        %4101 = vadd.xlane.f32.xlu0 %v4100
        %v4102 = vpop.xlane.xlu0 %4101
        %v4103 = vsel %vm1855, %v4069, 0.0
        %4104 = vadd.xlane.f32.xlu0 %v4103
        %v4105 = vpop.xlane.xlu0 %4104
        %v4106 = vsel %vm1855, %v4070, 0.0
        %4107 = vadd.xlane.f32.xlu0 %v4106
        %v4108 = vpop.xlane.xlu0 %4107
        %v4109 = vsel %vm1855, %v4071, 0.0
        %4110 = vadd.xlane.f32.xlu0 %v4109
        %v4111 = vpop.xlane.xlu0 %4110
        %v4112 = vsel %vm1855, %v4072, 0.0
        %4113 = vadd.xlane.f32.xlu0 %v4112
        %v4114 = vpop.xlane.xlu0 %4113
        %v4115 = vsel %vm1855, %v4073, 0.0
        %4116 = vadd.xlane.f32.xlu0 %v4115
        %v4117 = vpop.xlane.xlu0 %4116
        %v4118 = vsel %vm1855, %v4074, 0.0
        %4119 = vadd.xlane.f32.xlu0 %v4118
        %v4120 = vpop.xlane.xlu0 %4119
        %v4121 = vsel %vm1855, %v4075, 0.0
        %4122 = vadd.xlane.f32.xlu0 %v4121
        %v4123 = vpop.xlane.xlu0 %4122
        %v4124 = vmul.f32 %v4078, %v2354
        %v4125 = vmul.f32 %v4081, %v2354
        %v4126 = vmul.f32 %v4084, %v2354
        %v4127 = vmul.f32 %v4087, %v2354
        %v4128 = vmul.f32 %v4090, %v2354
        %v4129 = vmul.f32 %v4093, %v2354
        %v4130 = vmul.f32 %v4096, %v2354
        %v4131 = vmul.f32 %v4099, %v2354
        %v4132 = vmul.f32 %v4102, %v2354
        %v4133 = vmul.f32 %v4105, %v2354
        %v4134 = vmul.f32 %v4108, %v2354
        %v4135 = vmul.f32 %v4111, %v2354
        %v4136 = vmul.f32 %v4114, %v2354
        %v4137 = vmul.f32 %v4117, %v2354
        %v4138 = vmul.f32 %v4120, %v2354
        %v4139 = vmul.f32 %v4123, %v2354
        %v4140 = vmul.f32 %v4044, %v4044
        %v4141 = vmul.f32 %v4045, %v4045
        %v4142 = vmul.f32 %v4046, %v4046
        %v4143 = vmul.f32 %v4047, %v4047
        %v4144 = vmul.f32 %v4048, %v4048
        %v4145 = vmul.f32 %v4049, %v4049
        %v4146 = vmul.f32 %v4050, %v4050
        %v4147 = vmul.f32 %v4051, %v4051
        %v4148 = vmul.f32 %v4052, %v4052
        %v4149 = vmul.f32 %v4053, %v4053
        %v4150 = vmul.f32 %v4054, %v4054
        %v4151 = vmul.f32 %v4055, %v4055
        %v4152 = vmul.f32 %v4056, %v4056
        %v4153 = vmul.f32 %v4057, %v4057
        %v4154 = vmul.f32 %v4058, %v4058
        %v4155 = vmul.f32 %v4059, %v4059
        %v4156 = vsub.f32 %v4124, %v4140
        %v4157 = vsub.f32 %v4125, %v4141
        %v4158 = vsub.f32 %v4126, %v4142
        %v4159 = vsub.f32 %v4127, %v4143
        %v4160 = vsub.f32 %v4128, %v4144
        %v4161 = vsub.f32 %v4129, %v4145
        %v4162 = vsub.f32 %v4130, %v4146
        %v4163 = vsub.f32 %v4131, %v4147
        %v4164 = vsub.f32 %v4132, %v4148
        %v4165 = vsub.f32 %v4133, %v4149
        %v4166 = vsub.f32 %v4134, %v4150
        %v4167 = vsub.f32 %v4135, %v4151
        %v4168 = vsub.f32 %v4136, %v4152
        %v4169 = vsub.f32 %v4137, %v4153
        %v4170 = vsub.f32 %v4138, %v4154
        %v4171 = vsub.f32 %v4139, %v4155
        %v4172 = vmax.f32 %v4156, 0.0
        %v4173 = vmax.f32 %v4157, 0.0
        %v4174 = vmax.f32 %v4158, 0.0
        %v4175 = vmax.f32 %v4159, 0.0
        %v4176 = vmax.f32 %v4160, 0.0
        %v4177 = vmax.f32 %v4161, 0.0
        %v4178 = vmax.f32 %v4162, 0.0
        %v4179 = vmax.f32 %v4163, 0.0
        %v4180 = vmax.f32 %v4164, 0.0
        %v4181 = vmax.f32 %v4165, 0.0
        %v4182 = vmax.f32 %v4166, 0.0
        %v4183 = vmax.f32 %v4167, 0.0
        %v4184 = vmax.f32 %v4168, 0.0
        %v4185 = vmax.f32 %v4169, 0.0
        %v4186 = vmax.f32 %v4170, 0.0
        %v4187 = vmax.f32 %v4171, 0.0
        %v4188 = vadd.f32 %v4172, 1e-05
        %v4189 = vadd.f32 %v4173, 1e-05
        %v4190 = vadd.f32 %v4174, 1e-05
        %v4191 = vadd.f32 %v4175, 1e-05
        %v4192 = vadd.f32 %v4176, 1e-05
        %v4193 = vadd.f32 %v4177, 1e-05
        %v4194 = vadd.f32 %v4178, 1e-05
        %v4195 = vadd.f32 %v4179, 1e-05
        %v4196 = vadd.f32 %v4180, 1e-05
        %v4197 = vadd.f32 %v4181, 1e-05
        %v4198 = vadd.f32 %v4182, 1e-05
        %v4199 = vadd.f32 %v4183, 1e-05
        %v4200 = vadd.f32 %v4184, 1e-05
        %v4201 = vadd.f32 %v4185, 1e-05
        %v4202 = vadd.f32 %v4186, 1e-05
        %v4203 = vadd.f32 %v4187, 1e-05
        %v4204 = vrsqrt.pop %v4188
        %v4205 = vrsqrt.pop %v4189
        %v4206 = vrsqrt.pop %v4190
        %v4207 = vrsqrt.pop %v4191
        %v4208 = vrsqrt.pop %v4192
        %v4209 = vrsqrt.pop %v4193
        %v4210 = vrsqrt.pop %v4194
        %v4211 = vrsqrt.pop %v4195
        %v4212 = vrsqrt.pop %v4196
        %v4213 = vrsqrt.pop %v4197
        %v4214 = vrsqrt.pop %v4198
        %v4215 = vrsqrt.pop %v4199
        %v4216 = vrsqrt.pop %v4200
        %v4217 = vrsqrt.pop %v4201
        %v4218 = vrsqrt.pop %v4202
        %v4219 = vrsqrt.pop %v4203
        %v4220 = vsub.f32 %v3980, %v4044
        %v4221 = vsub.f32 %v3981, %v4045
        %v4222 = vsub.f32 %v3982, %v4046
        %v4223 = vsub.f32 %v3983, %v4047
        %v4224 = vsub.f32 %v3984, %v4048
        %v4225 = vsub.f32 %v3985, %v4049
        %v4226 = vsub.f32 %v3986, %v4050
        %v4227 = vsub.f32 %v3987, %v4051
        %v4228 = vsub.f32 %v3988, %v4052
        %v4229 = vsub.f32 %v3989, %v4053
        %v4230 = vsub.f32 %v3990, %v4054
        %v4231 = vsub.f32 %v3991, %v4055
        %v4232 = vsub.f32 %v3992, %v4056
        %v4233 = vsub.f32 %v3993, %v4057
        %v4234 = vsub.f32 %v3994, %v4058
        %v4235 = vsub.f32 %v3995, %v4059
        %v4236 = vld [vmem:[%s29] sm:$0x1]
        %v4238 = vlaneseq
        %v4239 = vshrl.u32 %v4238, 7
        %v4240 = vsub.s32 0, %v4239
        %v4241 = vrot.slane %v4236, %v4240
        %v4243 = vmul.f32 %v4204, %v4241
        %v4244 = vmul.f32 %v4205, %v4241
        %v4245 = vmul.f32 %v4206, %v4241
        %v4246 = vmul.f32 %v4207, %v4241
        %v4247 = vmul.f32 %v4208, %v4241
        %v4248 = vmul.f32 %v4209, %v4241
        %v4249 = vmul.f32 %v4210, %v4241
        %v4250 = vmul.f32 %v4211, %v4241
        %v4251 = vmul.f32 %v4212, %v4241
        %v4252 = vmul.f32 %v4213, %v4241
        %v4253 = vmul.f32 %v4214, %v4241
        %v4254 = vmul.f32 %v4215, %v4241
        %v4255 = vmul.f32 %v4216, %v4241
        %v4256 = vmul.f32 %v4217, %v4241
        %v4257 = vmul.f32 %v4218, %v4241
        %v4258 = vmul.f32 %v4219, %v4241
        %v4259 = vmul.f32 %v4220, %v4243
        %v4260 = vmul.f32 %v4221, %v4244
        %v4261 = vmul.f32 %v4222, %v4245
        %v4262 = vmul.f32 %v4223, %v4246
        %v4263 = vmul.f32 %v4224, %v4247
        %v4264 = vmul.f32 %v4225, %v4248
        %v4265 = vmul.f32 %v4226, %v4249
        %v4266 = vmul.f32 %v4227, %v4250
        %v4267 = vmul.f32 %v4228, %v4251
        %v4268 = vmul.f32 %v4229, %v4252
        %v4269 = vmul.f32 %v4230, %v4253
        %v4270 = vmul.f32 %v4231, %v4254
        %v4271 = vmul.f32 %v4232, %v4255
        %v4272 = vmul.f32 %v4233, %v4256
        %v4273 = vmul.f32 %v4234, %v4257
        %v4274 = vmul.f32 %v4235, %v4258
        %v4275 = vld [vmem:[%s31] sm:$0x1]
        %v4277 = vlaneseq
        %v4278 = vshrl.u32 %v4277, 7
        %v4279 = vsub.s32 0, %v4278
        %v4280 = vrot.slane %v4275, %v4279
        %v4282 = vadd.f32 %v4259, %v4280
        %v4283 = vadd.f32 %v4260, %v4280
        %v4284 = vadd.f32 %v4261, %v4280
        %v4285 = vadd.f32 %v4262, %v4280
        %v4286 = vadd.f32 %v4263, %v4280
        %v4287 = vadd.f32 %v4264, %v4280
        %v4288 = vadd.f32 %v4265, %v4280
        %v4289 = vadd.f32 %v4266, %v4280
        %v4290 = vadd.f32 %v4267, %v4280
        %v4291 = vadd.f32 %v4268, %v4280
        %v4292 = vadd.f32 %v4269, %v4280
        %v4293 = vadd.f32 %v4270, %v4280
        %v4294 = vadd.f32 %v4271, %v4280
        %v4295 = vadd.f32 %v4272, %v4280
        %v4296 = vadd.f32 %v4273, %v4280
        %v4297 = vadd.f32 %v4274, %v4280
        %v4298 = vmul.f32 %v4282, %v1685
        %v4299 = vmul.f32 %v4283, %v1686
        %v4300 = vmul.f32 %v4284, %v1687
        %v4301 = vmul.f32 %v4285, %v1688
        %v4302 = vmul.f32 %v4286, %v1689
        %v4303 = vmul.f32 %v4287, %v1690
        %v4304 = vmul.f32 %v4288, %v1691
        %v4305 = vmul.f32 %v4289, %v1692
        %v4306 = vmul.f32 %v4290, %v1693
        %v4307 = vmul.f32 %v4291, %v1694
        %v4308 = vmul.f32 %v4292, %v1695
        %v4309 = vmul.f32 %v4293, %v1696
        %v4310 = vmul.f32 %v4294, %v1697
        %v4311 = vmul.f32 %v4295, %v1698
        %v4312 = vmul.f32 %v4296, %v1699
        %v4313 = vmul.f32 %v4297, %v1700
        %v4314 = vrot.slane %v4298, 7
        %v4315 = vrot.slane %v4299, 7
        %v4316 = vrot.slane %v4300, 7
        %v4317 = vrot.slane %v4301, 7
        %v4318 = vrot.slane %v4302, 7
        %v4319 = vrot.slane %v4303, 7
        %v4320 = vrot.slane %v4304, 7
        %v4321 = vrot.slane %v4305, 7
        %v4322 = vrot.slane %v4306, 7
        %v4323 = vrot.slane %v4307, 7
        %v4324 = vrot.slane %v4308, 7
        %v4325 = vrot.slane %v4309, 7
        %v4326 = vrot.slane %v4310, 7
        %v4327 = vrot.slane %v4311, 7
        %v4328 = vrot.slane %v4312, 7
        %v4329 = vrot.slane %v4313, 7
        %v4330 = vsel %vm1733, %v4328, %v4329
        %v4331 = vsel %vm1733, %v4327, %v4328
        %v4332 = vsel %vm1733, %v4326, %v4327
        %v4333 = vsel %vm1733, %v4325, %v4326
        %v4334 = vsel %vm1733, %v4324, %v4325
        %v4335 = vsel %vm1733, %v4323, %v4324
        %v4336 = vsel %vm1733, %v4322, %v4323
        %v4337 = vsel %vm1733, %v4321, %v4322
        %v4338 = vsel %vm1733, %v4320, %v4321
        %v4339 = vsel %vm1733, %v4319, %v4320
        %v4340 = vsel %vm1733, %v4318, %v4319
        %v4341 = vsel %vm1733, %v4317, %v4318
        %v4342 = vsel %vm1733, %v4316, %v4317
        %v4343 = vsel %vm1733, %v4315, %v4316
        %v4344 = vsel %vm1733, %v4314, %v4315
        %v4345 = vsel %vm1733, %v4329, %v4314
        %v4346 = vmul.f32 %v4345, %v1589
        %v4347 = vmul.f32 %v4344, %v1590
        %v4348 = vmul.f32 %v4343, %v1591
        %v4349 = vmul.f32 %v4342, %v1592
        %v4350 = vmul.f32 %v4341, %v1593
        %v4351 = vmul.f32 %v4340, %v1594
        %v4352 = vmul.f32 %v4339, %v1595
        %v4353 = vmul.f32 %v4338, %v1596
        %v4354 = vmul.f32 %v4337, %v1597
        %v4355 = vmul.f32 %v4336, %v1598
        %v4356 = vmul.f32 %v4335, %v1599
        %v4357 = vmul.f32 %v4334, %v1600
        %v4358 = vmul.f32 %v4333, %v1601
        %v4359 = vmul.f32 %v4332, %v1602
        %v4360 = vmul.f32 %v4331, %v1603
        %v4361 = vmul.f32 %v4330, %v1604
        %v4362 = vrot.slane %v4298, 1
        %v4363 = vrot.slane %v4299, 1
        %v4364 = vrot.slane %v4300, 1
        %v4365 = vrot.slane %v4301, 1
        %v4366 = vrot.slane %v4302, 1
        %v4367 = vrot.slane %v4303, 1
        %v4368 = vrot.slane %v4304, 1
        %v4369 = vrot.slane %v4305, 1
        %v4370 = vrot.slane %v4306, 1
        %v4371 = vrot.slane %v4307, 1
        %v4372 = vrot.slane %v4308, 1
        %v4373 = vrot.slane %v4309, 1
        %v4374 = vrot.slane %v4310, 1
        %v4375 = vrot.slane %v4311, 1
        %v4376 = vrot.slane %v4312, 1
        %v4377 = vrot.slane %v4313, 1
        %v4378 = vsel %vm1782, %v4376, %v4377
        %v4379 = vsel %vm1782, %v4375, %v4376
        %v4380 = vsel %vm1782, %v4374, %v4375
        %v4381 = vsel %vm1782, %v4373, %v4374
        %v4382 = vsel %vm1782, %v4372, %v4373
        %v4383 = vsel %vm1782, %v4371, %v4372
        %v4384 = vsel %vm1782, %v4370, %v4371
        %v4385 = vsel %vm1782, %v4369, %v4370
        %v4386 = vsel %vm1782, %v4368, %v4369
        %v4387 = vsel %vm1782, %v4367, %v4368
        %v4388 = vsel %vm1782, %v4366, %v4367
        %v4389 = vsel %vm1782, %v4365, %v4366
        %v4390 = vsel %vm1782, %v4364, %v4365
        %v4391 = vsel %vm1782, %v4363, %v4364
        %v4392 = vsel %vm1782, %v4362, %v4363
        %v4393 = vsel %vm1782, %v4377, %v4362
        %v4394 = vmul.f32 %v4392, %v1637
        %v4395 = vmul.f32 %v4391, %v1638
        %v4396 = vmul.f32 %v4390, %v1639
        %v4397 = vmul.f32 %v4389, %v1640
        %v4398 = vmul.f32 %v4388, %v1641
        %v4399 = vmul.f32 %v4387, %v1642
        %v4400 = vmul.f32 %v4386, %v1643
        %v4401 = vmul.f32 %v4385, %v1644
        %v4402 = vmul.f32 %v4384, %v1645
        %v4403 = vmul.f32 %v4383, %v1646
        %v4404 = vmul.f32 %v4382, %v1647
        %v4405 = vmul.f32 %v4381, %v1648
        %v4406 = vmul.f32 %v4380, %v1649
        %v4407 = vmul.f32 %v4379, %v1650
        %v4408 = vmul.f32 %v4378, %v1651
        %v4409 = vmul.f32 %v4393, %v1652
        %v4410 = vld [vmem:[%s33] sm:$0xf]
        %v4411 = vld [vmem:[%s33 + $0x4] sm:$0xf]
        %v4412 = vld [vmem:[%s33 + $0x8] sm:$0xf]
        %v4413 = vld [vmem:[%s33 + $0xc] sm:$0xf]
        %v4414 = vld [vmem:[%s33 + $0x10] sm:$0xf]
        %v4415 = vld [vmem:[%s33 + $0x14] sm:$0xf]
        %v4416 = vld [vmem:[%s33 + $0x18] sm:$0xf]
        %v4417 = vld [vmem:[%s33 + $0x1c] sm:$0xf]
        %v4418 = vld [vmem:[%s33 + $0x20] sm:$0xf]
        %v4419 = vld [vmem:[%s33 + $0x24] sm:$0xf]
        %v4420 = vld [vmem:[%s33 + $0x28] sm:$0xf]
        %v4421 = vld [vmem:[%s33 + $0x2c] sm:$0xf]
        %v4422 = vpack.c.bf16 %v4347, %v4346
        %v4423 = vpack.c.bf16 %v4349, %v4348
        %v4424 = vpack.c.bf16 %v4351, %v4350
        %v4425 = vpack.c.bf16 %v4353, %v4352
        %v4426 = vpack.c.bf16 %v4355, %v4354
        %v4427 = vpack.c.bf16 %v4357, %v4356
        %v4428 = vpack.c.bf16 %v4359, %v4358
        %v4429 = vpack.c.bf16 %v4361, %v4360
        %v4430 = vpack.c.bf16 %v4299, %v4298
        %v4431 = vpack.c.bf16 %v4301, %v4300
        %v4432 = vpack.c.bf16 %v4303, %v4302
        %v4433 = vpack.c.bf16 %v4305, %v4304
        %v4434 = vpack.c.bf16 %v4307, %v4306
        %v4435 = vpack.c.bf16 %v4309, %v4308
        %v4436 = vpack.c.bf16 %v4311, %v4310
        %v4437 = vpack.c.bf16 %v4313, %v4312
        %v4442 = vunpack.c.l.b16 %v4414
        %v4443 = vunpack.c.l.b16 %v4415
        %v4444 = vunpack.c.l.b16 %v4416
        %v4445 = vunpack.c.l.b16 %v4417
        %v4446 = vpack.c.b16 %v4443, %v4442
        %v4447 = vpack.c.b16 %v4445, %v4444
        %v4451 = vsel %vm1855, %v4430, 0
        %v4454 = vsel %vm1855, %v4431, 0
        %v4457 = vsel %vm1855, %v4432, 0
        %v4460 = vsel %vm1855, %v4433, 0
        %v4463 = vsel %vm1855, %v4434, 0
        %v4466 = vsel %vm1855, %v4435, 0
        %v4469 = vsel %vm1855, %v4436, 0
        %v4472 = vsel %vm1855, %v4437, 0
        %4474 = vmatprep.subr.bf16.mxu0 0
        %4475 = vmatpush1.bf16.msra.mxu0 %v4446
        %4476 = vmatprep.subr.bf16.mxu0 0
        %4477 = vmatpush1.bf16.msra.mxu0 %v4447
        %4478 = vmatprep.subr.bf16.mxu0 0
        %4479 = vmatpush1.bf16.msra.mxu0 0
        %4480 = vmatprep.subr.bf16.mxu0 0
        %4481 = vmatpush1.bf16.msra.mxu0 0
        %4482 = vmatprep.subr.bf16.mxu0 0
        %4483 = vmatpush1.bf16.msra.mxu0 0
        %4484 = vmatprep.subr.bf16.mxu0 0
        %4485 = vmatpush1.bf16.msra.mxu0 0
        %4486 = vmatprep.subr.bf16.mxu0 0
        %4487 = vmatpush1.bf16.msra.mxu0 0
        %4488 = vmatprep.subr.bf16.mxu0 0
        %4489 = vmatpush1.bf16.msra.mxu0 0
        %4490 = vmatprep.subr.bf16.mxu0 0
        %4491 = vmatpush1.bf16.msra.mxu0 0
        %4492 = vmatprep.subr.bf16.mxu0 0
        %4493 = vmatpush1.bf16.msra.mxu0 0
        %4494 = vmatprep.subr.bf16.mxu0 0
        %4495 = vmatpush1.bf16.msra.mxu0 0
        %4496 = vmatprep.subr.bf16.mxu0 0
        %4497 = vmatpush1.bf16.msra.mxu0 0
        %4498 = vmatprep.subr.bf16.mxu0 0
        %4499 = vmatpush1.bf16.msra.mxu0 0
        %4500 = vmatprep.subr.bf16.mxu0 0
        %4501 = vmatpush1.bf16.msra.mxu0 0
        %4502 = vmatprep.subr.bf16.mxu0 0
        %4503 = vmatpush1.bf16.msra.mxu0 0
        %4504 = vmatprep.subr.bf16.mxu0 0
        %4505 = vmatpush1.bf16.msra.mxu0 0
        %4506 = vmatprep.mubr.bf16.mxu0 0
        %4507 = vmatmul.mubr.bf16.gmra.mrb[0].mxu0 %v4451
        %v4508 = vpop.f32.mrb[0].mxu0
        %v4509 = vadd.f32 0.0, %v4508
        %v4510 = vpop.f32.mrb[0].mxu0
        %v4511 = vpop.f32.mrb[0].mxu0
        %v4512 = vadd.f32 0.0, %v4511
        %v4513 = vpop.f32.mrb[0].mxu0
        %4514 = vmatprep.mubr.bf16.mxu0 0
        %4515 = vmatmul.mubr.bf16.gmra.mrb[0].mxu0 %v4454
        %v4516 = vpop.f32.mrb[0].mxu0
        %v4517 = vadd.f32 0.0, %v4516
        %v4518 = vpop.f32.mrb[0].mxu0
        %v4519 = vpop.f32.mrb[0].mxu0
        %v4520 = vadd.f32 0.0, %v4519
        %v4521 = vpop.f32.mrb[0].mxu0
        %4522 = vmatprep.mubr.bf16.mxu0 0
        %4523 = vmatmul.mubr.bf16.gmra.mrb[0].mxu0 %v4457
        %v4524 = vpop.f32.mrb[0].mxu0
        %v4525 = vadd.f32 0.0, %v4524
        %v4526 = vpop.f32.mrb[0].mxu0
        %v4527 = vpop.f32.mrb[0].mxu0
        %v4528 = vadd.f32 0.0, %v4527
        %v4529 = vpop.f32.mrb[0].mxu0
        %4530 = vmatprep.mubr.bf16.mxu0 0
        %4531 = vmatmul.mubr.bf16.gmra.mrb[0].mxu0 %v4460
        %v4532 = vpop.f32.mrb[0].mxu0
        %v4533 = vadd.f32 0.0, %v4532
        %v4534 = vpop.f32.mrb[0].mxu0
        %v4535 = vpop.f32.mrb[0].mxu0
        %v4536 = vadd.f32 0.0, %v4535
        %v4537 = vpop.f32.mrb[0].mxu0
        %4538 = vmatprep.mubr.bf16.mxu0 0
        %4539 = vmatmul.mubr.bf16.gmra.mrb[0].mxu0 %v4463
        %v4540 = vpop.f32.mrb[0].mxu0
        %v4541 = vadd.f32 0.0, %v4540
        %v4542 = vpop.f32.mrb[0].mxu0
        %v4543 = vpop.f32.mrb[0].mxu0
        %v4544 = vadd.f32 0.0, %v4543
        %v4545 = vpop.f32.mrb[0].mxu0
        %4546 = vmatprep.mubr.bf16.mxu0 0
        %4547 = vmatmul.mubr.bf16.gmra.mrb[0].mxu0 %v4466
        %v4548 = vpop.f32.mrb[0].mxu0
        %v4549 = vadd.f32 0.0, %v4548
        %v4550 = vpop.f32.mrb[0].mxu0
        %v4551 = vpop.f32.mrb[0].mxu0
        %v4552 = vadd.f32 0.0, %v4551
        %v4553 = vpop.f32.mrb[0].mxu0
        %4554 = vmatprep.mubr.bf16.mxu0 0
        %4555 = vmatmul.mubr.bf16.gmra.mrb[0].mxu0 %v4469
        %v4556 = vpop.f32.mrb[0].mxu0
        %v4557 = vadd.f32 0.0, %v4556
        %v4558 = vpop.f32.mrb[0].mxu0
        %v4559 = vpop.f32.mrb[0].mxu0
        %v4560 = vadd.f32 0.0, %v4559
        %v4561 = vpop.f32.mrb[0].mxu0
        %4562 = vmatprep.mubr.bf16.mxu0 0
        %4563 = vmatmul.mubr.bf16.gmra.mrb[0].mxu0 %v4472
        %v4564 = vpop.f32.mrb[0].mxu0
        %v4565 = vadd.f32 0.0, %v4564
        %v4566 = vpop.f32.mrb[0].mxu0
        %v4567 = vpop.f32.mrb[0].mxu0
        %v4568 = vadd.f32 0.0, %v4567
        %v4569 = vpop.f32.mrb[0].mxu0
        %4570 = vdwg.mxu0
        %v4575 = vunpack.c.l.b16 %v4410
        %v4576 = vunpack.c.l.b16 %v4411
        %v4577 = vunpack.c.l.b16 %v4412
        %v4578 = vunpack.c.l.b16 %v4413
        %v4579 = vpack.c.b16 %v4576, %v4575
        %v4580 = vpack.c.b16 %v4578, %v4577
        %v4584 = vsel %vm1855, %v4422, 0
        %v4587 = vsel %vm1855, %v4423, 0
        %v4590 = vsel %vm1855, %v4424, 0
        %v4593 = vsel %vm1855, %v4425, 0
        %v4596 = vsel %vm1855, %v4426, 0
        %v4599 = vsel %vm1855, %v4427, 0
        %v4602 = vsel %vm1855, %v4428, 0
        %v4605 = vsel %vm1855, %v4429, 0
        %4607 = vmatprep.subr.bf16.mxu0 0
        %4608 = vmatpush1.bf16.msra.mxu0 %v4579
        %4609 = vmatprep.subr.bf16.mxu0 0
        %4610 = vmatpush1.bf16.msra.mxu0 %v4580
        %4611 = vmatprep.subr.bf16.mxu0 0
        %4612 = vmatpush1.bf16.msra.mxu0 0
        %4613 = vmatprep.subr.bf16.mxu0 0
        %4614 = vmatpush1.bf16.msra.mxu0 0
        %4615 = vmatprep.subr.bf16.mxu0 0
        %4616 = vmatpush1.bf16.msra.mxu0 0
        %4617 = vmatprep.subr.bf16.mxu0 0
        %4618 = vmatpush1.bf16.msra.mxu0 0
        %4619 = vmatprep.subr.bf16.mxu0 0
        %4620 = vmatpush1.bf16.msra.mxu0 0
        %4621 = vmatprep.subr.bf16.mxu0 0
        %4622 = vmatpush1.bf16.msra.mxu0 0
        %4623 = vmatprep.subr.bf16.mxu0 0
        %4624 = vmatpush1.bf16.msra.mxu0 0
        %4625 = vmatprep.subr.bf16.mxu0 0
        %4626 = vmatpush1.bf16.msra.mxu0 0
        %4627 = vmatprep.subr.bf16.mxu0 0
        %4628 = vmatpush1.bf16.msra.mxu0 0
        %4629 = vmatprep.subr.bf16.mxu0 0
        %4630 = vmatpush1.bf16.msra.mxu0 0
        %4631 = vmatprep.subr.bf16.mxu0 0
        %4632 = vmatpush1.bf16.msra.mxu0 0
        %4633 = vmatprep.subr.bf16.mxu0 0
        %4634 = vmatpush1.bf16.msra.mxu0 0
        %4635 = vmatprep.subr.bf16.mxu0 0
        %4636 = vmatpush1.bf16.msra.mxu0 0
        %4637 = vmatprep.subr.bf16.mxu0 0
        %4638 = vmatpush1.bf16.msra.mxu0 0
        %4639 = vmatprep.mubr.bf16.mxu0 0
        %4640 = vmatmul.mubr.bf16.gmra.mrb[0].mxu0 %v4584
        %v4641 = vpop.f32.mrb[0].mxu0
        %v4642 = vadd.f32 %v4509, %v4641
        %v4643 = vpop.f32.mrb[0].mxu0
        %v4644 = vpop.f32.mrb[0].mxu0
        %v4645 = vadd.f32 %v4512, %v4644
        %v4646 = vpop.f32.mrb[0].mxu0
        %4647 = vmatprep.mubr.bf16.mxu0 0
        %4648 = vmatmul.mubr.bf16.gmra.mrb[0].mxu0 %v4587
        %v4649 = vpop.f32.mrb[0].mxu0
        %v4650 = vadd.f32 %v4517, %v4649
        %v4651 = vpop.f32.mrb[0].mxu0
        %v4652 = vpop.f32.mrb[0].mxu0
        %v4653 = vadd.f32 %v4520, %v4652
        %v4654 = vpop.f32.mrb[0].mxu0
        %4655 = vmatprep.mubr.bf16.mxu0 0
        %4656 = vmatmul.mubr.bf16.gmra.mrb[0].mxu0 %v4590
        %v4657 = vpop.f32.mrb[0].mxu0
        %v4658 = vadd.f32 %v4525, %v4657
        %v4659 = vpop.f32.mrb[0].mxu0
        %v4660 = vpop.f32.mrb[0].mxu0
        %v4661 = vadd.f32 %v4528, %v4660
        %v4662 = vpop.f32.mrb[0].mxu0
        %4663 = vmatprep.mubr.bf16.mxu0 0
        %4664 = vmatmul.mubr.bf16.gmra.mrb[0].mxu0 %v4593
        %v4665 = vpop.f32.mrb[0].mxu0
        %v4666 = vadd.f32 %v4533, %v4665
        %v4667 = vpop.f32.mrb[0].mxu0
        %v4668 = vpop.f32.mrb[0].mxu0
        %v4669 = vadd.f32 %v4536, %v4668
        %v4670 = vpop.f32.mrb[0].mxu0
        %4671 = vmatprep.mubr.bf16.mxu0 0
        %4672 = vmatmul.mubr.bf16.gmra.mrb[0].mxu0 %v4596
        %v4673 = vpop.f32.mrb[0].mxu0
        %v4674 = vadd.f32 %v4541, %v4673
        %v4675 = vpop.f32.mrb[0].mxu0
        %v4676 = vpop.f32.mrb[0].mxu0
        %v4677 = vadd.f32 %v4544, %v4676
        %v4678 = vpop.f32.mrb[0].mxu0
        %4679 = vmatprep.mubr.bf16.mxu0 0
        %4680 = vmatmul.mubr.bf16.gmra.mrb[0].mxu0 %v4599
        %v4681 = vpop.f32.mrb[0].mxu0
        %v4682 = vadd.f32 %v4549, %v4681
        %v4683 = vpop.f32.mrb[0].mxu0
        %v4684 = vpop.f32.mrb[0].mxu0
        %v4685 = vadd.f32 %v4552, %v4684
        %v4686 = vpop.f32.mrb[0].mxu0
        %4687 = vmatprep.mubr.bf16.mxu0 0
        %4688 = vmatmul.mubr.bf16.gmra.mrb[0].mxu0 %v4602
        %v4689 = vpop.f32.mrb[0].mxu0
        %v4690 = vadd.f32 %v4557, %v4689
        %v4691 = vpop.f32.mrb[0].mxu0
        %v4692 = vpop.f32.mrb[0].mxu0
        %v4693 = vadd.f32 %v4560, %v4692
        %v4694 = vpop.f32.mrb[0].mxu0
        %4695 = vmatprep.mubr.bf16.mxu0 0
        %4696 = vmatmul.mubr.bf16.gmra.mrb[0].mxu0 %v4605
        %v4697 = vpop.f32.mrb[0].mxu0
        %v4698 = vadd.f32 %v4565, %v4697
        %v4699 = vpop.f32.mrb[0].mxu0
        %v4700 = vpop.f32.mrb[0].mxu0
        %v4701 = vadd.f32 %v4568, %v4700
        %v4702 = vpop.f32.mrb[0].mxu0
        %4703 = vdwg.mxu0
        %v4704 = vpack.c.bf16 %v4395, %v4394
        %v4705 = vpack.c.bf16 %v4397, %v4396
        %v4706 = vpack.c.bf16 %v4399, %v4398
        %v4707 = vpack.c.bf16 %v4401, %v4400
        %v4708 = vpack.c.bf16 %v4403, %v4402
        %v4709 = vpack.c.bf16 %v4405, %v4404
        %v4710 = vpack.c.bf16 %v4407, %v4406
        %v4711 = vpack.c.bf16 %v4409, %v4408
        %v4716 = vunpack.c.l.b16 %v4418
        %v4717 = vunpack.c.l.b16 %v4419
        %v4718 = vunpack.c.l.b16 %v4420
        %v4719 = vunpack.c.l.b16 %v4421
        %v4720 = vpack.c.b16 %v4717, %v4716
        %v4721 = vpack.c.b16 %v4719, %v4718
        %v4725 = vsel %vm1855, %v4704, 0
        %v4728 = vsel %vm1855, %v4705, 0
        %v4731 = vsel %vm1855, %v4706, 0
        %v4734 = vsel %vm1855, %v4707, 0
        %v4737 = vsel %vm1855, %v4708, 0
        %v4740 = vsel %vm1855, %v4709, 0
        %v4743 = vsel %vm1855, %v4710, 0
        %v4746 = vsel %vm1855, %v4711, 0
        %4748 = vmatprep.subr.bf16.mxu0 0
        %4749 = vmatpush1.bf16.msra.mxu0 %v4720
        %4750 = vmatprep.subr.bf16.mxu0 0
        %4751 = vmatpush1.bf16.msra.mxu0 %v4721
        %4752 = vmatprep.subr.bf16.mxu0 0
        %4753 = vmatpush1.bf16.msra.mxu0 0
        %4754 = vmatprep.subr.bf16.mxu0 0
        %4755 = vmatpush1.bf16.msra.mxu0 0
        %4756 = vmatprep.subr.bf16.mxu0 0
        %4757 = vmatpush1.bf16.msra.mxu0 0
        %4758 = vmatprep.subr.bf16.mxu0 0
        %4759 = vmatpush1.bf16.msra.mxu0 0
        %4760 = vmatprep.subr.bf16.mxu0 0
        %4761 = vmatpush1.bf16.msra.mxu0 0
        %4762 = vmatprep.subr.bf16.mxu0 0
        %4763 = vmatpush1.bf16.msra.mxu0 0
        %4764 = vmatprep.subr.bf16.mxu0 0
        %4765 = vmatpush1.bf16.msra.mxu0 0
        %4766 = vmatprep.subr.bf16.mxu0 0
        %4767 = vmatpush1.bf16.msra.mxu0 0
        %4768 = vmatprep.subr.bf16.mxu0 0
        %4769 = vmatpush1.bf16.msra.mxu0 0
        %4770 = vmatprep.subr.bf16.mxu0 0
        %4771 = vmatpush1.bf16.msra.mxu0 0
        %4772 = vmatprep.subr.bf16.mxu0 0
        %4773 = vmatpush1.bf16.msra.mxu0 0
        %4774 = vmatprep.subr.bf16.mxu0 0
        %4775 = vmatpush1.bf16.msra.mxu0 0
        %4776 = vmatprep.subr.bf16.mxu0 0
        %4777 = vmatpush1.bf16.msra.mxu0 0
        %4778 = vmatprep.subr.bf16.mxu0 0
        %4779 = vmatpush1.bf16.msra.mxu0 0
        %4780 = vmatprep.mubr.bf16.mxu0 0
        %4781 = vmatmul.mubr.bf16.gmra.mrb[0].mxu0 %v4725
        %v4782 = vpop.f32.mrb[0].mxu0
        %v4783 = vadd.f32 0.0, %v4782
        %v4784 = vpop.f32.mrb[0].mxu0
        %v4785 = vpop.f32.mrb[0].mxu0
        %v4786 = vadd.f32 0.0, %v4785
        %v4787 = vpop.f32.mrb[0].mxu0
        %4788 = vmatprep.mubr.bf16.mxu0 0
        %4789 = vmatmul.mubr.bf16.gmra.mrb[0].mxu0 %v4728
        %v4790 = vpop.f32.mrb[0].mxu0
        %v4791 = vadd.f32 0.0, %v4790
        %v4792 = vpop.f32.mrb[0].mxu0
        %v4793 = vpop.f32.mrb[0].mxu0
        %v4794 = vadd.f32 0.0, %v4793
        %v4795 = vpop.f32.mrb[0].mxu0
        %4796 = vmatprep.mubr.bf16.mxu0 0
        %4797 = vmatmul.mubr.bf16.gmra.mrb[0].mxu0 %v4731
        %v4798 = vpop.f32.mrb[0].mxu0
        %v4799 = vadd.f32 0.0, %v4798
        %v4800 = vpop.f32.mrb[0].mxu0
        %v4801 = vpop.f32.mrb[0].mxu0
        %v4802 = vadd.f32 0.0, %v4801
        %v4803 = vpop.f32.mrb[0].mxu0
        %4804 = vmatprep.mubr.bf16.mxu0 0
        %4805 = vmatmul.mubr.bf16.gmra.mrb[0].mxu0 %v4734
        %v4806 = vpop.f32.mrb[0].mxu0
        %v4807 = vadd.f32 0.0, %v4806
        %v4808 = vpop.f32.mrb[0].mxu0
        %v4809 = vpop.f32.mrb[0].mxu0
        %v4810 = vadd.f32 0.0, %v4809
        %v4811 = vpop.f32.mrb[0].mxu0
        %4812 = vmatprep.mubr.bf16.mxu0 0
        %4813 = vmatmul.mubr.bf16.gmra.mrb[0].mxu0 %v4737
        %v4814 = vpop.f32.mrb[0].mxu0
        %v4815 = vadd.f32 0.0, %v4814
        %v4816 = vpop.f32.mrb[0].mxu0
        %v4817 = vpop.f32.mrb[0].mxu0
        %v4818 = vadd.f32 0.0, %v4817
        %v4819 = vpop.f32.mrb[0].mxu0
        %4820 = vmatprep.mubr.bf16.mxu0 0
        %4821 = vmatmul.mubr.bf16.gmra.mrb[0].mxu0 %v4740
        %v4822 = vpop.f32.mrb[0].mxu0
        %v4823 = vadd.f32 0.0, %v4822
        %v4824 = vpop.f32.mrb[0].mxu0
        %v4825 = vpop.f32.mrb[0].mxu0
        %v4826 = vadd.f32 0.0, %v4825
        %v4827 = vpop.f32.mrb[0].mxu0
        %4828 = vmatprep.mubr.bf16.mxu0 0
        %4829 = vmatmul.mubr.bf16.gmra.mrb[0].mxu0 %v4743
        %v4830 = vpop.f32.mrb[0].mxu0
        %v4831 = vadd.f32 0.0, %v4830
        %v4832 = vpop.f32.mrb[0].mxu0
        %v4833 = vpop.f32.mrb[0].mxu0
        %v4834 = vadd.f32 0.0, %v4833
        %v4835 = vpop.f32.mrb[0].mxu0
        %4836 = vmatprep.mubr.bf16.mxu0 0
        %4837 = vmatmul.mubr.bf16.gmra.mrb[0].mxu0 %v4746
        %v4838 = vpop.f32.mrb[0].mxu0
        %v4839 = vadd.f32 0.0, %v4838
        %v4840 = vpop.f32.mrb[0].mxu0
        %v4841 = vpop.f32.mrb[0].mxu0
        %v4842 = vadd.f32 0.0, %v4841
        %v4843 = vpop.f32.mrb[0].mxu0
        %4844 = vdwg.mxu0
        %v4845 = vadd.f32 %v4642, %v4783
        %v4846 = vadd.f32 %v4645, %v4786
        %v4847 = vadd.f32 %v4650, %v4791
        %v4848 = vadd.f32 %v4653, %v4794
        %v4849 = vadd.f32 %v4658, %v4799
        %v4850 = vadd.f32 %v4661, %v4802
        %v4851 = vadd.f32 %v4666, %v4807
        %v4852 = vadd.f32 %v4669, %v4810
        %v4853 = vadd.f32 %v4674, %v4815
        %v4854 = vadd.f32 %v4677, %v4818
        %v4855 = vadd.f32 %v4682, %v4823
        %v4856 = vadd.f32 %v4685, %v4826
        %v4857 = vadd.f32 %v4690, %v4831
        %v4858 = vadd.f32 %v4693, %v4834
        %v4859 = vadd.f32 %v4698, %v4839
        %v4860 = vadd.f32 %v4701, %v4842
        %v4861 = vld [vmem:[%s35] sm:$0x1]
        %v4863 = vlaneseq
        %v4864 = vshrl.u32 %v4863, 7
        %v4865 = vsub.s32 0, %v4864
        %v4866 = vrot.slane %v4861, %v4865
        %v4868 = vadd.f32 %v4845, %v4866
        %v4869 = vadd.f32 %v4846, %v4866
        %v4870 = vadd.f32 %v4847, %v4866
        %v4871 = vadd.f32 %v4848, %v4866
        %v4872 = vadd.f32 %v4849, %v4866
        %v4873 = vadd.f32 %v4850, %v4866
        %v4874 = vadd.f32 %v4851, %v4866
        %v4875 = vadd.f32 %v4852, %v4866
        %v4876 = vadd.f32 %v4853, %v4866
        %v4877 = vadd.f32 %v4854, %v4866
        %v4878 = vadd.f32 %v4855, %v4866
        %v4879 = vadd.f32 %v4856, %v4866
        %v4880 = vadd.f32 %v4857, %v4866
        %v4881 = vadd.f32 %v4858, %v4866
        %v4882 = vadd.f32 %v4859, %v4866
        %v4883 = vadd.f32 %v4860, %v4866
        %v4884 = vmax.f32 %v4868, 0.0
        %v4885 = vmax.f32 %v4869, 0.0
        %v4886 = vmax.f32 %v4870, 0.0
        %v4887 = vmax.f32 %v4871, 0.0
        %v4888 = vmax.f32 %v4872, 0.0
        %v4889 = vmax.f32 %v4873, 0.0
        %v4890 = vmax.f32 %v4874, 0.0
        %v4891 = vmax.f32 %v4875, 0.0
        %v4892 = vmax.f32 %v4876, 0.0
        %v4893 = vmax.f32 %v4877, 0.0
        %v4894 = vmax.f32 %v4878, 0.0
        %v4895 = vmax.f32 %v4879, 0.0
        %v4896 = vmax.f32 %v4880, 0.0
        %v4897 = vmax.f32 %v4881, 0.0
        %v4898 = vmax.f32 %v4882, 0.0
        %v4899 = vmax.f32 %v4883, 0.0
        %v4900 = vsel %vm1855, %v4884, 0.0
        %4901 = vadd.xlane.f32.xlu0 %v4900
        %v4902 = vpop.xlane.xlu0 %4901
        %v4903 = vsel %vm1855, %v4885, 0.0
        %4904 = vadd.xlane.f32.xlu0 %v4903
        %v4905 = vpop.xlane.xlu0 %4904
        %v4906 = vsel %vm1855, %v4886, 0.0
        %4907 = vadd.xlane.f32.xlu0 %v4906
        %v4908 = vpop.xlane.xlu0 %4907
        %v4909 = vsel %vm1855, %v4887, 0.0
        %4910 = vadd.xlane.f32.xlu0 %v4909
        %v4911 = vpop.xlane.xlu0 %4910
        %v4912 = vsel %vm1855, %v4888, 0.0
        %4913 = vadd.xlane.f32.xlu0 %v4912
        %v4914 = vpop.xlane.xlu0 %4913
        %v4915 = vsel %vm1855, %v4889, 0.0
        %4916 = vadd.xlane.f32.xlu0 %v4915
        %v4917 = vpop.xlane.xlu0 %4916
        %v4918 = vsel %vm1855, %v4890, 0.0
        %4919 = vadd.xlane.f32.xlu0 %v4918
        %v4920 = vpop.xlane.xlu0 %4919
        %v4921 = vsel %vm1855, %v4891, 0.0
        %4922 = vadd.xlane.f32.xlu0 %v4921
        %v4923 = vpop.xlane.xlu0 %4922
        %v4924 = vsel %vm1855, %v4892, 0.0
        %4925 = vadd.xlane.f32.xlu0 %v4924
        %v4926 = vpop.xlane.xlu0 %4925
        %v4927 = vsel %vm1855, %v4893, 0.0
        %4928 = vadd.xlane.f32.xlu0 %v4927
        %v4929 = vpop.xlane.xlu0 %4928
        %v4930 = vsel %vm1855, %v4894, 0.0
        %4931 = vadd.xlane.f32.xlu0 %v4930
        %v4932 = vpop.xlane.xlu0 %4931
        %v4933 = vsel %vm1855, %v4895, 0.0
        %4934 = vadd.xlane.f32.xlu0 %v4933
        %v4935 = vpop.xlane.xlu0 %4934
        %v4936 = vsel %vm1855, %v4896, 0.0
        %4937 = vadd.xlane.f32.xlu0 %v4936
        %v4938 = vpop.xlane.xlu0 %4937
        %v4939 = vsel %vm1855, %v4897, 0.0
        %4940 = vadd.xlane.f32.xlu0 %v4939
        %v4941 = vpop.xlane.xlu0 %4940
        %v4942 = vsel %vm1855, %v4898, 0.0
        %4943 = vadd.xlane.f32.xlu0 %v4942
        %v4944 = vpop.xlane.xlu0 %4943
        %v4945 = vsel %vm1855, %v4899, 0.0
        %4946 = vadd.xlane.f32.xlu0 %v4945
        %v4947 = vpop.xlane.xlu0 %4946
        %v4948 = vmul.f32 %v4902, %v2354
        %v4949 = vmul.f32 %v4905, %v2354
        %v4950 = vmul.f32 %v4908, %v2354
        %v4951 = vmul.f32 %v4911, %v2354
        %v4952 = vmul.f32 %v4914, %v2354
        %v4953 = vmul.f32 %v4917, %v2354
        %v4954 = vmul.f32 %v4920, %v2354
        %v4955 = vmul.f32 %v4923, %v2354
        %v4956 = vmul.f32 %v4926, %v2354
        %v4957 = vmul.f32 %v4929, %v2354
        %v4958 = vmul.f32 %v4932, %v2354
        %v4959 = vmul.f32 %v4935, %v2354
        %v4960 = vmul.f32 %v4938, %v2354
        %v4961 = vmul.f32 %v4941, %v2354
        %v4962 = vmul.f32 %v4944, %v2354
        %v4963 = vmul.f32 %v4947, %v2354
        %v4964 = vmul.f32 %v4884, %v4884
        %v4965 = vmul.f32 %v4885, %v4885
        %v4966 = vmul.f32 %v4886, %v4886
        %v4967 = vmul.f32 %v4887, %v4887
        %v4968 = vmul.f32 %v4888, %v4888
        %v4969 = vmul.f32 %v4889, %v4889
        %v4970 = vmul.f32 %v4890, %v4890
        %v4971 = vmul.f32 %v4891, %v4891
        %v4972 = vmul.f32 %v4892, %v4892
        %v4973 = vmul.f32 %v4893, %v4893
        %v4974 = vmul.f32 %v4894, %v4894
        %v4975 = vmul.f32 %v4895, %v4895
        %v4976 = vmul.f32 %v4896, %v4896
        %v4977 = vmul.f32 %v4897, %v4897
        %v4978 = vmul.f32 %v4898, %v4898
        %v4979 = vmul.f32 %v4899, %v4899
        %v4980 = vsel %vm1855, %v4964, 0.0
        %4981 = vadd.xlane.f32.xlu0 %v4980
        %v4982 = vpop.xlane.xlu0 %4981
        %v4983 = vsel %vm1855, %v4965, 0.0
        %4984 = vadd.xlane.f32.xlu0 %v4983
        %v4985 = vpop.xlane.xlu0 %4984
        %v4986 = vsel %vm1855, %v4966, 0.0
        %4987 = vadd.xlane.f32.xlu0 %v4986
        %v4988 = vpop.xlane.xlu0 %4987
        %v4989 = vsel %vm1855, %v4967, 0.0
        %4990 = vadd.xlane.f32.xlu0 %v4989
        %v4991 = vpop.xlane.xlu0 %4990
        %v4992 = vsel %vm1855, %v4968, 0.0
        %4993 = vadd.xlane.f32.xlu0 %v4992
        %v4994 = vpop.xlane.xlu0 %4993
        %v4995 = vsel %vm1855, %v4969, 0.0
        %4996 = vadd.xlane.f32.xlu0 %v4995
        %v4997 = vpop.xlane.xlu0 %4996
        %v4998 = vsel %vm1855, %v4970, 0.0
        %4999 = vadd.xlane.f32.xlu0 %v4998
        %v5000 = vpop.xlane.xlu0 %4999
        %v5001 = vsel %vm1855, %v4971, 0.0
        %5002 = vadd.xlane.f32.xlu0 %v5001
        %v5003 = vpop.xlane.xlu0 %5002
        %v5004 = vsel %vm1855, %v4972, 0.0
        %5005 = vadd.xlane.f32.xlu0 %v5004
        %v5006 = vpop.xlane.xlu0 %5005
        %v5007 = vsel %vm1855, %v4973, 0.0
        %5008 = vadd.xlane.f32.xlu0 %v5007
        %v5009 = vpop.xlane.xlu0 %5008
        %v5010 = vsel %vm1855, %v4974, 0.0
        %5011 = vadd.xlane.f32.xlu0 %v5010
        %v5012 = vpop.xlane.xlu0 %5011
        %v5013 = vsel %vm1855, %v4975, 0.0
        %5014 = vadd.xlane.f32.xlu0 %v5013
        %v5015 = vpop.xlane.xlu0 %5014
        %v5016 = vsel %vm1855, %v4976, 0.0
        %5017 = vadd.xlane.f32.xlu0 %v5016
        %v5018 = vpop.xlane.xlu0 %5017
        %v5019 = vsel %vm1855, %v4977, 0.0
        %5020 = vadd.xlane.f32.xlu0 %v5019
        %v5021 = vpop.xlane.xlu0 %5020
        %v5022 = vsel %vm1855, %v4978, 0.0
        %5023 = vadd.xlane.f32.xlu0 %v5022
        %v5024 = vpop.xlane.xlu0 %5023
        %v5025 = vsel %vm1855, %v4979, 0.0
        %5026 = vadd.xlane.f32.xlu0 %v5025
        %v5027 = vpop.xlane.xlu0 %5026
        %v5028 = vmul.f32 %v4982, %v2354
        %v5029 = vmul.f32 %v4985, %v2354
        %v5030 = vmul.f32 %v4988, %v2354
        %v5031 = vmul.f32 %v4991, %v2354
        %v5032 = vmul.f32 %v4994, %v2354
        %v5033 = vmul.f32 %v4997, %v2354
        %v5034 = vmul.f32 %v5000, %v2354
        %v5035 = vmul.f32 %v5003, %v2354
        %v5036 = vmul.f32 %v5006, %v2354
        %v5037 = vmul.f32 %v5009, %v2354
        %v5038 = vmul.f32 %v5012, %v2354
        %v5039 = vmul.f32 %v5015, %v2354
        %v5040 = vmul.f32 %v5018, %v2354
        %v5041 = vmul.f32 %v5021, %v2354
        %v5042 = vmul.f32 %v5024, %v2354
        %v5043 = vmul.f32 %v5027, %v2354
        %v5044 = vmul.f32 %v4948, %v4948
        %v5045 = vmul.f32 %v4949, %v4949
        %v5046 = vmul.f32 %v4950, %v4950
        %v5047 = vmul.f32 %v4951, %v4951
        %v5048 = vmul.f32 %v4952, %v4952
        %v5049 = vmul.f32 %v4953, %v4953
        %v5050 = vmul.f32 %v4954, %v4954
        %v5051 = vmul.f32 %v4955, %v4955
        %v5052 = vmul.f32 %v4956, %v4956
        %v5053 = vmul.f32 %v4957, %v4957
        %v5054 = vmul.f32 %v4958, %v4958
        %v5055 = vmul.f32 %v4959, %v4959
        %v5056 = vmul.f32 %v4960, %v4960
        %v5057 = vmul.f32 %v4961, %v4961
        %v5058 = vmul.f32 %v4962, %v4962
        %v5059 = vmul.f32 %v4963, %v4963
        %v5060 = vsub.f32 %v5028, %v5044
        %v5061 = vsub.f32 %v5029, %v5045
        %v5062 = vsub.f32 %v5030, %v5046
        %v5063 = vsub.f32 %v5031, %v5047
        %v5064 = vsub.f32 %v5032, %v5048
        %v5065 = vsub.f32 %v5033, %v5049
        %v5066 = vsub.f32 %v5034, %v5050
        %v5067 = vsub.f32 %v5035, %v5051
        %v5068 = vsub.f32 %v5036, %v5052
        %v5069 = vsub.f32 %v5037, %v5053
        %v5070 = vsub.f32 %v5038, %v5054
        %v5071 = vsub.f32 %v5039, %v5055
        %v5072 = vsub.f32 %v5040, %v5056
        %v5073 = vsub.f32 %v5041, %v5057
        %v5074 = vsub.f32 %v5042, %v5058
        %v5075 = vsub.f32 %v5043, %v5059
        %v5076 = vmax.f32 %v5060, 0.0
        %v5077 = vmax.f32 %v5061, 0.0
        %v5078 = vmax.f32 %v5062, 0.0
        %v5079 = vmax.f32 %v5063, 0.0
        %v5080 = vmax.f32 %v5064, 0.0
        %v5081 = vmax.f32 %v5065, 0.0
        %v5082 = vmax.f32 %v5066, 0.0
        %v5083 = vmax.f32 %v5067, 0.0
        %v5084 = vmax.f32 %v5068, 0.0
        %v5085 = vmax.f32 %v5069, 0.0
        %v5086 = vmax.f32 %v5070, 0.0
        %v5087 = vmax.f32 %v5071, 0.0
        %v5088 = vmax.f32 %v5072, 0.0
        %v5089 = vmax.f32 %v5073, 0.0
        %v5090 = vmax.f32 %v5074, 0.0
        %v5091 = vmax.f32 %v5075, 0.0
        %v5092 = vadd.f32 %v5076, 1e-05
        %v5093 = vadd.f32 %v5077, 1e-05
        %v5094 = vadd.f32 %v5078, 1e-05
        %v5095 = vadd.f32 %v5079, 1e-05
        %v5096 = vadd.f32 %v5080, 1e-05
        %v5097 = vadd.f32 %v5081, 1e-05
        %v5098 = vadd.f32 %v5082, 1e-05
        %v5099 = vadd.f32 %v5083, 1e-05
        %v5100 = vadd.f32 %v5084, 1e-05
        %v5101 = vadd.f32 %v5085, 1e-05
        %v5102 = vadd.f32 %v5086, 1e-05
        %v5103 = vadd.f32 %v5087, 1e-05
        %v5104 = vadd.f32 %v5088, 1e-05
        %v5105 = vadd.f32 %v5089, 1e-05
        %v5106 = vadd.f32 %v5090, 1e-05
        %v5107 = vadd.f32 %v5091, 1e-05
        %v5108 = vrsqrt.pop %v5092
        %v5109 = vrsqrt.pop %v5093
        %v5110 = vrsqrt.pop %v5094
        %v5111 = vrsqrt.pop %v5095
        %v5112 = vrsqrt.pop %v5096
        %v5113 = vrsqrt.pop %v5097
        %v5114 = vrsqrt.pop %v5098
        %v5115 = vrsqrt.pop %v5099
        %v5116 = vrsqrt.pop %v5100
        %v5117 = vrsqrt.pop %v5101
        %v5118 = vrsqrt.pop %v5102
        %v5119 = vrsqrt.pop %v5103
        %v5120 = vrsqrt.pop %v5104
        %v5121 = vrsqrt.pop %v5105
        %v5122 = vrsqrt.pop %v5106
        %v5123 = vrsqrt.pop %v5107
        %v5124 = vsub.f32 %v4884, %v4948
        %v5125 = vsub.f32 %v4885, %v4949
        %v5126 = vsub.f32 %v4886, %v4950
        %v5127 = vsub.f32 %v4887, %v4951
        %v5128 = vsub.f32 %v4888, %v4952
        %v5129 = vsub.f32 %v4889, %v4953
        %v5130 = vsub.f32 %v4890, %v4954
        %v5131 = vsub.f32 %v4891, %v4955
        %v5132 = vsub.f32 %v4892, %v4956
        %v5133 = vsub.f32 %v4893, %v4957
        %v5134 = vsub.f32 %v4894, %v4958
        %v5135 = vsub.f32 %v4895, %v4959
        %v5136 = vsub.f32 %v4896, %v4960
        %v5137 = vsub.f32 %v4897, %v4961
        %v5138 = vsub.f32 %v4898, %v4962
        %v5139 = vsub.f32 %v4899, %v4963
        %v5140 = vld [vmem:[%s37] sm:$0x1]
        %v5142 = vlaneseq
        %v5143 = vshrl.u32 %v5142, 7
        %v5144 = vsub.s32 0, %v5143
        %v5145 = vrot.slane %v5140, %v5144
        %v5147 = vmul.f32 %v5108, %v5145
        %v5148 = vmul.f32 %v5109, %v5145
        %v5149 = vmul.f32 %v5110, %v5145
        %v5150 = vmul.f32 %v5111, %v5145
        %v5151 = vmul.f32 %v5112, %v5145
        %v5152 = vmul.f32 %v5113, %v5145
        %v5153 = vmul.f32 %v5114, %v5145
        %v5154 = vmul.f32 %v5115, %v5145
        %v5155 = vmul.f32 %v5116, %v5145
        %v5156 = vmul.f32 %v5117, %v5145
        %v5157 = vmul.f32 %v5118, %v5145
        %v5158 = vmul.f32 %v5119, %v5145
        %v5159 = vmul.f32 %v5120, %v5145
        %v5160 = vmul.f32 %v5121, %v5145
        %v5161 = vmul.f32 %v5122, %v5145
        %v5162 = vmul.f32 %v5123, %v5145
        %v5163 = vmul.f32 %v5124, %v5147
        %v5164 = vmul.f32 %v5125, %v5148
        %v5165 = vmul.f32 %v5126, %v5149
        %v5166 = vmul.f32 %v5127, %v5150
        %v5167 = vmul.f32 %v5128, %v5151
        %v5168 = vmul.f32 %v5129, %v5152
        %v5169 = vmul.f32 %v5130, %v5153
        %v5170 = vmul.f32 %v5131, %v5154
        %v5171 = vmul.f32 %v5132, %v5155
        %v5172 = vmul.f32 %v5133, %v5156
        %v5173 = vmul.f32 %v5134, %v5157
        %v5174 = vmul.f32 %v5135, %v5158
        %v5175 = vmul.f32 %v5136, %v5159
        %v5176 = vmul.f32 %v5137, %v5160
        %v5177 = vmul.f32 %v5138, %v5161
        %v5178 = vmul.f32 %v5139, %v5162
        %v5179 = vld [vmem:[%s39] sm:$0x1]
        %v5181 = vlaneseq
        %v5182 = vshrl.u32 %v5181, 7
        %v5183 = vsub.s32 0, %v5182
        %v5184 = vrot.slane %v5179, %v5183
        %v5186 = vadd.f32 %v5163, %v5184
        %v5187 = vadd.f32 %v5164, %v5184
        %v5188 = vadd.f32 %v5165, %v5184
        %v5189 = vadd.f32 %v5166, %v5184
        %v5190 = vadd.f32 %v5167, %v5184
        %v5191 = vadd.f32 %v5168, %v5184
        %v5192 = vadd.f32 %v5169, %v5184
        %v5193 = vadd.f32 %v5170, %v5184
        %v5194 = vadd.f32 %v5171, %v5184
        %v5195 = vadd.f32 %v5172, %v5184
        %v5196 = vadd.f32 %v5173, %v5184
        %v5197 = vadd.f32 %v5174, %v5184
        %v5198 = vadd.f32 %v5175, %v5184
        %v5199 = vadd.f32 %v5176, %v5184
        %v5200 = vadd.f32 %v5177, %v5184
        %v5201 = vadd.f32 %v5178, %v5184
        %v5202 = vld [vmem:[%s41] sm:$0x1]
        %v5203 = vpack.c.bf16 %v5187, %v5186
        %v5204 = vpack.c.bf16 %v5189, %v5188
        %v5205 = vpack.c.bf16 %v5191, %v5190
        %v5206 = vpack.c.bf16 %v5193, %v5192
        %v5207 = vpack.c.bf16 %v5195, %v5194
        %v5208 = vpack.c.bf16 %v5197, %v5196
        %v5209 = vpack.c.bf16 %v5199, %v5198
        %v5210 = vpack.c.bf16 %v5201, %v5200
        %v5211 = vld [vmem:[#allocation3] sm:$0x1]
        %5213 = vset.pattern.permute.xlu0 0
        %5214 = vperm.xlu0 %5213, %v5211
        %v5215 = vpop.permute.xlu0 %5214
        %v5217 = vlaneseq
        %v5218 = vshrl.u32 %v5217, 7
        %v5219 = vsub.s32 0, %v5218
        %v5220 = vrot.slane %v5215, %v5219
        %v5222 = vsel %vm1855, %v5202, 0
        %v5225 = vsel %vm1855, %v5203, 0
        %v5228 = vsel %vm1855, %v5204, 0
        %v5231 = vsel %vm1855, %v5205, 0
        %v5234 = vsel %vm1855, %v5206, 0
        %v5237 = vsel %vm1855, %v5207, 0
        %v5240 = vsel %vm1855, %v5208, 0
        %v5243 = vsel %vm1855, %v5209, 0
        %v5246 = vsel %vm1855, %v5210, 0
        %5248 = vmatprep.subr.bf16.mxu0 0
        %5249 = vmatpush1.bf16.xpose.msra.mxu0 %v5225
        %5250 = vmatprep.subr.bf16.mxu0 0
        %5251 = vmatpush1.bf16.xpose.msra.mxu0 %v5228
        %5252 = vmatprep.subr.bf16.mxu0 0
        %5253 = vmatpush1.bf16.xpose.msra.mxu0 %v5231
        %5254 = vmatprep.subr.bf16.mxu0 0
        %5255 = vmatpush1.bf16.xpose.msra.mxu0 %v5234
        %5256 = vmatprep.subr.bf16.mxu0 0
        %5257 = vmatpush1.bf16.xpose.msra.mxu0 %v5237
        %5258 = vmatprep.subr.bf16.mxu0 0
        %5259 = vmatpush1.bf16.xpose.msra.mxu0 %v5240
        %5260 = vmatprep.subr.bf16.mxu0 0
        %5261 = vmatpush1.bf16.xpose.msra.mxu0 %v5243
        %5262 = vmatprep.subr.bf16.mxu0 0
        %5263 = vmatpush1.bf16.xpose.msra.mxu0 %v5246
        %5264 = vmatprep.subr.bf16.mxu0 0
        %5265 = vmatpush1.bf16.xpose.msra.mxu0 0
        %5266 = vmatprep.subr.bf16.mxu0 0
        %5267 = vmatpush1.bf16.xpose.msra.mxu0 0
        %5268 = vmatprep.subr.bf16.mxu0 0
        %5269 = vmatpush1.bf16.xpose.msra.mxu0 0
        %5270 = vmatprep.subr.bf16.mxu0 0
        %5271 = vmatpush1.bf16.xpose.msra.mxu0 0
        %5272 = vmatprep.subr.bf16.mxu0 0
        %5273 = vmatpush1.bf16.xpose.msra.mxu0 0
        %5274 = vmatprep.subr.bf16.mxu0 0
        %5275 = vmatpush1.bf16.xpose.msra.mxu0 0
        %5276 = vmatprep.subr.bf16.mxu0 0
        %5277 = vmatpush1.bf16.xpose.msra.mxu0 0
        %5278 = vmatprep.subr.bf16.mxu0 0
        %5279 = vmatpush1.bf16.xpose.msra.mxu0 0
        %5280 = vmatprep.mubr.bf16.mxu0 0
        %5281 = vmatmul.mubr.bf16.gmra.mrb[0].mxu0 %v5222
        %v5282 = vpop.f32.mrb[0].mxu0
        %v5283 = vadd.f32 %v5220, %v5282
        %v5284 = vpop.f32.mrb[0].mxu0
        %v5285 = vpop.f32.mrb[0].mxu0
        %v5286 = vpop.f32.mrb[0].mxu0
        %5287 = vdwg.mxu0
        %v5288 = vsel %vm3599, 0.0, %v5283
        %v5289 = vld [vmem:[#allocation5] sm:$0x1]
        %5291 = vset.pattern.permute.xlu0 0
        %5292 = vperm.xlu0 %5291, %v5289
        %v5293 = vpop.permute.xlu0 %5292
        %v5295 = vlaneseq
        %v5296 = vshrl.u32 %v5295, 7
        %v5297 = vsub.s32 0, %v5296
        %v5298 = vrot.slane %v5293, %v5297
        %v5299 = vadd.f32 %v5288, %v5298
        %5300 = vxpose.xlu0.b32.start [1/16] %v5299, 128
        %5301 = vxpose.xlu0.b32.cont [2/16] 0.0, 128
        %5302 = vxpose.xlu0.b32.cont [3/16] 0.0, 128
        %5303 = vxpose.xlu0.b32.cont [4/16] 0.0, 128
        %5304 = vxpose.xlu0.b32.cont [5/16] 0.0, 128
        %5305 = vxpose.xlu0.b32.cont [6/16] 0.0, 128
        %5306 = vxpose.xlu0.b32.cont [7/16] 0.0, 128
        %5307 = vxpose.xlu0.b32.cont [8/16] 0.0, 128
        %5308 = vxpose.xlu0.b32.cont [9/16] 0.0, 128
        %5309 = vxpose.xlu0.b32.cont [10/16] 0.0, 128
        %5310 = vxpose.xlu0.b32.cont [11/16] 0.0, 128
        %5311 = vxpose.xlu0.b32.cont [12/16] 0.0, 128
        %5312 = vxpose.xlu0.b32.cont [13/16] 0.0, 128
        %5313 = vxpose.xlu0.b32.cont [14/16] 0.0, 128
        %5314 = vxpose.xlu0.b32.cont [15/16] 0.0, 128
        %5315 = vxpose.xlu0.b32.end [16/16] 0.0, 128
        %v5316 = vpop.trf.xlu0
        %v5317 = vpop.trf.xlu0
        %v5318 = vpop.trf.xlu0
        %v5319 = vpop.trf.xlu0
        %v5320 = vpop.trf.xlu0
        %v5321 = vpop.trf.xlu0
        %v5322 = vpop.trf.xlu0
        %v5323 = vpop.trf.xlu0
        %v5324 = vpop.trf.xlu0
        %v5325 = vpop.trf.xlu0
        %v5326 = vpop.trf.xlu0
        %v5327 = vpop.trf.xlu0
        %v5328 = vpop.trf.xlu0
        %v5329 = vpop.trf.xlu0
        %v5330 = vpop.trf.xlu0
        %v5331 = vpop.trf.xlu0
        %v5332 = vld [vmem:[%s69] sm:$0x1]
        %5334 = vset.pattern.permute.xlu0 0
        %5335 = vperm.xlu0 %5334, %v5316
        %v5336 = vpop.permute.xlu0 %5335
        %5339 = vset.pattern.permute.xlu0 0
        %5340 = vperm.xlu0 %5339, %v5317
        %v5341 = vpop.permute.xlu0 %5340
        %5344 = vset.pattern.permute.xlu0 0
        %5345 = vperm.xlu0 %5344, %v5318
        %v5346 = vpop.permute.xlu0 %5345
        %5349 = vset.pattern.permute.xlu0 0
        %5350 = vperm.xlu0 %5349, %v5319
        %v5351 = vpop.permute.xlu0 %5350
        %5354 = vset.pattern.permute.xlu0 0
        %5355 = vperm.xlu0 %5354, %v5320
        %v5356 = vpop.permute.xlu0 %5355
        %5359 = vset.pattern.permute.xlu0 0
        %5360 = vperm.xlu0 %5359, %v5321
        %v5361 = vpop.permute.xlu0 %5360
        %5364 = vset.pattern.permute.xlu0 0
        %5365 = vperm.xlu0 %5364, %v5322
        %v5366 = vpop.permute.xlu0 %5365
        %5369 = vset.pattern.permute.xlu0 0
        %5370 = vperm.xlu0 %5369, %v5323
        %v5371 = vpop.permute.xlu0 %5370
        %5374 = vset.pattern.permute.xlu0 0
        %5375 = vperm.xlu0 %5374, %v5324
        %v5376 = vpop.permute.xlu0 %5375
        %5379 = vset.pattern.permute.xlu0 0
        %5380 = vperm.xlu0 %5379, %v5325
        %v5381 = vpop.permute.xlu0 %5380
        %5384 = vset.pattern.permute.xlu0 0
        %5385 = vperm.xlu0 %5384, %v5326
        %v5386 = vpop.permute.xlu0 %5385
        %5389 = vset.pattern.permute.xlu0 0
        %5390 = vperm.xlu0 %5389, %v5327
        %v5391 = vpop.permute.xlu0 %5390
        %5394 = vset.pattern.permute.xlu0 0
        %5395 = vperm.xlu0 %5394, %v5328
        %v5396 = vpop.permute.xlu0 %5395
        %5399 = vset.pattern.permute.xlu0 0
        %5400 = vperm.xlu0 %5399, %v5329
        %v5401 = vpop.permute.xlu0 %5400
        %5404 = vset.pattern.permute.xlu0 0
        %5405 = vperm.xlu0 %5404, %v5330
        %v5406 = vpop.permute.xlu0 %5405
        %5409 = vset.pattern.permute.xlu0 0
        %5410 = vperm.xlu0 %5409, %v5331
        %v5411 = vpop.permute.xlu0 %5410
        %v5414 = vlaneseq
        %v5415 = vshrl.u32 %v5414, 7
        %v5416 = vsub.s32 0, %v5415
        %v5417 = vrot.slane %v5332, %v5416
        %vm5419 = vcmp.gt.f32.partialorder %v5336, %v5417
        %vm5420 = vcmp.gt.f32.partialorder %v5341, %v5417
        %vm5421 = vcmp.gt.f32.partialorder %v5346, %v5417
        %vm5422 = vcmp.gt.f32.partialorder %v5351, %v5417
        %vm5423 = vcmp.gt.f32.partialorder %v5356, %v5417
        %vm5424 = vcmp.gt.f32.partialorder %v5361, %v5417
        %vm5425 = vcmp.gt.f32.partialorder %v5366, %v5417
        %vm5426 = vcmp.gt.f32.partialorder %v5371, %v5417
        %vm5427 = vcmp.gt.f32.partialorder %v5376, %v5417
        %vm5428 = vcmp.gt.f32.partialorder %v5381, %v5417
        %vm5429 = vcmp.gt.f32.partialorder %v5386, %v5417
        %vm5430 = vcmp.gt.f32.partialorder %v5391, %v5417
        %vm5431 = vcmp.gt.f32.partialorder %v5396, %v5417
        %vm5432 = vcmp.gt.f32.partialorder %v5401, %v5417
        %vm5433 = vcmp.gt.f32.partialorder %v5406, %v5417
        %vm5434 = vcmp.gt.f32.partialorder %v5411, %v5417
        %v5435 = vsel %vm5419, 1, 0
        %v5436 = vsel %vm5420, 1, 0
        %v5437 = vsel %vm5421, 1, 0
        %v5438 = vsel %vm5422, 1, 0
        %v5439 = vsel %vm5423, 1, 0
        %v5440 = vsel %vm5424, 1, 0
        %v5441 = vsel %vm5425, 1, 0
        %v5442 = vsel %vm5426, 1, 0
        %v5443 = vsel %vm5427, 1, 0
        %v5444 = vsel %vm5428, 1, 0
        %v5445 = vsel %vm5429, 1, 0
        %v5446 = vsel %vm5430, 1, 0
        %v5447 = vsel %vm5431, 1, 0
        %v5448 = vsel %vm5432, 1, 0
        %v5449 = vsel %vm5433, 1, 0
        %v5450 = vsel %vm5434, 1, 0
        %v5451 = vand.u32 %v5435, 65535
        %v5452 = vshrl.u32 %v5435, 16
        %v5453 = vcvt.s32.f32 %v5451
        %v5454 = vcvt.s32.f32 %v5452
        %5455 = vadd.xlane.f32.xlu0 %v5453
        %v5456 = vpop.xlane.xlu0 %5455
        %5457 = vadd.xlane.f32.xlu0 %v5454
        %v5458 = vpop.xlane.xlu0 %5457
        %v5459 = vcvt.f32.s32 %v5456
        %v5460 = vcvt.f32.s32 %v5458
        %v5461 = vshll.u32 %v5460, 16
        %v5462 = vadd.s32 %v5461, %v5459
        %v5463 = vand.u32 %v5436, 65535
        %v5464 = vshrl.u32 %v5436, 16
        %v5465 = vcvt.s32.f32 %v5463
        %v5466 = vcvt.s32.f32 %v5464
        %5467 = vadd.xlane.f32.xlu0 %v5465
        %v5468 = vpop.xlane.xlu0 %5467
        %5469 = vadd.xlane.f32.xlu0 %v5466
        %v5470 = vpop.xlane.xlu0 %5469
        %v5471 = vcvt.f32.s32 %v5468
        %v5472 = vcvt.f32.s32 %v5470
        %v5473 = vshll.u32 %v5472, 16
        %v5474 = vadd.s32 %v5473, %v5471
        %v5475 = vand.u32 %v5437, 65535
        %v5476 = vshrl.u32 %v5437, 16
        %v5477 = vcvt.s32.f32 %v5475
        %v5478 = vcvt.s32.f32 %v5476
        %5479 = vadd.xlane.f32.xlu0 %v5477
        %v5480 = vpop.xlane.xlu0 %5479
        %5481 = vadd.xlane.f32.xlu0 %v5478
        %v5482 = vpop.xlane.xlu0 %5481
        %v5483 = vcvt.f32.s32 %v5480
        %v5484 = vcvt.f32.s32 %v5482
        %v5485 = vshll.u32 %v5484, 16
        %v5486 = vadd.s32 %v5485, %v5483
        %v5487 = vand.u32 %v5438, 65535
        %v5488 = vshrl.u32 %v5438, 16
        %v5489 = vcvt.s32.f32 %v5487
        %v5490 = vcvt.s32.f32 %v5488
        %5491 = vadd.xlane.f32.xlu0 %v5489
        %v5492 = vpop.xlane.xlu0 %5491
        %5493 = vadd.xlane.f32.xlu0 %v5490
        %v5494 = vpop.xlane.xlu0 %5493
        %v5495 = vcvt.f32.s32 %v5492
        %v5496 = vcvt.f32.s32 %v5494
        %v5497 = vshll.u32 %v5496, 16
        %v5498 = vadd.s32 %v5497, %v5495
        %v5499 = vand.u32 %v5439, 65535
        %v5500 = vshrl.u32 %v5439, 16
        %v5501 = vcvt.s32.f32 %v5499
        %v5502 = vcvt.s32.f32 %v5500
        %5503 = vadd.xlane.f32.xlu0 %v5501
        %v5504 = vpop.xlane.xlu0 %5503
        %5505 = vadd.xlane.f32.xlu0 %v5502
        %v5506 = vpop.xlane.xlu0 %5505
        %v5507 = vcvt.f32.s32 %v5504
        %v5508 = vcvt.f32.s32 %v5506
        %v5509 = vshll.u32 %v5508, 16
        %v5510 = vadd.s32 %v5509, %v5507
        %v5511 = vand.u32 %v5440, 65535
        %v5512 = vshrl.u32 %v5440, 16
        %v5513 = vcvt.s32.f32 %v5511
        %v5514 = vcvt.s32.f32 %v5512
        %5515 = vadd.xlane.f32.xlu0 %v5513
        %v5516 = vpop.xlane.xlu0 %5515
        %5517 = vadd.xlane.f32.xlu0 %v5514
        %v5518 = vpop.xlane.xlu0 %5517
        %v5519 = vcvt.f32.s32 %v5516
        %v5520 = vcvt.f32.s32 %v5518
        %v5521 = vshll.u32 %v5520, 16
        %v5522 = vadd.s32 %v5521, %v5519
        %v5523 = vand.u32 %v5441, 65535
        %v5524 = vshrl.u32 %v5441, 16
        %v5525 = vcvt.s32.f32 %v5523
        %v5526 = vcvt.s32.f32 %v5524
        %5527 = vadd.xlane.f32.xlu0 %v5525
        %v5528 = vpop.xlane.xlu0 %5527
        %5529 = vadd.xlane.f32.xlu0 %v5526
        %v5530 = vpop.xlane.xlu0 %5529
        %v5531 = vcvt.f32.s32 %v5528
        %v5532 = vcvt.f32.s32 %v5530
        %v5533 = vshll.u32 %v5532, 16
        %v5534 = vadd.s32 %v5533, %v5531
        %v5535 = vand.u32 %v5442, 65535
        %v5536 = vshrl.u32 %v5442, 16
        %v5537 = vcvt.s32.f32 %v5535
        %v5538 = vcvt.s32.f32 %v5536
        %5539 = vadd.xlane.f32.xlu0 %v5537
        %v5540 = vpop.xlane.xlu0 %5539
        %5541 = vadd.xlane.f32.xlu0 %v5538
        %v5542 = vpop.xlane.xlu0 %5541
        %v5543 = vcvt.f32.s32 %v5540
        %v5544 = vcvt.f32.s32 %v5542
        %v5545 = vshll.u32 %v5544, 16
        %v5546 = vadd.s32 %v5545, %v5543
        %v5547 = vand.u32 %v5443, 65535
        %v5548 = vshrl.u32 %v5443, 16
        %v5549 = vcvt.s32.f32 %v5547
        %v5550 = vcvt.s32.f32 %v5548
        %5551 = vadd.xlane.f32.xlu0 %v5549
        %v5552 = vpop.xlane.xlu0 %5551
        %5553 = vadd.xlane.f32.xlu0 %v5550
        %v5554 = vpop.xlane.xlu0 %5553
        %v5555 = vcvt.f32.s32 %v5552
        %v5556 = vcvt.f32.s32 %v5554
        %v5557 = vshll.u32 %v5556, 16
        %v5558 = vadd.s32 %v5557, %v5555
        %v5559 = vand.u32 %v5444, 65535
        %v5560 = vshrl.u32 %v5444, 16
        %v5561 = vcvt.s32.f32 %v5559
        %v5562 = vcvt.s32.f32 %v5560
        %5563 = vadd.xlane.f32.xlu0 %v5561
        %v5564 = vpop.xlane.xlu0 %5563
        %5565 = vadd.xlane.f32.xlu0 %v5562
        %v5566 = vpop.xlane.xlu0 %5565
        %v5567 = vcvt.f32.s32 %v5564
        %v5568 = vcvt.f32.s32 %v5566
        %v5569 = vshll.u32 %v5568, 16
        %v5570 = vadd.s32 %v5569, %v5567
        %v5571 = vand.u32 %v5445, 65535
        %v5572 = vshrl.u32 %v5445, 16
        %v5573 = vcvt.s32.f32 %v5571
        %v5574 = vcvt.s32.f32 %v5572
        %5575 = vadd.xlane.f32.xlu0 %v5573
        %v5576 = vpop.xlane.xlu0 %5575
        %5577 = vadd.xlane.f32.xlu0 %v5574
        %v5578 = vpop.xlane.xlu0 %5577
        %v5579 = vcvt.f32.s32 %v5576
        %v5580 = vcvt.f32.s32 %v5578
        %v5581 = vshll.u32 %v5580, 16
        %v5582 = vadd.s32 %v5581, %v5579
        %v5583 = vand.u32 %v5446, 65535
        %v5584 = vshrl.u32 %v5446, 16
        %v5585 = vcvt.s32.f32 %v5583
        %v5586 = vcvt.s32.f32 %v5584
        %5587 = vadd.xlane.f32.xlu0 %v5585
        %v5588 = vpop.xlane.xlu0 %5587
        %5589 = vadd.xlane.f32.xlu0 %v5586
        %v5590 = vpop.xlane.xlu0 %5589
        %v5591 = vcvt.f32.s32 %v5588
        %v5592 = vcvt.f32.s32 %v5590
        %v5593 = vshll.u32 %v5592, 16
        %v5594 = vadd.s32 %v5593, %v5591
        %v5595 = vand.u32 %v5447, 65535
        %v5596 = vshrl.u32 %v5447, 16
        %v5597 = vcvt.s32.f32 %v5595
        %v5598 = vcvt.s32.f32 %v5596
        %5599 = vadd.xlane.f32.xlu0 %v5597
        %v5600 = vpop.xlane.xlu0 %5599
        %5601 = vadd.xlane.f32.xlu0 %v5598
        %v5602 = vpop.xlane.xlu0 %5601
        %v5603 = vcvt.f32.s32 %v5600
        %v5604 = vcvt.f32.s32 %v5602
        %v5605 = vshll.u32 %v5604, 16
        %v5606 = vadd.s32 %v5605, %v5603
        %v5607 = vand.u32 %v5448, 65535
        %v5608 = vshrl.u32 %v5448, 16
        %v5609 = vcvt.s32.f32 %v5607
        %v5610 = vcvt.s32.f32 %v5608
        %5611 = vadd.xlane.f32.xlu0 %v5609
        %v5612 = vpop.xlane.xlu0 %5611
        %5613 = vadd.xlane.f32.xlu0 %v5610
        %v5614 = vpop.xlane.xlu0 %5613
        %v5615 = vcvt.f32.s32 %v5612
        %v5616 = vcvt.f32.s32 %v5614
        %v5617 = vshll.u32 %v5616, 16
        %v5618 = vadd.s32 %v5617, %v5615
        %v5619 = vand.u32 %v5449, 65535
        %v5620 = vshrl.u32 %v5449, 16
        %v5621 = vcvt.s32.f32 %v5619
        %v5622 = vcvt.s32.f32 %v5620
        %5623 = vadd.xlane.f32.xlu0 %v5621
        %v5624 = vpop.xlane.xlu0 %5623
        %5625 = vadd.xlane.f32.xlu0 %v5622
        %v5626 = vpop.xlane.xlu0 %5625
        %v5627 = vcvt.f32.s32 %v5624
        %v5628 = vcvt.f32.s32 %v5626
        %v5629 = vshll.u32 %v5628, 16
        %v5630 = vadd.s32 %v5629, %v5627
        %v5631 = vand.u32 %v5450, 65535
        %v5632 = vshrl.u32 %v5450, 16
        %v5633 = vcvt.s32.f32 %v5631
        %v5634 = vcvt.s32.f32 %v5632
        %5635 = vadd.xlane.f32.xlu0 %v5633
        %v5636 = vpop.xlane.xlu0 %5635
        %5637 = vadd.xlane.f32.xlu0 %v5634
        %v5638 = vpop.xlane.xlu0 %5637
        %v5639 = vcvt.f32.s32 %v5636
        %v5640 = vcvt.f32.s32 %v5638
        %v5641 = vshll.u32 %v5640, 16
        %v5642 = vadd.s32 %v5641, %v5639
        %v5643 = vlaneseq
        %v5644 = vand.u32 %v5643, 127
        %vm5645 = vcmp.eq.s32.totalorder %v5644, %v5462
        %vm5646 = vcmp.eq.s32.totalorder %v5644, %v5474
        %vm5647 = vcmp.eq.s32.totalorder %v5644, %v5486
        %vm5648 = vcmp.eq.s32.totalorder %v5644, %v5498
        %vm5649 = vcmp.eq.s32.totalorder %v5644, %v5510
        %vm5650 = vcmp.eq.s32.totalorder %v5644, %v5522
        %vm5651 = vcmp.eq.s32.totalorder %v5644, %v5534
        %vm5652 = vcmp.eq.s32.totalorder %v5644, %v5546
        %vm5653 = vcmp.eq.s32.totalorder %v5644, %v5558
        %vm5654 = vcmp.eq.s32.totalorder %v5644, %v5570
        %vm5655 = vcmp.eq.s32.totalorder %v5644, %v5582
        %vm5656 = vcmp.eq.s32.totalorder %v5644, %v5594
        %vm5657 = vcmp.eq.s32.totalorder %v5644, %v5606
        %vm5658 = vcmp.eq.s32.totalorder %v5644, %v5618
        %vm5659 = vcmp.eq.s32.totalorder %v5644, %v5630
        %vm5660 = vcmp.eq.s32.totalorder %v5644, %v5642
        %v5661 = vsel %vm5645, 1, 0
        %v5662 = vsel %vm5646, 1, 0
        %v5663 = vsel %vm5647, 1, 0
        %v5664 = vsel %vm5648, 1, 0
        %v5665 = vsel %vm5649, 1, 0
        %v5666 = vsel %vm5650, 1, 0
        %v5667 = vsel %vm5651, 1, 0
        %v5668 = vsel %vm5652, 1, 0
        %v5669 = vsel %vm5653, 1, 0
        %v5670 = vsel %vm5654, 1, 0
        %v5671 = vsel %vm5655, 1, 0
        %v5672 = vsel %vm5656, 1, 0
        %v5673 = vsel %vm5657, 1, 0
        %v5674 = vsel %vm5658, 1, 0
        %v5675 = vsel %vm5659, 1, 0
        %v5676 = vsel %vm5660, 1, 0
        %v5677 = vcvt.s32.f32 %v5661
        %v5678 = vcvt.s32.f32 %v5662
        %v5679 = vcvt.s32.f32 %v5663
        %v5680 = vcvt.s32.f32 %v5664
        %v5681 = vcvt.s32.f32 %v5665
        %v5682 = vcvt.s32.f32 %v5666
        %v5683 = vcvt.s32.f32 %v5667
        %v5684 = vcvt.s32.f32 %v5668
        %v5685 = vcvt.s32.f32 %v5669
        %v5686 = vcvt.s32.f32 %v5670
        %v5687 = vcvt.s32.f32 %v5671
        %v5688 = vcvt.s32.f32 %v5672
        %v5689 = vcvt.s32.f32 %v5673
        %v5690 = vcvt.s32.f32 %v5674
        %v5691 = vcvt.s32.f32 %v5675
        %v5692 = vcvt.s32.f32 %v5676
        %v5693 = vld [vmem:[%s73] sm:$0xff]
        %v5694 = vld [vmem:[%s73 + $0x8] sm:$0xff]
        %v5695 = vld [vmem:[%s73 + $0x10] sm:$0xff]
        %v5696 = vld [vmem:[%s73 + $0x18] sm:$0xff]
        %v5697 = vld [vmem:[%s73 + $0x20] sm:$0xff]
        %v5698 = vld [vmem:[%s73 + $0x28] sm:$0xff]
        %v5699 = vld [vmem:[%s73 + $0x30] sm:$0xff]
        %v5700 = vld [vmem:[%s73 + $0x38] sm:$0xff]
        %vm5701 = vcmask 523264
        %v5703 = vsel %vm5701, %v5677, 0
        %v5706 = vsel %vm5701, %v5678, 0
        %v5709 = vsel %vm5701, %v5679, 0
        %v5712 = vsel %vm5701, %v5680, 0
        %v5715 = vsel %vm5701, %v5681, 0
        %v5718 = vsel %vm5701, %v5682, 0
        %v5721 = vsel %vm5701, %v5683, 0
        %v5724 = vsel %vm5701, %v5684, 0
        %v5727 = vsel %vm5701, %v5685, 0
        %v5730 = vsel %vm5701, %v5686, 0
        %v5733 = vsel %vm5701, %v5687, 0
        %v5736 = vsel %vm5701, %v5688, 0
        %v5739 = vsel %vm5701, %v5689, 0
        %v5742 = vsel %vm5701, %v5690, 0
        %v5745 = vsel %vm5701, %v5691, 0
        %v5748 = vsel %vm5701, %v5692, 0
        %5750 = vmatprep.subr.mxu0 0.0
        %5751 = vmatpush1.msra.mxu0 %v5693
        %5752 = vmatprep.subr.mxu0 0.0
        %5753 = vmatpush1.msra.mxu0 %v5694
        %5754 = vmatprep.subr.mxu0 0.0
        %5755 = vmatpush1.msra.mxu0 %v5695
        %5756 = vmatprep.subr.mxu0 0.0
        %5757 = vmatpush1.msra.mxu0 %v5696
        %5758 = vmatprep.subr.mxu0 0.0
        %5759 = vmatpush1.msra.mxu0 %v5697
        %5760 = vmatprep.subr.mxu0 0.0
        %5761 = vmatpush1.msra.mxu0 %v5698
        %5762 = vmatprep.subr.mxu0 0.0
        %5763 = vmatpush1.msra.mxu0 %v5699
        %5764 = vmatprep.subr.mxu0 0.0
        %5765 = vmatpush1.msra.mxu0 %v5700
        %5766 = vmatprep.subr.mxu0 0.0
        %5767 = vmatpush1.msra.mxu0 0.0
        %5768 = vmatprep.subr.mxu0 0.0
        %5769 = vmatpush1.msra.mxu0 0.0
        %5770 = vmatprep.subr.mxu0 0.0
        %5771 = vmatpush1.msra.mxu0 0.0
        %5772 = vmatprep.subr.mxu0 0.0
        %5773 = vmatpush1.msra.mxu0 0.0
        %5774 = vmatprep.subr.mxu0 0.0
        %5775 = vmatpush1.msra.mxu0 0.0
        %5776 = vmatprep.subr.mxu0 0.0
        %5777 = vmatpush1.msra.mxu0 0.0
        %5778 = vmatprep.subr.mxu0 0.0
        %5779 = vmatpush1.msra.mxu0 0.0
        %5780 = vmatprep.subr.mxu0 0.0
        %5781 = vmatpush1.msra.mxu0 0.0
        %5782 = vmatprep.subr.mxu0 0.0
        %5783 = vmatpush1.msra.mxu0 0.0
        %5784 = vmatprep.subr.mxu0 0.0
        %5785 = vmatpush1.msra.mxu0 0.0
        %5786 = vmatprep.subr.mxu0 0.0
        %5787 = vmatpush1.msra.mxu0 0.0
        %5788 = vmatprep.subr.mxu0 0.0
        %5789 = vmatpush1.msra.mxu0 0.0
        %5790 = vmatprep.subr.mxu0 0.0
        %5791 = vmatpush1.msra.mxu0 0.0
        %5792 = vmatprep.subr.mxu0 0.0
        %5793 = vmatpush1.msra.mxu0 0.0
        %5794 = vmatprep.subr.mxu0 0.0
        %5795 = vmatpush1.msra.mxu0 0.0
        %5796 = vmatprep.subr.mxu0 0.0
        %5797 = vmatpush1.msra.mxu0 0.0
        %5798 = vmatprep.subr.mxu0 0.0
        %5799 = vmatpush1.msra.mxu0 0.0
        %5800 = vmatprep.subr.mxu0 0.0
        %5801 = vmatpush1.msra.mxu0 0.0
        %5802 = vmatprep.subr.mxu0 0.0
        %5803 = vmatpush1.msra.mxu0 0.0
        %5804 = vmatprep.subr.mxu0 0.0
        %5805 = vmatpush1.msra.mxu0 0.0
        %5806 = vmatprep.subr.mxu0 0.0
        %5807 = vmatpush1.msra.mxu0 0.0
        %5808 = vmatprep.subr.mxu0 0.0
        %5809 = vmatpush1.msra.mxu0 0.0
        %5810 = vmatprep.subr.mxu0 0.0
        %5811 = vmatpush1.msra.mxu0 0.0
        %5812 = vmatprep.subr.mxu0 0.0
        %5813 = vmatpush1.msra.mxu0 0.0
        %5814 = vmatprep.mubr.f32.mxu0 0.0
        %5815 = vmatmul.mubr.f32.gmra.mrb[0].mxu0 %v5703
        %v5816 = vpop.f32.mrb[0].mxu0
        %v5817 = vadd.f32 0.0, %v5816
        %v5818 = vpop.f32.mrb[0].mxu0
        %5819 = vmatprep.mubr.f32.mxu0 0.0
        %5820 = vmatmul.mubr.f32.gmra.mrb[0].mxu0 %v5706
        %v5821 = vpop.f32.mrb[0].mxu0
        %v5822 = vadd.f32 0.0, %v5821
        %v5823 = vpop.f32.mrb[0].mxu0
        %5824 = vmatprep.mubr.f32.mxu0 0.0
        %5825 = vmatmul.mubr.f32.gmra.mrb[0].mxu0 %v5709
        %v5826 = vpop.f32.mrb[0].mxu0
        %v5827 = vadd.f32 0.0, %v5826
        %v5828 = vpop.f32.mrb[0].mxu0
        %5829 = vmatprep.mubr.f32.mxu0 0.0
        %5830 = vmatmul.mubr.f32.gmra.mrb[0].mxu0 %v5712
        %v5831 = vpop.f32.mrb[0].mxu0
        %v5832 = vadd.f32 0.0, %v5831
        %v5833 = vpop.f32.mrb[0].mxu0
        %5834 = vmatprep.mubr.f32.mxu0 0.0
        %5835 = vmatmul.mubr.f32.gmra.mrb[0].mxu0 %v5715
        %v5836 = vpop.f32.mrb[0].mxu0
        %v5837 = vadd.f32 0.0, %v5836
        %v5838 = vpop.f32.mrb[0].mxu0
        %5839 = vmatprep.mubr.f32.mxu0 0.0
        %5840 = vmatmul.mubr.f32.gmra.mrb[0].mxu0 %v5718
        %v5841 = vpop.f32.mrb[0].mxu0
        %v5842 = vadd.f32 0.0, %v5841
        %v5843 = vpop.f32.mrb[0].mxu0
        %5844 = vmatprep.mubr.f32.mxu0 0.0
        %5845 = vmatmul.mubr.f32.gmra.mrb[0].mxu0 %v5721
        %v5846 = vpop.f32.mrb[0].mxu0
        %v5847 = vadd.f32 0.0, %v5846
        %v5848 = vpop.f32.mrb[0].mxu0
        %5849 = vmatprep.mubr.f32.mxu0 0.0
        %5850 = vmatmul.mubr.f32.gmra.mrb[0].mxu0 %v5724
        %v5851 = vpop.f32.mrb[0].mxu0
        %v5852 = vadd.f32 0.0, %v5851
        %v5853 = vpop.f32.mrb[0].mxu0
        %5854 = vmatprep.mubr.f32.mxu0 0.0
        %5855 = vmatmul.mubr.f32.gmra.mrb[0].mxu0 %v5727
        %v5856 = vpop.f32.mrb[0].mxu0
        %v5857 = vadd.f32 0.0, %v5856
        %v5858 = vpop.f32.mrb[0].mxu0
        %5859 = vmatprep.mubr.f32.mxu0 0.0
        %5860 = vmatmul.mubr.f32.gmra.mrb[0].mxu0 %v5730
        %v5861 = vpop.f32.mrb[0].mxu0
        %v5862 = vadd.f32 0.0, %v5861
        %v5863 = vpop.f32.mrb[0].mxu0
        %5864 = vmatprep.mubr.f32.mxu0 0.0
        %5865 = vmatmul.mubr.f32.gmra.mrb[0].mxu0 %v5733
        %v5866 = vpop.f32.mrb[0].mxu0
        %v5867 = vadd.f32 0.0, %v5866
        %v5868 = vpop.f32.mrb[0].mxu0
        %5869 = vmatprep.mubr.f32.mxu0 0.0
        %5870 = vmatmul.mubr.f32.gmra.mrb[0].mxu0 %v5736
        %v5871 = vpop.f32.mrb[0].mxu0
        %v5872 = vadd.f32 0.0, %v5871
        %v5873 = vpop.f32.mrb[0].mxu0
        %5874 = vmatprep.mubr.f32.mxu0 0.0
        %5875 = vmatmul.mubr.f32.gmra.mrb[0].mxu0 %v5739
        %v5876 = vpop.f32.mrb[0].mxu0
        %v5877 = vadd.f32 0.0, %v5876
        %v5878 = vpop.f32.mrb[0].mxu0
        %5879 = vmatprep.mubr.f32.mxu0 0.0
        %5880 = vmatmul.mubr.f32.gmra.mrb[0].mxu0 %v5742
        %v5881 = vpop.f32.mrb[0].mxu0
        %v5882 = vadd.f32 0.0, %v5881
        %v5883 = vpop.f32.mrb[0].mxu0
        %5884 = vmatprep.mubr.f32.mxu0 0.0
        %5885 = vmatmul.mubr.f32.gmra.mrb[0].mxu0 %v5745
        %v5886 = vpop.f32.mrb[0].mxu0
        %v5887 = vadd.f32 0.0, %v5886
        %v5888 = vpop.f32.mrb[0].mxu0
        %5889 = vmatprep.mubr.f32.mxu0 0.0
        %5890 = vmatmul.mubr.f32.gmra.mrb[0].mxu0 %v5748
        %v5891 = vpop.f32.mrb[0].mxu0
        %v5892 = vadd.f32 0.0, %v5891
        %v5893 = vpop.f32.mrb[0].mxu0
        %5894 = vdwg.mxu0
        %v5895 = vmul.f32 %v5817, %v1685
        %v5896 = vmul.f32 %v5822, %v1686
        %v5897 = vmul.f32 %v5827, %v1687
        %v5898 = vmul.f32 %v5832, %v1688
        %v5899 = vmul.f32 %v5837, %v1689
        %v5900 = vmul.f32 %v5842, %v1690
        %v5901 = vmul.f32 %v5847, %v1691
        %v5902 = vmul.f32 %v5852, %v1692
        %v5903 = vmul.f32 %v5857, %v1693
        %v5904 = vmul.f32 %v5862, %v1694
        %v5905 = vmul.f32 %v5867, %v1695
        %v5906 = vmul.f32 %v5872, %v1696
        %v5907 = vmul.f32 %v5877, %v1697
        %v5908 = vmul.f32 %v5882, %v1698
        %v5909 = vmul.f32 %v5887, %v1699
        %v5910 = vmul.f32 %v5892, %v1700
        %v5911 = vadd.f32 %v1331, %v5895
        %v5912 = vadd.f32 %v1332, %v5896
        %v5913 = vadd.f32 %v1333, %v5897
        %v5914 = vadd.f32 %v1334, %v5898
        %v5915 = vadd.f32 %v1335, %v5899
        %v5916 = vadd.f32 %v1336, %v5900
        %v5917 = vadd.f32 %v1337, %v5901
        %v5918 = vadd.f32 %v1338, %v5902
        %v5919 = vadd.f32 %v1339, %v5903
        %v5920 = vadd.f32 %v1340, %v5904
        %v5921 = vadd.f32 %v1341, %v5905
        %v5922 = vadd.f32 %v1342, %v5906
        %v5923 = vadd.f32 %v1343, %v5907
        %v5924 = vadd.f32 %v1344, %v5908
        %v5925 = vadd.f32 %v1345, %v5909
        %v5926 = vadd.f32 %v1346, %v5910
        %5927 = vst [vmem:[%s1288] sm:$0x1] %v5299
        %5928 = vst.msk [vmem:[%s1324] sm:$0xff] %vm1855, %v5911
        %5929 = vst.msk [vmem:[%s1324 + $0x8] sm:$0xff] %vm1855, %v5912
        %5930 = vst.msk [vmem:[%s1324 + $0x10] sm:$0xff] %vm1855, %v5913
        %5931 = vst.msk [vmem:[%s1324 + $0x18] sm:$0xff] %vm1855, %v5914
        %5932 = vst.msk [vmem:[%s1324 + $0x20] sm:$0xff] %vm1855, %v5915
        %5933 = vst.msk [vmem:[%s1324 + $0x28] sm:$0xff] %vm1855, %v5916
        %5934 = vst.msk [vmem:[%s1324 + $0x30] sm:$0xff] %vm1855, %v5917
        %5935 = vst.msk [vmem:[%s1324 + $0x38] sm:$0xff] %vm1855, %v5918
        %5936 = vst.msk [vmem:[%s1324 + $0x40] sm:$0xff] %vm1855, %v5919
        %5937 = vst.msk [vmem:[%s1324 + $0x48] sm:$0xff] %vm1855, %v5920
        %5938 = vst.msk [vmem:[%s1324 + $0x50] sm:$0xff] %vm1855, %v5921
        %5939 = vst.msk [vmem:[%s1324 + $0x58] sm:$0xff] %vm1855, %v5922
        %5940 = vst.msk [vmem:[%s1324 + $0x60] sm:$0xff] %vm1855, %v5923
        %5941 = vst.msk [vmem:[%s1324 + $0x68] sm:$0xff] %vm1855, %v5924
        %5942 = vst.msk [vmem:[%s1324 + $0x70] sm:$0xff] %vm1855, %v5925
        %5943 = vst.msk [vmem:[%s1324 + $0x78] sm:$0xff] %vm1855, %v5926
        %v5944 = vmul.f32 %v5911, %v1685
        %v5945 = vmul.f32 %v5912, %v1686
        %v5946 = vmul.f32 %v5913, %v1687
        %v5947 = vmul.f32 %v5914, %v1688
        %v5948 = vmul.f32 %v5915, %v1689
        %v5949 = vmul.f32 %v5916, %v1690
        %v5950 = vmul.f32 %v5917, %v1691
        %v5951 = vmul.f32 %v5918, %v1692
        %v5952 = vmul.f32 %v5919, %v1693
        %v5953 = vmul.f32 %v5920, %v1694
        %v5954 = vmul.f32 %v5921, %v1695
        %v5955 = vmul.f32 %v5922, %v1696
        %v5956 = vmul.f32 %v5923, %v1697
        %v5957 = vmul.f32 %v5924, %v1698
        %v5958 = vmul.f32 %v5925, %v1699
        %v5959 = vmul.f32 %v5926, %v1700
        %v5960 = vrot.slane %v5944, 7
        %v5961 = vrot.slane %v5945, 7
        %v5962 = vrot.slane %v5946, 7
        %v5963 = vrot.slane %v5947, 7
        %v5964 = vrot.slane %v5948, 7
        %v5965 = vrot.slane %v5949, 7
        %v5966 = vrot.slane %v5950, 7
        %v5967 = vrot.slane %v5951, 7
        %v5968 = vrot.slane %v5952, 7
        %v5969 = vrot.slane %v5953, 7
        %v5970 = vrot.slane %v5954, 7
        %v5971 = vrot.slane %v5955, 7
        %v5972 = vrot.slane %v5956, 7
        %v5973 = vrot.slane %v5957, 7
        %v5974 = vrot.slane %v5958, 7
        %v5975 = vrot.slane %v5959, 7
        %v5976 = vsel %vm1733, %v5974, %v5975
        %v5977 = vsel %vm1733, %v5973, %v5974
        %v5978 = vsel %vm1733, %v5972, %v5973
        %v5979 = vsel %vm1733, %v5971, %v5972
        %v5980 = vsel %vm1733, %v5970, %v5971
        %v5981 = vsel %vm1733, %v5969, %v5970
        %v5982 = vsel %vm1733, %v5968, %v5969
        %v5983 = vsel %vm1733, %v5967, %v5968
        %v5984 = vsel %vm1733, %v5966, %v5967
        %v5985 = vsel %vm1733, %v5965, %v5966
        %v5986 = vsel %vm1733, %v5964, %v5965
        %v5987 = vsel %vm1733, %v5963, %v5964
        %v5988 = vsel %vm1733, %v5962, %v5963
        %v5989 = vsel %vm1733, %v5961, %v5962
        %v5990 = vsel %vm1733, %v5960, %v5961
        %v5991 = vsel %vm1733, %v5975, %v5960
        %v5992 = vmul.f32 %v5991, %v1589
        %v5993 = vmul.f32 %v5990, %v1590
        %v5994 = vmul.f32 %v5989, %v1591
        %v5995 = vmul.f32 %v5988, %v1592
        %v5996 = vmul.f32 %v5987, %v1593
        %v5997 = vmul.f32 %v5986, %v1594
        %v5998 = vmul.f32 %v5985, %v1595
        %v5999 = vmul.f32 %v5984, %v1596
        %v6000 = vmul.f32 %v5983, %v1597
        %v6001 = vmul.f32 %v5982, %v1598
        %v6002 = vmul.f32 %v5981, %v1599
        %v6003 = vmul.f32 %v5980, %v1600
        %v6004 = vmul.f32 %v5979, %v1601
        %v6005 = vmul.f32 %v5978, %v1602
        %v6006 = vmul.f32 %v5977, %v1603
        %v6007 = vmul.f32 %v5976, %v1604
        %v6008 = vrot.slane %v5944, 1
        %v6009 = vrot.slane %v5945, 1
        %v6010 = vrot.slane %v5946, 1
        %v6011 = vrot.slane %v5947, 1
        %v6012 = vrot.slane %v5948, 1
        %v6013 = vrot.slane %v5949, 1
        %v6014 = vrot.slane %v5950, 1
        %v6015 = vrot.slane %v5951, 1
        %v6016 = vrot.slane %v5952, 1
        %v6017 = vrot.slane %v5953, 1
        %v6018 = vrot.slane %v5954, 1
        %v6019 = vrot.slane %v5955, 1
        %v6020 = vrot.slane %v5956, 1
        %v6021 = vrot.slane %v5957, 1
        %v6022 = vrot.slane %v5958, 1
        %v6023 = vrot.slane %v5959, 1
        %v6024 = vsel %vm1782, %v6022, %v6023
        %v6025 = vsel %vm1782, %v6021, %v6022
        %v6026 = vsel %vm1782, %v6020, %v6021
        %v6027 = vsel %vm1782, %v6019, %v6020
        %v6028 = vsel %vm1782, %v6018, %v6019
        %v6029 = vsel %vm1782, %v6017, %v6018
        %v6030 = vsel %vm1782, %v6016, %v6017
        %v6031 = vsel %vm1782, %v6015, %v6016
        %v6032 = vsel %vm1782, %v6014, %v6015
        %v6033 = vsel %vm1782, %v6013, %v6014
        %v6034 = vsel %vm1782, %v6012, %v6013
        %v6035 = vsel %vm1782, %v6011, %v6012
        %v6036 = vsel %vm1782, %v6010, %v6011
        %v6037 = vsel %vm1782, %v6009, %v6010
        %v6038 = vsel %vm1782, %v6008, %v6009
        %v6039 = vsel %vm1782, %v6023, %v6008
        %v6040 = vmul.f32 %v6038, %v1637
        %v6041 = vmul.f32 %v6037, %v1638
        %v6042 = vmul.f32 %v6036, %v1639
        %v6043 = vmul.f32 %v6035, %v1640
        %v6044 = vmul.f32 %v6034, %v1641
        %v6045 = vmul.f32 %v6033, %v1642
        %v6046 = vmul.f32 %v6032, %v1643
        %v6047 = vmul.f32 %v6031, %v1644
        %v6048 = vmul.f32 %v6030, %v1645
        %v6049 = vmul.f32 %v6029, %v1646
        %v6050 = vmul.f32 %v6028, %v1647
        %v6051 = vmul.f32 %v6027, %v1648
        %v6052 = vmul.f32 %v6026, %v1649
        %v6053 = vmul.f32 %v6025, %v1650
        %v6054 = vmul.f32 %v6024, %v1651
        %v6055 = vmul.f32 %v6039, %v1652
        %v6056 = vld [vmem:[%s45] sm:$0xf]
        %v6057 = vld [vmem:[%s45 + $0x4] sm:$0xf]
        %v6058 = vld [vmem:[%s45 + $0x8] sm:$0xf]
        %v6059 = vld [vmem:[%s45 + $0xc] sm:$0xf]
        %v6060 = vld [vmem:[%s45 + $0x10] sm:$0xf]
        %v6061 = vld [vmem:[%s45 + $0x14] sm:$0xf]
        %v6062 = vld [vmem:[%s45 + $0x18] sm:$0xf]
        %v6063 = vld [vmem:[%s45 + $0x1c] sm:$0xf]
        %v6064 = vld [vmem:[%s45 + $0x20] sm:$0xf]
        %v6065 = vld [vmem:[%s45 + $0x24] sm:$0xf]
        %v6066 = vld [vmem:[%s45 + $0x28] sm:$0xf]
        %v6067 = vld [vmem:[%s45 + $0x2c] sm:$0xf]
        %v6068 = vpack.c.bf16 %v5993, %v5992
        %v6069 = vpack.c.bf16 %v5995, %v5994
        %v6070 = vpack.c.bf16 %v5997, %v5996
        %v6071 = vpack.c.bf16 %v5999, %v5998
        %v6072 = vpack.c.bf16 %v6001, %v6000
        %v6073 = vpack.c.bf16 %v6003, %v6002
        %v6074 = vpack.c.bf16 %v6005, %v6004
        %v6075 = vpack.c.bf16 %v6007, %v6006
        %v6076 = vpack.c.bf16 %v5945, %v5944
        %v6077 = vpack.c.bf16 %v5947, %v5946
        %v6078 = vpack.c.bf16 %v5949, %v5948
        %v6079 = vpack.c.bf16 %v5951, %v5950
        %v6080 = vpack.c.bf16 %v5953, %v5952
        %v6081 = vpack.c.bf16 %v5955, %v5954
        %v6082 = vpack.c.bf16 %v5957, %v5956
        %v6083 = vpack.c.bf16 %v5959, %v5958
        %v6088 = vunpack.c.l.b16 %v6060
        %v6089 = vunpack.c.l.b16 %v6061
        %v6090 = vunpack.c.l.b16 %v6062
        %v6091 = vunpack.c.l.b16 %v6063
        %v6092 = vpack.c.b16 %v6089, %v6088
        %v6093 = vpack.c.b16 %v6091, %v6090
        %v6097 = vsel %vm1855, %v6076, 0
        %v6100 = vsel %vm1855, %v6077, 0
        %v6103 = vsel %vm1855, %v6078, 0
        %v6106 = vsel %vm1855, %v6079, 0
        %v6109 = vsel %vm1855, %v6080, 0
        %v6112 = vsel %vm1855, %v6081, 0
        %v6115 = vsel %vm1855, %v6082, 0
        %v6118 = vsel %vm1855, %v6083, 0
        %6120 = vmatprep.subr.bf16.mxu0 0
        %6121 = vmatpush1.bf16.msra.mxu0 %v6092
        %6122 = vmatprep.subr.bf16.mxu0 0
        %6123 = vmatpush1.bf16.msra.mxu0 %v6093
        %6124 = vmatprep.subr.bf16.mxu0 0
        %6125 = vmatpush1.bf16.msra.mxu0 0
        %6126 = vmatprep.subr.bf16.mxu0 0
        %6127 = vmatpush1.bf16.msra.mxu0 0
        %6128 = vmatprep.subr.bf16.mxu0 0
        %6129 = vmatpush1.bf16.msra.mxu0 0
        %6130 = vmatprep.subr.bf16.mxu0 0
        %6131 = vmatpush1.bf16.msra.mxu0 0
        %6132 = vmatprep.subr.bf16.mxu0 0
        %6133 = vmatpush1.bf16.msra.mxu0 0
        %6134 = vmatprep.subr.bf16.mxu0 0
        %6135 = vmatpush1.bf16.msra.mxu0 0
        %6136 = vmatprep.subr.bf16.mxu0 0
        %6137 = vmatpush1.bf16.msra.mxu0 0
        %6138 = vmatprep.subr.bf16.mxu0 0
        %6139 = vmatpush1.bf16.msra.mxu0 0
        %6140 = vmatprep.subr.bf16.mxu0 0
        %6141 = vmatpush1.bf16.msra.mxu0 0
        %6142 = vmatprep.subr.bf16.mxu0 0
        %6143 = vmatpush1.bf16.msra.mxu0 0
        %6144 = vmatprep.subr.bf16.mxu0 0
        %6145 = vmatpush1.bf16.msra.mxu0 0
        %6146 = vmatprep.subr.bf16.mxu0 0
        %6147 = vmatpush1.bf16.msra.mxu0 0
        %6148 = vmatprep.subr.bf16.mxu0 0
        %6149 = vmatpush1.bf16.msra.mxu0 0
        %6150 = vmatprep.subr.bf16.mxu0 0
        %6151 = vmatpush1.bf16.msra.mxu0 0
        %6152 = vmatprep.mubr.bf16.mxu0 0
        %6153 = vmatmul.mubr.bf16.gmra.mrb[0].mxu0 %v6097
        %v6154 = vpop.f32.mrb[0].mxu0
        %v6155 = vadd.f32 0.0, %v6154
        %v6156 = vpop.f32.mrb[0].mxu0
        %v6157 = vpop.f32.mrb[0].mxu0
        %v6158 = vadd.f32 0.0, %v6157
        %v6159 = vpop.f32.mrb[0].mxu0
        %6160 = vmatprep.mubr.bf16.mxu0 0
        %6161 = vmatmul.mubr.bf16.gmra.mrb[0].mxu0 %v6100
        %v6162 = vpop.f32.mrb[0].mxu0
        %v6163 = vadd.f32 0.0, %v6162
        %v6164 = vpop.f32.mrb[0].mxu0
        %v6165 = vpop.f32.mrb[0].mxu0
        %v6166 = vadd.f32 0.0, %v6165
        %v6167 = vpop.f32.mrb[0].mxu0
        %6168 = vmatprep.mubr.bf16.mxu0 0
        %6169 = vmatmul.mubr.bf16.gmra.mrb[0].mxu0 %v6103
        %v6170 = vpop.f32.mrb[0].mxu0
        %v6171 = vadd.f32 0.0, %v6170
        %v6172 = vpop.f32.mrb[0].mxu0
        %v6173 = vpop.f32.mrb[0].mxu0
        %v6174 = vadd.f32 0.0, %v6173
        %v6175 = vpop.f32.mrb[0].mxu0
        %6176 = vmatprep.mubr.bf16.mxu0 0
        %6177 = vmatmul.mubr.bf16.gmra.mrb[0].mxu0 %v6106
        %v6178 = vpop.f32.mrb[0].mxu0
        %v6179 = vadd.f32 0.0, %v6178
        %v6180 = vpop.f32.mrb[0].mxu0
        %v6181 = vpop.f32.mrb[0].mxu0
        %v6182 = vadd.f32 0.0, %v6181
        %v6183 = vpop.f32.mrb[0].mxu0
        %6184 = vmatprep.mubr.bf16.mxu0 0
        %6185 = vmatmul.mubr.bf16.gmra.mrb[0].mxu0 %v6109
        %v6186 = vpop.f32.mrb[0].mxu0
        %v6187 = vadd.f32 0.0, %v6186
        %v6188 = vpop.f32.mrb[0].mxu0
        %v6189 = vpop.f32.mrb[0].mxu0
        %v6190 = vadd.f32 0.0, %v6189
        %v6191 = vpop.f32.mrb[0].mxu0
        %6192 = vmatprep.mubr.bf16.mxu0 0
        %6193 = vmatmul.mubr.bf16.gmra.mrb[0].mxu0 %v6112
        %v6194 = vpop.f32.mrb[0].mxu0
        %v6195 = vadd.f32 0.0, %v6194
        %v6196 = vpop.f32.mrb[0].mxu0
        %v6197 = vpop.f32.mrb[0].mxu0
        %v6198 = vadd.f32 0.0, %v6197
        %v6199 = vpop.f32.mrb[0].mxu0
        %6200 = vmatprep.mubr.bf16.mxu0 0
        %6201 = vmatmul.mubr.bf16.gmra.mrb[0].mxu0 %v6115
        %v6202 = vpop.f32.mrb[0].mxu0
        %v6203 = vadd.f32 0.0, %v6202
        %v6204 = vpop.f32.mrb[0].mxu0
        %v6205 = vpop.f32.mrb[0].mxu0
        %v6206 = vadd.f32 0.0, %v6205
        %v6207 = vpop.f32.mrb[0].mxu0
        %6208 = vmatprep.mubr.bf16.mxu0 0
        %6209 = vmatmul.mubr.bf16.gmra.mrb[0].mxu0 %v6118
        %v6210 = vpop.f32.mrb[0].mxu0
        %v6211 = vadd.f32 0.0, %v6210
        %v6212 = vpop.f32.mrb[0].mxu0
        %v6213 = vpop.f32.mrb[0].mxu0
        %v6214 = vadd.f32 0.0, %v6213
        %v6215 = vpop.f32.mrb[0].mxu0
        %6216 = vdwg.mxu0
        %v6221 = vunpack.c.l.b16 %v6056
        %v6222 = vunpack.c.l.b16 %v6057
        %v6223 = vunpack.c.l.b16 %v6058
        %v6224 = vunpack.c.l.b16 %v6059
        %v6225 = vpack.c.b16 %v6222, %v6221
        %v6226 = vpack.c.b16 %v6224, %v6223
        %v6230 = vsel %vm1855, %v6068, 0
        %v6233 = vsel %vm1855, %v6069, 0
        %v6236 = vsel %vm1855, %v6070, 0
        %v6239 = vsel %vm1855, %v6071, 0
        %v6242 = vsel %vm1855, %v6072, 0
        %v6245 = vsel %vm1855, %v6073, 0
        %v6248 = vsel %vm1855, %v6074, 0
        %v6251 = vsel %vm1855, %v6075, 0
        %6253 = vmatprep.subr.bf16.mxu0 0
        %6254 = vmatpush1.bf16.msra.mxu0 %v6225
        %6255 = vmatprep.subr.bf16.mxu0 0
        %6256 = vmatpush1.bf16.msra.mxu0 %v6226
        %6257 = vmatprep.subr.bf16.mxu0 0
        %6258 = vmatpush1.bf16.msra.mxu0 0
        %6259 = vmatprep.subr.bf16.mxu0 0
        %6260 = vmatpush1.bf16.msra.mxu0 0
        %6261 = vmatprep.subr.bf16.mxu0 0
        %6262 = vmatpush1.bf16.msra.mxu0 0
        %6263 = vmatprep.subr.bf16.mxu0 0
        %6264 = vmatpush1.bf16.msra.mxu0 0
        %6265 = vmatprep.subr.bf16.mxu0 0
        %6266 = vmatpush1.bf16.msra.mxu0 0
        %6267 = vmatprep.subr.bf16.mxu0 0
        %6268 = vmatpush1.bf16.msra.mxu0 0
        %6269 = vmatprep.subr.bf16.mxu0 0
        %6270 = vmatpush1.bf16.msra.mxu0 0
        %6271 = vmatprep.subr.bf16.mxu0 0
        %6272 = vmatpush1.bf16.msra.mxu0 0
        %6273 = vmatprep.subr.bf16.mxu0 0
        %6274 = vmatpush1.bf16.msra.mxu0 0
        %6275 = vmatprep.subr.bf16.mxu0 0
        %6276 = vmatpush1.bf16.msra.mxu0 0
        %6277 = vmatprep.subr.bf16.mxu0 0
        %6278 = vmatpush1.bf16.msra.mxu0 0
        %6279 = vmatprep.subr.bf16.mxu0 0
        %6280 = vmatpush1.bf16.msra.mxu0 0
        %6281 = vmatprep.subr.bf16.mxu0 0
        %6282 = vmatpush1.bf16.msra.mxu0 0
        %6283 = vmatprep.subr.bf16.mxu0 0
        %6284 = vmatpush1.bf16.msra.mxu0 0
        %6285 = vmatprep.mubr.bf16.mxu0 0
        %6286 = vmatmul.mubr.bf16.gmra.mrb[0].mxu0 %v6230
        %v6287 = vpop.f32.mrb[0].mxu0
        %v6288 = vadd.f32 %v6155, %v6287
        %v6289 = vpop.f32.mrb[0].mxu0
        %v6290 = vpop.f32.mrb[0].mxu0
        %v6291 = vadd.f32 %v6158, %v6290
        %v6292 = vpop.f32.mrb[0].mxu0
        %6293 = vmatprep.mubr.bf16.mxu0 0
        %6294 = vmatmul.mubr.bf16.gmra.mrb[0].mxu0 %v6233
        %v6295 = vpop.f32.mrb[0].mxu0
        %v6296 = vadd.f32 %v6163, %v6295
        %v6297 = vpop.f32.mrb[0].mxu0
        %v6298 = vpop.f32.mrb[0].mxu0
        %v6299 = vadd.f32 %v6166, %v6298
        %v6300 = vpop.f32.mrb[0].mxu0
        %6301 = vmatprep.mubr.bf16.mxu0 0
        %6302 = vmatmul.mubr.bf16.gmra.mrb[0].mxu0 %v6236
        %v6303 = vpop.f32.mrb[0].mxu0
        %v6304 = vadd.f32 %v6171, %v6303
        %v6305 = vpop.f32.mrb[0].mxu0
        %v6306 = vpop.f32.mrb[0].mxu0
        %v6307 = vadd.f32 %v6174, %v6306
        %v6308 = vpop.f32.mrb[0].mxu0
        %6309 = vmatprep.mubr.bf16.mxu0 0
        %6310 = vmatmul.mubr.bf16.gmra.mrb[0].mxu0 %v6239
        %v6311 = vpop.f32.mrb[0].mxu0
        %v6312 = vadd.f32 %v6179, %v6311
        %v6313 = vpop.f32.mrb[0].mxu0
        %v6314 = vpop.f32.mrb[0].mxu0
        %v6315 = vadd.f32 %v6182, %v6314
        %v6316 = vpop.f32.mrb[0].mxu0
        %6317 = vmatprep.mubr.bf16.mxu0 0
        %6318 = vmatmul.mubr.bf16.gmra.mrb[0].mxu0 %v6242
        %v6319 = vpop.f32.mrb[0].mxu0
        %v6320 = vadd.f32 %v6187, %v6319
        %v6321 = vpop.f32.mrb[0].mxu0
        %v6322 = vpop.f32.mrb[0].mxu0
        %v6323 = vadd.f32 %v6190, %v6322
        %v6324 = vpop.f32.mrb[0].mxu0
        %6325 = vmatprep.mubr.bf16.mxu0 0
        %6326 = vmatmul.mubr.bf16.gmra.mrb[0].mxu0 %v6245
        %v6327 = vpop.f32.mrb[0].mxu0
        %v6328 = vadd.f32 %v6195, %v6327
        %v6329 = vpop.f32.mrb[0].mxu0
        %v6330 = vpop.f32.mrb[0].mxu0
        %v6331 = vadd.f32 %v6198, %v6330
        %v6332 = vpop.f32.mrb[0].mxu0
        %6333 = vmatprep.mubr.bf16.mxu0 0
        %6334 = vmatmul.mubr.bf16.gmra.mrb[0].mxu0 %v6248
        %v6335 = vpop.f32.mrb[0].mxu0
        %v6336 = vadd.f32 %v6203, %v6335
        %v6337 = vpop.f32.mrb[0].mxu0
        %v6338 = vpop.f32.mrb[0].mxu0
        %v6339 = vadd.f32 %v6206, %v6338
        %v6340 = vpop.f32.mrb[0].mxu0
        %6341 = vmatprep.mubr.bf16.mxu0 0
        %6342 = vmatmul.mubr.bf16.gmra.mrb[0].mxu0 %v6251
        %v6343 = vpop.f32.mrb[0].mxu0
        %v6344 = vadd.f32 %v6211, %v6343
        %v6345 = vpop.f32.mrb[0].mxu0
        %v6346 = vpop.f32.mrb[0].mxu0
        %v6347 = vadd.f32 %v6214, %v6346
        %v6348 = vpop.f32.mrb[0].mxu0
        %6349 = vdwg.mxu0
        %v6350 = vpack.c.bf16 %v6041, %v6040
        %v6351 = vpack.c.bf16 %v6043, %v6042
        %v6352 = vpack.c.bf16 %v6045, %v6044
        %v6353 = vpack.c.bf16 %v6047, %v6046
        %v6354 = vpack.c.bf16 %v6049, %v6048
        %v6355 = vpack.c.bf16 %v6051, %v6050
        %v6356 = vpack.c.bf16 %v6053, %v6052
        %v6357 = vpack.c.bf16 %v6055, %v6054
        %v6362 = vunpack.c.l.b16 %v6064
        %v6363 = vunpack.c.l.b16 %v6065
        %v6364 = vunpack.c.l.b16 %v6066
        %v6365 = vunpack.c.l.b16 %v6067
        %v6366 = vpack.c.b16 %v6363, %v6362
        %v6367 = vpack.c.b16 %v6365, %v6364
        %v6371 = vsel %vm1855, %v6350, 0
        %v6374 = vsel %vm1855, %v6351, 0
        %v6377 = vsel %vm1855, %v6352, 0
        %v6380 = vsel %vm1855, %v6353, 0
        %v6383 = vsel %vm1855, %v6354, 0
        %v6386 = vsel %vm1855, %v6355, 0
        %v6389 = vsel %vm1855, %v6356, 0
        %v6392 = vsel %vm1855, %v6357, 0
        %6394 = vmatprep.subr.bf16.mxu0 0
        %6395 = vmatpush1.bf16.msra.mxu0 %v6366
        %6396 = vmatprep.subr.bf16.mxu0 0
        %6397 = vmatpush1.bf16.msra.mxu0 %v6367
        %6398 = vmatprep.subr.bf16.mxu0 0
        %6399 = vmatpush1.bf16.msra.mxu0 0
        %6400 = vmatprep.subr.bf16.mxu0 0
        %6401 = vmatpush1.bf16.msra.mxu0 0
        %6402 = vmatprep.subr.bf16.mxu0 0
        %6403 = vmatpush1.bf16.msra.mxu0 0
        %6404 = vmatprep.subr.bf16.mxu0 0
        %6405 = vmatpush1.bf16.msra.mxu0 0
        %6406 = vmatprep.subr.bf16.mxu0 0
        %6407 = vmatpush1.bf16.msra.mxu0 0
        %6408 = vmatprep.subr.bf16.mxu0 0
        %6409 = vmatpush1.bf16.msra.mxu0 0
        %6410 = vmatprep.subr.bf16.mxu0 0
        %6411 = vmatpush1.bf16.msra.mxu0 0
        %6412 = vmatprep.subr.bf16.mxu0 0
        %6413 = vmatpush1.bf16.msra.mxu0 0
        %6414 = vmatprep.subr.bf16.mxu0 0
        %6415 = vmatpush1.bf16.msra.mxu0 0
        %6416 = vmatprep.subr.bf16.mxu0 0
        %6417 = vmatpush1.bf16.msra.mxu0 0
        %6418 = vmatprep.subr.bf16.mxu0 0
        %6419 = vmatpush1.bf16.msra.mxu0 0
        %6420 = vmatprep.subr.bf16.mxu0 0
        %6421 = vmatpush1.bf16.msra.mxu0 0
        %6422 = vmatprep.subr.bf16.mxu0 0
        %6423 = vmatpush1.bf16.msra.mxu0 0
        %6424 = vmatprep.subr.bf16.mxu0 0
        %6425 = vmatpush1.bf16.msra.mxu0 0
        %6426 = vmatprep.mubr.bf16.mxu0 0
        %6427 = vmatmul.mubr.bf16.gmra.mrb[0].mxu0 %v6371
        %v6428 = vpop.f32.mrb[0].mxu0
        %v6429 = vadd.f32 0.0, %v6428
        %v6430 = vpop.f32.mrb[0].mxu0
        %v6431 = vpop.f32.mrb[0].mxu0
        %v6432 = vadd.f32 0.0, %v6431
        %v6433 = vpop.f32.mrb[0].mxu0
        %6434 = vmatprep.mubr.bf16.mxu0 0
        %6435 = vmatmul.mubr.bf16.gmra.mrb[0].mxu0 %v6374
        %v6436 = vpop.f32.mrb[0].mxu0
        %v6437 = vadd.f32 0.0, %v6436
        %v6438 = vpop.f32.mrb[0].mxu0
        %v6439 = vpop.f32.mrb[0].mxu0
        %v6440 = vadd.f32 0.0, %v6439
        %v6441 = vpop.f32.mrb[0].mxu0
        %6442 = vmatprep.mubr.bf16.mxu0 0
        %6443 = vmatmul.mubr.bf16.gmra.mrb[0].mxu0 %v6377
        %v6444 = vpop.f32.mrb[0].mxu0
        %v6445 = vadd.f32 0.0, %v6444
        %v6446 = vpop.f32.mrb[0].mxu0
        %v6447 = vpop.f32.mrb[0].mxu0
        %v6448 = vadd.f32 0.0, %v6447
        %v6449 = vpop.f32.mrb[0].mxu0
        %6450 = vmatprep.mubr.bf16.mxu0 0
        %6451 = vmatmul.mubr.bf16.gmra.mrb[0].mxu0 %v6380
        %v6452 = vpop.f32.mrb[0].mxu0
        %v6453 = vadd.f32 0.0, %v6452
        %v6454 = vpop.f32.mrb[0].mxu0
        %v6455 = vpop.f32.mrb[0].mxu0
        %v6456 = vadd.f32 0.0, %v6455
        %v6457 = vpop.f32.mrb[0].mxu0
        %6458 = vmatprep.mubr.bf16.mxu0 0
        %6459 = vmatmul.mubr.bf16.gmra.mrb[0].mxu0 %v6383
        %v6460 = vpop.f32.mrb[0].mxu0
        %v6461 = vadd.f32 0.0, %v6460
        %v6462 = vpop.f32.mrb[0].mxu0
        %v6463 = vpop.f32.mrb[0].mxu0
        %v6464 = vadd.f32 0.0, %v6463
        %v6465 = vpop.f32.mrb[0].mxu0
        %6466 = vmatprep.mubr.bf16.mxu0 0
        %6467 = vmatmul.mubr.bf16.gmra.mrb[0].mxu0 %v6386
        %v6468 = vpop.f32.mrb[0].mxu0
        %v6469 = vadd.f32 0.0, %v6468
        %v6470 = vpop.f32.mrb[0].mxu0
        %v6471 = vpop.f32.mrb[0].mxu0
        %v6472 = vadd.f32 0.0, %v6471
        %v6473 = vpop.f32.mrb[0].mxu0
        %6474 = vmatprep.mubr.bf16.mxu0 0
        %6475 = vmatmul.mubr.bf16.gmra.mrb[0].mxu0 %v6389
        %v6476 = vpop.f32.mrb[0].mxu0
        %v6477 = vadd.f32 0.0, %v6476
        %v6478 = vpop.f32.mrb[0].mxu0
        %v6479 = vpop.f32.mrb[0].mxu0
        %v6480 = vadd.f32 0.0, %v6479
        %v6481 = vpop.f32.mrb[0].mxu0
        %6482 = vmatprep.mubr.bf16.mxu0 0
        %6483 = vmatmul.mubr.bf16.gmra.mrb[0].mxu0 %v6392
        %v6484 = vpop.f32.mrb[0].mxu0
        %v6485 = vadd.f32 0.0, %v6484
        %v6486 = vpop.f32.mrb[0].mxu0
        %v6487 = vpop.f32.mrb[0].mxu0
        %v6488 = vadd.f32 0.0, %v6487
        %v6489 = vpop.f32.mrb[0].mxu0
        %6490 = vdwg.mxu0
        %v6491 = vadd.f32 %v6288, %v6429
        %v6492 = vadd.f32 %v6291, %v6432
        %v6493 = vadd.f32 %v6296, %v6437
        %v6494 = vadd.f32 %v6299, %v6440
        %v6495 = vadd.f32 %v6304, %v6445
        %v6496 = vadd.f32 %v6307, %v6448
        %v6497 = vadd.f32 %v6312, %v6453
        %v6498 = vadd.f32 %v6315, %v6456
        %v6499 = vadd.f32 %v6320, %v6461
        %v6500 = vadd.f32 %v6323, %v6464
        %v6501 = vadd.f32 %v6328, %v6469
        %v6502 = vadd.f32 %v6331, %v6472
        %v6503 = vadd.f32 %v6336, %v6477
        %v6504 = vadd.f32 %v6339, %v6480
        %v6505 = vadd.f32 %v6344, %v6485
        %v6506 = vadd.f32 %v6347, %v6488
        %v6507 = vld [vmem:[%s47] sm:$0x1]
        %v6509 = vlaneseq
        %v6510 = vshrl.u32 %v6509, 7
        %v6511 = vsub.s32 0, %v6510
        %v6512 = vrot.slane %v6507, %v6511
        %v6514 = vadd.f32 %v6491, %v6512
        %v6515 = vadd.f32 %v6492, %v6512
        %v6516 = vadd.f32 %v6493, %v6512
        %v6517 = vadd.f32 %v6494, %v6512
        %v6518 = vadd.f32 %v6495, %v6512
        %v6519 = vadd.f32 %v6496, %v6512
        %v6520 = vadd.f32 %v6497, %v6512
        %v6521 = vadd.f32 %v6498, %v6512
        %v6522 = vadd.f32 %v6499, %v6512
        %v6523 = vadd.f32 %v6500, %v6512
        %v6524 = vadd.f32 %v6501, %v6512
        %v6525 = vadd.f32 %v6502, %v6512
        %v6526 = vadd.f32 %v6503, %v6512
        %v6527 = vadd.f32 %v6504, %v6512
        %v6528 = vadd.f32 %v6505, %v6512
        %v6529 = vadd.f32 %v6506, %v6512
        %v6530 = vmax.f32 %v6514, 0.0
        %v6531 = vmax.f32 %v6515, 0.0
        %v6532 = vmax.f32 %v6516, 0.0
        %v6533 = vmax.f32 %v6517, 0.0
        %v6534 = vmax.f32 %v6518, 0.0
        %v6535 = vmax.f32 %v6519, 0.0
        %v6536 = vmax.f32 %v6520, 0.0
        %v6537 = vmax.f32 %v6521, 0.0
        %v6538 = vmax.f32 %v6522, 0.0
        %v6539 = vmax.f32 %v6523, 0.0
        %v6540 = vmax.f32 %v6524, 0.0
        %v6541 = vmax.f32 %v6525, 0.0
        %v6542 = vmax.f32 %v6526, 0.0
        %v6543 = vmax.f32 %v6527, 0.0
        %v6544 = vmax.f32 %v6528, 0.0
        %v6545 = vmax.f32 %v6529, 0.0
        %v6546 = vsel %vm1855, %v6530, 0.0
        %6547 = vadd.xlane.f32.xlu0 %v6546
        %v6548 = vpop.xlane.xlu0 %6547
        %v6549 = vsel %vm1855, %v6531, 0.0
        %6550 = vadd.xlane.f32.xlu0 %v6549
        %v6551 = vpop.xlane.xlu0 %6550
        %v6552 = vsel %vm1855, %v6532, 0.0
        %6553 = vadd.xlane.f32.xlu0 %v6552
        %v6554 = vpop.xlane.xlu0 %6553
        %v6555 = vsel %vm1855, %v6533, 0.0
        %6556 = vadd.xlane.f32.xlu0 %v6555
        %v6557 = vpop.xlane.xlu0 %6556
        %v6558 = vsel %vm1855, %v6534, 0.0
        %6559 = vadd.xlane.f32.xlu0 %v6558
        %v6560 = vpop.xlane.xlu0 %6559
        %v6561 = vsel %vm1855, %v6535, 0.0
        %6562 = vadd.xlane.f32.xlu0 %v6561
        %v6563 = vpop.xlane.xlu0 %6562
        %v6564 = vsel %vm1855, %v6536, 0.0
        %6565 = vadd.xlane.f32.xlu0 %v6564
        %v6566 = vpop.xlane.xlu0 %6565
        %v6567 = vsel %vm1855, %v6537, 0.0
        %6568 = vadd.xlane.f32.xlu0 %v6567
        %v6569 = vpop.xlane.xlu0 %6568
        %v6570 = vsel %vm1855, %v6538, 0.0
        %6571 = vadd.xlane.f32.xlu0 %v6570
        %v6572 = vpop.xlane.xlu0 %6571
        %v6573 = vsel %vm1855, %v6539, 0.0
        %6574 = vadd.xlane.f32.xlu0 %v6573
        %v6575 = vpop.xlane.xlu0 %6574
        %v6576 = vsel %vm1855, %v6540, 0.0
        %6577 = vadd.xlane.f32.xlu0 %v6576
        %v6578 = vpop.xlane.xlu0 %6577
        %v6579 = vsel %vm1855, %v6541, 0.0
        %6580 = vadd.xlane.f32.xlu0 %v6579
        %v6581 = vpop.xlane.xlu0 %6580
        %v6582 = vsel %vm1855, %v6542, 0.0
        %6583 = vadd.xlane.f32.xlu0 %v6582
        %v6584 = vpop.xlane.xlu0 %6583
        %v6585 = vsel %vm1855, %v6543, 0.0
        %6586 = vadd.xlane.f32.xlu0 %v6585
        %v6587 = vpop.xlane.xlu0 %6586
        %v6588 = vsel %vm1855, %v6544, 0.0
        %6589 = vadd.xlane.f32.xlu0 %v6588
        %v6590 = vpop.xlane.xlu0 %6589
        %v6591 = vsel %vm1855, %v6545, 0.0
        %6592 = vadd.xlane.f32.xlu0 %v6591
        %v6593 = vpop.xlane.xlu0 %6592
        %v6594 = vmul.f32 %v6548, %v2354
        %v6595 = vmul.f32 %v6551, %v2354
        %v6596 = vmul.f32 %v6554, %v2354
        %v6597 = vmul.f32 %v6557, %v2354
        %v6598 = vmul.f32 %v6560, %v2354
        %v6599 = vmul.f32 %v6563, %v2354
        %v6600 = vmul.f32 %v6566, %v2354
        %v6601 = vmul.f32 %v6569, %v2354
        %v6602 = vmul.f32 %v6572, %v2354
        %v6603 = vmul.f32 %v6575, %v2354
        %v6604 = vmul.f32 %v6578, %v2354
        %v6605 = vmul.f32 %v6581, %v2354
        %v6606 = vmul.f32 %v6584, %v2354
        %v6607 = vmul.f32 %v6587, %v2354
        %v6608 = vmul.f32 %v6590, %v2354
        %v6609 = vmul.f32 %v6593, %v2354
        %v6610 = vmul.f32 %v6530, %v6530
        %v6611 = vmul.f32 %v6531, %v6531
        %v6612 = vmul.f32 %v6532, %v6532
        %v6613 = vmul.f32 %v6533, %v6533
        %v6614 = vmul.f32 %v6534, %v6534
        %v6615 = vmul.f32 %v6535, %v6535
        %v6616 = vmul.f32 %v6536, %v6536
        %v6617 = vmul.f32 %v6537, %v6537
        %v6618 = vmul.f32 %v6538, %v6538
        %v6619 = vmul.f32 %v6539, %v6539
        %v6620 = vmul.f32 %v6540, %v6540
        %v6621 = vmul.f32 %v6541, %v6541
        %v6622 = vmul.f32 %v6542, %v6542
        %v6623 = vmul.f32 %v6543, %v6543
        %v6624 = vmul.f32 %v6544, %v6544
        %v6625 = vmul.f32 %v6545, %v6545
        %v6626 = vsel %vm1855, %v6610, 0.0
        %6627 = vadd.xlane.f32.xlu0 %v6626
        %v6628 = vpop.xlane.xlu0 %6627
        %v6629 = vsel %vm1855, %v6611, 0.0
        %6630 = vadd.xlane.f32.xlu0 %v6629
        %v6631 = vpop.xlane.xlu0 %6630
        %v6632 = vsel %vm1855, %v6612, 0.0
        %6633 = vadd.xlane.f32.xlu0 %v6632
        %v6634 = vpop.xlane.xlu0 %6633
        %v6635 = vsel %vm1855, %v6613, 0.0
        %6636 = vadd.xlane.f32.xlu0 %v6635
        %v6637 = vpop.xlane.xlu0 %6636
        %v6638 = vsel %vm1855, %v6614, 0.0
        %6639 = vadd.xlane.f32.xlu0 %v6638
        %v6640 = vpop.xlane.xlu0 %6639
        %v6641 = vsel %vm1855, %v6615, 0.0
        %6642 = vadd.xlane.f32.xlu0 %v6641
        %v6643 = vpop.xlane.xlu0 %6642
        %v6644 = vsel %vm1855, %v6616, 0.0
        %6645 = vadd.xlane.f32.xlu0 %v6644
        %v6646 = vpop.xlane.xlu0 %6645
        %v6647 = vsel %vm1855, %v6617, 0.0
        %6648 = vadd.xlane.f32.xlu0 %v6647
        %v6649 = vpop.xlane.xlu0 %6648
        %v6650 = vsel %vm1855, %v6618, 0.0
        %6651 = vadd.xlane.f32.xlu0 %v6650
        %v6652 = vpop.xlane.xlu0 %6651
        %v6653 = vsel %vm1855, %v6619, 0.0
        %6654 = vadd.xlane.f32.xlu0 %v6653
        %v6655 = vpop.xlane.xlu0 %6654
        %v6656 = vsel %vm1855, %v6620, 0.0
        %6657 = vadd.xlane.f32.xlu0 %v6656
        %v6658 = vpop.xlane.xlu0 %6657
        %v6659 = vsel %vm1855, %v6621, 0.0
        %6660 = vadd.xlane.f32.xlu0 %v6659
        %v6661 = vpop.xlane.xlu0 %6660
        %v6662 = vsel %vm1855, %v6622, 0.0
        %6663 = vadd.xlane.f32.xlu0 %v6662
        %v6664 = vpop.xlane.xlu0 %6663
        %v6665 = vsel %vm1855, %v6623, 0.0
        %6666 = vadd.xlane.f32.xlu0 %v6665
        %v6667 = vpop.xlane.xlu0 %6666
        %v6668 = vsel %vm1855, %v6624, 0.0
        %6669 = vadd.xlane.f32.xlu0 %v6668
        %v6670 = vpop.xlane.xlu0 %6669
        %v6671 = vsel %vm1855, %v6625, 0.0
        %6672 = vadd.xlane.f32.xlu0 %v6671
        %v6673 = vpop.xlane.xlu0 %6672
        %v6674 = vmul.f32 %v6628, %v2354
        %v6675 = vmul.f32 %v6631, %v2354
        %v6676 = vmul.f32 %v6634, %v2354
        %v6677 = vmul.f32 %v6637, %v2354
        %v6678 = vmul.f32 %v6640, %v2354
        %v6679 = vmul.f32 %v6643, %v2354
        %v6680 = vmul.f32 %v6646, %v2354
        %v6681 = vmul.f32 %v6649, %v2354
        %v6682 = vmul.f32 %v6652, %v2354
        %v6683 = vmul.f32 %v6655, %v2354
        %v6684 = vmul.f32 %v6658, %v2354
        %v6685 = vmul.f32 %v6661, %v2354
        %v6686 = vmul.f32 %v6664, %v2354
        %v6687 = vmul.f32 %v6667, %v2354
        %v6688 = vmul.f32 %v6670, %v2354
        %v6689 = vmul.f32 %v6673, %v2354
        %v6690 = vmul.f32 %v6594, %v6594
        %v6691 = vmul.f32 %v6595, %v6595
        %v6692 = vmul.f32 %v6596, %v6596
        %v6693 = vmul.f32 %v6597, %v6597
        %v6694 = vmul.f32 %v6598, %v6598
        %v6695 = vmul.f32 %v6599, %v6599
        %v6696 = vmul.f32 %v6600, %v6600
        %v6697 = vmul.f32 %v6601, %v6601
        %v6698 = vmul.f32 %v6602, %v6602
        %v6699 = vmul.f32 %v6603, %v6603
        %v6700 = vmul.f32 %v6604, %v6604
        %v6701 = vmul.f32 %v6605, %v6605
        %v6702 = vmul.f32 %v6606, %v6606
        %v6703 = vmul.f32 %v6607, %v6607
        %v6704 = vmul.f32 %v6608, %v6608
        %v6705 = vmul.f32 %v6609, %v6609
        %v6706 = vsub.f32 %v6674, %v6690
        %v6707 = vsub.f32 %v6675, %v6691
        %v6708 = vsub.f32 %v6676, %v6692
        %v6709 = vsub.f32 %v6677, %v6693
        %v6710 = vsub.f32 %v6678, %v6694
        %v6711 = vsub.f32 %v6679, %v6695
        %v6712 = vsub.f32 %v6680, %v6696
        %v6713 = vsub.f32 %v6681, %v6697
        %v6714 = vsub.f32 %v6682, %v6698
        %v6715 = vsub.f32 %v6683, %v6699
        %v6716 = vsub.f32 %v6684, %v6700
        %v6717 = vsub.f32 %v6685, %v6701
        %v6718 = vsub.f32 %v6686, %v6702
        %v6719 = vsub.f32 %v6687, %v6703
        %v6720 = vsub.f32 %v6688, %v6704
        %v6721 = vsub.f32 %v6689, %v6705
        %v6722 = vmax.f32 %v6706, 0.0
        %v6723 = vmax.f32 %v6707, 0.0
        %v6724 = vmax.f32 %v6708, 0.0
        %v6725 = vmax.f32 %v6709, 0.0
        %v6726 = vmax.f32 %v6710, 0.0
        %v6727 = vmax.f32 %v6711, 0.0
        %v6728 = vmax.f32 %v6712, 0.0
        %v6729 = vmax.f32 %v6713, 0.0
        %v6730 = vmax.f32 %v6714, 0.0
        %v6731 = vmax.f32 %v6715, 0.0
        %v6732 = vmax.f32 %v6716, 0.0
        %v6733 = vmax.f32 %v6717, 0.0
        %v6734 = vmax.f32 %v6718, 0.0
        %v6735 = vmax.f32 %v6719, 0.0
        %v6736 = vmax.f32 %v6720, 0.0
        %v6737 = vmax.f32 %v6721, 0.0
        %v6738 = vadd.f32 %v6722, 1e-05
        %v6739 = vadd.f32 %v6723, 1e-05
        %v6740 = vadd.f32 %v6724, 1e-05
        %v6741 = vadd.f32 %v6725, 1e-05
        %v6742 = vadd.f32 %v6726, 1e-05
        %v6743 = vadd.f32 %v6727, 1e-05
        %v6744 = vadd.f32 %v6728, 1e-05
        %v6745 = vadd.f32 %v6729, 1e-05
        %v6746 = vadd.f32 %v6730, 1e-05
        %v6747 = vadd.f32 %v6731, 1e-05
        %v6748 = vadd.f32 %v6732, 1e-05
        %v6749 = vadd.f32 %v6733, 1e-05
        %v6750 = vadd.f32 %v6734, 1e-05
        %v6751 = vadd.f32 %v6735, 1e-05
        %v6752 = vadd.f32 %v6736, 1e-05
        %v6753 = vadd.f32 %v6737, 1e-05
        %v6754 = vrsqrt.pop %v6738
        %v6755 = vrsqrt.pop %v6739
        %v6756 = vrsqrt.pop %v6740
        %v6757 = vrsqrt.pop %v6741
        %v6758 = vrsqrt.pop %v6742
        %v6759 = vrsqrt.pop %v6743
        %v6760 = vrsqrt.pop %v6744
        %v6761 = vrsqrt.pop %v6745
        %v6762 = vrsqrt.pop %v6746
        %v6763 = vrsqrt.pop %v6747
        %v6764 = vrsqrt.pop %v6748
        %v6765 = vrsqrt.pop %v6749
        %v6766 = vrsqrt.pop %v6750
        %v6767 = vrsqrt.pop %v6751
        %v6768 = vrsqrt.pop %v6752
        %v6769 = vrsqrt.pop %v6753
        %v6770 = vsub.f32 %v6530, %v6594
        %v6771 = vsub.f32 %v6531, %v6595
        %v6772 = vsub.f32 %v6532, %v6596
        %v6773 = vsub.f32 %v6533, %v6597
        %v6774 = vsub.f32 %v6534, %v6598
        %v6775 = vsub.f32 %v6535, %v6599
        %v6776 = vsub.f32 %v6536, %v6600
        %v6777 = vsub.f32 %v6537, %v6601
        %v6778 = vsub.f32 %v6538, %v6602
        %v6779 = vsub.f32 %v6539, %v6603
        %v6780 = vsub.f32 %v6540, %v6604
        %v6781 = vsub.f32 %v6541, %v6605
        %v6782 = vsub.f32 %v6542, %v6606
        %v6783 = vsub.f32 %v6543, %v6607
        %v6784 = vsub.f32 %v6544, %v6608
        %v6785 = vsub.f32 %v6545, %v6609
        %v6786 = vld [vmem:[%s49] sm:$0x1]
        %v6788 = vlaneseq
        %v6789 = vshrl.u32 %v6788, 7
        %v6790 = vsub.s32 0, %v6789
        %v6791 = vrot.slane %v6786, %v6790
        %v6793 = vmul.f32 %v6754, %v6791
        %v6794 = vmul.f32 %v6755, %v6791
        %v6795 = vmul.f32 %v6756, %v6791
        %v6796 = vmul.f32 %v6757, %v6791
        %v6797 = vmul.f32 %v6758, %v6791
        %v6798 = vmul.f32 %v6759, %v6791
        %v6799 = vmul.f32 %v6760, %v6791
        %v6800 = vmul.f32 %v6761, %v6791
        %v6801 = vmul.f32 %v6762, %v6791
        %v6802 = vmul.f32 %v6763, %v6791
        %v6803 = vmul.f32 %v6764, %v6791
        %v6804 = vmul.f32 %v6765, %v6791
        %v6805 = vmul.f32 %v6766, %v6791
        %v6806 = vmul.f32 %v6767, %v6791
        %v6807 = vmul.f32 %v6768, %v6791
        %v6808 = vmul.f32 %v6769, %v6791
        %v6809 = vmul.f32 %v6770, %v6793
        %v6810 = vmul.f32 %v6771, %v6794
        %v6811 = vmul.f32 %v6772, %v6795
        %v6812 = vmul.f32 %v6773, %v6796
        %v6813 = vmul.f32 %v6774, %v6797
        %v6814 = vmul.f32 %v6775, %v6798
        %v6815 = vmul.f32 %v6776, %v6799
        %v6816 = vmul.f32 %v6777, %v6800
        %v6817 = vmul.f32 %v6778, %v6801
        %v6818 = vmul.f32 %v6779, %v6802
        %v6819 = vmul.f32 %v6780, %v6803
        %v6820 = vmul.f32 %v6781, %v6804
        %v6821 = vmul.f32 %v6782, %v6805
        %v6822 = vmul.f32 %v6783, %v6806
        %v6823 = vmul.f32 %v6784, %v6807
        %v6824 = vmul.f32 %v6785, %v6808
        %v6825 = vld [vmem:[%s51] sm:$0x1]
        %v6827 = vlaneseq
        %v6828 = vshrl.u32 %v6827, 7
        %v6829 = vsub.s32 0, %v6828
        %v6830 = vrot.slane %v6825, %v6829
        %v6832 = vadd.f32 %v6809, %v6830
        %v6833 = vadd.f32 %v6810, %v6830
        %v6834 = vadd.f32 %v6811, %v6830
        %v6835 = vadd.f32 %v6812, %v6830
        %v6836 = vadd.f32 %v6813, %v6830
        %v6837 = vadd.f32 %v6814, %v6830
        %v6838 = vadd.f32 %v6815, %v6830
        %v6839 = vadd.f32 %v6816, %v6830
        %v6840 = vadd.f32 %v6817, %v6830
        %v6841 = vadd.f32 %v6818, %v6830
        %v6842 = vadd.f32 %v6819, %v6830
        %v6843 = vadd.f32 %v6820, %v6830
        %v6844 = vadd.f32 %v6821, %v6830
        %v6845 = vadd.f32 %v6822, %v6830
        %v6846 = vadd.f32 %v6823, %v6830
        %v6847 = vadd.f32 %v6824, %v6830
        %v6848 = vmul.f32 %v6832, %v1685
        %v6849 = vmul.f32 %v6833, %v1686
        %v6850 = vmul.f32 %v6834, %v1687
        %v6851 = vmul.f32 %v6835, %v1688
        %v6852 = vmul.f32 %v6836, %v1689
        %v6853 = vmul.f32 %v6837, %v1690
        %v6854 = vmul.f32 %v6838, %v1691
        %v6855 = vmul.f32 %v6839, %v1692
        %v6856 = vmul.f32 %v6840, %v1693
        %v6857 = vmul.f32 %v6841, %v1694
        %v6858 = vmul.f32 %v6842, %v1695
        %v6859 = vmul.f32 %v6843, %v1696
        %v6860 = vmul.f32 %v6844, %v1697
        %v6861 = vmul.f32 %v6845, %v1698
        %v6862 = vmul.f32 %v6846, %v1699
        %v6863 = vmul.f32 %v6847, %v1700
        %v6864 = vrot.slane %v6848, 7
        %v6865 = vrot.slane %v6849, 7
        %v6866 = vrot.slane %v6850, 7
        %v6867 = vrot.slane %v6851, 7
        %v6868 = vrot.slane %v6852, 7
        %v6869 = vrot.slane %v6853, 7
        %v6870 = vrot.slane %v6854, 7
        %v6871 = vrot.slane %v6855, 7
        %v6872 = vrot.slane %v6856, 7
        %v6873 = vrot.slane %v6857, 7
        %v6874 = vrot.slane %v6858, 7
        %v6875 = vrot.slane %v6859, 7
        %v6876 = vrot.slane %v6860, 7
        %v6877 = vrot.slane %v6861, 7
        %v6878 = vrot.slane %v6862, 7
        %v6879 = vrot.slane %v6863, 7
        %v6880 = vsel %vm1733, %v6878, %v6879
        %v6881 = vsel %vm1733, %v6877, %v6878
        %v6882 = vsel %vm1733, %v6876, %v6877
        %v6883 = vsel %vm1733, %v6875, %v6876
        %v6884 = vsel %vm1733, %v6874, %v6875
        %v6885 = vsel %vm1733, %v6873, %v6874
        %v6886 = vsel %vm1733, %v6872, %v6873
        %v6887 = vsel %vm1733, %v6871, %v6872
        %v6888 = vsel %vm1733, %v6870, %v6871
        %v6889 = vsel %vm1733, %v6869, %v6870
        %v6890 = vsel %vm1733, %v6868, %v6869
        %v6891 = vsel %vm1733, %v6867, %v6868
        %v6892 = vsel %vm1733, %v6866, %v6867
        %v6893 = vsel %vm1733, %v6865, %v6866
        %v6894 = vsel %vm1733, %v6864, %v6865
        %v6895 = vsel %vm1733, %v6879, %v6864
        %v6896 = vmul.f32 %v6895, %v1589
        %v6897 = vmul.f32 %v6894, %v1590
        %v6898 = vmul.f32 %v6893, %v1591
        %v6899 = vmul.f32 %v6892, %v1592
        %v6900 = vmul.f32 %v6891, %v1593
        %v6901 = vmul.f32 %v6890, %v1594
        %v6902 = vmul.f32 %v6889, %v1595
        %v6903 = vmul.f32 %v6888, %v1596
        %v6904 = vmul.f32 %v6887, %v1597
        %v6905 = vmul.f32 %v6886, %v1598
        %v6906 = vmul.f32 %v6885, %v1599
        %v6907 = vmul.f32 %v6884, %v1600
        %v6908 = vmul.f32 %v6883, %v1601
        %v6909 = vmul.f32 %v6882, %v1602
        %v6910 = vmul.f32 %v6881, %v1603
        %v6911 = vmul.f32 %v6880, %v1604
        %v6912 = vrot.slane %v6848, 1
        %v6913 = vrot.slane %v6849, 1
        %v6914 = vrot.slane %v6850, 1
        %v6915 = vrot.slane %v6851, 1
        %v6916 = vrot.slane %v6852, 1
        %v6917 = vrot.slane %v6853, 1
        %v6918 = vrot.slane %v6854, 1
        %v6919 = vrot.slane %v6855, 1
        %v6920 = vrot.slane %v6856, 1
        %v6921 = vrot.slane %v6857, 1
        %v6922 = vrot.slane %v6858, 1
        %v6923 = vrot.slane %v6859, 1
        %v6924 = vrot.slane %v6860, 1
        %v6925 = vrot.slane %v6861, 1
        %v6926 = vrot.slane %v6862, 1
        %v6927 = vrot.slane %v6863, 1
        %v6928 = vsel %vm1782, %v6926, %v6927
        %v6929 = vsel %vm1782, %v6925, %v6926
        %v6930 = vsel %vm1782, %v6924, %v6925
        %v6931 = vsel %vm1782, %v6923, %v6924
        %v6932 = vsel %vm1782, %v6922, %v6923
        %v6933 = vsel %vm1782, %v6921, %v6922
        %v6934 = vsel %vm1782, %v6920, %v6921
        %v6935 = vsel %vm1782, %v6919, %v6920
        %v6936 = vsel %vm1782, %v6918, %v6919
        %v6937 = vsel %vm1782, %v6917, %v6918
        %v6938 = vsel %vm1782, %v6916, %v6917
        %v6939 = vsel %vm1782, %v6915, %v6916
        %v6940 = vsel %vm1782, %v6914, %v6915
        %v6941 = vsel %vm1782, %v6913, %v6914
        %v6942 = vsel %vm1782, %v6912, %v6913
        %v6943 = vsel %vm1782, %v6927, %v6912
        %v6944 = vmul.f32 %v6942, %v1637
        %v6945 = vmul.f32 %v6941, %v1638
        %v6946 = vmul.f32 %v6940, %v1639
        %v6947 = vmul.f32 %v6939, %v1640
        %v6948 = vmul.f32 %v6938, %v1641
        %v6949 = vmul.f32 %v6937, %v1642
        %v6950 = vmul.f32 %v6936, %v1643
        %v6951 = vmul.f32 %v6935, %v1644
        %v6952 = vmul.f32 %v6934, %v1645
        %v6953 = vmul.f32 %v6933, %v1646
        %v6954 = vmul.f32 %v6932, %v1647
        %v6955 = vmul.f32 %v6931, %v1648
        %v6956 = vmul.f32 %v6930, %v1649
        %v6957 = vmul.f32 %v6929, %v1650
        %v6958 = vmul.f32 %v6928, %v1651
        %v6959 = vmul.f32 %v6943, %v1652
        %v6960 = vld [vmem:[%s53] sm:$0xf]
        %v6961 = vld [vmem:[%s53 + $0x4] sm:$0xf]
        %v6962 = vld [vmem:[%s53 + $0x8] sm:$0xf]
        %v6963 = vld [vmem:[%s53 + $0xc] sm:$0xf]
        %v6964 = vld [vmem:[%s53 + $0x10] sm:$0xf]
        %v6965 = vld [vmem:[%s53 + $0x14] sm:$0xf]
        %v6966 = vld [vmem:[%s53 + $0x18] sm:$0xf]
        %v6967 = vld [vmem:[%s53 + $0x1c] sm:$0xf]
        %v6968 = vld [vmem:[%s53 + $0x20] sm:$0xf]
        %v6969 = vld [vmem:[%s53 + $0x24] sm:$0xf]
        %v6970 = vld [vmem:[%s53 + $0x28] sm:$0xf]
        %v6971 = vld [vmem:[%s53 + $0x2c] sm:$0xf]
        %v6972 = vpack.c.bf16 %v6897, %v6896
        %v6973 = vpack.c.bf16 %v6899, %v6898
        %v6974 = vpack.c.bf16 %v6901, %v6900
        %v6975 = vpack.c.bf16 %v6903, %v6902
        %v6976 = vpack.c.bf16 %v6905, %v6904
        %v6977 = vpack.c.bf16 %v6907, %v6906
        %v6978 = vpack.c.bf16 %v6909, %v6908
        %v6979 = vpack.c.bf16 %v6911, %v6910
        %v6980 = vpack.c.bf16 %v6849, %v6848
        %v6981 = vpack.c.bf16 %v6851, %v6850
        %v6982 = vpack.c.bf16 %v6853, %v6852
        %v6983 = vpack.c.bf16 %v6855, %v6854
        %v6984 = vpack.c.bf16 %v6857, %v6856
        %v6985 = vpack.c.bf16 %v6859, %v6858
        %v6986 = vpack.c.bf16 %v6861, %v6860
        %v6987 = vpack.c.bf16 %v6863, %v6862
        %v6992 = vunpack.c.l.b16 %v6964
        %v6993 = vunpack.c.l.b16 %v6965
        %v6994 = vunpack.c.l.b16 %v6966
        %v6995 = vunpack.c.l.b16 %v6967
        %v6996 = vpack.c.b16 %v6993, %v6992
        %v6997 = vpack.c.b16 %v6995, %v6994
        %v7001 = vsel %vm1855, %v6980, 0
        %v7004 = vsel %vm1855, %v6981, 0
        %v7007 = vsel %vm1855, %v6982, 0
        %v7010 = vsel %vm1855, %v6983, 0
        %v7013 = vsel %vm1855, %v6984, 0
        %v7016 = vsel %vm1855, %v6985, 0
        %v7019 = vsel %vm1855, %v6986, 0
        %v7022 = vsel %vm1855, %v6987, 0
        %7024 = vmatprep.subr.bf16.mxu0 0
        %7025 = vmatpush1.bf16.msra.mxu0 %v6996
        %7026 = vmatprep.subr.bf16.mxu0 0
        %7027 = vmatpush1.bf16.msra.mxu0 %v6997
        %7028 = vmatprep.subr.bf16.mxu0 0
        %7029 = vmatpush1.bf16.msra.mxu0 0
        %7030 = vmatprep.subr.bf16.mxu0 0
        %7031 = vmatpush1.bf16.msra.mxu0 0
        %7032 = vmatprep.subr.bf16.mxu0 0
        %7033 = vmatpush1.bf16.msra.mxu0 0
        %7034 = vmatprep.subr.bf16.mxu0 0
        %7035 = vmatpush1.bf16.msra.mxu0 0
        %7036 = vmatprep.subr.bf16.mxu0 0
        %7037 = vmatpush1.bf16.msra.mxu0 0
        %7038 = vmatprep.subr.bf16.mxu0 0
        %7039 = vmatpush1.bf16.msra.mxu0 0
        %7040 = vmatprep.subr.bf16.mxu0 0
        %7041 = vmatpush1.bf16.msra.mxu0 0
        %7042 = vmatprep.subr.bf16.mxu0 0
        %7043 = vmatpush1.bf16.msra.mxu0 0
        %7044 = vmatprep.subr.bf16.mxu0 0
        %7045 = vmatpush1.bf16.msra.mxu0 0
        %7046 = vmatprep.subr.bf16.mxu0 0
        %7047 = vmatpush1.bf16.msra.mxu0 0
        %7048 = vmatprep.subr.bf16.mxu0 0
        %7049 = vmatpush1.bf16.msra.mxu0 0
        %7050 = vmatprep.subr.bf16.mxu0 0
        %7051 = vmatpush1.bf16.msra.mxu0 0
        %7052 = vmatprep.subr.bf16.mxu0 0
        %7053 = vmatpush1.bf16.msra.mxu0 0
        %7054 = vmatprep.subr.bf16.mxu0 0
        %7055 = vmatpush1.bf16.msra.mxu0 0
        %7056 = vmatprep.mubr.bf16.mxu0 0
        %7057 = vmatmul.mubr.bf16.gmra.mrb[0].mxu0 %v7001
        %v7058 = vpop.f32.mrb[0].mxu0
        %v7059 = vadd.f32 0.0, %v7058
        %v7060 = vpop.f32.mrb[0].mxu0
        %v7061 = vpop.f32.mrb[0].mxu0
        %v7062 = vadd.f32 0.0, %v7061
        %v7063 = vpop.f32.mrb[0].mxu0
        %7064 = vmatprep.mubr.bf16.mxu0 0
        %7065 = vmatmul.mubr.bf16.gmra.mrb[0].mxu0 %v7004
        %v7066 = vpop.f32.mrb[0].mxu0
        %v7067 = vadd.f32 0.0, %v7066
        %v7068 = vpop.f32.mrb[0].mxu0
        %v7069 = vpop.f32.mrb[0].mxu0
        %v7070 = vadd.f32 0.0, %v7069
        %v7071 = vpop.f32.mrb[0].mxu0
        %7072 = vmatprep.mubr.bf16.mxu0 0
        %7073 = vmatmul.mubr.bf16.gmra.mrb[0].mxu0 %v7007
        %v7074 = vpop.f32.mrb[0].mxu0
        %v7075 = vadd.f32 0.0, %v7074
        %v7076 = vpop.f32.mrb[0].mxu0
        %v7077 = vpop.f32.mrb[0].mxu0
        %v7078 = vadd.f32 0.0, %v7077
        %v7079 = vpop.f32.mrb[0].mxu0
        %7080 = vmatprep.mubr.bf16.mxu0 0
        %7081 = vmatmul.mubr.bf16.gmra.mrb[0].mxu0 %v7010
        %v7082 = vpop.f32.mrb[0].mxu0
        %v7083 = vadd.f32 0.0, %v7082
        %v7084 = vpop.f32.mrb[0].mxu0
        %v7085 = vpop.f32.mrb[0].mxu0
        %v7086 = vadd.f32 0.0, %v7085
        %v7087 = vpop.f32.mrb[0].mxu0
        %7088 = vmatprep.mubr.bf16.mxu0 0
        %7089 = vmatmul.mubr.bf16.gmra.mrb[0].mxu0 %v7013
        %v7090 = vpop.f32.mrb[0].mxu0
        %v7091 = vadd.f32 0.0, %v7090
        %v7092 = vpop.f32.mrb[0].mxu0
        %v7093 = vpop.f32.mrb[0].mxu0
        %v7094 = vadd.f32 0.0, %v7093
        %v7095 = vpop.f32.mrb[0].mxu0
        %7096 = vmatprep.mubr.bf16.mxu0 0
        %7097 = vmatmul.mubr.bf16.gmra.mrb[0].mxu0 %v7016
        %v7098 = vpop.f32.mrb[0].mxu0
        %v7099 = vadd.f32 0.0, %v7098
        %v7100 = vpop.f32.mrb[0].mxu0
        %v7101 = vpop.f32.mrb[0].mxu0
        %v7102 = vadd.f32 0.0, %v7101
        %v7103 = vpop.f32.mrb[0].mxu0
        %7104 = vmatprep.mubr.bf16.mxu0 0
        %7105 = vmatmul.mubr.bf16.gmra.mrb[0].mxu0 %v7019
        %v7106 = vpop.f32.mrb[0].mxu0
        %v7107 = vadd.f32 0.0, %v7106
        %v7108 = vpop.f32.mrb[0].mxu0
        %v7109 = vpop.f32.mrb[0].mxu0
        %v7110 = vadd.f32 0.0, %v7109
        %v7111 = vpop.f32.mrb[0].mxu0
        %7112 = vmatprep.mubr.bf16.mxu0 0
        %7113 = vmatmul.mubr.bf16.gmra.mrb[0].mxu0 %v7022
        %v7114 = vpop.f32.mrb[0].mxu0
        %v7115 = vadd.f32 0.0, %v7114
        %v7116 = vpop.f32.mrb[0].mxu0
        %v7117 = vpop.f32.mrb[0].mxu0
        %v7118 = vadd.f32 0.0, %v7117
        %v7119 = vpop.f32.mrb[0].mxu0
        %7120 = vdwg.mxu0
        %v7125 = vunpack.c.l.b16 %v6960
        %v7126 = vunpack.c.l.b16 %v6961
        %v7127 = vunpack.c.l.b16 %v6962
        %v7128 = vunpack.c.l.b16 %v6963
        %v7129 = vpack.c.b16 %v7126, %v7125
        %v7130 = vpack.c.b16 %v7128, %v7127
        %v7134 = vsel %vm1855, %v6972, 0
        %v7137 = vsel %vm1855, %v6973, 0
        %v7140 = vsel %vm1855, %v6974, 0
        %v7143 = vsel %vm1855, %v6975, 0
        %v7146 = vsel %vm1855, %v6976, 0
        %v7149 = vsel %vm1855, %v6977, 0
        %v7152 = vsel %vm1855, %v6978, 0
        %v7155 = vsel %vm1855, %v6979, 0
        %7157 = vmatprep.subr.bf16.mxu0 0
        %7158 = vmatpush1.bf16.msra.mxu0 %v7129
        %7159 = vmatprep.subr.bf16.mxu0 0
        %7160 = vmatpush1.bf16.msra.mxu0 %v7130
        %7161 = vmatprep.subr.bf16.mxu0 0
        %7162 = vmatpush1.bf16.msra.mxu0 0
        %7163 = vmatprep.subr.bf16.mxu0 0
        %7164 = vmatpush1.bf16.msra.mxu0 0
        %7165 = vmatprep.subr.bf16.mxu0 0
        %7166 = vmatpush1.bf16.msra.mxu0 0
        %7167 = vmatprep.subr.bf16.mxu0 0
        %7168 = vmatpush1.bf16.msra.mxu0 0
        %7169 = vmatprep.subr.bf16.mxu0 0
        %7170 = vmatpush1.bf16.msra.mxu0 0
        %7171 = vmatprep.subr.bf16.mxu0 0
        %7172 = vmatpush1.bf16.msra.mxu0 0
        %7173 = vmatprep.subr.bf16.mxu0 0
        %7174 = vmatpush1.bf16.msra.mxu0 0
        %7175 = vmatprep.subr.bf16.mxu0 0
        %7176 = vmatpush1.bf16.msra.mxu0 0
        %7177 = vmatprep.subr.bf16.mxu0 0
        %7178 = vmatpush1.bf16.msra.mxu0 0
        %7179 = vmatprep.subr.bf16.mxu0 0
        %7180 = vmatpush1.bf16.msra.mxu0 0
        %7181 = vmatprep.subr.bf16.mxu0 0
        %7182 = vmatpush1.bf16.msra.mxu0 0
        %7183 = vmatprep.subr.bf16.mxu0 0
        %7184 = vmatpush1.bf16.msra.mxu0 0
        %7185 = vmatprep.subr.bf16.mxu0 0
        %7186 = vmatpush1.bf16.msra.mxu0 0
        %7187 = vmatprep.subr.bf16.mxu0 0
        %7188 = vmatpush1.bf16.msra.mxu0 0
        %7189 = vmatprep.mubr.bf16.mxu0 0
        %7190 = vmatmul.mubr.bf16.gmra.mrb[0].mxu0 %v7134
        %v7191 = vpop.f32.mrb[0].mxu0
        %v7192 = vadd.f32 %v7059, %v7191
        %v7193 = vpop.f32.mrb[0].mxu0
        %v7194 = vpop.f32.mrb[0].mxu0
        %v7195 = vadd.f32 %v7062, %v7194
        %v7196 = vpop.f32.mrb[0].mxu0
        %7197 = vmatprep.mubr.bf16.mxu0 0
        %7198 = vmatmul.mubr.bf16.gmra.mrb[0].mxu0 %v7137
        %v7199 = vpop.f32.mrb[0].mxu0
        %v7200 = vadd.f32 %v7067, %v7199
        %v7201 = vpop.f32.mrb[0].mxu0
        %v7202 = vpop.f32.mrb[0].mxu0
        %v7203 = vadd.f32 %v7070, %v7202
        %v7204 = vpop.f32.mrb[0].mxu0
        %7205 = vmatprep.mubr.bf16.mxu0 0
        %7206 = vmatmul.mubr.bf16.gmra.mrb[0].mxu0 %v7140
        %v7207 = vpop.f32.mrb[0].mxu0
        %v7208 = vadd.f32 %v7075, %v7207
        %v7209 = vpop.f32.mrb[0].mxu0
        %v7210 = vpop.f32.mrb[0].mxu0
        %v7211 = vadd.f32 %v7078, %v7210
        %v7212 = vpop.f32.mrb[0].mxu0
        %7213 = vmatprep.mubr.bf16.mxu0 0
        %7214 = vmatmul.mubr.bf16.gmra.mrb[0].mxu0 %v7143
        %v7215 = vpop.f32.mrb[0].mxu0
        %v7216 = vadd.f32 %v7083, %v7215
        %v7217 = vpop.f32.mrb[0].mxu0
        %v7218 = vpop.f32.mrb[0].mxu0
        %v7219 = vadd.f32 %v7086, %v7218
        %v7220 = vpop.f32.mrb[0].mxu0
        %7221 = vmatprep.mubr.bf16.mxu0 0
        %7222 = vmatmul.mubr.bf16.gmra.mrb[0].mxu0 %v7146
        %v7223 = vpop.f32.mrb[0].mxu0
        %v7224 = vadd.f32 %v7091, %v7223
        %v7225 = vpop.f32.mrb[0].mxu0
        %v7226 = vpop.f32.mrb[0].mxu0
        %v7227 = vadd.f32 %v7094, %v7226
        %v7228 = vpop.f32.mrb[0].mxu0
        %7229 = vmatprep.mubr.bf16.mxu0 0
        %7230 = vmatmul.mubr.bf16.gmra.mrb[0].mxu0 %v7149
        %v7231 = vpop.f32.mrb[0].mxu0
        %v7232 = vadd.f32 %v7099, %v7231
        %v7233 = vpop.f32.mrb[0].mxu0
        %v7234 = vpop.f32.mrb[0].mxu0
        %v7235 = vadd.f32 %v7102, %v7234
        %v7236 = vpop.f32.mrb[0].mxu0
        %7237 = vmatprep.mubr.bf16.mxu0 0
        %7238 = vmatmul.mubr.bf16.gmra.mrb[0].mxu0 %v7152
        %v7239 = vpop.f32.mrb[0].mxu0
        %v7240 = vadd.f32 %v7107, %v7239
        %v7241 = vpop.f32.mrb[0].mxu0
        %v7242 = vpop.f32.mrb[0].mxu0
        %v7243 = vadd.f32 %v7110, %v7242
        %v7244 = vpop.f32.mrb[0].mxu0
        %7245 = vmatprep.mubr.bf16.mxu0 0
        %7246 = vmatmul.mubr.bf16.gmra.mrb[0].mxu0 %v7155
        %v7247 = vpop.f32.mrb[0].mxu0
        %v7248 = vadd.f32 %v7115, %v7247
        %v7249 = vpop.f32.mrb[0].mxu0
        %v7250 = vpop.f32.mrb[0].mxu0
        %v7251 = vadd.f32 %v7118, %v7250
        %v7252 = vpop.f32.mrb[0].mxu0
        %7253 = vdwg.mxu0
        %v7254 = vpack.c.bf16 %v6945, %v6944
        %v7255 = vpack.c.bf16 %v6947, %v6946
        %v7256 = vpack.c.bf16 %v6949, %v6948
        %v7257 = vpack.c.bf16 %v6951, %v6950
        %v7258 = vpack.c.bf16 %v6953, %v6952
        %v7259 = vpack.c.bf16 %v6955, %v6954
        %v7260 = vpack.c.bf16 %v6957, %v6956
        %v7261 = vpack.c.bf16 %v6959, %v6958
        %v7266 = vunpack.c.l.b16 %v6968
        %v7267 = vunpack.c.l.b16 %v6969
        %v7268 = vunpack.c.l.b16 %v6970
        %v7269 = vunpack.c.l.b16 %v6971
        %v7270 = vpack.c.b16 %v7267, %v7266
        %v7271 = vpack.c.b16 %v7269, %v7268
        %v7275 = vsel %vm1855, %v7254, 0
        %v7278 = vsel %vm1855, %v7255, 0
        %v7281 = vsel %vm1855, %v7256, 0
        %v7284 = vsel %vm1855, %v7257, 0
        %v7287 = vsel %vm1855, %v7258, 0
        %v7290 = vsel %vm1855, %v7259, 0
        %v7293 = vsel %vm1855, %v7260, 0
        %v7296 = vsel %vm1855, %v7261, 0
        %7298 = vmatprep.subr.bf16.mxu0 0
        %7299 = vmatpush1.bf16.msra.mxu0 %v7270
        %7300 = vmatprep.subr.bf16.mxu0 0
        %7301 = vmatpush1.bf16.msra.mxu0 %v7271
        %7302 = vmatprep.subr.bf16.mxu0 0
        %7303 = vmatpush1.bf16.msra.mxu0 0
        %7304 = vmatprep.subr.bf16.mxu0 0
        %7305 = vmatpush1.bf16.msra.mxu0 0
        %7306 = vmatprep.subr.bf16.mxu0 0
        %7307 = vmatpush1.bf16.msra.mxu0 0
        %7308 = vmatprep.subr.bf16.mxu0 0
        %7309 = vmatpush1.bf16.msra.mxu0 0
        %7310 = vmatprep.subr.bf16.mxu0 0
        %7311 = vmatpush1.bf16.msra.mxu0 0
        %7312 = vmatprep.subr.bf16.mxu0 0
        %7313 = vmatpush1.bf16.msra.mxu0 0
        %7314 = vmatprep.subr.bf16.mxu0 0
        %7315 = vmatpush1.bf16.msra.mxu0 0
        %7316 = vmatprep.subr.bf16.mxu0 0
        %7317 = vmatpush1.bf16.msra.mxu0 0
        %7318 = vmatprep.subr.bf16.mxu0 0
        %7319 = vmatpush1.bf16.msra.mxu0 0
        %7320 = vmatprep.subr.bf16.mxu0 0
        %7321 = vmatpush1.bf16.msra.mxu0 0
        %7322 = vmatprep.subr.bf16.mxu0 0
        %7323 = vmatpush1.bf16.msra.mxu0 0
        %7324 = vmatprep.subr.bf16.mxu0 0
        %7325 = vmatpush1.bf16.msra.mxu0 0
        %7326 = vmatprep.subr.bf16.mxu0 0
        %7327 = vmatpush1.bf16.msra.mxu0 0
        %7328 = vmatprep.subr.bf16.mxu0 0
        %7329 = vmatpush1.bf16.msra.mxu0 0
        %7330 = vmatprep.mubr.bf16.mxu0 0
        %7331 = vmatmul.mubr.bf16.gmra.mrb[0].mxu0 %v7275
        %v7332 = vpop.f32.mrb[0].mxu0
        %v7333 = vadd.f32 0.0, %v7332
        %v7334 = vpop.f32.mrb[0].mxu0
        %v7335 = vpop.f32.mrb[0].mxu0
        %v7336 = vadd.f32 0.0, %v7335
        %v7337 = vpop.f32.mrb[0].mxu0
        %7338 = vmatprep.mubr.bf16.mxu0 0
        %7339 = vmatmul.mubr.bf16.gmra.mrb[0].mxu0 %v7278
        %v7340 = vpop.f32.mrb[0].mxu0
        %v7341 = vadd.f32 0.0, %v7340
        %v7342 = vpop.f32.mrb[0].mxu0
        %v7343 = vpop.f32.mrb[0].mxu0
        %v7344 = vadd.f32 0.0, %v7343
        %v7345 = vpop.f32.mrb[0].mxu0
        %7346 = vmatprep.mubr.bf16.mxu0 0
        %7347 = vmatmul.mubr.bf16.gmra.mrb[0].mxu0 %v7281
        %v7348 = vpop.f32.mrb[0].mxu0
        %v7349 = vadd.f32 0.0, %v7348
        %v7350 = vpop.f32.mrb[0].mxu0
        %v7351 = vpop.f32.mrb[0].mxu0
        %v7352 = vadd.f32 0.0, %v7351
        %v7353 = vpop.f32.mrb[0].mxu0
        %7354 = vmatprep.mubr.bf16.mxu0 0
        %7355 = vmatmul.mubr.bf16.gmra.mrb[0].mxu0 %v7284
        %v7356 = vpop.f32.mrb[0].mxu0
        %v7357 = vadd.f32 0.0, %v7356
        %v7358 = vpop.f32.mrb[0].mxu0
        %v7359 = vpop.f32.mrb[0].mxu0
        %v7360 = vadd.f32 0.0, %v7359
        %v7361 = vpop.f32.mrb[0].mxu0
        %7362 = vmatprep.mubr.bf16.mxu0 0
        %7363 = vmatmul.mubr.bf16.gmra.mrb[0].mxu0 %v7287
        %v7364 = vpop.f32.mrb[0].mxu0
        %v7365 = vadd.f32 0.0, %v7364
        %v7366 = vpop.f32.mrb[0].mxu0
        %v7367 = vpop.f32.mrb[0].mxu0
        %v7368 = vadd.f32 0.0, %v7367
        %v7369 = vpop.f32.mrb[0].mxu0
        %7370 = vmatprep.mubr.bf16.mxu0 0
        %7371 = vmatmul.mubr.bf16.gmra.mrb[0].mxu0 %v7290
        %v7372 = vpop.f32.mrb[0].mxu0
        %v7373 = vadd.f32 0.0, %v7372
        %v7374 = vpop.f32.mrb[0].mxu0
        %v7375 = vpop.f32.mrb[0].mxu0
        %v7376 = vadd.f32 0.0, %v7375
        %v7377 = vpop.f32.mrb[0].mxu0
        %7378 = vmatprep.mubr.bf16.mxu0 0
        %7379 = vmatmul.mubr.bf16.gmra.mrb[0].mxu0 %v7293
        %v7380 = vpop.f32.mrb[0].mxu0
        %v7381 = vadd.f32 0.0, %v7380
        %v7382 = vpop.f32.mrb[0].mxu0
        %v7383 = vpop.f32.mrb[0].mxu0
        %v7384 = vadd.f32 0.0, %v7383
        %v7385 = vpop.f32.mrb[0].mxu0
        %7386 = vmatprep.mubr.bf16.mxu0 0
        %7387 = vmatmul.mubr.bf16.gmra.mrb[0].mxu0 %v7296
        %v7388 = vpop.f32.mrb[0].mxu0
        %v7389 = vadd.f32 0.0, %v7388
        %v7390 = vpop.f32.mrb[0].mxu0
        %v7391 = vpop.f32.mrb[0].mxu0
        %v7392 = vadd.f32 0.0, %v7391
        %v7393 = vpop.f32.mrb[0].mxu0
        %7394 = vdwg.mxu0
        %v7395 = vadd.f32 %v7192, %v7333
        %v7396 = vadd.f32 %v7195, %v7336
        %v7397 = vadd.f32 %v7200, %v7341
        %v7398 = vadd.f32 %v7203, %v7344
        %v7399 = vadd.f32 %v7208, %v7349
        %v7400 = vadd.f32 %v7211, %v7352
        %v7401 = vadd.f32 %v7216, %v7357
        %v7402 = vadd.f32 %v7219, %v7360
        %v7403 = vadd.f32 %v7224, %v7365
        %v7404 = vadd.f32 %v7227, %v7368
        %v7405 = vadd.f32 %v7232, %v7373
        %v7406 = vadd.f32 %v7235, %v7376
        %v7407 = vadd.f32 %v7240, %v7381
        %v7408 = vadd.f32 %v7243, %v7384
        %v7409 = vadd.f32 %v7248, %v7389
        %v7410 = vadd.f32 %v7251, %v7392
        %v7411 = vld [vmem:[%s55] sm:$0x1]
        %v7413 = vlaneseq
        %v7414 = vshrl.u32 %v7413, 7
        %v7415 = vsub.s32 0, %v7414
        %v7416 = vrot.slane %v7411, %v7415
        %v7418 = vadd.f32 %v7395, %v7416
        %v7419 = vadd.f32 %v7396, %v7416
        %v7420 = vadd.f32 %v7397, %v7416
        %v7421 = vadd.f32 %v7398, %v7416
        %v7422 = vadd.f32 %v7399, %v7416
        %v7423 = vadd.f32 %v7400, %v7416
        %v7424 = vadd.f32 %v7401, %v7416
        %v7425 = vadd.f32 %v7402, %v7416
        %v7426 = vadd.f32 %v7403, %v7416
        %v7427 = vadd.f32 %v7404, %v7416
        %v7428 = vadd.f32 %v7405, %v7416
        %v7429 = vadd.f32 %v7406, %v7416
        %v7430 = vadd.f32 %v7407, %v7416
        %v7431 = vadd.f32 %v7408, %v7416
        %v7432 = vadd.f32 %v7409, %v7416
        %v7433 = vadd.f32 %v7410, %v7416
        %v7434 = vmax.f32 %v7418, 0.0
        %v7435 = vmax.f32 %v7419, 0.0
        %v7436 = vmax.f32 %v7420, 0.0
        %v7437 = vmax.f32 %v7421, 0.0
        %v7438 = vmax.f32 %v7422, 0.0
        %v7439 = vmax.f32 %v7423, 0.0
        %v7440 = vmax.f32 %v7424, 0.0
        %v7441 = vmax.f32 %v7425, 0.0
        %v7442 = vmax.f32 %v7426, 0.0
        %v7443 = vmax.f32 %v7427, 0.0
        %v7444 = vmax.f32 %v7428, 0.0
        %v7445 = vmax.f32 %v7429, 0.0
        %v7446 = vmax.f32 %v7430, 0.0
        %v7447 = vmax.f32 %v7431, 0.0
        %v7448 = vmax.f32 %v7432, 0.0
        %v7449 = vmax.f32 %v7433, 0.0
        %v7450 = vsel %vm1855, %v7434, 0.0
        %7451 = vadd.xlane.f32.xlu0 %v7450
        %v7452 = vpop.xlane.xlu0 %7451
        %v7453 = vsel %vm1855, %v7435, 0.0
        %7454 = vadd.xlane.f32.xlu0 %v7453
        %v7455 = vpop.xlane.xlu0 %7454
        %v7456 = vsel %vm1855, %v7436, 0.0
        %7457 = vadd.xlane.f32.xlu0 %v7456
        %v7458 = vpop.xlane.xlu0 %7457
        %v7459 = vsel %vm1855, %v7437, 0.0
        %7460 = vadd.xlane.f32.xlu0 %v7459
        %v7461 = vpop.xlane.xlu0 %7460
        %v7462 = vsel %vm1855, %v7438, 0.0
        %7463 = vadd.xlane.f32.xlu0 %v7462
        %v7464 = vpop.xlane.xlu0 %7463
        %v7465 = vsel %vm1855, %v7439, 0.0
        %7466 = vadd.xlane.f32.xlu0 %v7465
        %v7467 = vpop.xlane.xlu0 %7466
        %v7468 = vsel %vm1855, %v7440, 0.0
        %7469 = vadd.xlane.f32.xlu0 %v7468
        %v7470 = vpop.xlane.xlu0 %7469
        %v7471 = vsel %vm1855, %v7441, 0.0
        %7472 = vadd.xlane.f32.xlu0 %v7471
        %v7473 = vpop.xlane.xlu0 %7472
        %v7474 = vsel %vm1855, %v7442, 0.0
        %7475 = vadd.xlane.f32.xlu0 %v7474
        %v7476 = vpop.xlane.xlu0 %7475
        %v7477 = vsel %vm1855, %v7443, 0.0
        %7478 = vadd.xlane.f32.xlu0 %v7477
        %v7479 = vpop.xlane.xlu0 %7478
        %v7480 = vsel %vm1855, %v7444, 0.0
        %7481 = vadd.xlane.f32.xlu0 %v7480
        %v7482 = vpop.xlane.xlu0 %7481
        %v7483 = vsel %vm1855, %v7445, 0.0
        %7484 = vadd.xlane.f32.xlu0 %v7483
        %v7485 = vpop.xlane.xlu0 %7484
        %v7486 = vsel %vm1855, %v7446, 0.0
        %7487 = vadd.xlane.f32.xlu0 %v7486
        %v7488 = vpop.xlane.xlu0 %7487
        %v7489 = vsel %vm1855, %v7447, 0.0
        %7490 = vadd.xlane.f32.xlu0 %v7489
        %v7491 = vpop.xlane.xlu0 %7490
        %v7492 = vsel %vm1855, %v7448, 0.0
        %7493 = vadd.xlane.f32.xlu0 %v7492
        %v7494 = vpop.xlane.xlu0 %7493
        %v7495 = vsel %vm1855, %v7449, 0.0
        %7496 = vadd.xlane.f32.xlu0 %v7495
        %v7497 = vpop.xlane.xlu0 %7496
        %v7498 = vmul.f32 %v7452, %v2354
        %v7499 = vmul.f32 %v7455, %v2354
        %v7500 = vmul.f32 %v7458, %v2354
        %v7501 = vmul.f32 %v7461, %v2354
        %v7502 = vmul.f32 %v7464, %v2354
        %v7503 = vmul.f32 %v7467, %v2354
        %v7504 = vmul.f32 %v7470, %v2354
        %v7505 = vmul.f32 %v7473, %v2354
        %v7506 = vmul.f32 %v7476, %v2354
        %v7507 = vmul.f32 %v7479, %v2354
        %v7508 = vmul.f32 %v7482, %v2354
        %v7509 = vmul.f32 %v7485, %v2354
        %v7510 = vmul.f32 %v7488, %v2354
        %v7511 = vmul.f32 %v7491, %v2354
        %v7512 = vmul.f32 %v7494, %v2354
        %v7513 = vmul.f32 %v7497, %v2354
        %v7514 = vmul.f32 %v7434, %v7434
        %v7515 = vmul.f32 %v7435, %v7435
        %v7516 = vmul.f32 %v7436, %v7436
        %v7517 = vmul.f32 %v7437, %v7437
        %v7518 = vmul.f32 %v7438, %v7438
        %v7519 = vmul.f32 %v7439, %v7439
        %v7520 = vmul.f32 %v7440, %v7440
        %v7521 = vmul.f32 %v7441, %v7441
        %v7522 = vmul.f32 %v7442, %v7442
        %v7523 = vmul.f32 %v7443, %v7443
        %v7524 = vmul.f32 %v7444, %v7444
        %v7525 = vmul.f32 %v7445, %v7445
        %v7526 = vmul.f32 %v7446, %v7446
        %v7527 = vmul.f32 %v7447, %v7447
        %v7528 = vmul.f32 %v7448, %v7448
        %v7529 = vmul.f32 %v7449, %v7449
        %v7530 = vsel %vm1855, %v7514, 0.0
        %7531 = vadd.xlane.f32.xlu0 %v7530
        %v7532 = vpop.xlane.xlu0 %7531
        %v7533 = vsel %vm1855, %v7515, 0.0
        %7534 = vadd.xlane.f32.xlu0 %v7533
        %v7535 = vpop.xlane.xlu0 %7534
        %v7536 = vsel %vm1855, %v7516, 0.0
        %7537 = vadd.xlane.f32.xlu0 %v7536
        %v7538 = vpop.xlane.xlu0 %7537
        %v7539 = vsel %vm1855, %v7517, 0.0
        %7540 = vadd.xlane.f32.xlu0 %v7539
        %v7541 = vpop.xlane.xlu0 %7540
        %v7542 = vsel %vm1855, %v7518, 0.0
        %7543 = vadd.xlane.f32.xlu0 %v7542
        %v7544 = vpop.xlane.xlu0 %7543
        %v7545 = vsel %vm1855, %v7519, 0.0
        %7546 = vadd.xlane.f32.xlu0 %v7545
        %v7547 = vpop.xlane.xlu0 %7546
        %v7548 = vsel %vm1855, %v7520, 0.0
        %7549 = vadd.xlane.f32.xlu0 %v7548
        %v7550 = vpop.xlane.xlu0 %7549
        %v7551 = vsel %vm1855, %v7521, 0.0
        %7552 = vadd.xlane.f32.xlu0 %v7551
        %v7553 = vpop.xlane.xlu0 %7552
        %v7554 = vsel %vm1855, %v7522, 0.0
        %7555 = vadd.xlane.f32.xlu0 %v7554
        %v7556 = vpop.xlane.xlu0 %7555
        %v7557 = vsel %vm1855, %v7523, 0.0
        %7558 = vadd.xlane.f32.xlu0 %v7557
        %v7559 = vpop.xlane.xlu0 %7558
        %v7560 = vsel %vm1855, %v7524, 0.0
        %7561 = vadd.xlane.f32.xlu0 %v7560
        %v7562 = vpop.xlane.xlu0 %7561
        %v7563 = vsel %vm1855, %v7525, 0.0
        %7564 = vadd.xlane.f32.xlu0 %v7563
        %v7565 = vpop.xlane.xlu0 %7564
        %v7566 = vsel %vm1855, %v7526, 0.0
        %7567 = vadd.xlane.f32.xlu0 %v7566
        %v7568 = vpop.xlane.xlu0 %7567
        %v7569 = vsel %vm1855, %v7527, 0.0
        %7570 = vadd.xlane.f32.xlu0 %v7569
        %v7571 = vpop.xlane.xlu0 %7570
        %v7572 = vsel %vm1855, %v7528, 0.0
        %7573 = vadd.xlane.f32.xlu0 %v7572
        %v7574 = vpop.xlane.xlu0 %7573
        %v7575 = vsel %vm1855, %v7529, 0.0
        %7576 = vadd.xlane.f32.xlu0 %v7575
        %v7577 = vpop.xlane.xlu0 %7576
        %v7578 = vmul.f32 %v7532, %v2354
        %v7579 = vmul.f32 %v7535, %v2354
        %v7580 = vmul.f32 %v7538, %v2354
        %v7581 = vmul.f32 %v7541, %v2354
        %v7582 = vmul.f32 %v7544, %v2354
        %v7583 = vmul.f32 %v7547, %v2354
        %v7584 = vmul.f32 %v7550, %v2354
        %v7585 = vmul.f32 %v7553, %v2354
        %v7586 = vmul.f32 %v7556, %v2354
        %v7587 = vmul.f32 %v7559, %v2354
        %v7588 = vmul.f32 %v7562, %v2354
        %v7589 = vmul.f32 %v7565, %v2354
        %v7590 = vmul.f32 %v7568, %v2354
        %v7591 = vmul.f32 %v7571, %v2354
        %v7592 = vmul.f32 %v7574, %v2354
        %v7593 = vmul.f32 %v7577, %v2354
        %v7594 = vmul.f32 %v7498, %v7498
        %v7595 = vmul.f32 %v7499, %v7499
        %v7596 = vmul.f32 %v7500, %v7500
        %v7597 = vmul.f32 %v7501, %v7501
        %v7598 = vmul.f32 %v7502, %v7502
        %v7599 = vmul.f32 %v7503, %v7503
        %v7600 = vmul.f32 %v7504, %v7504
        %v7601 = vmul.f32 %v7505, %v7505
        %v7602 = vmul.f32 %v7506, %v7506
        %v7603 = vmul.f32 %v7507, %v7507
        %v7604 = vmul.f32 %v7508, %v7508
        %v7605 = vmul.f32 %v7509, %v7509
        %v7606 = vmul.f32 %v7510, %v7510
        %v7607 = vmul.f32 %v7511, %v7511
        %v7608 = vmul.f32 %v7512, %v7512
        %v7609 = vmul.f32 %v7513, %v7513
        %v7610 = vsub.f32 %v7578, %v7594
        %v7611 = vsub.f32 %v7579, %v7595
        %v7612 = vsub.f32 %v7580, %v7596
        %v7613 = vsub.f32 %v7581, %v7597
        %v7614 = vsub.f32 %v7582, %v7598
        %v7615 = vsub.f32 %v7583, %v7599
        %v7616 = vsub.f32 %v7584, %v7600
        %v7617 = vsub.f32 %v7585, %v7601
        %v7618 = vsub.f32 %v7586, %v7602
        %v7619 = vsub.f32 %v7587, %v7603
        %v7620 = vsub.f32 %v7588, %v7604
        %v7621 = vsub.f32 %v7589, %v7605
        %v7622 = vsub.f32 %v7590, %v7606
        %v7623 = vsub.f32 %v7591, %v7607
        %v7624 = vsub.f32 %v7592, %v7608
        %v7625 = vsub.f32 %v7593, %v7609
        %v7626 = vmax.f32 %v7610, 0.0
        %v7627 = vmax.f32 %v7611, 0.0
        %v7628 = vmax.f32 %v7612, 0.0
        %v7629 = vmax.f32 %v7613, 0.0
        %v7630 = vmax.f32 %v7614, 0.0
        %v7631 = vmax.f32 %v7615, 0.0
        %v7632 = vmax.f32 %v7616, 0.0
        %v7633 = vmax.f32 %v7617, 0.0
        %v7634 = vmax.f32 %v7618, 0.0
        %v7635 = vmax.f32 %v7619, 0.0
        %v7636 = vmax.f32 %v7620, 0.0
        %v7637 = vmax.f32 %v7621, 0.0
        %v7638 = vmax.f32 %v7622, 0.0
        %v7639 = vmax.f32 %v7623, 0.0
        %v7640 = vmax.f32 %v7624, 0.0
        %v7641 = vmax.f32 %v7625, 0.0
        %v7642 = vadd.f32 %v7626, 1e-05
        %v7643 = vadd.f32 %v7627, 1e-05
        %v7644 = vadd.f32 %v7628, 1e-05
        %v7645 = vadd.f32 %v7629, 1e-05
        %v7646 = vadd.f32 %v7630, 1e-05
        %v7647 = vadd.f32 %v7631, 1e-05
        %v7648 = vadd.f32 %v7632, 1e-05
        %v7649 = vadd.f32 %v7633, 1e-05
        %v7650 = vadd.f32 %v7634, 1e-05
        %v7651 = vadd.f32 %v7635, 1e-05
        %v7652 = vadd.f32 %v7636, 1e-05
        %v7653 = vadd.f32 %v7637, 1e-05
        %v7654 = vadd.f32 %v7638, 1e-05
        %v7655 = vadd.f32 %v7639, 1e-05
        %v7656 = vadd.f32 %v7640, 1e-05
        %v7657 = vadd.f32 %v7641, 1e-05
        %v7658 = vrsqrt.pop %v7642
        %v7659 = vrsqrt.pop %v7643
        %v7660 = vrsqrt.pop %v7644
        %v7661 = vrsqrt.pop %v7645
        %v7662 = vrsqrt.pop %v7646
        %v7663 = vrsqrt.pop %v7647
        %v7664 = vrsqrt.pop %v7648
        %v7665 = vrsqrt.pop %v7649
        %v7666 = vrsqrt.pop %v7650
        %v7667 = vrsqrt.pop %v7651
        %v7668 = vrsqrt.pop %v7652
        %v7669 = vrsqrt.pop %v7653
        %v7670 = vrsqrt.pop %v7654
        %v7671 = vrsqrt.pop %v7655
        %v7672 = vrsqrt.pop %v7656
        %v7673 = vrsqrt.pop %v7657
        %v7674 = vsub.f32 %v7434, %v7498
        %v7675 = vsub.f32 %v7435, %v7499
        %v7676 = vsub.f32 %v7436, %v7500
        %v7677 = vsub.f32 %v7437, %v7501
        %v7678 = vsub.f32 %v7438, %v7502
        %v7679 = vsub.f32 %v7439, %v7503
        %v7680 = vsub.f32 %v7440, %v7504
        %v7681 = vsub.f32 %v7441, %v7505
        %v7682 = vsub.f32 %v7442, %v7506
        %v7683 = vsub.f32 %v7443, %v7507
        %v7684 = vsub.f32 %v7444, %v7508
        %v7685 = vsub.f32 %v7445, %v7509
        %v7686 = vsub.f32 %v7446, %v7510
        %v7687 = vsub.f32 %v7447, %v7511
        %v7688 = vsub.f32 %v7448, %v7512
        %v7689 = vsub.f32 %v7449, %v7513
        %v7690 = vld [vmem:[%s57] sm:$0x1]
        %v7692 = vlaneseq
        %v7693 = vshrl.u32 %v7692, 7
        %v7694 = vsub.s32 0, %v7693
        %v7695 = vrot.slane %v7690, %v7694
        %v7697 = vmul.f32 %v7658, %v7695
        %v7698 = vmul.f32 %v7659, %v7695
        %v7699 = vmul.f32 %v7660, %v7695
        %v7700 = vmul.f32 %v7661, %v7695
        %v7701 = vmul.f32 %v7662, %v7695
        %v7702 = vmul.f32 %v7663, %v7695
        %v7703 = vmul.f32 %v7664, %v7695
        %v7704 = vmul.f32 %v7665, %v7695
        %v7705 = vmul.f32 %v7666, %v7695
        %v7706 = vmul.f32 %v7667, %v7695
        %v7707 = vmul.f32 %v7668, %v7695
        %v7708 = vmul.f32 %v7669, %v7695
        %v7709 = vmul.f32 %v7670, %v7695
        %v7710 = vmul.f32 %v7671, %v7695
        %v7711 = vmul.f32 %v7672, %v7695
        %v7712 = vmul.f32 %v7673, %v7695
        %v7713 = vmul.f32 %v7674, %v7697
        %v7714 = vmul.f32 %v7675, %v7698
        %v7715 = vmul.f32 %v7676, %v7699
        %v7716 = vmul.f32 %v7677, %v7700
        %v7717 = vmul.f32 %v7678, %v7701
        %v7718 = vmul.f32 %v7679, %v7702
        %v7719 = vmul.f32 %v7680, %v7703
        %v7720 = vmul.f32 %v7681, %v7704
        %v7721 = vmul.f32 %v7682, %v7705
        %v7722 = vmul.f32 %v7683, %v7706
        %v7723 = vmul.f32 %v7684, %v7707
        %v7724 = vmul.f32 %v7685, %v7708
        %v7725 = vmul.f32 %v7686, %v7709
        %v7726 = vmul.f32 %v7687, %v7710
        %v7727 = vmul.f32 %v7688, %v7711
        %v7728 = vmul.f32 %v7689, %v7712
        %v7729 = vld [vmem:[%s59] sm:$0x1]
        %v7731 = vlaneseq
        %v7732 = vshrl.u32 %v7731, 7
        %v7733 = vsub.s32 0, %v7732
        %v7734 = vrot.slane %v7729, %v7733
        %v7736 = vadd.f32 %v7713, %v7734
        %v7737 = vadd.f32 %v7714, %v7734
        %v7738 = vadd.f32 %v7715, %v7734
        %v7739 = vadd.f32 %v7716, %v7734
        %v7740 = vadd.f32 %v7717, %v7734
        %v7741 = vadd.f32 %v7718, %v7734
        %v7742 = vadd.f32 %v7719, %v7734
        %v7743 = vadd.f32 %v7720, %v7734
        %v7744 = vadd.f32 %v7721, %v7734
        %v7745 = vadd.f32 %v7722, %v7734
        %v7746 = vadd.f32 %v7723, %v7734
        %v7747 = vadd.f32 %v7724, %v7734
        %v7748 = vadd.f32 %v7725, %v7734
        %v7749 = vadd.f32 %v7726, %v7734
        %v7750 = vadd.f32 %v7727, %v7734
        %v7751 = vadd.f32 %v7728, %v7734
        %v7752 = vld [vmem:[%s61] sm:$0x1]
        %v7753 = vpack.c.bf16 %v7737, %v7736
        %v7754 = vpack.c.bf16 %v7739, %v7738
        %v7755 = vpack.c.bf16 %v7741, %v7740
        %v7756 = vpack.c.bf16 %v7743, %v7742
        %v7757 = vpack.c.bf16 %v7745, %v7744
        %v7758 = vpack.c.bf16 %v7747, %v7746
        %v7759 = vpack.c.bf16 %v7749, %v7748
        %v7760 = vpack.c.bf16 %v7751, %v7750
        %v7761 = vld [vmem:[#allocation4] sm:$0x1]
        %7763 = vset.pattern.permute.xlu0 0
        %7764 = vperm.xlu0 %7763, %v7761
        %v7765 = vpop.permute.xlu0 %7764
        %v7767 = vlaneseq
        %v7768 = vshrl.u32 %v7767, 7
        %v7769 = vsub.s32 0, %v7768
        %v7770 = vrot.slane %v7765, %v7769
        %v7772 = vsel %vm1855, %v7752, 0
        %v7775 = vsel %vm1855, %v7753, 0
        %v7778 = vsel %vm1855, %v7754, 0
        %v7781 = vsel %vm1855, %v7755, 0
        %v7784 = vsel %vm1855, %v7756, 0
        %v7787 = vsel %vm1855, %v7757, 0
        %v7790 = vsel %vm1855, %v7758, 0
        %v7793 = vsel %vm1855, %v7759, 0
        %v7796 = vsel %vm1855, %v7760, 0
        %7798 = vmatprep.subr.bf16.mxu0 0
        %7799 = vmatpush1.bf16.xpose.msra.mxu0 %v7775
        %7800 = vmatprep.subr.bf16.mxu0 0
        %7801 = vmatpush1.bf16.xpose.msra.mxu0 %v7778
        %7802 = vmatprep.subr.bf16.mxu0 0
        %7803 = vmatpush1.bf16.xpose.msra.mxu0 %v7781
        %7804 = vmatprep.subr.bf16.mxu0 0
        %7805 = vmatpush1.bf16.xpose.msra.mxu0 %v7784
        %7806 = vmatprep.subr.bf16.mxu0 0
        %7807 = vmatpush1.bf16.xpose.msra.mxu0 %v7787
        %7808 = vmatprep.subr.bf16.mxu0 0
        %7809 = vmatpush1.bf16.xpose.msra.mxu0 %v7790
        %7810 = vmatprep.subr.bf16.mxu0 0
        %7811 = vmatpush1.bf16.xpose.msra.mxu0 %v7793
        %7812 = vmatprep.subr.bf16.mxu0 0
        %7813 = vmatpush1.bf16.xpose.msra.mxu0 %v7796
        %7814 = vmatprep.subr.bf16.mxu0 0
        %7815 = vmatpush1.bf16.xpose.msra.mxu0 0
        %7816 = vmatprep.subr.bf16.mxu0 0
        %7817 = vmatpush1.bf16.xpose.msra.mxu0 0
        %7818 = vmatprep.subr.bf16.mxu0 0
        %7819 = vmatpush1.bf16.xpose.msra.mxu0 0
        %7820 = vmatprep.subr.bf16.mxu0 0
        %7821 = vmatpush1.bf16.xpose.msra.mxu0 0
        %7822 = vmatprep.subr.bf16.mxu0 0
        %7823 = vmatpush1.bf16.xpose.msra.mxu0 0
        %7824 = vmatprep.subr.bf16.mxu0 0
        %7825 = vmatpush1.bf16.xpose.msra.mxu0 0
        %7826 = vmatprep.subr.bf16.mxu0 0
        %7827 = vmatpush1.bf16.xpose.msra.mxu0 0
        %7828 = vmatprep.subr.bf16.mxu0 0
        %7829 = vmatpush1.bf16.xpose.msra.mxu0 0
        %7830 = vmatprep.mubr.bf16.mxu0 0
        %7831 = vmatmul.mubr.bf16.gmra.mrb[0].mxu0 %v7772
        %v7832 = vpop.f32.mrb[0].mxu0
        %v7833 = vadd.f32 %v7770, %v7832
        %v7834 = vpop.f32.mrb[0].mxu0
        %v7835 = vpop.f32.mrb[0].mxu0
        %v7836 = vpop.f32.mrb[0].mxu0
        %7837 = vdwg.mxu0
        %v7838 = vsel %vm3599, 0.0, %v7833
        %v7839 = vld [vmem:[#allocation6] sm:$0x1]
        %7841 = vset.pattern.permute.xlu0 0
        %7842 = vperm.xlu0 %7841, %v7839
        %v7843 = vpop.permute.xlu0 %7842
        %v7845 = vlaneseq
        %v7846 = vshrl.u32 %v7845, 7
        %v7847 = vsub.s32 0, %v7846
        %v7848 = vrot.slane %v7843, %v7847
        %v7849 = vadd.f32 %v7838, %v7848
        %7850 = vxpose.xlu0.b32.start [1/16] %v7849, 128
        %7851 = vxpose.xlu0.b32.cont [2/16] 0.0, 128
        %7852 = vxpose.xlu0.b32.cont [3/16] 0.0, 128
        %7853 = vxpose.xlu0.b32.cont [4/16] 0.0, 128
        %7854 = vxpose.xlu0.b32.cont [5/16] 0.0, 128
        %7855 = vxpose.xlu0.b32.cont [6/16] 0.0, 128
        %7856 = vxpose.xlu0.b32.cont [7/16] 0.0, 128
        %7857 = vxpose.xlu0.b32.cont [8/16] 0.0, 128
        %7858 = vxpose.xlu0.b32.cont [9/16] 0.0, 128
        %7859 = vxpose.xlu0.b32.cont [10/16] 0.0, 128
        %7860 = vxpose.xlu0.b32.cont [11/16] 0.0, 128
        %7861 = vxpose.xlu0.b32.cont [12/16] 0.0, 128
        %7862 = vxpose.xlu0.b32.cont [13/16] 0.0, 128
        %7863 = vxpose.xlu0.b32.cont [14/16] 0.0, 128
        %7864 = vxpose.xlu0.b32.cont [15/16] 0.0, 128
        %7865 = vxpose.xlu0.b32.end [16/16] 0.0, 128
        %v7866 = vpop.trf.xlu0
        %v7867 = vpop.trf.xlu0
        %v7868 = vpop.trf.xlu0
        %v7869 = vpop.trf.xlu0
        %v7870 = vpop.trf.xlu0
        %v7871 = vpop.trf.xlu0
        %v7872 = vpop.trf.xlu0
        %v7873 = vpop.trf.xlu0
        %v7874 = vpop.trf.xlu0
        %v7875 = vpop.trf.xlu0
        %v7876 = vpop.trf.xlu0
        %v7877 = vpop.trf.xlu0
        %v7878 = vpop.trf.xlu0
        %v7879 = vpop.trf.xlu0
        %v7880 = vpop.trf.xlu0
        %v7881 = vpop.trf.xlu0
        %v7882 = vld [vmem:[%s71] sm:$0x1]
        %7884 = vset.pattern.permute.xlu0 0
        %7885 = vperm.xlu0 %7884, %v7866
        %v7886 = vpop.permute.xlu0 %7885
        %7889 = vset.pattern.permute.xlu0 0
        %7890 = vperm.xlu0 %7889, %v7867
        %v7891 = vpop.permute.xlu0 %7890
        %7894 = vset.pattern.permute.xlu0 0
        %7895 = vperm.xlu0 %7894, %v7868
        %v7896 = vpop.permute.xlu0 %7895
        %7899 = vset.pattern.permute.xlu0 0
        %7900 = vperm.xlu0 %7899, %v7869
        %v7901 = vpop.permute.xlu0 %7900
        %7904 = vset.pattern.permute.xlu0 0
        %7905 = vperm.xlu0 %7904, %v7870
        %v7906 = vpop.permute.xlu0 %7905
        %7909 = vset.pattern.permute.xlu0 0
        %7910 = vperm.xlu0 %7909, %v7871
        %v7911 = vpop.permute.xlu0 %7910
        %7914 = vset.pattern.permute.xlu0 0
        %7915 = vperm.xlu0 %7914, %v7872
        %v7916 = vpop.permute.xlu0 %7915
        %7919 = vset.pattern.permute.xlu0 0
        %7920 = vperm.xlu0 %7919, %v7873
        %v7921 = vpop.permute.xlu0 %7920
        %7924 = vset.pattern.permute.xlu0 0
        %7925 = vperm.xlu0 %7924, %v7874
        %v7926 = vpop.permute.xlu0 %7925
        %7929 = vset.pattern.permute.xlu0 0
        %7930 = vperm.xlu0 %7929, %v7875
        %v7931 = vpop.permute.xlu0 %7930
        %7934 = vset.pattern.permute.xlu0 0
        %7935 = vperm.xlu0 %7934, %v7876
        %v7936 = vpop.permute.xlu0 %7935
        %7939 = vset.pattern.permute.xlu0 0
        %7940 = vperm.xlu0 %7939, %v7877
        %v7941 = vpop.permute.xlu0 %7940
        %7944 = vset.pattern.permute.xlu0 0
        %7945 = vperm.xlu0 %7944, %v7878
        %v7946 = vpop.permute.xlu0 %7945
        %7949 = vset.pattern.permute.xlu0 0
        %7950 = vperm.xlu0 %7949, %v7879
        %v7951 = vpop.permute.xlu0 %7950
        %7954 = vset.pattern.permute.xlu0 0
        %7955 = vperm.xlu0 %7954, %v7880
        %v7956 = vpop.permute.xlu0 %7955
        %7959 = vset.pattern.permute.xlu0 0
        %7960 = vperm.xlu0 %7959, %v7881
        %v7961 = vpop.permute.xlu0 %7960
        %v7964 = vlaneseq
        %v7965 = vshrl.u32 %v7964, 7
        %v7966 = vsub.s32 0, %v7965
        %v7967 = vrot.slane %v7882, %v7966
        %vm7969 = vcmp.gt.f32.partialorder %v7886, %v7967
        %vm7970 = vcmp.gt.f32.partialorder %v7891, %v7967
        %vm7971 = vcmp.gt.f32.partialorder %v7896, %v7967
        %vm7972 = vcmp.gt.f32.partialorder %v7901, %v7967
        %vm7973 = vcmp.gt.f32.partialorder %v7906, %v7967
        %vm7974 = vcmp.gt.f32.partialorder %v7911, %v7967
        %vm7975 = vcmp.gt.f32.partialorder %v7916, %v7967
        %vm7976 = vcmp.gt.f32.partialorder %v7921, %v7967
        %vm7977 = vcmp.gt.f32.partialorder %v7926, %v7967
        %vm7978 = vcmp.gt.f32.partialorder %v7931, %v7967
        %vm7979 = vcmp.gt.f32.partialorder %v7936, %v7967
        %vm7980 = vcmp.gt.f32.partialorder %v7941, %v7967
        %vm7981 = vcmp.gt.f32.partialorder %v7946, %v7967
        %vm7982 = vcmp.gt.f32.partialorder %v7951, %v7967
        %vm7983 = vcmp.gt.f32.partialorder %v7956, %v7967
        %vm7984 = vcmp.gt.f32.partialorder %v7961, %v7967
        %v7985 = vsel %vm7969, 1, 0
        %v7986 = vsel %vm7970, 1, 0
        %v7987 = vsel %vm7971, 1, 0
        %v7988 = vsel %vm7972, 1, 0
        %v7989 = vsel %vm7973, 1, 0
        %v7990 = vsel %vm7974, 1, 0
        %v7991 = vsel %vm7975, 1, 0
        %v7992 = vsel %vm7976, 1, 0
        %v7993 = vsel %vm7977, 1, 0
        %v7994 = vsel %vm7978, 1, 0
        %v7995 = vsel %vm7979, 1, 0
        %v7996 = vsel %vm7980, 1, 0
        %v7997 = vsel %vm7981, 1, 0
        %v7998 = vsel %vm7982, 1, 0
        %v7999 = vsel %vm7983, 1, 0
        %v8000 = vsel %vm7984, 1, 0
        %v8001 = vand.u32 %v7985, 65535
        %v8002 = vshrl.u32 %v7985, 16
        %v8003 = vcvt.s32.f32 %v8001
        %v8004 = vcvt.s32.f32 %v8002
        %8005 = vadd.xlane.f32.xlu0 %v8003
        %v8006 = vpop.xlane.xlu0 %8005
        %8007 = vadd.xlane.f32.xlu0 %v8004
        %v8008 = vpop.xlane.xlu0 %8007
        %v8009 = vcvt.f32.s32 %v8006
        %v8010 = vcvt.f32.s32 %v8008
        %v8011 = vshll.u32 %v8010, 16
        %v8012 = vadd.s32 %v8011, %v8009
        %v8013 = vand.u32 %v7986, 65535
        %v8014 = vshrl.u32 %v7986, 16
        %v8015 = vcvt.s32.f32 %v8013
        %v8016 = vcvt.s32.f32 %v8014
        %8017 = vadd.xlane.f32.xlu0 %v8015
        %v8018 = vpop.xlane.xlu0 %8017
        %8019 = vadd.xlane.f32.xlu0 %v8016
        %v8020 = vpop.xlane.xlu0 %8019
        %v8021 = vcvt.f32.s32 %v8018
        %v8022 = vcvt.f32.s32 %v8020
        %v8023 = vshll.u32 %v8022, 16
        %v8024 = vadd.s32 %v8023, %v8021
        %v8025 = vand.u32 %v7987, 65535
        %v8026 = vshrl.u32 %v7987, 16
        %v8027 = vcvt.s32.f32 %v8025
        %v8028 = vcvt.s32.f32 %v8026
        %8029 = vadd.xlane.f32.xlu0 %v8027
        %v8030 = vpop.xlane.xlu0 %8029
        %8031 = vadd.xlane.f32.xlu0 %v8028
        %v8032 = vpop.xlane.xlu0 %8031
        %v8033 = vcvt.f32.s32 %v8030
        %v8034 = vcvt.f32.s32 %v8032
        %v8035 = vshll.u32 %v8034, 16
        %v8036 = vadd.s32 %v8035, %v8033
        %v8037 = vand.u32 %v7988, 65535
        %v8038 = vshrl.u32 %v7988, 16
        %v8039 = vcvt.s32.f32 %v8037
        %v8040 = vcvt.s32.f32 %v8038
        %8041 = vadd.xlane.f32.xlu0 %v8039
        %v8042 = vpop.xlane.xlu0 %8041
        %8043 = vadd.xlane.f32.xlu0 %v8040
        %v8044 = vpop.xlane.xlu0 %8043
        %v8045 = vcvt.f32.s32 %v8042
        %v8046 = vcvt.f32.s32 %v8044
        %v8047 = vshll.u32 %v8046, 16
        %v8048 = vadd.s32 %v8047, %v8045
        %v8049 = vand.u32 %v7989, 65535
        %v8050 = vshrl.u32 %v7989, 16
        %v8051 = vcvt.s32.f32 %v8049
        %v8052 = vcvt.s32.f32 %v8050
        %8053 = vadd.xlane.f32.xlu0 %v8051
        %v8054 = vpop.xlane.xlu0 %8053
        %8055 = vadd.xlane.f32.xlu0 %v8052
        %v8056 = vpop.xlane.xlu0 %8055
        %v8057 = vcvt.f32.s32 %v8054
        %v8058 = vcvt.f32.s32 %v8056
        %v8059 = vshll.u32 %v8058, 16
        %v8060 = vadd.s32 %v8059, %v8057
        %v8061 = vand.u32 %v7990, 65535
        %v8062 = vshrl.u32 %v7990, 16
        %v8063 = vcvt.s32.f32 %v8061
        %v8064 = vcvt.s32.f32 %v8062
        %8065 = vadd.xlane.f32.xlu0 %v8063
        %v8066 = vpop.xlane.xlu0 %8065
        %8067 = vadd.xlane.f32.xlu0 %v8064
        %v8068 = vpop.xlane.xlu0 %8067
        %v8069 = vcvt.f32.s32 %v8066
        %v8070 = vcvt.f32.s32 %v8068
        %v8071 = vshll.u32 %v8070, 16
        %v8072 = vadd.s32 %v8071, %v8069
        %v8073 = vand.u32 %v7991, 65535
        %v8074 = vshrl.u32 %v7991, 16
        %v8075 = vcvt.s32.f32 %v8073
        %v8076 = vcvt.s32.f32 %v8074
        %8077 = vadd.xlane.f32.xlu0 %v8075
        %v8078 = vpop.xlane.xlu0 %8077
        %8079 = vadd.xlane.f32.xlu0 %v8076
        %v8080 = vpop.xlane.xlu0 %8079
        %v8081 = vcvt.f32.s32 %v8078
        %v8082 = vcvt.f32.s32 %v8080
        %v8083 = vshll.u32 %v8082, 16
        %v8084 = vadd.s32 %v8083, %v8081
        %v8085 = vand.u32 %v7992, 65535
        %v8086 = vshrl.u32 %v7992, 16
        %v8087 = vcvt.s32.f32 %v8085
        %v8088 = vcvt.s32.f32 %v8086
        %8089 = vadd.xlane.f32.xlu0 %v8087
        %v8090 = vpop.xlane.xlu0 %8089
        %8091 = vadd.xlane.f32.xlu0 %v8088
        %v8092 = vpop.xlane.xlu0 %8091
        %v8093 = vcvt.f32.s32 %v8090
        %v8094 = vcvt.f32.s32 %v8092
        %v8095 = vshll.u32 %v8094, 16
        %v8096 = vadd.s32 %v8095, %v8093
        %v8097 = vand.u32 %v7993, 65535
        %v8098 = vshrl.u32 %v7993, 16
        %v8099 = vcvt.s32.f32 %v8097
        %v8100 = vcvt.s32.f32 %v8098
        %8101 = vadd.xlane.f32.xlu0 %v8099
        %v8102 = vpop.xlane.xlu0 %8101
        %8103 = vadd.xlane.f32.xlu0 %v8100
        %v8104 = vpop.xlane.xlu0 %8103
        %v8105 = vcvt.f32.s32 %v8102
        %v8106 = vcvt.f32.s32 %v8104
        %v8107 = vshll.u32 %v8106, 16
        %v8108 = vadd.s32 %v8107, %v8105
        %v8109 = vand.u32 %v7994, 65535
        %v8110 = vshrl.u32 %v7994, 16
        %v8111 = vcvt.s32.f32 %v8109
        %v8112 = vcvt.s32.f32 %v8110
        %8113 = vadd.xlane.f32.xlu0 %v8111
        %v8114 = vpop.xlane.xlu0 %8113
        %8115 = vadd.xlane.f32.xlu0 %v8112
        %v8116 = vpop.xlane.xlu0 %8115
        %v8117 = vcvt.f32.s32 %v8114
        %v8118 = vcvt.f32.s32 %v8116
        %v8119 = vshll.u32 %v8118, 16
        %v8120 = vadd.s32 %v8119, %v8117
        %v8121 = vand.u32 %v7995, 65535
        %v8122 = vshrl.u32 %v7995, 16
        %v8123 = vcvt.s32.f32 %v8121
        %v8124 = vcvt.s32.f32 %v8122
        %8125 = vadd.xlane.f32.xlu0 %v8123
        %v8126 = vpop.xlane.xlu0 %8125
        %8127 = vadd.xlane.f32.xlu0 %v8124
        %v8128 = vpop.xlane.xlu0 %8127
        %v8129 = vcvt.f32.s32 %v8126
        %v8130 = vcvt.f32.s32 %v8128
        %v8131 = vshll.u32 %v8130, 16
        %v8132 = vadd.s32 %v8131, %v8129
        %v8133 = vand.u32 %v7996, 65535
        %v8134 = vshrl.u32 %v7996, 16
        %v8135 = vcvt.s32.f32 %v8133
        %v8136 = vcvt.s32.f32 %v8134
        %8137 = vadd.xlane.f32.xlu0 %v8135
        %v8138 = vpop.xlane.xlu0 %8137
        %8139 = vadd.xlane.f32.xlu0 %v8136
        %v8140 = vpop.xlane.xlu0 %8139
        %v8141 = vcvt.f32.s32 %v8138
        %v8142 = vcvt.f32.s32 %v8140
        %v8143 = vshll.u32 %v8142, 16
        %v8144 = vadd.s32 %v8143, %v8141
        %v8145 = vand.u32 %v7997, 65535
        %v8146 = vshrl.u32 %v7997, 16
        %v8147 = vcvt.s32.f32 %v8145
        %v8148 = vcvt.s32.f32 %v8146
        %8149 = vadd.xlane.f32.xlu0 %v8147
        %v8150 = vpop.xlane.xlu0 %8149
        %8151 = vadd.xlane.f32.xlu0 %v8148
        %v8152 = vpop.xlane.xlu0 %8151
        %v8153 = vcvt.f32.s32 %v8150
        %v8154 = vcvt.f32.s32 %v8152
        %v8155 = vshll.u32 %v8154, 16
        %v8156 = vadd.s32 %v8155, %v8153
        %v8157 = vand.u32 %v7998, 65535
        %v8158 = vshrl.u32 %v7998, 16
        %v8159 = vcvt.s32.f32 %v8157
        %v8160 = vcvt.s32.f32 %v8158
        %8161 = vadd.xlane.f32.xlu0 %v8159
        %v8162 = vpop.xlane.xlu0 %8161
        %8163 = vadd.xlane.f32.xlu0 %v8160
        %v8164 = vpop.xlane.xlu0 %8163
        %v8165 = vcvt.f32.s32 %v8162
        %v8166 = vcvt.f32.s32 %v8164
        %v8167 = vshll.u32 %v8166, 16
        %v8168 = vadd.s32 %v8167, %v8165
        %v8169 = vand.u32 %v7999, 65535
        %v8170 = vshrl.u32 %v7999, 16
        %v8171 = vcvt.s32.f32 %v8169
        %v8172 = vcvt.s32.f32 %v8170
        %8173 = vadd.xlane.f32.xlu0 %v8171
        %v8174 = vpop.xlane.xlu0 %8173
        %8175 = vadd.xlane.f32.xlu0 %v8172
        %v8176 = vpop.xlane.xlu0 %8175
        %v8177 = vcvt.f32.s32 %v8174
        %v8178 = vcvt.f32.s32 %v8176
        %v8179 = vshll.u32 %v8178, 16
        %v8180 = vadd.s32 %v8179, %v8177
        %v8181 = vand.u32 %v8000, 65535
        %v8182 = vshrl.u32 %v8000, 16
        %v8183 = vcvt.s32.f32 %v8181
        %v8184 = vcvt.s32.f32 %v8182
        %8185 = vadd.xlane.f32.xlu0 %v8183
        %v8186 = vpop.xlane.xlu0 %8185
        %8187 = vadd.xlane.f32.xlu0 %v8184
        %v8188 = vpop.xlane.xlu0 %8187
        %v8189 = vcvt.f32.s32 %v8186
        %v8190 = vcvt.f32.s32 %v8188
        %v8191 = vshll.u32 %v8190, 16
        %v8192 = vadd.s32 %v8191, %v8189
        %vm8193 = vcmp.eq.s32.totalorder %v5644, %v8012
        %vm8194 = vcmp.eq.s32.totalorder %v5644, %v8024
        %vm8195 = vcmp.eq.s32.totalorder %v5644, %v8036
        %vm8196 = vcmp.eq.s32.totalorder %v5644, %v8048
        %vm8197 = vcmp.eq.s32.totalorder %v5644, %v8060
        %vm8198 = vcmp.eq.s32.totalorder %v5644, %v8072
        %vm8199 = vcmp.eq.s32.totalorder %v5644, %v8084
        %vm8200 = vcmp.eq.s32.totalorder %v5644, %v8096
        %vm8201 = vcmp.eq.s32.totalorder %v5644, %v8108
        %vm8202 = vcmp.eq.s32.totalorder %v5644, %v8120
        %vm8203 = vcmp.eq.s32.totalorder %v5644, %v8132
        %vm8204 = vcmp.eq.s32.totalorder %v5644, %v8144
        %vm8205 = vcmp.eq.s32.totalorder %v5644, %v8156
        %vm8206 = vcmp.eq.s32.totalorder %v5644, %v8168
        %vm8207 = vcmp.eq.s32.totalorder %v5644, %v8180
        %vm8208 = vcmp.eq.s32.totalorder %v5644, %v8192
        %v8209 = vsel %vm8193, 1, 0
        %v8210 = vsel %vm8194, 1, 0
        %v8211 = vsel %vm8195, 1, 0
        %v8212 = vsel %vm8196, 1, 0
        %v8213 = vsel %vm8197, 1, 0
        %v8214 = vsel %vm8198, 1, 0
        %v8215 = vsel %vm8199, 1, 0
        %v8216 = vsel %vm8200, 1, 0
        %v8217 = vsel %vm8201, 1, 0
        %v8218 = vsel %vm8202, 1, 0
        %v8219 = vsel %vm8203, 1, 0
        %v8220 = vsel %vm8204, 1, 0
        %v8221 = vsel %vm8205, 1, 0
        %v8222 = vsel %vm8206, 1, 0
        %v8223 = vsel %vm8207, 1, 0
        %v8224 = vsel %vm8208, 1, 0
        %v8225 = vcvt.s32.f32 %v8209
        %v8226 = vcvt.s32.f32 %v8210
        %v8227 = vcvt.s32.f32 %v8211
        %v8228 = vcvt.s32.f32 %v8212
        %v8229 = vcvt.s32.f32 %v8213
        %v8230 = vcvt.s32.f32 %v8214
        %v8231 = vcvt.s32.f32 %v8215
        %v8232 = vcvt.s32.f32 %v8216
        %v8233 = vcvt.s32.f32 %v8217
        %v8234 = vcvt.s32.f32 %v8218
        %v8235 = vcvt.s32.f32 %v8219
        %v8236 = vcvt.s32.f32 %v8220
        %v8237 = vcvt.s32.f32 %v8221
        %v8238 = vcvt.s32.f32 %v8222
        %v8239 = vcvt.s32.f32 %v8223
        %v8240 = vcvt.s32.f32 %v8224
        %v8241 = vld [vmem:[%s75] sm:$0xff]
        %v8242 = vld [vmem:[%s75 + $0x8] sm:$0xff]
        %v8243 = vld [vmem:[%s75 + $0x10] sm:$0xff]
        %v8244 = vld [vmem:[%s75 + $0x18] sm:$0xff]
        %v8245 = vld [vmem:[%s75 + $0x20] sm:$0xff]
        %v8246 = vld [vmem:[%s75 + $0x28] sm:$0xff]
        %v8247 = vld [vmem:[%s75 + $0x30] sm:$0xff]
        %v8248 = vld [vmem:[%s75 + $0x38] sm:$0xff]
        %v8250 = vsel %vm5701, %v8225, 0
        %v8253 = vsel %vm5701, %v8226, 0
        %v8256 = vsel %vm5701, %v8227, 0
        %v8259 = vsel %vm5701, %v8228, 0
        %v8262 = vsel %vm5701, %v8229, 0
        %v8265 = vsel %vm5701, %v8230, 0
        %v8268 = vsel %vm5701, %v8231, 0
        %v8271 = vsel %vm5701, %v8232, 0
        %v8274 = vsel %vm5701, %v8233, 0
        %v8277 = vsel %vm5701, %v8234, 0
        %v8280 = vsel %vm5701, %v8235, 0
        %v8283 = vsel %vm5701, %v8236, 0
        %v8286 = vsel %vm5701, %v8237, 0
        %v8289 = vsel %vm5701, %v8238, 0
        %v8292 = vsel %vm5701, %v8239, 0
        %v8295 = vsel %vm5701, %v8240, 0
        %8297 = vmatprep.subr.mxu0 0.0
        %8298 = vmatpush1.msra.mxu0 %v8241
        %8299 = vmatprep.subr.mxu0 0.0
        %8300 = vmatpush1.msra.mxu0 %v8242
        %8301 = vmatprep.subr.mxu0 0.0
        %8302 = vmatpush1.msra.mxu0 %v8243
        %8303 = vmatprep.subr.mxu0 0.0
        %8304 = vmatpush1.msra.mxu0 %v8244
        %8305 = vmatprep.subr.mxu0 0.0
        %8306 = vmatpush1.msra.mxu0 %v8245
        %8307 = vmatprep.subr.mxu0 0.0
        %8308 = vmatpush1.msra.mxu0 %v8246
        %8309 = vmatprep.subr.mxu0 0.0
        %8310 = vmatpush1.msra.mxu0 %v8247
        %8311 = vmatprep.subr.mxu0 0.0
        %8312 = vmatpush1.msra.mxu0 %v8248
        %8313 = vmatprep.subr.mxu0 0.0
        %8314 = vmatpush1.msra.mxu0 0.0
        %8315 = vmatprep.subr.mxu0 0.0
        %8316 = vmatpush1.msra.mxu0 0.0
        %8317 = vmatprep.subr.mxu0 0.0
        %8318 = vmatpush1.msra.mxu0 0.0
        %8319 = vmatprep.subr.mxu0 0.0
        %8320 = vmatpush1.msra.mxu0 0.0
        %8321 = vmatprep.subr.mxu0 0.0
        %8322 = vmatpush1.msra.mxu0 0.0
        %8323 = vmatprep.subr.mxu0 0.0
        %8324 = vmatpush1.msra.mxu0 0.0
        %8325 = vmatprep.subr.mxu0 0.0
        %8326 = vmatpush1.msra.mxu0 0.0
        %8327 = vmatprep.subr.mxu0 0.0
        %8328 = vmatpush1.msra.mxu0 0.0
        %8329 = vmatprep.subr.mxu0 0.0
        %8330 = vmatpush1.msra.mxu0 0.0
        %8331 = vmatprep.subr.mxu0 0.0
        %8332 = vmatpush1.msra.mxu0 0.0
        %8333 = vmatprep.subr.mxu0 0.0
        %8334 = vmatpush1.msra.mxu0 0.0
        %8335 = vmatprep.subr.mxu0 0.0
        %8336 = vmatpush1.msra.mxu0 0.0
        %8337 = vmatprep.subr.mxu0 0.0
        %8338 = vmatpush1.msra.mxu0 0.0
        %8339 = vmatprep.subr.mxu0 0.0
        %8340 = vmatpush1.msra.mxu0 0.0
        %8341 = vmatprep.subr.mxu0 0.0
        %8342 = vmatpush1.msra.mxu0 0.0
        %8343 = vmatprep.subr.mxu0 0.0
        %8344 = vmatpush1.msra.mxu0 0.0
        %8345 = vmatprep.subr.mxu0 0.0
        %8346 = vmatpush1.msra.mxu0 0.0
        %8347 = vmatprep.subr.mxu0 0.0
        %8348 = vmatpush1.msra.mxu0 0.0
        %8349 = vmatprep.subr.mxu0 0.0
        %8350 = vmatpush1.msra.mxu0 0.0
        %8351 = vmatprep.subr.mxu0 0.0
        %8352 = vmatpush1.msra.mxu0 0.0
        %8353 = vmatprep.subr.mxu0 0.0
        %8354 = vmatpush1.msra.mxu0 0.0
        %8355 = vmatprep.subr.mxu0 0.0
        %8356 = vmatpush1.msra.mxu0 0.0
        %8357 = vmatprep.subr.mxu0 0.0
        %8358 = vmatpush1.msra.mxu0 0.0
        %8359 = vmatprep.subr.mxu0 0.0
        %8360 = vmatpush1.msra.mxu0 0.0
        %8361 = vmatprep.mubr.f32.mxu0 0.0
        %8362 = vmatmul.mubr.f32.gmra.mrb[0].mxu0 %v8250
        %v8363 = vpop.f32.mrb[0].mxu0
        %v8364 = vadd.f32 0.0, %v8363
        %v8365 = vpop.f32.mrb[0].mxu0
        %8366 = vmatprep.mubr.f32.mxu0 0.0
        %8367 = vmatmul.mubr.f32.gmra.mrb[0].mxu0 %v8253
        %v8368 = vpop.f32.mrb[0].mxu0
        %v8369 = vadd.f32 0.0, %v8368
        %v8370 = vpop.f32.mrb[0].mxu0
        %8371 = vmatprep.mubr.f32.mxu0 0.0
        %8372 = vmatmul.mubr.f32.gmra.mrb[0].mxu0 %v8256
        %v8373 = vpop.f32.mrb[0].mxu0
        %v8374 = vadd.f32 0.0, %v8373
        %v8375 = vpop.f32.mrb[0].mxu0
        %8376 = vmatprep.mubr.f32.mxu0 0.0
        %8377 = vmatmul.mubr.f32.gmra.mrb[0].mxu0 %v8259
        %v8378 = vpop.f32.mrb[0].mxu0
        %v8379 = vadd.f32 0.0, %v8378
        %v8380 = vpop.f32.mrb[0].mxu0
        %8381 = vmatprep.mubr.f32.mxu0 0.0
        %8382 = vmatmul.mubr.f32.gmra.mrb[0].mxu0 %v8262
        %v8383 = vpop.f32.mrb[0].mxu0
        %v8384 = vadd.f32 0.0, %v8383
        %v8385 = vpop.f32.mrb[0].mxu0
        %8386 = vmatprep.mubr.f32.mxu0 0.0
        %8387 = vmatmul.mubr.f32.gmra.mrb[0].mxu0 %v8265
        %v8388 = vpop.f32.mrb[0].mxu0
        %v8389 = vadd.f32 0.0, %v8388
        %v8390 = vpop.f32.mrb[0].mxu0
        %8391 = vmatprep.mubr.f32.mxu0 0.0
        %8392 = vmatmul.mubr.f32.gmra.mrb[0].mxu0 %v8268
        %v8393 = vpop.f32.mrb[0].mxu0
        %v8394 = vadd.f32 0.0, %v8393
        %v8395 = vpop.f32.mrb[0].mxu0
        %8396 = vmatprep.mubr.f32.mxu0 0.0
        %8397 = vmatmul.mubr.f32.gmra.mrb[0].mxu0 %v8271
        %v8398 = vpop.f32.mrb[0].mxu0
        %v8399 = vadd.f32 0.0, %v8398
        %v8400 = vpop.f32.mrb[0].mxu0
        %8401 = vmatprep.mubr.f32.mxu0 0.0
        %8402 = vmatmul.mubr.f32.gmra.mrb[0].mxu0 %v8274
        %v8403 = vpop.f32.mrb[0].mxu0
        %v8404 = vadd.f32 0.0, %v8403
        %v8405 = vpop.f32.mrb[0].mxu0
        %8406 = vmatprep.mubr.f32.mxu0 0.0
        %8407 = vmatmul.mubr.f32.gmra.mrb[0].mxu0 %v8277
        %v8408 = vpop.f32.mrb[0].mxu0
        %v8409 = vadd.f32 0.0, %v8408
        %v8410 = vpop.f32.mrb[0].mxu0
        %8411 = vmatprep.mubr.f32.mxu0 0.0
        %8412 = vmatmul.mubr.f32.gmra.mrb[0].mxu0 %v8280
        %v8413 = vpop.f32.mrb[0].mxu0
        %v8414 = vadd.f32 0.0, %v8413
        %v8415 = vpop.f32.mrb[0].mxu0
        %8416 = vmatprep.mubr.f32.mxu0 0.0
        %8417 = vmatmul.mubr.f32.gmra.mrb[0].mxu0 %v8283
        %v8418 = vpop.f32.mrb[0].mxu0
        %v8419 = vadd.f32 0.0, %v8418
        %v8420 = vpop.f32.mrb[0].mxu0
        %8421 = vmatprep.mubr.f32.mxu0 0.0
        %8422 = vmatmul.mubr.f32.gmra.mrb[0].mxu0 %v8286
        %v8423 = vpop.f32.mrb[0].mxu0
        %v8424 = vadd.f32 0.0, %v8423
        %v8425 = vpop.f32.mrb[0].mxu0
        %8426 = vmatprep.mubr.f32.mxu0 0.0
        %8427 = vmatmul.mubr.f32.gmra.mrb[0].mxu0 %v8289
        %v8428 = vpop.f32.mrb[0].mxu0
        %v8429 = vadd.f32 0.0, %v8428
        %v8430 = vpop.f32.mrb[0].mxu0
        %8431 = vmatprep.mubr.f32.mxu0 0.0
        %8432 = vmatmul.mubr.f32.gmra.mrb[0].mxu0 %v8292
        %v8433 = vpop.f32.mrb[0].mxu0
        %v8434 = vadd.f32 0.0, %v8433
        %v8435 = vpop.f32.mrb[0].mxu0
        %8436 = vmatprep.mubr.f32.mxu0 0.0
        %8437 = vmatmul.mubr.f32.gmra.mrb[0].mxu0 %v8295
        %v8438 = vpop.f32.mrb[0].mxu0
        %v8439 = vadd.f32 0.0, %v8438
        %v8440 = vpop.f32.mrb[0].mxu0
        %8441 = vdwg.mxu0
        %v8442 = vmul.f32 %v8364, %v1685
        %v8443 = vmul.f32 %v8369, %v1686
        %v8444 = vmul.f32 %v8374, %v1687
        %v8445 = vmul.f32 %v8379, %v1688
        %v8446 = vmul.f32 %v8384, %v1689
        %v8447 = vmul.f32 %v8389, %v1690
        %v8448 = vmul.f32 %v8394, %v1691
        %v8449 = vmul.f32 %v8399, %v1692
        %v8450 = vmul.f32 %v8404, %v1693
        %v8451 = vmul.f32 %v8409, %v1694
        %v8452 = vmul.f32 %v8414, %v1695
        %v8453 = vmul.f32 %v8419, %v1696
        %v8454 = vmul.f32 %v8424, %v1697
        %v8455 = vmul.f32 %v8429, %v1698
        %v8456 = vmul.f32 %v8434, %v1699
        %v8457 = vmul.f32 %v8439, %v1700
        %v8458 = vadd.f32 %v5911, %v8442
        %v8459 = vadd.f32 %v5912, %v8443
        %v8460 = vadd.f32 %v5913, %v8444
        %v8461 = vadd.f32 %v5914, %v8445
        %v8462 = vadd.f32 %v5915, %v8446
        %v8463 = vadd.f32 %v5916, %v8447
        %v8464 = vadd.f32 %v5917, %v8448
        %v8465 = vadd.f32 %v5918, %v8449
        %v8466 = vadd.f32 %v5919, %v8450
        %v8467 = vadd.f32 %v5920, %v8451
        %v8468 = vadd.f32 %v5921, %v8452
        %v8469 = vadd.f32 %v5922, %v8453
        %v8470 = vadd.f32 %v5923, %v8454
        %v8471 = vadd.f32 %v5924, %v8455
        %v8472 = vadd.f32 %v5925, %v8456
        %v8473 = vadd.f32 %v5926, %v8457
        %8474 = vst [vmem:[%s1294] sm:$0x1] %v7849
        %8475 = vst.msk [vmem:[%s1329] sm:$0xff] %vm1855, %v8458
        %8476 = vst.msk [vmem:[%s1329 + $0x8] sm:$0xff] %vm1855, %v8459
        %8477 = vst.msk [vmem:[%s1329 + $0x10] sm:$0xff] %vm1855, %v8460
        %8478 = vst.msk [vmem:[%s1329 + $0x18] sm:$0xff] %vm1855, %v8461
        %8479 = vst.msk [vmem:[%s1329 + $0x20] sm:$0xff] %vm1855, %v8462
        %8480 = vst.msk [vmem:[%s1329 + $0x28] sm:$0xff] %vm1855, %v8463
        %8481 = vst.msk [vmem:[%s1329 + $0x30] sm:$0xff] %vm1855, %v8464
        %8482 = vst.msk [vmem:[%s1329 + $0x38] sm:$0xff] %vm1855, %v8465
        %8483 = vst.msk [vmem:[%s1329 + $0x40] sm:$0xff] %vm1855, %v8466
        %8484 = vst.msk [vmem:[%s1329 + $0x48] sm:$0xff] %vm1855, %v8467
        %8485 = vst.msk [vmem:[%s1329 + $0x50] sm:$0xff] %vm1855, %v8468
        %8486 = vst.msk [vmem:[%s1329 + $0x58] sm:$0xff] %vm1855, %v8469
        %8487 = vst.msk [vmem:[%s1329 + $0x60] sm:$0xff] %vm1855, %v8470
        %8488 = vst.msk [vmem:[%s1329 + $0x68] sm:$0xff] %vm1855, %v8471
        %8489 = vst.msk [vmem:[%s1329 + $0x70] sm:$0xff] %vm1855, %v8472
        %8490 = vst.msk [vmem:[%s1329 + $0x78] sm:$0xff] %vm1855, %v8473
        %p8491 = scmp.lt.s32.totalorder %s113, 1
        %s8492 = scalar_select %p8491, %s113, 1
        %s8493 = scalar_lea.vmem %s77, %s8492
        %s8494 = sand.u32 %s955, 1
        %s8495 = scalar_lea.sflag [#allocation8], %s8494
        %s8496 = sand.u32 %s955, 1
        %s8497 = scalar_lea.vmem [#allocation7], %s8496
        %s8498 = sand.u32 %s981, 1
        %s8499 = scalar_lea.sflag [#allocation10], %s8498
        %s8500 = sand.u32 %s981, 1
        %s8501 = scalar_lea.vmem [#allocation9], %s8500
        %p8502 = scmp.lt.s32.totalorder %s113, 1
        %s8503 = scalar_select %p8502, %s113, 1
        %s8504 = smul.addr %s8503, 16
        %s8505 = smul.addr %s8504, 8
        %s8506 = scalar_lea.vmem %s83, %s8505
        %p8507 = scmp.lt.s32.totalorder %s113, 1
        %s8508 = scalar_select %p8507, %s113, 1
        %s8509 = smul.addr %s8508, 16
        %s8510 = smul.addr %s8509, 8
        %s8511 = scalar_lea.vmem %s85, %s8510
        // Predicated region
        $region173: #{variance_adaptor_forward.1} parent=171 // pred_check
          %p8512 = pneg %p939
        $region174: #{variance_adaptor_forward.1} parent=171 // pred_check_branch
          %8514 = sbr.rel (%p8512) target = $region176
        $region175: #{variance_adaptor_forward.1} parent=171 // pred_region
          _
        $region176: #{variance_adaptor_forward.1} parent=171 // pred_fallthru
          _
        // Predicated region
        $region177: #{variance_adaptor_forward.1} parent=171 // pred_check
          %p8515 = pneg %p965
        $region178: #{variance_adaptor_forward.1} parent=171 // pred_check_branch
          %8517 = sbr.rel (%p8515) target = $region180
        $region179: #{variance_adaptor_forward.1} parent=171 // pred_region
          %s8519 = ssub.s32 16, 16
          %8520 = vsyncadd %s8495, %s8519
          %s8521 = smul.addr %s113, 16
          %s8522 = scalar_lea.hbm %s79, %s8521
          %s8524 = sshll.u32 %s8497, 4
          %s8525 = int_to_ptr.vmem [resolvable:$true] %s8524
          %8527 = dma.vmem_to_hbm [thread:$0]  %s8525, 16, %s8522, %s8495
        $region180: #{variance_adaptor_forward.1} parent=171 // pred_fallthru
          _
        // Predicated region
        $region181: #{variance_adaptor_forward.1} parent=171 // pred_check
          %p8528 = pneg %p991
        $region182: #{variance_adaptor_forward.1} parent=171 // pred_check_branch
          %8530 = sbr.rel (%p8528) target = $region184
        $region183: #{variance_adaptor_forward.1} parent=171 // pred_region
          %s8532 = ssub.s32 16, 16
          %8533 = vsyncadd %s8499, %s8532
          %s8534 = smul.addr %s113, 16
          %s8535 = scalar_lea.hbm %s81, %s8534
          %s8537 = sshll.u32 %s8501, 4
          %s8538 = int_to_ptr.vmem [resolvable:$true] %s8537
          %8540 = dma.vmem_to_hbm [thread:$0]  %s8538, 16, %s8535, %s8499
        $region184: #{variance_adaptor_forward.1} parent=171 // pred_fallthru
          _
        // Predicated region
        $region185: #{variance_adaptor_forward.1} parent=171 // pred_check
          %p8541 = pneg %p1017
        $region186: #{variance_adaptor_forward.1} parent=171 // pred_check_branch
          %8543 = sbr.rel (%p8541) target = $region188
        $region187: #{variance_adaptor_forward.1} parent=171 // pred_region
          _
        $region188: #{variance_adaptor_forward.1} parent=171 // pred_fallthru
          _
        // Predicated region
        $region189: #{variance_adaptor_forward.1} parent=171 // pred_check
          %p8544 = pneg %p1043
        $region190: #{variance_adaptor_forward.1} parent=171 // pred_check_branch
          %8546 = sbr.rel (%p8544) target = $region192
        $region191: #{variance_adaptor_forward.1} parent=171 // pred_region
          _
        $region192: #{variance_adaptor_forward.1} parent=171 // pred_fallthru
          _
      $region172: #{variance_adaptor_forward.1} parent=5 // pred_fallthru
        _
      %p8547 = scmp.le.s32.totalorder 2, %s108
      // Predicated region
      $region193: #{variance_adaptor_forward.1} parent=5 // pred_check
        %p8548 = pneg %p8547
      $region194: #{variance_adaptor_forward.1} parent=5 // pred_check_branch
        %8550 = sbr.rel (%p8548) target = $region196
      $region195: #{variance_adaptor_forward.1} parent=5 // pred_region
        %s8551 = ssub.s32 %s108, 2
        // Predicated region
        $region197: #{variance_adaptor_forward.1} parent=195 // pred_check
          %p8552 = pneg %p945
        $region198: #{variance_adaptor_forward.1} parent=195 // pred_check_branch
          %8554 = sbr.rel (%p8552) target = $region200
        $region199: #{variance_adaptor_forward.1} parent=195 // pred_region
          %p8555 = scmp.lt.s32.totalorder %s114, 1
          %s8556 = scalar_select %p8555, %s114, 1
          %s8557 = scalar_lea.vmem %s77, %s8556
        $region200: #{variance_adaptor_forward.1} parent=195 // pred_fallthru
          _
        // Predicated region
        $region201: #{variance_adaptor_forward.1} parent=195 // pred_check
          %p8558 = pneg %p971
        $region202: #{variance_adaptor_forward.1} parent=195 // pred_check_branch
          %8560 = sbr.rel (%p8558) target = $region204
        $region203: #{variance_adaptor_forward.1} parent=195 // pred_region
          %s8561 = sand.u32 %s956, 1
          %s8562 = scalar_lea.sflag [#allocation8], %s8561
          %s8563 = sand.u32 %s956, 1
          %s8564 = scalar_lea.vmem [#allocation7], %s8563
          %8565 = dma.done %s8562, 16
        $region204: #{variance_adaptor_forward.1} parent=195 // pred_fallthru
          _
        // Predicated region
        $region205: #{variance_adaptor_forward.1} parent=195 // pred_check
          %p8566 = pneg %p997
        $region206: #{variance_adaptor_forward.1} parent=195 // pred_check_branch
          %8568 = sbr.rel (%p8566) target = $region208
        $region207: #{variance_adaptor_forward.1} parent=195 // pred_region
          %s8569 = sand.u32 %s982, 1
          %s8570 = scalar_lea.sflag [#allocation10], %s8569
          %s8571 = sand.u32 %s982, 1
          %s8572 = scalar_lea.vmem [#allocation9], %s8571
          %8573 = dma.done %s8570, 16
        $region208: #{variance_adaptor_forward.1} parent=195 // pred_fallthru
          _
        // Predicated region
        $region209: #{variance_adaptor_forward.1} parent=195 // pred_check
          %p8574 = pneg %p1023
        $region210: #{variance_adaptor_forward.1} parent=195 // pred_check_branch
          %8576 = sbr.rel (%p8574) target = $region212
        $region211: #{variance_adaptor_forward.1} parent=195 // pred_region
          %p8577 = scmp.lt.s32.totalorder %s114, 1
          %s8578 = scalar_select %p8577, %s114, 1
          %s8579 = smul.addr %s8578, 16
          %s8580 = smul.addr %s8579, 8
          %s8581 = scalar_lea.vmem %s83, %s8580
        $region212: #{variance_adaptor_forward.1} parent=195 // pred_fallthru
          _
        // Predicated region
        $region213: #{variance_adaptor_forward.1} parent=195 // pred_check
          %p8582 = pneg %p1049
        $region214: #{variance_adaptor_forward.1} parent=195 // pred_check_branch
          %8584 = sbr.rel (%p8582) target = $region216
        $region215: #{variance_adaptor_forward.1} parent=195 // pred_region
          %p8585 = scmp.lt.s32.totalorder %s114, 1
          %s8586 = scalar_select %p8585, %s114, 1
          %s8587 = smul.addr %s8586, 16
          %s8588 = smul.addr %s8587, 8
          %s8589 = scalar_lea.vmem %s85, %s8588
        $region216: #{variance_adaptor_forward.1} parent=195 // pred_fallthru
          _
      $region196: #{variance_adaptor_forward.1} parent=5 // pred_fallthru
        _
    $region6: #{variance_adaptor_forward.1} parent=1 // loop_footer
      %s112 = sadd.s32 1, %s108
    $region7: #{variance_adaptor_forward.1} parent=1 // loop_footer_branch
      %107 = sbr.rel target = $region3
    $region8: #{variance_adaptor_forward.1} parent=1 // loop_exit
      _
    %8590 = vsyncpa [#allocation8], 1
    %s8591 = scalar_lea.sflag [#allocation8], 1
    %8592 = vsyncpa %s8591, 1
    %8593 = vsyncpa [#allocation10], 1
    %s8594 = scalar_lea.sflag [#allocation10], 1
    %8595 = vsyncpa %s8594, 1

</llo_original>
